<compile_context>
chip_gen: v6e
topology: v6e:2x2x1
jax: 0.10.0
libtpu: 0.0.40
codegen_flags: <defaults>
</compile_context>

<pallas_src>
import jax
import jax.numpy as jnp
import numpy as np
from jax.experimental import pallas as pl
from jax.experimental.pallas import tpu as pltpu


# VMEM limit safe on v5e/v6e (128 MiB physical) and v7x (64 MiB physical).
try:
    _VMEM_LIMIT = int(min(48 * 1024 * 1024,
                          pltpu.get_tpu_info().vmem_capacity_bytes // 2))
except Exception:  # conservative fallback, valid on every generation
    _VMEM_LIMIT = 32 * 1024 * 1024

_VMEM_SPEC = pl.BlockSpec(memory_space=pltpu.MemorySpace.VMEM)


# ----------------------------------------------------------------------------
# Pallas kernels
# ----------------------------------------------------------------------------
def _matmul_bias_relu_kernel(x_ref, w_ref, b_ref, o_ref):
    """o = relu(x @ w + b); x:(M,K) bf16, w:(K,N) bf16, b:(1,N) f32, o:(M,N) f32."""
    acc = jnp.dot(x_ref[...], w_ref[...], preferred_element_type=jnp.float32)
    o_ref[...] = jnp.maximum(acc + b_ref[...], 0.0)


def matmul_bias_relu(x, w, b):
    m = x.shape[0]
    n = w.shape[1]
    return pl.pallas_call(
        _matmul_bias_relu_kernel,
        out_shape=jax.ShapeDtypeStruct((m, n), jnp.float32),
        in_specs=[_VMEM_SPEC, _VMEM_SPEC, _VMEM_SPEC],
        out_specs=_VMEM_SPEC,
        compiler_params=pltpu.CompilerParams(vmem_limit_bytes=_VMEM_LIMIT),
    )(x, w, b)


def _head_kernel(x_ref, wfc_ref, bfc_ref, whead_ref, bhead_ref, o_ref):
    """Fused fc -> LeakyReLU(0.01) -> head, tiled over the fc N dimension.

    x:(B,3136) bf16, wfc block:(3136,TN) bf16, bfc block:(1,TN) f32,
    whead block:(TN,A) bf16, bhead:(1,A) f32, o:(B,A) f32 accumulator.
    """
    j = pl.program_id(0)
    h = jnp.dot(x_ref[...], wfc_ref[...],
                preferred_element_type=jnp.float32) + bfc_ref[...]
    h = jnp.where(h > 0, h, 0.01 * h)                       # LeakyReLU(0.01)
    part = jnp.dot(h, whead_ref[...].astype(jnp.float32),
                   preferred_element_type=jnp.float32)      # (B, A)

    @pl.when(j == 0)
    def _():
        o_ref[...] = part + bhead_ref[...]

    @pl.when(j != 0)
    def _():
        o_ref[...] = o_ref[...] + part


def dqn_head(x, w_fc, b_fc, w_head, b_head, *, tn=256):
    bsz = x.shape[0]
    kfc, nfc = w_fc.shape
    na = w_head.shape[1]
    assert nfc % tn == 0
    return pl.pallas_call(
        _head_kernel,
        out_shape=jax.ShapeDtypeStruct((bsz, na), jnp.float32),
        grid_spec=pltpu.PrefetchScalarGridSpec(
            num_scalar_prefetch=0,
            grid=(nfc // tn,),
            in_specs=[
                pl.BlockSpec((bsz, kfc), lambda j: (0, 0)),   # x (resident)
                pl.BlockSpec((kfc, tn), lambda j: (0, j)),    # fc weight slice
                pl.BlockSpec((1, tn), lambda j: (0, j)),      # fc bias slice
                pl.BlockSpec((tn, na), lambda j: (j, 0)),     # head weight rows
                pl.BlockSpec((1, na), lambda j: (0, 0)),      # head bias
            ],
            out_specs=pl.BlockSpec((bsz, na), lambda j: (0, 0)),
        ),
        compiler_params=pltpu.CompilerParams(
            dimension_semantics=("arbitrary",),   # output accumulates over this axis
            vmem_limit_bytes=_VMEM_LIMIT),
    )(x, w_fc, b_fc, w_head, b_head)


# ----------------------------------------------------------------------------
# Plain-JAX glue: NHWC im2col patch extraction (data layout only, no math)
# ----------------------------------------------------------------------------
def im2col_nhwc(x, kh, kw, stride):
    """x: (B, H, W, C) -> patches (B, Ho, Wo, kh*kw*C) in (i, j, c) feature order."""
    b, h, w, c = x.shape
    ho = (h - kh) // stride + 1
    wo = (w - kw) // stride + 1
    cols = []
    for i in range(kh):
        for j in range(kw):
            cols.append(x[:, i:i + stride * ho:stride, j:j + stride * wo:stride, :])
    patches = jnp.stack(cols, axis=3)                    # (B, Ho, Wo, kh*kw, C)
    return patches.reshape(b, ho, wo, kh * kw * c), ho, wo


def conv2d_relu_nhwc(x, w2d, b2d, kh, kw, stride):
    """VALID conv + ReLU on NHWC input via im2col + Pallas matmul. Output NHWC."""
    b = x.shape[0]
    patches, ho, wo = im2col_nhwc(x, kh, kw, stride)
    k = patches.shape[-1]
    m = b * ho * wo
    m_pad = ((m + 7) // 8) * 8                           # sublane alignment
    pat2d = patches.reshape(m, k).astype(jnp.bfloat16)
    if m_pad != m:
        pat2d = jnp.pad(pat2d, ((0, m_pad - m), (0, 0)))
    y = matmul_bias_relu(pat2d, w2d, b2d)                # (m_pad, oc) f32
    return y[:m].reshape(b, ho, wo, w2d.shape[1])


# ----------------------------------------------------------------------------
# Full DQN forward (conv1/2/3 + ReLU, fc + LeakyReLU, head)
# ----------------------------------------------------------------------------
@jax.jit
def dqn_forward(x_nchw, kp):
    x = jnp.transpose(x_nchw, (0, 2, 3, 1))              # NCHW -> NHWC, once
    x = conv2d_relu_nhwc(x, kp["w_conv1"], kp["b_conv1"], 8, 8, 4)
    x = conv2d_relu_nhwc(x, kp["w_conv2"], kp["b_conv2"], 4, 4, 2)
    x = conv2d_relu_nhwc(x, kp["w_conv3"], kp["b_conv3"], 3, 3, 1)
    flat = x.reshape(x.shape[0], -1).astype(jnp.bfloat16)  # NHWC flatten; fc rows pre-permuted
    return dqn_head(flat, kp["w_fc"], kp["b_fc"], kp["w_head"], kp["b_head"])


# ----------------------------------------------------------------------------
# Params: canonical PyTorch-layout f32 + kernel-ready (permuted, bf16) versions
# ----------------------------------------------------------------------------
def init_params(key, channels, num_actions):
    ks = jax.random.split(key, 10)

    def rnd(k, shape, fan_in):
        return (jax.random.normal(k, shape, jnp.float32) /
                np.sqrt(fan_in)).astype(jnp.float32)

    p = {}
    p["w_conv1"] = rnd(ks[0], (32, channels, 8, 8), channels * 64)
    p["b_conv1"] = rnd(ks[1], (32,), channels * 64)
    p["w_conv2"] = rnd(ks[2], (64, 32, 4, 4), 32 * 16)
    p["b_conv2"] = rnd(ks[3], (64,), 32 * 16)
    p["w_conv3"] = rnd(ks[4], (64, 64, 3, 3), 64 * 9)
    p["b_conv3"] = rnd(ks[5], (64,), 64 * 9)
    p["w_fc"] = rnd(ks[6], (3136, 512), 3136)
    p["b_fc"] = rnd(ks[7], (512,), 3136)
    p["w_head"] = rnd(ks[8], (512, num_actions), 512)
    p["b_head"] = rnd(ks[9], (num_actions,), 512)
    return p


def prepare_kernel_params(p):
    """One-time host-side layout prep: NHWC matmul weights, bf16 weights, f32 biases."""
    kp = {}

    def conv_w(w):  # OIHW -> (kh*kw*I, O), matching NHWC im2col (i, j, c) order
        o, i, kh, kw = w.shape
        return w.transpose(2, 3, 1, 0).reshape(kh * kw * i, o).astype(jnp.bfloat16)

    kp["w_conv1"] = conv_w(p["w_conv1"]); kp["b_conv1"] = p["b_conv1"].reshape(1, -1)
    kp["w_conv2"] = conv_w(p["w_conv2"]); kp["b_conv2"] = p["b_conv2"].reshape(1, -1)
    kp["w_conv3"] = conv_w(p["w_conv3"]); kp["b_conv3"] = p["b_conv3"].reshape(1, -1)
    # fc rows are in PyTorch NCHW-flatten order (c,h,w); permute once to NHWC (h,w,c)
    kp["w_fc"] = (p["w_fc"].reshape(64, 7, 7, 512)
                  .transpose(1, 2, 0, 3).reshape(3136, 512).astype(jnp.bfloat16))
    kp["b_fc"] = p["b_fc"].reshape(1, -1)
    kp["w_head"] = p["w_head"].astype(jnp.bfloat16)
    kp["b_head"] = p["b_head"].reshape(1, -1)
    return kp


# ----------------------------------------------------------------------------
# Pure-JAX reference (PyTorch NCHW semantics) for the self-check
# ----------------------------------------------------------------------------
def reference_forward(x, p):
    def conv(x, w, b, s):
        y = jax.lax.conv_general_dilated(
            x, w, (s, s), "VALID", dimension_numbers=("NCHW", "OIHW", "NCHW"))
        return jax.nn.relu(y + b[None, :, None, None])

    x = conv(x, p["w_conv1"], p["b_conv1"], 4)
    x = conv(x, p["w_conv2"], p["b_conv2"], 2)
    x = conv(x, p["w_conv3"], p["b_conv3"], 1)
    flat = x.reshape(x.shape[0], -1)
    h = flat @ p["w_fc"] + p["b_fc"]
    h = jnp.where(h > 0, h, 0.01 * h)                     # LeakyReLU(0.01)
    return h @ p["w_head"] + p["b_head"]


if __name__ == "__main__":
    batch, channels, num_actions = 2, 4, 4
    key = jax.random.PRNGKey(0)
    k_x, k_p = jax.random.split(key)

    # 84x84 spatial is required: fc expects 3136 = 64*7*7 from the conv stack.
    x = jax.random.uniform(k_x, (batch, channels, 84, 84), jnp.float32)
    params = init_params(k_p, channels, num_actions)
    kparams = prepare_kernel_params(params)

    out = jax.block_until_ready(dqn_forward(x, kparams))

    # Reference uses the same bf16-rounded weights (so only activation rounding differs).
    qparams = {k: (v.astype(jnp.bfloat16).astype(jnp.float32)
                   if k.startswith("w_") else v) for k, v in params.items()}
    ref = reference_forward(x, qparams)

    assert out.shape == (batch, num_actions)
    np.testing.assert_allclose(np.asarray(out), np.asarray(ref), atol=5e-2, rtol=5e-2)
    print("KERNEL_OK")
</pallas_src>

<mosaic_0001>
module attributes {stable_mosaic.version = 11 : i64} {
  func.func @_matmul_bias_relu_kernel(%arg0: memref<800x256xbf16, #tpu.memory_space<vmem>>, %arg1: memref<256x32xbf16, #tpu.memory_space<vmem>>, %arg2: memref<1x32xf32, #tpu.memory_space<vmem>>, %arg3: memref<800x32xf32, #tpu.memory_space<vmem>>) attributes {dimension_semantics = [], scalar_prefetch = 0 : i64, scratch_operands = 0 : i64, tpu.core_type = #tpu.core_type<tc>} {
    %c0 = arith.constant 0 : index
    %c0_0 = arith.constant 0 : index
    %0 = vector.load %arg0[%c0, %c0_0] : memref<800x256xbf16, #tpu.memory_space<vmem>>, vector<800x256xbf16>
    %c0_1 = arith.constant 0 : index
    %c0_2 = arith.constant 0 : index
    %1 = vector.load %arg1[%c0_1, %c0_2] : memref<256x32xbf16, #tpu.memory_space<vmem>>, vector<256x32xbf16>
    %cst = arith.constant dense<0.000000e+00> : vector<800x32xf32>
    %2 = tpu.matmul %0, %1, %cst {dimension_numbers = #tpu.dot_dimension_numbers<[1], [0], [0], [1], [0, 0, 1, 1], [], []>} : vector<800x256xbf16>, vector<256x32xbf16>, vector<800x32xf32> -> vector<800x32xf32>
    %c0_3 = arith.constant 0 : index
    %c0_4 = arith.constant 0 : index
    %3 = vector.load %arg2[%c0_3, %c0_4] : memref<1x32xf32, #tpu.memory_space<vmem>>, vector<1x32xf32>
    %4 = vector.broadcast %3 : vector<1x32xf32> to vector<800x32xf32>
    %5 = arith.addf %2, %4 : vector<800x32xf32>
    %cst_5 = arith.constant 0.000000e+00 : f32
    %6 = vector.broadcast %cst_5 : f32 to vector<800x32xf32>
    %7 = arith.maximumf %5, %6 : vector<800x32xf32>
    %c0_6 = arith.constant 0 : index
    %c0_7 = arith.constant 0 : index
    %8 = vector.load %arg3[%c0_6, %c0_7] : memref<800x32xf32, #tpu.memory_space<vmem>>, vector<800x32xf32>
    tpu.vector_store %arg3[%c0_6, %c0_7], %7 {strides = array<i32>} : memref<800x32xf32, #tpu.memory_space<vmem>>, vector<800x32xf32>,
    return
  }
}

module attributes {stable_mosaic.version = 11 : i64} {
  func.func @_matmul_bias_relu_kernel(%arg0: memref<168x512xbf16, #tpu.memory_space<vmem>>, %arg1: memref<512x64xbf16, #tpu.memory_space<vmem>>, %arg2: memref<1x64xf32, #tpu.memory_space<vmem>>, %arg3: memref<168x64xf32, #tpu.memory_space<vmem>>) attributes {dimension_semantics = [], scalar_prefetch = 0 : i64, scratch_operands = 0 : i64, tpu.core_type = #tpu.core_type<tc>} {
    %c0 = arith.constant 0 : index
    %c0_0 = arith.constant 0 : index
    %0 = vector.load %arg0[%c0, %c0_0] : memref<168x512xbf16, #tpu.memory_space<vmem>>, vector<168x512xbf16>
    %c0_1 = arith.constant 0 : index
    %c0_2 = arith.constant 0 : index
    %1 = vector.load %arg1[%c0_1, %c0_2] : memref<512x64xbf16, #tpu.memory_space<vmem>>, vector<512x64xbf16>
    %cst = arith.constant dense<0.000000e+00> : vector<168x64xf32>
    %2 = tpu.matmul %0, %1, %cst {dimension_numbers = #tpu.dot_dimension_numbers<[1], [0], [0], [1], [0, 0, 1, 1], [], []>} : vector<168x512xbf16>, vector<512x64xbf16>, vector<168x64xf32> -> vector<168x64xf32>
    %c0_3 = arith.constant 0 : index
    %c0_4 = arith.constant 0 : index
    %3 = vector.load %arg2[%c0_3, %c0_4] : memref<1x64xf32, #tpu.memory_space<vmem>>, vector<1x64xf32>
    %4 = vector.broadcast %3 : vector<1x64xf32> to vector<168x64xf32>
    %5 = arith.addf %2, %4 : vector<168x64xf32>
    %cst_5 = arith.constant 0.000000e+00 : f32
    %6 = vector.broadcast %cst_5 : f32 to vector<168x64xf32>
    %7 = arith.maximumf %5, %6 : vector<168x64xf32>
    %c0_6 = arith.constant 0 : index
    %c0_7 = arith.constant 0 : index
    %8 = vector.load %arg3[%c0_6, %c0_7] : memref<168x64xf32, #tpu.memory_space<vmem>>, vector<168x64xf32>
    tpu.vector_store %arg3[%c0_6, %c0_7], %7 {strides = array<i32>} : memref<168x64xf32, #tpu.memory_space<vmem>>, vector<168x64xf32>,
    return
  }
}

module attributes {stable_mosaic.version = 11 : i64} {
  func.func @_matmul_bias_relu_kernel(%arg0: memref<104x576xbf16, #tpu.memory_space<vmem>>, %arg1: memref<576x64xbf16, #tpu.memory_space<vmem>>, %arg2: memref<1x64xf32, #tpu.memory_space<vmem>>, %arg3: memref<104x64xf32, #tpu.memory_space<vmem>>) attributes {dimension_semantics = [], scalar_prefetch = 0 : i64, scratch_operands = 0 : i64, tpu.core_type = #tpu.core_type<tc>} {
    %c0 = arith.constant 0 : index
    %c0_0 = arith.constant 0 : index
    %0 = vector.load %arg0[%c0, %c0_0] : memref<104x576xbf16, #tpu.memory_space<vmem>>, vector<104x576xbf16>
    %c0_1 = arith.constant 0 : index
    %c0_2 = arith.constant 0 : index
    %1 = vector.load %arg1[%c0_1, %c0_2] : memref<576x64xbf16, #tpu.memory_space<vmem>>, vector<576x64xbf16>
    %cst = arith.constant dense<0.000000e+00> : vector<104x64xf32>
    %2 = tpu.matmul %0, %1, %cst {dimension_numbers = #tpu.dot_dimension_numbers<[1], [0], [0], [1], [0, 0, 1, 1], [], []>} : vector<104x576xbf16>, vector<576x64xbf16>, vector<104x64xf32> -> vector<104x64xf32>
    %c0_3 = arith.constant 0 : index
    %c0_4 = arith.constant 0 : index
    %3 = vector.load %arg2[%c0_3, %c0_4] : memref<1x64xf32, #tpu.memory_space<vmem>>, vector<1x64xf32>
    %4 = vector.broadcast %3 : vector<1x64xf32> to vector<104x64xf32>
    %5 = arith.addf %2, %4 : vector<104x64xf32>
    %cst_5 = arith.constant 0.000000e+00 : f32
    %6 = vector.broadcast %cst_5 : f32 to vector<104x64xf32>
    %7 = arith.maximumf %5, %6 : vector<104x64xf32>
    %c0_6 = arith.constant 0 : index
    %c0_7 = arith.constant 0 : index
    %8 = vector.load %arg3[%c0_6, %c0_7] : memref<104x64xf32, #tpu.memory_space<vmem>>, vector<104x64xf32>
    tpu.vector_store %arg3[%c0_6, %c0_7], %7 {strides = array<i32>} : memref<104x64xf32, #tpu.memory_space<vmem>>, vector<104x64xf32>,
    return
  }
}

module attributes {stable_mosaic.version = 11 : i64} {
  func.func @_head_kernel(%arg0: i32, %arg1: memref<2x3136xbf16, #tpu.memory_space<vmem>>, %arg2: memref<3136x256xbf16, #tpu.memory_space<vmem>>, %arg3: memref<1x256xf32, #tpu.memory_space<vmem>>, %arg4: memref<256x4xbf16, #tpu.memory_space<vmem>>, %arg5: memref<1x4xf32, #tpu.memory_space<vmem>>, %arg6: memref<2x4xf32, #tpu.memory_space<vmem>>) attributes {dimension_semantics = [#tpu.dimension_semantics<arbitrary>], iteration_bounds = array<i64: 2>, scalar_prefetch = 0 : i64, scratch_operands = 0 : i64, tpu.core_type = #tpu.core_type<tc>, window_params = [{pipeline_mode = #tpu.pipeline_mode<synchronous>, transform_indices = @transform_0, window_bounds = array<i64: 2, 3136>}, {transform_indices = @transform_1, window_bounds = array<i64: 3136, 256>}, {transform_indices = @transform_2, window_bounds = array<i64: 1, 256>}, {transform_indices = @transform_3, window_bounds = array<i64: 256, 4>}, {pipeline_mode = #tpu.pipeline_mode<synchronous>, transform_indices = @transform_4, window_bounds = array<i64: 1, 4>}, {pipeline_mode = #tpu.pipeline_mode<synchronous>, transform_indices = @transform_5, window_bounds = array<i64: 2, 4>}]} {
    %c0 = arith.constant 0 : index
    %c0_0 = arith.constant 0 : index
    %0 = vector.load %arg1[%c0, %c0_0] : memref<2x3136xbf16, #tpu.memory_space<vmem>>, vector<2x3136xbf16>
    %c0_1 = arith.constant 0 : index
    %c0_2 = arith.constant 0 : index
    %1 = vector.load %arg2[%c0_1, %c0_2] : memref<3136x256xbf16, #tpu.memory_space<vmem>>, vector<3136x256xbf16>
    %cst = arith.constant dense<0.000000e+00> : vector<2x256xf32>
    %2 = tpu.matmul %0, %1, %cst {dimension_numbers = #tpu.dot_dimension_numbers<[1], [0], [0], [1], [0, 0, 1, 1], [], []>} : vector<2x3136xbf16>, vector<3136x256xbf16>, vector<2x256xf32> -> vector<2x256xf32>
    %c0_3 = arith.constant 0 : index
    %c0_4 = arith.constant 0 : index
    %3 = vector.load %arg3[%c0_3, %c0_4] : memref<1x256xf32, #tpu.memory_space<vmem>>, vector<1x256xf32>
    %4 = vector.broadcast %3 : vector<1x256xf32> to vector<2x256xf32>
    %5 = arith.addf %2, %4 : vector<2x256xf32>
    %cst_5 = arith.constant 0.000000e+00 : f32
    %6 = vector.broadcast %cst_5 : f32 to vector<2x256xf32>
    %7 = arith.cmpf ogt, %5, %6 : vector<2x256xf32>
    %cst_6 = arith.constant 0.00999999977 : f32
    %8 = vector.broadcast %cst_6 : f32 to vector<2x256xf32>
    %9 = arith.mulf %8, %5 : vector<2x256xf32>
    %10 = arith.select %7, %5, %9 : vector<2x256xi1>, vector<2x256xf32>
    %c0_7 = arith.constant 0 : index
    %c0_8 = arith.constant 0 : index
    %11 = vector.load %arg4[%c0_7, %c0_8] : memref<256x4xbf16, #tpu.memory_space<vmem>>, vector<256x4xbf16>
    %12 = arith.extf %11 : vector<256x4xbf16> to vector<256x4xf32>
    %cst_9 = arith.constant dense<0.000000e+00> : vector<2x4xf32>
    %13 = tpu.matmul %10, %12, %cst_9 {dimension_numbers = #tpu.dot_dimension_numbers<[1], [0], [0], [1], [0, 0, 1, 1], [], []>} : vector<2x256xf32>, vector<256x4xf32>, vector<2x4xf32> -> vector<2x4xf32>
    %c0_i32 = arith.constant 0 : i32
    %14 = arith.cmpi eq, %arg0, %c0_i32 : i32
    %15 = arith.extui %14 : i1 to i32
    %c0_i32_10 = arith.constant 0 : i32
    %16 = arith.cmpi ne, %15, %c0_i32_10 : i32
    scf.if %16 {
      %c0_13 = arith.constant 0 : index
      %c0_14 = arith.constant 0 : index
      %20 = vector.load %arg5[%c0_13, %c0_14] : memref<1x4xf32, #tpu.memory_space<vmem>>, vector<1x4xf32>
      %21 = vector.broadcast %20 : vector<1x4xf32> to vector<2x4xf32>
      %22 = arith.addf %13, %21 : vector<2x4xf32>
      %c0_15 = arith.constant 0 : index
      %c0_16 = arith.constant 0 : index
      %23 = vector.load %arg6[%c0_15, %c0_16] : memref<2x4xf32, #tpu.memory_space<vmem>>, vector<2x4xf32>
      tpu.vector_store %arg6[%c0_15, %c0_16], %22 {strides = array<i32>} : memref<2x4xf32, #tpu.memory_space<vmem>>, vector<2x4xf32>,
    } else {
    }
    %c0_i32_11 = arith.constant 0 : i32
    %17 = arith.cmpi ne, %arg0, %c0_i32_11 : i32
    %18 = arith.extui %17 : i1 to i32
    %c0_i32_12 = arith.constant 0 : i32
    %19 = arith.cmpi ne, %18, %c0_i32_12 : i32
    scf.if %19 {
      %c0_13 = arith.constant 0 : index
      %c0_14 = arith.constant 0 : index
      %20 = vector.load %arg6[%c0_13, %c0_14] : memref<2x4xf32, #tpu.memory_space<vmem>>, vector<2x4xf32>
      %21 = arith.addf %20, %13 : vector<2x4xf32>
      %c0_15 = arith.constant 0 : index
      %c0_16 = arith.constant 0 : index
      %22 = vector.load %arg6[%c0_15, %c0_16] : memref<2x4xf32, #tpu.memory_space<vmem>>, vector<2x4xf32>
      tpu.vector_store %arg6[%c0_15, %c0_16], %21 {strides = array<i32>} : memref<2x4xf32, #tpu.memory_space<vmem>>, vector<2x4xf32>,
    } else {
    }
    return
  }
  func.func @transform_0(%arg0: i32) -> (i32, i32) {
    %c0_i32 = arith.constant 0 : i32
    %c0_i32_0 = arith.constant 0 : i32
    %c0_i32_1 = arith.constant 0 : i32
    return %c0_i32, %c0_i32_0 : i32, i32
  }
  func.func @transform_1(%arg0: i32) -> (i32, i32) {
    %c0_i32 = arith.constant 0 : i32
    %c0_i32_0 = arith.constant 0 : i32
    return %c0_i32, %arg0 : i32, i32
  }
  func.func @transform_2(%arg0: i32) -> (i32, i32) {
    %c0_i32 = arith.constant 0 : i32
    %c0_i32_0 = arith.constant 0 : i32
    return %c0_i32, %arg0 : i32, i32
  }
  func.func @transform_3(%arg0: i32) -> (i32, i32) {
    %c0_i32 = arith.constant 0 : i32
    %c0_i32_0 = arith.constant 0 : i32
    return %arg0, %c0_i32 : i32, i32
  }
  func.func @transform_4(%arg0: i32) -> (i32, i32) {
    %c0_i32 = arith.constant 0 : i32
    %c0_i32_0 = arith.constant 0 : i32
    %c0_i32_1 = arith.constant 0 : i32
    return %c0_i32, %c0_i32_0 : i32, i32
  }
  func.func @transform_5(%arg0: i32) -> (i32, i32) {
    %c0_i32 = arith.constant 0 : i32
    %c0_i32_0 = arith.constant 0 : i32
    %c0_i32_1 = arith.constant 0 : i32
    return %c0_i32, %c0_i32_0 : i32, i32
  }
}

</mosaic_0001>

<llo_original>
// kernel: dqn_forward.4
$region0: #{dqn_forward.4}
  #allocation0 [shape = 'u32[]', space=smem, size = 0x4, offset = 0x4, fixed_abs, tag = 'smem constant byte address 0x4 - core index']
  #allocation1 [shape = 'u32[144,128]{1,0:T(1,128)}', space=vmem, size = 0x12000, scoped, tag = 'internal scratch']
  %s0 = inlined_call_operand.vmem [shape: bf16[800,256], index: 0, kind: input, shape index: {}]
  %s1 = inlined_call_operand.vmem [shape: bf16[256,32], index: 1, kind: input, shape index: {}]
  %s2 = inlined_call_operand.vmem [shape: f32[1,32], index: 2, kind: input, shape index: {}]
  %s3 = inlined_call_operand.vmem [shape: f32[800,32], index: 3, kind: output, shape index: {}]
  %s4 = sld [smem:[#allocation0]]
  $region22: #{dqn_forward.4} parent=0
    _
  %s6 = ssub.s32 1, %s4
  %s7 = scalar_select 0, %s6, %s4
  // Predicated region
  $region2: #{dqn_forward.4} parent=0 // pred_check
    _
  $region3: #{dqn_forward.4} parent=0 // pred_check_branch
    %9 = sbr.rel (0) target = $region5
  $region4: #{dqn_forward.4} parent=0 // pred_region
    _
  $region5: #{dqn_forward.4} parent=0 // pred_fallthru
    _
  // Predicated region
  $region6: #{dqn_forward.4} parent=0 // pred_check
    _
  $region7: #{dqn_forward.4} parent=0 // pred_check_branch
    %11 = sbr.rel (0) target = $region9
  $region8: #{dqn_forward.4} parent=0 // pred_region
    _
  $region9: #{dqn_forward.4} parent=0 // pred_fallthru
    _
  // Predicated region
  $region10: #{dqn_forward.4} parent=0 // pred_check
    _
  $region11: #{dqn_forward.4} parent=0 // pred_check_branch
    %13 = sbr.rel (0) target = $region13
  $region12: #{dqn_forward.4} parent=0 // pred_region
    _
  $region13: #{dqn_forward.4} parent=0 // pred_fallthru
    _
  %v15 = vld [vmem:[%s0] sm:$0xff]
  %v16 = vld [vmem:[%s0 + $0x8] sm:$0xff]
  %v17 = vld [vmem:[%s0 + $0x10] sm:$0xff]
  %v18 = vld [vmem:[%s0 + $0x18] sm:$0xff]
  %v19 = vld [vmem:[%s0 + $0x20] sm:$0xff]
  %v20 = vld [vmem:[%s0 + $0x28] sm:$0xff]
  %v21 = vld [vmem:[%s0 + $0x30] sm:$0xff]
  %v22 = vld [vmem:[%s0 + $0x38] sm:$0xff]
  %v23 = vld [vmem:[%s0 + $0x40] sm:$0xff]
  %v24 = vld [vmem:[%s0 + $0x48] sm:$0xff]
  %v25 = vld [vmem:[%s0 + $0x50] sm:$0xff]
  %v26 = vld [vmem:[%s0 + $0x58] sm:$0xff]
  %v27 = vld [vmem:[%s0 + $0x60] sm:$0xff]
  %v28 = vld [vmem:[%s0 + $0x68] sm:$0xff]
  %v29 = vld [vmem:[%s0 + $0x70] sm:$0xff]
  %v30 = vld [vmem:[%s0 + $0x78] sm:$0xff]
  %v31 = vld [vmem:[%s0 + $0x80] sm:$0xff]
  %v32 = vld [vmem:[%s0 + $0x88] sm:$0xff]
  %v33 = vld [vmem:[%s0 + $0x90] sm:$0xff]
  %v34 = vld [vmem:[%s0 + $0x98] sm:$0xff]
  %v35 = vld [vmem:[%s0 + $0xa0] sm:$0xff]
  %v36 = vld [vmem:[%s0 + $0xa8] sm:$0xff]
  %v37 = vld [vmem:[%s0 + $0xb0] sm:$0xff]
  %v38 = vld [vmem:[%s0 + $0xb8] sm:$0xff]
  %v39 = vld [vmem:[%s0 + $0xc0] sm:$0xff]
  %v40 = vld [vmem:[%s0 + $0xc8] sm:$0xff]
  %v41 = vld [vmem:[%s0 + $0xd0] sm:$0xff]
  %v42 = vld [vmem:[%s0 + $0xd8] sm:$0xff]
  %v43 = vld [vmem:[%s0 + $0xe0] sm:$0xff]
  %v44 = vld [vmem:[%s0 + $0xe8] sm:$0xff]
  %v45 = vld [vmem:[%s0 + $0xf0] sm:$0xff]
  %v46 = vld [vmem:[%s0 + $0xf8] sm:$0xff]
  %v47 = vld [vmem:[%s0 + $0x100] sm:$0xff]
  %v48 = vld [vmem:[%s0 + $0x108] sm:$0xff]
  %v49 = vld [vmem:[%s0 + $0x110] sm:$0xff]
  %v50 = vld [vmem:[%s0 + $0x118] sm:$0xff]
  %v51 = vld [vmem:[%s0 + $0x120] sm:$0xff]
  %v52 = vld [vmem:[%s0 + $0x128] sm:$0xff]
  %v53 = vld [vmem:[%s0 + $0x130] sm:$0xff]
  %v54 = vld [vmem:[%s0 + $0x138] sm:$0xff]
  %v55 = vld [vmem:[%s0 + $0x140] sm:$0xff]
  %v56 = vld [vmem:[%s0 + $0x148] sm:$0xff]
  %v57 = vld [vmem:[%s0 + $0x150] sm:$0xff]
  %v58 = vld [vmem:[%s0 + $0x158] sm:$0xff]
  %v59 = vld [vmem:[%s0 + $0x160] sm:$0xff]
  %v60 = vld [vmem:[%s0 + $0x168] sm:$0xff]
  %v61 = vld [vmem:[%s0 + $0x170] sm:$0xff]
  %v62 = vld [vmem:[%s0 + $0x178] sm:$0xff]
  %v63 = vld [vmem:[%s0 + $0x180] sm:$0xff]
  %v64 = vld [vmem:[%s0 + $0x188] sm:$0xff]
  %v65 = vld [vmem:[%s0 + $0x190] sm:$0xff]
  %v66 = vld [vmem:[%s0 + $0x198] sm:$0xff]
  %v67 = vld [vmem:[%s0 + $0x1a0] sm:$0xff]
  %v68 = vld [vmem:[%s0 + $0x1a8] sm:$0xff]
  %v69 = vld [vmem:[%s0 + $0x1b0] sm:$0xff]
  %v70 = vld [vmem:[%s0 + $0x1b8] sm:$0xff]
  %v71 = vld [vmem:[%s0 + $0x1c0] sm:$0xff]
  %v72 = vld [vmem:[%s0 + $0x1c8] sm:$0xff]
  %v73 = vld [vmem:[%s0 + $0x1d0] sm:$0xff]
  %v74 = vld [vmem:[%s0 + $0x1d8] sm:$0xff]
  %v75 = vld [vmem:[%s0 + $0x1e0] sm:$0xff]
  %v76 = vld [vmem:[%s0 + $0x1e8] sm:$0xff]
  %v77 = vld [vmem:[%s0 + $0x1f0] sm:$0xff]
  %v78 = vld [vmem:[%s0 + $0x1f8] sm:$0xff]
  %v79 = vld [vmem:[%s0 + $0x200] sm:$0xff]
  %v80 = vld [vmem:[%s0 + $0x208] sm:$0xff]
  %v81 = vld [vmem:[%s0 + $0x210] sm:$0xff]
  %v82 = vld [vmem:[%s0 + $0x218] sm:$0xff]
  %v83 = vld [vmem:[%s0 + $0x220] sm:$0xff]
  %v84 = vld [vmem:[%s0 + $0x228] sm:$0xff]
  %v85 = vld [vmem:[%s0 + $0x230] sm:$0xff]
  %v86 = vld [vmem:[%s0 + $0x238] sm:$0xff]
  %v87 = vld [vmem:[%s0 + $0x240] sm:$0xff]
  %v88 = vld [vmem:[%s0 + $0x248] sm:$0xff]
  %v89 = vld [vmem:[%s0 + $0x250] sm:$0xff]
  %v90 = vld [vmem:[%s0 + $0x258] sm:$0xff]
  %v91 = vld [vmem:[%s0 + $0x260] sm:$0xff]
  %v92 = vld [vmem:[%s0 + $0x268] sm:$0xff]
  %v93 = vld [vmem:[%s0 + $0x270] sm:$0xff]
  %v94 = vld [vmem:[%s0 + $0x278] sm:$0xff]
  %v95 = vld [vmem:[%s0 + $0x280] sm:$0xff]
  %v96 = vld [vmem:[%s0 + $0x288] sm:$0xff]
  %v97 = vld [vmem:[%s0 + $0x290] sm:$0xff]
  %v98 = vld [vmem:[%s0 + $0x298] sm:$0xff]
  %v99 = vld [vmem:[%s0 + $0x2a0] sm:$0xff]
  %v100 = vld [vmem:[%s0 + $0x2a8] sm:$0xff]
  %v101 = vld [vmem:[%s0 + $0x2b0] sm:$0xff]
  %v102 = vld [vmem:[%s0 + $0x2b8] sm:$0xff]
  %v103 = vld [vmem:[%s0 + $0x2c0] sm:$0xff]
  %v104 = vld [vmem:[%s0 + $0x2c8] sm:$0xff]
  %v105 = vld [vmem:[%s0 + $0x2d0] sm:$0xff]
  %v106 = vld [vmem:[%s0 + $0x2d8] sm:$0xff]
  %v107 = vld [vmem:[%s0 + $0x2e0] sm:$0xff]
  %v108 = vld [vmem:[%s0 + $0x2e8] sm:$0xff]
  %v109 = vld [vmem:[%s0 + $0x2f0] sm:$0xff]
  %v110 = vld [vmem:[%s0 + $0x2f8] sm:$0xff]
  %v111 = vld [vmem:[%s0 + $0x300] sm:$0xff]
  %v112 = vld [vmem:[%s0 + $0x308] sm:$0xff]
  %v113 = vld [vmem:[%s0 + $0x310] sm:$0xff]
  %v114 = vld [vmem:[%s0 + $0x318] sm:$0xff]
  %v115 = vld [vmem:[%s1] sm:$0xf]
  %v116 = vld [vmem:[%s1 + $0x4] sm:$0xf]
  %v117 = vld [vmem:[%s1 + $0x8] sm:$0xf]
  %v118 = vld [vmem:[%s1 + $0xc] sm:$0xf]
  %v119 = vld [vmem:[%s1 + $0x10] sm:$0xf]
  %v120 = vld [vmem:[%s1 + $0x14] sm:$0xf]
  %v121 = vld [vmem:[%s1 + $0x18] sm:$0xf]
  %v122 = vld [vmem:[%s1 + $0x1c] sm:$0xf]
  %v123 = vld [vmem:[%s1 + $0x20] sm:$0xf]
  %v124 = vld [vmem:[%s1 + $0x24] sm:$0xf]
  %v125 = vld [vmem:[%s1 + $0x28] sm:$0xf]
  %v126 = vld [vmem:[%s1 + $0x2c] sm:$0xf]
  %v127 = vld [vmem:[%s1 + $0x30] sm:$0xf]
  %v128 = vld [vmem:[%s1 + $0x34] sm:$0xf]
  %v129 = vld [vmem:[%s1 + $0x38] sm:$0xf]
  %v130 = vld [vmem:[%s1 + $0x3c] sm:$0xf]
  %v131 = vld [vmem:[%s1 + $0x40] sm:$0xf]
  %v132 = vld [vmem:[%s1 + $0x44] sm:$0xf]
  %v133 = vld [vmem:[%s1 + $0x48] sm:$0xf]
  %v134 = vld [vmem:[%s1 + $0x4c] sm:$0xf]
  %v135 = vld [vmem:[%s1 + $0x50] sm:$0xf]
  %v136 = vld [vmem:[%s1 + $0x54] sm:$0xf]
  %v137 = vld [vmem:[%s1 + $0x58] sm:$0xf]
  %v138 = vld [vmem:[%s1 + $0x5c] sm:$0xf]
  %v139 = vld [vmem:[%s1 + $0x60] sm:$0xf]
  %v140 = vld [vmem:[%s1 + $0x64] sm:$0xf]
  %v141 = vld [vmem:[%s1 + $0x68] sm:$0xf]
  %v142 = vld [vmem:[%s1 + $0x6c] sm:$0xf]
  %v143 = vld [vmem:[%s1 + $0x70] sm:$0xf]
  %v144 = vld [vmem:[%s1 + $0x74] sm:$0xf]
  %v145 = vld [vmem:[%s1 + $0x78] sm:$0xf]
  %v146 = vld [vmem:[%s1 + $0x7c] sm:$0xf]
  %v147 = vld [vmem:[%s2] sm:$0x1]
  %v149 = vlaneseq
  %v150 = vshrl.u32 %v149, 7
  %v151 = vsub.s32 0, %v150
  %v152 = vrot.slane %v147, %v151
  %v254 = vunpack.c.l.b16 %v15
  %v255 = vunpack.c.h.b16 %v15
  %v256 = vunpack.c.l.b16 %v16
  %v257 = vunpack.c.h.b16 %v16
  %v258 = vunpack.c.l.b16 %v17
  %v259 = vunpack.c.h.b16 %v17
  %v260 = vunpack.c.l.b16 %v18
  %v261 = vunpack.c.h.b16 %v18
  %v262 = vunpack.c.l.b16 %v19
  %v263 = vunpack.c.h.b16 %v19
  %v264 = vunpack.c.l.b16 %v20
  %v265 = vunpack.c.h.b16 %v20
  %v266 = vunpack.c.l.b16 %v21
  %v267 = vunpack.c.h.b16 %v21
  %v268 = vunpack.c.l.b16 %v22
  %v269 = vunpack.c.h.b16 %v22
  %v270 = vunpack.c.l.b16 %v23
  %v271 = vunpack.c.h.b16 %v23
  %v272 = vunpack.c.l.b16 %v24
  %v273 = vunpack.c.h.b16 %v24
  %v274 = vunpack.c.l.b16 %v25
  %v275 = vunpack.c.h.b16 %v25
  %v276 = vunpack.c.l.b16 %v26
  %v277 = vunpack.c.h.b16 %v26
  %v278 = vunpack.c.l.b16 %v27
  %v279 = vunpack.c.h.b16 %v27
  %v280 = vunpack.c.l.b16 %v28
  %v281 = vunpack.c.h.b16 %v28
  %v282 = vunpack.c.l.b16 %v29
  %v283 = vunpack.c.h.b16 %v29
  %v284 = vunpack.c.l.b16 %v30
  %v285 = vunpack.c.h.b16 %v30
  %v286 = vunpack.c.l.b16 %v31
  %v287 = vunpack.c.h.b16 %v31
  %v288 = vunpack.c.l.b16 %v32
  %v289 = vunpack.c.h.b16 %v32
  %v290 = vunpack.c.l.b16 %v33
  %v291 = vunpack.c.h.b16 %v33
  %v292 = vunpack.c.l.b16 %v34
  %v293 = vunpack.c.h.b16 %v34
  %v294 = vunpack.c.l.b16 %v35
  %v295 = vunpack.c.h.b16 %v35
  %v296 = vunpack.c.l.b16 %v36
  %v297 = vunpack.c.h.b16 %v36
  %v298 = vunpack.c.l.b16 %v37
  %v299 = vunpack.c.h.b16 %v37
  %v300 = vunpack.c.l.b16 %v38
  %v301 = vunpack.c.h.b16 %v38
  %v302 = vunpack.c.l.b16 %v39
  %v303 = vunpack.c.h.b16 %v39
  %v304 = vunpack.c.l.b16 %v40
  %v305 = vunpack.c.h.b16 %v40
  %v306 = vunpack.c.l.b16 %v41
  %v307 = vunpack.c.h.b16 %v41
  %v308 = vunpack.c.l.b16 %v42
  %v309 = vunpack.c.h.b16 %v42
  %v310 = vunpack.c.l.b16 %v43
  %v311 = vunpack.c.h.b16 %v43
  %v312 = vunpack.c.l.b16 %v44
  %v313 = vunpack.c.h.b16 %v44
  %v314 = vunpack.c.l.b16 %v45
  %v315 = vunpack.c.h.b16 %v45
  %v316 = vunpack.c.l.b16 %v46
  %v317 = vunpack.c.h.b16 %v46
  %v318 = vunpack.c.l.b16 %v47
  %v319 = vunpack.c.h.b16 %v47
  %v320 = vunpack.c.l.b16 %v48
  %v321 = vunpack.c.h.b16 %v48
  %v322 = vunpack.c.l.b16 %v49
  %v323 = vunpack.c.h.b16 %v49
  %v324 = vunpack.c.l.b16 %v50
  %v325 = vunpack.c.h.b16 %v50
  %v326 = vunpack.c.l.b16 %v51
  %v327 = vunpack.c.h.b16 %v51
  %v328 = vunpack.c.l.b16 %v52
  %v329 = vunpack.c.h.b16 %v52
  %v330 = vunpack.c.l.b16 %v53
  %v331 = vunpack.c.h.b16 %v53
  %v332 = vunpack.c.l.b16 %v54
  %v333 = vunpack.c.h.b16 %v54
  %v334 = vunpack.c.l.b16 %v55
  %v335 = vunpack.c.h.b16 %v55
  %v336 = vunpack.c.l.b16 %v56
  %v337 = vunpack.c.h.b16 %v56
  %v338 = vunpack.c.l.b16 %v57
  %v339 = vunpack.c.h.b16 %v57
  %v340 = vunpack.c.l.b16 %v58
  %v341 = vunpack.c.h.b16 %v58
  %v342 = vunpack.c.l.b16 %v59
  %v343 = vunpack.c.h.b16 %v59
  %v344 = vunpack.c.l.b16 %v60
  %v345 = vunpack.c.h.b16 %v60
  %v346 = vunpack.c.l.b16 %v61
  %v347 = vunpack.c.h.b16 %v61
  %v348 = vunpack.c.l.b16 %v62
  %v349 = vunpack.c.h.b16 %v62
  %v350 = vunpack.c.l.b16 %v63
  %v351 = vunpack.c.h.b16 %v63
  %v352 = vunpack.c.l.b16 %v64
  %v353 = vunpack.c.h.b16 %v64
  %v354 = vunpack.c.l.b16 %v65
  %v355 = vunpack.c.h.b16 %v65
  %v356 = vunpack.c.l.b16 %v66
  %v357 = vunpack.c.h.b16 %v66
  %v358 = vunpack.c.l.b16 %v67
  %v359 = vunpack.c.h.b16 %v67
  %v360 = vunpack.c.l.b16 %v68
  %v361 = vunpack.c.h.b16 %v68
  %v362 = vunpack.c.l.b16 %v69
  %v363 = vunpack.c.h.b16 %v69
  %v364 = vunpack.c.l.b16 %v70
  %v365 = vunpack.c.h.b16 %v70
  %v366 = vunpack.c.l.b16 %v71
  %v367 = vunpack.c.h.b16 %v71
  %v368 = vunpack.c.l.b16 %v72
  %v369 = vunpack.c.h.b16 %v72
  %v370 = vunpack.c.l.b16 %v73
  %v371 = vunpack.c.h.b16 %v73
  %v372 = vunpack.c.l.b16 %v74
  %v373 = vunpack.c.h.b16 %v74
  %v374 = vunpack.c.l.b16 %v75
  %v375 = vunpack.c.h.b16 %v75
  %v376 = vunpack.c.l.b16 %v76
  %v377 = vunpack.c.h.b16 %v76
  %v378 = vunpack.c.l.b16 %v77
  %v379 = vunpack.c.h.b16 %v77
  %v380 = vunpack.c.l.b16 %v78
  %v381 = vunpack.c.h.b16 %v78
  %v382 = vunpack.c.l.b16 %v79
  %v383 = vunpack.c.h.b16 %v79
  %v384 = vunpack.c.l.b16 %v80
  %v385 = vunpack.c.h.b16 %v80
  %v386 = vunpack.c.l.b16 %v81
  %v387 = vunpack.c.h.b16 %v81
  %v388 = vunpack.c.l.b16 %v82
  %v389 = vunpack.c.h.b16 %v82
  %v390 = vunpack.c.l.b16 %v83
  %v391 = vunpack.c.h.b16 %v83
  %v392 = vunpack.c.l.b16 %v84
  %v393 = vunpack.c.h.b16 %v84
  %v394 = vunpack.c.l.b16 %v85
  %v395 = vunpack.c.h.b16 %v85
  %v396 = vunpack.c.l.b16 %v86
  %v397 = vunpack.c.h.b16 %v86
  %v398 = vunpack.c.l.b16 %v87
  %v399 = vunpack.c.h.b16 %v87
  %v400 = vunpack.c.l.b16 %v88
  %v401 = vunpack.c.h.b16 %v88
  %v402 = vunpack.c.l.b16 %v89
  %v403 = vunpack.c.h.b16 %v89
  %v404 = vunpack.c.l.b16 %v90
  %v405 = vunpack.c.h.b16 %v90
  %v406 = vunpack.c.l.b16 %v91
  %v407 = vunpack.c.h.b16 %v91
  %v408 = vunpack.c.l.b16 %v92
  %v409 = vunpack.c.h.b16 %v92
  %v410 = vunpack.c.l.b16 %v93
  %v411 = vunpack.c.h.b16 %v93
  %v412 = vunpack.c.l.b16 %v94
  %v413 = vunpack.c.h.b16 %v94
  %v414 = vunpack.c.l.b16 %v95
  %v415 = vunpack.c.h.b16 %v95
  %v416 = vunpack.c.l.b16 %v96
  %v417 = vunpack.c.h.b16 %v96
  %v418 = vunpack.c.l.b16 %v97
  %v419 = vunpack.c.h.b16 %v97
  %v420 = vunpack.c.l.b16 %v98
  %v421 = vunpack.c.h.b16 %v98
  %v422 = vunpack.c.l.b16 %v99
  %v423 = vunpack.c.h.b16 %v99
  %v424 = vunpack.c.l.b16 %v100
  %v425 = vunpack.c.h.b16 %v100
  %v426 = vunpack.c.l.b16 %v101
  %v427 = vunpack.c.h.b16 %v101
  %v428 = vunpack.c.l.b16 %v102
  %v429 = vunpack.c.h.b16 %v102
  %v430 = vunpack.c.l.b16 %v103
  %v431 = vunpack.c.h.b16 %v103
  %v432 = vunpack.c.l.b16 %v104
  %v433 = vunpack.c.h.b16 %v104
  %v434 = vunpack.c.l.b16 %v105
  %v435 = vunpack.c.h.b16 %v105
  %v436 = vunpack.c.l.b16 %v106
  %v437 = vunpack.c.h.b16 %v106
  %v438 = vunpack.c.l.b16 %v107
  %v439 = vunpack.c.h.b16 %v107
  %v440 = vunpack.c.l.b16 %v108
  %v441 = vunpack.c.h.b16 %v108
  %v442 = vunpack.c.l.b16 %v109
  %v443 = vunpack.c.h.b16 %v109
  %v444 = vunpack.c.l.b16 %v110
  %v445 = vunpack.c.h.b16 %v110
  %v446 = vunpack.c.l.b16 %v111
  %v447 = vunpack.c.h.b16 %v111
  %v448 = vunpack.c.l.b16 %v112
  %v449 = vunpack.c.h.b16 %v112
  %v450 = vunpack.c.l.b16 %v113
  %v451 = vunpack.c.h.b16 %v113
  %v452 = vunpack.c.l.b16 %v114
  %v453 = vunpack.c.h.b16 %v114
  %v454 = vpack.c.b16 %v256, %v254
  %v455 = vpack.c.b16 %v257, %v255
  %v456 = vpack.c.b16 %v260, %v258
  %v457 = vpack.c.b16 %v261, %v259
  %v458 = vpack.c.b16 %v264, %v262
  %v459 = vpack.c.b16 %v265, %v263
  %v460 = vpack.c.b16 %v268, %v266
  %v461 = vpack.c.b16 %v269, %v267
  %v462 = vpack.c.b16 %v272, %v270
  %v463 = vpack.c.b16 %v273, %v271
  %v464 = vpack.c.b16 %v276, %v274
  %v465 = vpack.c.b16 %v277, %v275
  %v466 = vpack.c.b16 %v280, %v278
  %v467 = vpack.c.b16 %v281, %v279
  %v468 = vpack.c.b16 %v284, %v282
  %v469 = vpack.c.b16 %v285, %v283
  %v470 = vpack.c.b16 %v288, %v286
  %v471 = vpack.c.b16 %v289, %v287
  %v472 = vpack.c.b16 %v292, %v290
  %v473 = vpack.c.b16 %v293, %v291
  %v474 = vpack.c.b16 %v296, %v294
  %v475 = vpack.c.b16 %v297, %v295
  %v476 = vpack.c.b16 %v300, %v298
  %v477 = vpack.c.b16 %v301, %v299
  %v478 = vpack.c.b16 %v304, %v302
  %v479 = vpack.c.b16 %v305, %v303
  %v480 = vpack.c.b16 %v308, %v306
  %v481 = vpack.c.b16 %v309, %v307
  %v482 = vpack.c.b16 %v312, %v310
  %v483 = vpack.c.b16 %v313, %v311
  %v484 = vpack.c.b16 %v316, %v314
  %v485 = vpack.c.b16 %v317, %v315
  %v486 = vpack.c.b16 %v320, %v318
  %v487 = vpack.c.b16 %v321, %v319
  %v488 = vpack.c.b16 %v324, %v322
  %v489 = vpack.c.b16 %v325, %v323
  %v490 = vpack.c.b16 %v328, %v326
  %v491 = vpack.c.b16 %v329, %v327
  %v492 = vpack.c.b16 %v332, %v330
  %v493 = vpack.c.b16 %v333, %v331
  %v494 = vpack.c.b16 %v336, %v334
  %v495 = vpack.c.b16 %v337, %v335
  %v496 = vpack.c.b16 %v340, %v338
  %v497 = vpack.c.b16 %v341, %v339
  %v498 = vpack.c.b16 %v344, %v342
  %v499 = vpack.c.b16 %v345, %v343
  %v500 = vpack.c.b16 %v348, %v346
  %v501 = vpack.c.b16 %v349, %v347
  %v502 = vpack.c.b16 %v352, %v350
  %v503 = vpack.c.b16 %v353, %v351
  %v504 = vpack.c.b16 %v356, %v354
  %v505 = vpack.c.b16 %v357, %v355
  %v506 = vpack.c.b16 %v360, %v358
  %v507 = vpack.c.b16 %v361, %v359
  %v508 = vpack.c.b16 %v364, %v362
  %v509 = vpack.c.b16 %v365, %v363
  %v510 = vpack.c.b16 %v368, %v366
  %v511 = vpack.c.b16 %v369, %v367
  %v512 = vpack.c.b16 %v372, %v370
  %v513 = vpack.c.b16 %v373, %v371
  %v514 = vpack.c.b16 %v376, %v374
  %v515 = vpack.c.b16 %v377, %v375
  %v516 = vpack.c.b16 %v380, %v378
  %v517 = vpack.c.b16 %v381, %v379
  %v518 = vpack.c.b16 %v384, %v382
  %v519 = vpack.c.b16 %v385, %v383
  %v520 = vpack.c.b16 %v388, %v386
  %v521 = vpack.c.b16 %v389, %v387
  %v522 = vpack.c.b16 %v392, %v390
  %v523 = vpack.c.b16 %v393, %v391
  %v524 = vpack.c.b16 %v396, %v394
  %v525 = vpack.c.b16 %v397, %v395
  %v526 = vpack.c.b16 %v400, %v398
  %v527 = vpack.c.b16 %v401, %v399
  %v528 = vpack.c.b16 %v404, %v402
  %v529 = vpack.c.b16 %v405, %v403
  %v530 = vpack.c.b16 %v408, %v406
  %v531 = vpack.c.b16 %v409, %v407
  %v532 = vpack.c.b16 %v412, %v410
  %v533 = vpack.c.b16 %v413, %v411
  %v534 = vpack.c.b16 %v416, %v414
  %v535 = vpack.c.b16 %v417, %v415
  %v536 = vpack.c.b16 %v420, %v418
  %v537 = vpack.c.b16 %v421, %v419
  %v538 = vpack.c.b16 %v424, %v422
  %v539 = vpack.c.b16 %v425, %v423
  %v540 = vpack.c.b16 %v428, %v426
  %v541 = vpack.c.b16 %v429, %v427
  %v542 = vpack.c.b16 %v432, %v430
  %v543 = vpack.c.b16 %v433, %v431
  %v544 = vpack.c.b16 %v436, %v434
  %v545 = vpack.c.b16 %v437, %v435
  %v546 = vpack.c.b16 %v440, %v438
  %v547 = vpack.c.b16 %v441, %v439
  %v548 = vpack.c.b16 %v444, %v442
  %v549 = vpack.c.b16 %v445, %v443
  %v550 = vpack.c.b16 %v448, %v446
  %v551 = vpack.c.b16 %v449, %v447
  %v552 = vpack.c.b16 %v452, %v450
  %v553 = vpack.c.b16 %v453, %v451
  %v686 = vunpack.c.l.b16 %v115
  %v687 = vunpack.c.l.b16 %v116
  %v688 = vunpack.c.l.b16 %v117
  %v689 = vunpack.c.l.b16 %v118
  %v690 = vunpack.c.l.b16 %v119
  %v691 = vunpack.c.l.b16 %v120
  %v692 = vunpack.c.l.b16 %v121
  %v693 = vunpack.c.l.b16 %v122
  %v694 = vunpack.c.l.b16 %v123
  %v695 = vunpack.c.l.b16 %v124
  %v696 = vunpack.c.l.b16 %v125
  %v697 = vunpack.c.l.b16 %v126
  %v698 = vunpack.c.l.b16 %v127
  %v699 = vunpack.c.l.b16 %v128
  %v700 = vunpack.c.l.b16 %v129
  %v701 = vunpack.c.l.b16 %v130
  %v702 = vunpack.c.l.b16 %v131
  %v703 = vunpack.c.l.b16 %v132
  %v704 = vunpack.c.l.b16 %v133
  %v705 = vunpack.c.l.b16 %v134
  %v706 = vunpack.c.l.b16 %v135
  %v707 = vunpack.c.l.b16 %v136
  %v708 = vunpack.c.l.b16 %v137
  %v709 = vunpack.c.l.b16 %v138
  %v710 = vunpack.c.l.b16 %v139
  %v711 = vunpack.c.l.b16 %v140
  %v712 = vunpack.c.l.b16 %v141
  %v713 = vunpack.c.l.b16 %v142
  %v714 = vunpack.c.l.b16 %v143
  %v715 = vunpack.c.l.b16 %v144
  %v716 = vunpack.c.l.b16 %v145
  %v717 = vunpack.c.l.b16 %v146
  %v718 = vpack.c.b16 %v687, %v686
  %v719 = vpack.c.b16 %v689, %v688
  %v720 = vpack.c.b16 %v691, %v690
  %v721 = vpack.c.b16 %v693, %v692
  %v722 = vpack.c.b16 %v695, %v694
  %v723 = vpack.c.b16 %v697, %v696
  %v724 = vpack.c.b16 %v699, %v698
  %v725 = vpack.c.b16 %v701, %v700
  %v726 = vpack.c.b16 %v703, %v702
  %v727 = vpack.c.b16 %v705, %v704
  %v728 = vpack.c.b16 %v707, %v706
  %v729 = vpack.c.b16 %v709, %v708
  %v730 = vpack.c.b16 %v711, %v710
  %v731 = vpack.c.b16 %v713, %v712
  %v732 = vpack.c.b16 %v715, %v714
  %v733 = vpack.c.b16 %v717, %v716
  %750 = vmatprep.subr.bf16.mxu0 0
  %751 = vmatpush1.bf16.msra.mxu0 %v725
  %752 = vmatprep.subr.bf16.mxu0 0
  %753 = vmatpush1.bf16.msra.mxu0 %v724
  %754 = vmatprep.subr.bf16.mxu0 0
  %755 = vmatpush1.bf16.msra.mxu0 %v723
  %756 = vmatprep.subr.bf16.mxu0 0
  %757 = vmatpush1.bf16.msra.mxu0 %v722
  %758 = vmatprep.subr.bf16.mxu0 0
  %759 = vmatpush1.bf16.msra.mxu0 %v721
  %760 = vmatprep.subr.bf16.mxu0 0
  %761 = vmatpush1.bf16.msra.mxu0 %v720
  %762 = vmatprep.subr.bf16.mxu0 0
  %763 = vmatpush1.bf16.msra.mxu0 %v719
  %764 = vmatprep.subr.bf16.mxu0 0
  %765 = vmatpush1.bf16.msra.mxu0 %v718
  %766 = vmatprep.subr.bf16.mxu0 0
  %767 = vmatpush2.bf16.msra.mxu0 %v733
  %768 = vmatprep.subr.bf16.mxu0 0
  %769 = vmatpush2.bf16.msra.mxu0 %v732
  %770 = vmatprep.subr.bf16.mxu0 0
  %771 = vmatpush2.bf16.msra.mxu0 %v731
  %772 = vmatprep.subr.bf16.mxu0 0
  %773 = vmatpush2.bf16.msra.mxu0 %v730
  %774 = vmatprep.subr.bf16.mxu0 0
  %775 = vmatpush2.bf16.msra.mxu0 %v729
  %776 = vmatprep.subr.bf16.mxu0 0
  %777 = vmatpush2.bf16.msra.mxu0 %v728
  %778 = vmatprep.subr.bf16.mxu0 0
  %779 = vmatpush2.bf16.msra.mxu0 %v727
  %780 = vmatprep.subr.bf16.mxu0 0
  %781 = vmatpush2.bf16.msra.mxu0 %v726
  %782 = vmatprep.mubr.bf16.mxu0 %v455
  %783 = vmatmul.mubr.bf16.gmra.mxu0 %v454
  %v784 = vpop.f32.mrf.mxu0
  %v785 = vadd.f32 %v152, %v784
  %v786 = vpop.f32.mrf.mxu0
  %v787 = vpop.f32.mrf.mxu0
  %v788 = vadd.f32 %v152, %v787
  %v789 = vpop.f32.mrf.mxu0
  %790 = vmatprep.mubr.bf16.mxu0 %v457
  %791 = vmatmul.mubr.bf16.gmra.mxu0 %v456
  %v792 = vpop.f32.mrf.mxu0
  %v793 = vadd.f32 %v152, %v792
  %v794 = vpop.f32.mrf.mxu0
  %v795 = vpop.f32.mrf.mxu0
  %v796 = vadd.f32 %v152, %v795
  %v797 = vpop.f32.mrf.mxu0
  %798 = vmatprep.mubr.bf16.mxu0 %v459
  %799 = vmatmul.mubr.bf16.gmra.mxu0 %v458
  %v800 = vpop.f32.mrf.mxu0
  %v801 = vadd.f32 %v152, %v800
  %v802 = vpop.f32.mrf.mxu0
  %v803 = vpop.f32.mrf.mxu0
  %v804 = vadd.f32 %v152, %v803
  %v805 = vpop.f32.mrf.mxu0
  %806 = vmatprep.mubr.bf16.mxu0 %v461
  %807 = vmatmul.mubr.bf16.gmra.mxu0 %v460
  %v808 = vpop.f32.mrf.mxu0
  %v809 = vadd.f32 %v152, %v808
  %v810 = vpop.f32.mrf.mxu0
  %v811 = vpop.f32.mrf.mxu0
  %v812 = vadd.f32 %v152, %v811
  %v813 = vpop.f32.mrf.mxu0
  %814 = vmatprep.mubr.bf16.mxu0 %v463
  %815 = vmatmul.mubr.bf16.gmra.mxu0 %v462
  %v816 = vpop.f32.mrf.mxu0
  %v817 = vadd.f32 %v152, %v816
  %v818 = vpop.f32.mrf.mxu0
  %v819 = vpop.f32.mrf.mxu0
  %v820 = vadd.f32 %v152, %v819
  %v821 = vpop.f32.mrf.mxu0
  %822 = vmatprep.mubr.bf16.mxu0 %v465
  %823 = vmatmul.mubr.bf16.gmra.mxu0 %v464
  %v824 = vpop.f32.mrf.mxu0
  %v825 = vadd.f32 %v152, %v824
  %v826 = vpop.f32.mrf.mxu0
  %v827 = vpop.f32.mrf.mxu0
  %v828 = vadd.f32 %v152, %v827
  %v829 = vpop.f32.mrf.mxu0
  %830 = vmatprep.mubr.bf16.mxu0 %v467
  %831 = vmatmul.mubr.bf16.gmra.mxu0 %v466
  %v832 = vpop.f32.mrf.mxu0
  %v833 = vadd.f32 %v152, %v832
  %v834 = vpop.f32.mrf.mxu0
  %v835 = vpop.f32.mrf.mxu0
  %v836 = vadd.f32 %v152, %v835
  %v837 = vpop.f32.mrf.mxu0
  %838 = vmatprep.mubr.bf16.mxu0 %v469
  %839 = vmatmul.mubr.bf16.gmra.mxu0 %v468
  %v840 = vpop.f32.mrf.mxu0
  %v841 = vadd.f32 %v152, %v840
  %v842 = vpop.f32.mrf.mxu0
  %v843 = vpop.f32.mrf.mxu0
  %v844 = vadd.f32 %v152, %v843
  %v845 = vpop.f32.mrf.mxu0
  %846 = vmatprep.mubr.bf16.mxu0 %v471
  %847 = vmatmul.mubr.bf16.gmra.mxu0 %v470
  %v848 = vpop.f32.mrf.mxu0
  %v849 = vadd.f32 %v152, %v848
  %v850 = vpop.f32.mrf.mxu0
  %v851 = vpop.f32.mrf.mxu0
  %v852 = vadd.f32 %v152, %v851
  %v853 = vpop.f32.mrf.mxu0
  %854 = vmatprep.mubr.bf16.mxu0 %v473
  %855 = vmatmul.mubr.bf16.gmra.mxu0 %v472
  %v856 = vpop.f32.mrf.mxu0
  %v857 = vadd.f32 %v152, %v856
  %v858 = vpop.f32.mrf.mxu0
  %v859 = vpop.f32.mrf.mxu0
  %v860 = vadd.f32 %v152, %v859
  %v861 = vpop.f32.mrf.mxu0
  %862 = vmatprep.mubr.bf16.mxu0 %v475
  %863 = vmatmul.mubr.bf16.gmra.mxu0 %v474
  %v864 = vpop.f32.mrf.mxu0
  %v865 = vadd.f32 %v152, %v864
  %v866 = vpop.f32.mrf.mxu0
  %v867 = vpop.f32.mrf.mxu0
  %v868 = vadd.f32 %v152, %v867
  %v869 = vpop.f32.mrf.mxu0
  %870 = vmatprep.mubr.bf16.mxu0 %v477
  %871 = vmatmul.mubr.bf16.gmra.mxu0 %v476
  %v872 = vpop.f32.mrf.mxu0
  %v873 = vadd.f32 %v152, %v872
  %v874 = vpop.f32.mrf.mxu0
  %v875 = vpop.f32.mrf.mxu0
  %v876 = vadd.f32 %v152, %v875
  %v877 = vpop.f32.mrf.mxu0
  %878 = vmatprep.mubr.bf16.mxu0 %v479
  %879 = vmatmul.mubr.bf16.gmra.mxu0 %v478
  %v880 = vpop.f32.mrf.mxu0
  %v881 = vadd.f32 %v152, %v880
  %v882 = vpop.f32.mrf.mxu0
  %v883 = vpop.f32.mrf.mxu0
  %v884 = vadd.f32 %v152, %v883
  %v885 = vpop.f32.mrf.mxu0
  %886 = vmatprep.mubr.bf16.mxu0 %v481
  %887 = vmatmul.mubr.bf16.gmra.mxu0 %v480
  %v888 = vpop.f32.mrf.mxu0
  %v889 = vadd.f32 %v152, %v888
  %v890 = vpop.f32.mrf.mxu0
  %v891 = vpop.f32.mrf.mxu0
  %v892 = vadd.f32 %v152, %v891
  %v893 = vpop.f32.mrf.mxu0
  %894 = vmatprep.mubr.bf16.mxu0 %v483
  %895 = vmatmul.mubr.bf16.gmra.mxu0 %v482
  %v896 = vpop.f32.mrf.mxu0
  %v897 = vadd.f32 %v152, %v896
  %v898 = vpop.f32.mrf.mxu0
  %v899 = vpop.f32.mrf.mxu0
  %v900 = vadd.f32 %v152, %v899
  %v901 = vpop.f32.mrf.mxu0
  %902 = vmatprep.mubr.bf16.mxu0 %v485
  %903 = vmatmul.mubr.bf16.gmra.mxu0 %v484
  %v904 = vpop.f32.mrf.mxu0
  %v905 = vadd.f32 %v152, %v904
  %v906 = vpop.f32.mrf.mxu0
  %v907 = vpop.f32.mrf.mxu0
  %v908 = vadd.f32 %v152, %v907
  %v909 = vpop.f32.mrf.mxu0
  %910 = vmatprep.mubr.bf16.mxu0 %v487
  %911 = vmatmul.mubr.bf16.gmra.mxu0 %v486
  %v912 = vpop.f32.mrf.mxu0
  %v913 = vadd.f32 %v152, %v912
  %v914 = vpop.f32.mrf.mxu0
  %v915 = vpop.f32.mrf.mxu0
  %v916 = vadd.f32 %v152, %v915
  %v917 = vpop.f32.mrf.mxu0
  %918 = vmatprep.mubr.bf16.mxu0 %v489
  %919 = vmatmul.mubr.bf16.gmra.mxu0 %v488
  %v920 = vpop.f32.mrf.mxu0
  %v921 = vadd.f32 %v152, %v920
  %v922 = vpop.f32.mrf.mxu0
  %v923 = vpop.f32.mrf.mxu0
  %v924 = vadd.f32 %v152, %v923
  %v925 = vpop.f32.mrf.mxu0
  %926 = vmatprep.mubr.bf16.mxu0 %v491
  %927 = vmatmul.mubr.bf16.gmra.mxu0 %v490
  %v928 = vpop.f32.mrf.mxu0
  %v929 = vadd.f32 %v152, %v928
  %v930 = vpop.f32.mrf.mxu0
  %v931 = vpop.f32.mrf.mxu0
  %v932 = vadd.f32 %v152, %v931
  %v933 = vpop.f32.mrf.mxu0
  %934 = vmatprep.mubr.bf16.mxu0 %v493
  %935 = vmatmul.mubr.bf16.gmra.mxu0 %v492
  %v936 = vpop.f32.mrf.mxu0
  %v937 = vadd.f32 %v152, %v936
  %v938 = vpop.f32.mrf.mxu0
  %v939 = vpop.f32.mrf.mxu0
  %v940 = vadd.f32 %v152, %v939
  %v941 = vpop.f32.mrf.mxu0
  %942 = vmatprep.mubr.bf16.mxu0 %v495
  %943 = vmatmul.mubr.bf16.gmra.mxu0 %v494
  %v944 = vpop.f32.mrf.mxu0
  %v945 = vadd.f32 %v152, %v944
  %v946 = vpop.f32.mrf.mxu0
  %v947 = vpop.f32.mrf.mxu0
  %v948 = vadd.f32 %v152, %v947
  %v949 = vpop.f32.mrf.mxu0
  %950 = vmatprep.mubr.bf16.mxu0 %v497
  %951 = vmatmul.mubr.bf16.gmra.mxu0 %v496
  %v952 = vpop.f32.mrf.mxu0
  %v953 = vadd.f32 %v152, %v952
  %v954 = vpop.f32.mrf.mxu0
  %v955 = vpop.f32.mrf.mxu0
  %v956 = vadd.f32 %v152, %v955
  %v957 = vpop.f32.mrf.mxu0
  %958 = vmatprep.mubr.bf16.mxu0 %v499
  %959 = vmatmul.mubr.bf16.gmra.mxu0 %v498
  %v960 = vpop.f32.mrf.mxu0
  %v961 = vadd.f32 %v152, %v960
  %v962 = vpop.f32.mrf.mxu0
  %v963 = vpop.f32.mrf.mxu0
  %v964 = vadd.f32 %v152, %v963
  %v965 = vpop.f32.mrf.mxu0
  %966 = vmatprep.mubr.bf16.mxu0 %v501
  %967 = vmatmul.mubr.bf16.gmra.mxu0 %v500
  %v968 = vpop.f32.mrf.mxu0
  %v969 = vadd.f32 %v152, %v968
  %v970 = vpop.f32.mrf.mxu0
  %v971 = vpop.f32.mrf.mxu0
  %v972 = vadd.f32 %v152, %v971
  %v973 = vpop.f32.mrf.mxu0
  %974 = vmatprep.mubr.bf16.mxu0 %v503
  %975 = vmatmul.mubr.bf16.gmra.mxu0 %v502
  %v976 = vpop.f32.mrf.mxu0
  %v977 = vadd.f32 %v152, %v976
  %v978 = vpop.f32.mrf.mxu0
  %v979 = vpop.f32.mrf.mxu0
  %v980 = vadd.f32 %v152, %v979
  %v981 = vpop.f32.mrf.mxu0
  %982 = vmatprep.mubr.bf16.mxu0 %v505
  %983 = vmatmul.mubr.bf16.gmra.mxu0 %v504
  %v984 = vpop.f32.mrf.mxu0
  %v985 = vadd.f32 %v152, %v984
  %v986 = vpop.f32.mrf.mxu0
  %v987 = vpop.f32.mrf.mxu0
  %v988 = vadd.f32 %v152, %v987
  %v989 = vpop.f32.mrf.mxu0
  %990 = vmatprep.mubr.bf16.mxu0 %v507
  %991 = vmatmul.mubr.bf16.gmra.mxu0 %v506
  %v992 = vpop.f32.mrf.mxu0
  %v993 = vadd.f32 %v152, %v992
  %v994 = vpop.f32.mrf.mxu0
  %v995 = vpop.f32.mrf.mxu0
  %v996 = vadd.f32 %v152, %v995
  %v997 = vpop.f32.mrf.mxu0
  %998 = vmatprep.mubr.bf16.mxu0 %v509
  %999 = vmatmul.mubr.bf16.gmra.mxu0 %v508
  %v1000 = vpop.f32.mrf.mxu0
  %v1001 = vadd.f32 %v152, %v1000
  %v1002 = vpop.f32.mrf.mxu0
  %v1003 = vpop.f32.mrf.mxu0
  %v1004 = vadd.f32 %v152, %v1003
  %v1005 = vpop.f32.mrf.mxu0
  %1006 = vmatprep.mubr.bf16.mxu0 %v511
  %1007 = vmatmul.mubr.bf16.gmra.mxu0 %v510
  %v1008 = vpop.f32.mrf.mxu0
  %v1009 = vadd.f32 %v152, %v1008
  %v1010 = vpop.f32.mrf.mxu0
  %v1011 = vpop.f32.mrf.mxu0
  %v1012 = vadd.f32 %v152, %v1011
  %v1013 = vpop.f32.mrf.mxu0
  %1014 = vmatprep.mubr.bf16.mxu0 %v513
  %1015 = vmatmul.mubr.bf16.gmra.mxu0 %v512
  %v1016 = vpop.f32.mrf.mxu0
  %v1017 = vadd.f32 %v152, %v1016
  %v1018 = vpop.f32.mrf.mxu0
  %v1019 = vpop.f32.mrf.mxu0
  %v1020 = vadd.f32 %v152, %v1019
  %v1021 = vpop.f32.mrf.mxu0
  %1022 = vmatprep.mubr.bf16.mxu0 %v515
  %1023 = vmatmul.mubr.bf16.gmra.mxu0 %v514
  %v1024 = vpop.f32.mrf.mxu0
  %v1025 = vadd.f32 %v152, %v1024
  %v1026 = vpop.f32.mrf.mxu0
  %v1027 = vpop.f32.mrf.mxu0
  %v1028 = vadd.f32 %v152, %v1027
  %v1029 = vpop.f32.mrf.mxu0
  %1030 = vmatprep.mubr.bf16.mxu0 %v517
  %1031 = vmatmul.mubr.bf16.gmra.mxu0 %v516
  %v1032 = vpop.f32.mrf.mxu0
  %v1033 = vadd.f32 %v152, %v1032
  %v1034 = vpop.f32.mrf.mxu0
  %v1035 = vpop.f32.mrf.mxu0
  %v1036 = vadd.f32 %v152, %v1035
  %v1037 = vpop.f32.mrf.mxu0
  %1038 = vmatprep.mubr.bf16.mxu0 %v519
  %1039 = vmatmul.mubr.bf16.gmra.mxu0 %v518
  %v1040 = vpop.f32.mrf.mxu0
  %v1041 = vadd.f32 %v152, %v1040
  %v1042 = vpop.f32.mrf.mxu0
  %v1043 = vpop.f32.mrf.mxu0
  %v1044 = vadd.f32 %v152, %v1043
  %v1045 = vpop.f32.mrf.mxu0
  %1046 = vmatprep.mubr.bf16.mxu0 %v521
  %1047 = vmatmul.mubr.bf16.gmra.mxu0 %v520
  %v1048 = vpop.f32.mrf.mxu0
  %v1049 = vadd.f32 %v152, %v1048
  %v1050 = vpop.f32.mrf.mxu0
  %v1051 = vpop.f32.mrf.mxu0
  %v1052 = vadd.f32 %v152, %v1051
  %v1053 = vpop.f32.mrf.mxu0
  %1054 = vmatprep.mubr.bf16.mxu0 %v523
  %1055 = vmatmul.mubr.bf16.gmra.mxu0 %v522
  %v1056 = vpop.f32.mrf.mxu0
  %v1057 = vadd.f32 %v152, %v1056
  %v1058 = vpop.f32.mrf.mxu0
  %v1059 = vpop.f32.mrf.mxu0
  %v1060 = vadd.f32 %v152, %v1059
  %v1061 = vpop.f32.mrf.mxu0
  %1062 = vmatprep.mubr.bf16.mxu0 %v525
  %1063 = vmatmul.mubr.bf16.gmra.mxu0 %v524
  %v1064 = vpop.f32.mrf.mxu0
  %v1065 = vadd.f32 %v152, %v1064
  %v1066 = vpop.f32.mrf.mxu0
  %v1067 = vpop.f32.mrf.mxu0
  %v1068 = vadd.f32 %v152, %v1067
  %v1069 = vpop.f32.mrf.mxu0
  %1070 = vmatprep.mubr.bf16.mxu0 %v527
  %1071 = vmatmul.mubr.bf16.gmra.mxu0 %v526
  %v1072 = vpop.f32.mrf.mxu0
  %v1073 = vadd.f32 %v152, %v1072
  %v1074 = vpop.f32.mrf.mxu0
  %v1075 = vpop.f32.mrf.mxu0
  %v1076 = vadd.f32 %v152, %v1075
  %v1077 = vpop.f32.mrf.mxu0
  %1078 = vmatprep.mubr.bf16.mxu0 %v529
  %1079 = vmatmul.mubr.bf16.gmra.mxu0 %v528
  %v1080 = vpop.f32.mrf.mxu0
  %v1081 = vadd.f32 %v152, %v1080
  %v1082 = vpop.f32.mrf.mxu0
  %v1083 = vpop.f32.mrf.mxu0
  %v1084 = vadd.f32 %v152, %v1083
  %v1085 = vpop.f32.mrf.mxu0
  %1086 = vmatprep.mubr.bf16.mxu0 %v531
  %1087 = vmatmul.mubr.bf16.gmra.mxu0 %v530
  %v1088 = vpop.f32.mrf.mxu0
  %v1089 = vadd.f32 %v152, %v1088
  %v1090 = vpop.f32.mrf.mxu0
  %v1091 = vpop.f32.mrf.mxu0
  %v1092 = vadd.f32 %v152, %v1091
  %v1093 = vpop.f32.mrf.mxu0
  %1094 = vmatprep.mubr.bf16.mxu0 %v533
  %1095 = vmatmul.mubr.bf16.gmra.mxu0 %v532
  %v1096 = vpop.f32.mrf.mxu0
  %v1097 = vadd.f32 %v152, %v1096
  %v1098 = vpop.f32.mrf.mxu0
  %v1099 = vpop.f32.mrf.mxu0
  %v1100 = vadd.f32 %v152, %v1099
  %v1101 = vpop.f32.mrf.mxu0
  %1102 = vmatprep.mubr.bf16.mxu0 %v535
  %1103 = vmatmul.mubr.bf16.gmra.mxu0 %v534
  %v1104 = vpop.f32.mrf.mxu0
  %v1105 = vadd.f32 %v152, %v1104
  %v1106 = vpop.f32.mrf.mxu0
  %v1107 = vpop.f32.mrf.mxu0
  %v1108 = vadd.f32 %v152, %v1107
  %v1109 = vpop.f32.mrf.mxu0
  %1110 = vmatprep.mubr.bf16.mxu0 %v537
  %1111 = vmatmul.mubr.bf16.gmra.mxu0 %v536
  %v1112 = vpop.f32.mrf.mxu0
  %v1113 = vadd.f32 %v152, %v1112
  %v1114 = vpop.f32.mrf.mxu0
  %v1115 = vpop.f32.mrf.mxu0
  %v1116 = vadd.f32 %v152, %v1115
  %v1117 = vpop.f32.mrf.mxu0
  %1118 = vmatprep.mubr.bf16.mxu0 %v539
  %1119 = vmatmul.mubr.bf16.gmra.mxu0 %v538
  %v1120 = vpop.f32.mrf.mxu0
  %v1121 = vadd.f32 %v152, %v1120
  %v1122 = vpop.f32.mrf.mxu0
  %v1123 = vpop.f32.mrf.mxu0
  %v1124 = vadd.f32 %v152, %v1123
  %v1125 = vpop.f32.mrf.mxu0
  %1126 = vmatprep.mubr.bf16.mxu0 %v541
  %1127 = vmatmul.mubr.bf16.gmra.mxu0 %v540
  %v1128 = vpop.f32.mrf.mxu0
  %v1129 = vadd.f32 %v152, %v1128
  %v1130 = vpop.f32.mrf.mxu0
  %v1131 = vpop.f32.mrf.mxu0
  %v1132 = vadd.f32 %v152, %v1131
  %v1133 = vpop.f32.mrf.mxu0
  %1134 = vmatprep.mubr.bf16.mxu0 %v543
  %1135 = vmatmul.mubr.bf16.gmra.mxu0 %v542
  %v1136 = vpop.f32.mrf.mxu0
  %v1137 = vadd.f32 %v152, %v1136
  %v1138 = vpop.f32.mrf.mxu0
  %v1139 = vpop.f32.mrf.mxu0
  %v1140 = vadd.f32 %v152, %v1139
  %v1141 = vpop.f32.mrf.mxu0
  %1142 = vmatprep.mubr.bf16.mxu0 %v545
  %1143 = vmatmul.mubr.bf16.gmra.mxu0 %v544
  %v1144 = vpop.f32.mrf.mxu0
  %v1145 = vadd.f32 %v152, %v1144
  %v1146 = vpop.f32.mrf.mxu0
  %v1147 = vpop.f32.mrf.mxu0
  %v1148 = vadd.f32 %v152, %v1147
  %v1149 = vpop.f32.mrf.mxu0
  %1150 = vmatprep.mubr.bf16.mxu0 %v547
  %1151 = vmatmul.mubr.bf16.gmra.mxu0 %v546
  %v1152 = vpop.f32.mrf.mxu0
  %v1153 = vadd.f32 %v152, %v1152
  %v1154 = vpop.f32.mrf.mxu0
  %v1155 = vpop.f32.mrf.mxu0
  %v1156 = vadd.f32 %v152, %v1155
  %v1157 = vpop.f32.mrf.mxu0
  %1158 = vmatprep.mubr.bf16.mxu0 %v549
  %1159 = vmatmul.mubr.bf16.gmra.mxu0 %v548
  %v1160 = vpop.f32.mrf.mxu0
  %v1161 = vadd.f32 %v152, %v1160
  %v1162 = vpop.f32.mrf.mxu0
  %v1163 = vpop.f32.mrf.mxu0
  %v1164 = vadd.f32 %v152, %v1163
  %v1165 = vpop.f32.mrf.mxu0
  %1166 = vmatprep.mubr.bf16.mxu0 %v551
  %1167 = vmatmul.mubr.bf16.gmra.mxu0 %v550
  %v1168 = vpop.f32.mrf.mxu0
  %v1169 = vadd.f32 %v152, %v1168
  %v1170 = vpop.f32.mrf.mxu0
  %v1171 = vpop.f32.mrf.mxu0
  %v1172 = vadd.f32 %v152, %v1171
  %v1173 = vpop.f32.mrf.mxu0
  %1174 = vmatprep.mubr.bf16.mxu0 %v553
  %1175 = vmatmul.mubr.bf16.gmra.mxu0 %v552
  %v1176 = vpop.f32.mrf.mxu0
  %v1177 = vadd.f32 %v152, %v1176
  %v1178 = vpop.f32.mrf.mxu0
  %v1179 = vpop.f32.mrf.mxu0
  %v1180 = vadd.f32 %v152, %v1179
  %v1181 = vpop.f32.mrf.mxu0
  %1182 = vdwg.mxu0
  %v1183 = vmax.f32 %v785, 0.0
  %v1184 = vmax.f32 %v788, 0.0
  %v1185 = vmax.f32 %v793, 0.0
  %v1186 = vmax.f32 %v796, 0.0
  %v1187 = vmax.f32 %v801, 0.0
  %v1188 = vmax.f32 %v804, 0.0
  %v1189 = vmax.f32 %v809, 0.0
  %v1190 = vmax.f32 %v812, 0.0
  %v1191 = vmax.f32 %v817, 0.0
  %v1192 = vmax.f32 %v820, 0.0
  %v1193 = vmax.f32 %v825, 0.0
  %v1194 = vmax.f32 %v828, 0.0
  %v1195 = vmax.f32 %v833, 0.0
  %v1196 = vmax.f32 %v836, 0.0
  %v1197 = vmax.f32 %v841, 0.0
  %v1198 = vmax.f32 %v844, 0.0
  %v1199 = vmax.f32 %v849, 0.0
  %v1200 = vmax.f32 %v852, 0.0
  %v1201 = vmax.f32 %v857, 0.0
  %v1202 = vmax.f32 %v860, 0.0
  %v1203 = vmax.f32 %v865, 0.0
  %v1204 = vmax.f32 %v868, 0.0
  %v1205 = vmax.f32 %v873, 0.0
  %v1206 = vmax.f32 %v876, 0.0
  %v1207 = vmax.f32 %v881, 0.0
  %v1208 = vmax.f32 %v884, 0.0
  %v1209 = vmax.f32 %v889, 0.0
  %v1210 = vmax.f32 %v892, 0.0
  %v1211 = vmax.f32 %v897, 0.0
  %v1212 = vmax.f32 %v900, 0.0
  %v1213 = vmax.f32 %v905, 0.0
  %v1214 = vmax.f32 %v908, 0.0
  %v1215 = vmax.f32 %v913, 0.0
  %v1216 = vmax.f32 %v916, 0.0
  %v1217 = vmax.f32 %v921, 0.0
  %v1218 = vmax.f32 %v924, 0.0
  %v1219 = vmax.f32 %v929, 0.0
  %v1220 = vmax.f32 %v932, 0.0
  %v1221 = vmax.f32 %v937, 0.0
  %v1222 = vmax.f32 %v940, 0.0
  %v1223 = vmax.f32 %v945, 0.0
  %v1224 = vmax.f32 %v948, 0.0
  %v1225 = vmax.f32 %v953, 0.0
  %v1226 = vmax.f32 %v956, 0.0
  %v1227 = vmax.f32 %v961, 0.0
  %v1228 = vmax.f32 %v964, 0.0
  %v1229 = vmax.f32 %v969, 0.0
  %v1230 = vmax.f32 %v972, 0.0
  %v1231 = vmax.f32 %v977, 0.0
  %v1232 = vmax.f32 %v980, 0.0
  %v1233 = vmax.f32 %v985, 0.0
  %v1234 = vmax.f32 %v988, 0.0
  %v1235 = vmax.f32 %v993, 0.0
  %v1236 = vmax.f32 %v996, 0.0
  %v1237 = vmax.f32 %v1001, 0.0
  %v1238 = vmax.f32 %v1004, 0.0
  %v1239 = vmax.f32 %v1009, 0.0
  %v1240 = vmax.f32 %v1012, 0.0
  %v1241 = vmax.f32 %v1017, 0.0
  %v1242 = vmax.f32 %v1020, 0.0
  %v1243 = vmax.f32 %v1025, 0.0
  %v1244 = vmax.f32 %v1028, 0.0
  %v1245 = vmax.f32 %v1033, 0.0
  %v1246 = vmax.f32 %v1036, 0.0
  %v1247 = vmax.f32 %v1041, 0.0
  %v1248 = vmax.f32 %v1044, 0.0
  %v1249 = vmax.f32 %v1049, 0.0
  %v1250 = vmax.f32 %v1052, 0.0
  %v1251 = vmax.f32 %v1057, 0.0
  %v1252 = vmax.f32 %v1060, 0.0
  %v1253 = vmax.f32 %v1065, 0.0
  %v1254 = vmax.f32 %v1068, 0.0
  %v1255 = vmax.f32 %v1073, 0.0
  %v1256 = vmax.f32 %v1076, 0.0
  %v1257 = vmax.f32 %v1081, 0.0
  %v1258 = vmax.f32 %v1084, 0.0
  %v1259 = vmax.f32 %v1089, 0.0
  %v1260 = vmax.f32 %v1092, 0.0
  %v1261 = vmax.f32 %v1097, 0.0
  %v1262 = vmax.f32 %v1100, 0.0
  %v1263 = vmax.f32 %v1105, 0.0
  %v1264 = vmax.f32 %v1108, 0.0
  %v1265 = vmax.f32 %v1113, 0.0
  %v1266 = vmax.f32 %v1116, 0.0
  %v1267 = vmax.f32 %v1121, 0.0
  %v1268 = vmax.f32 %v1124, 0.0
  %v1269 = vmax.f32 %v1129, 0.0
  %v1270 = vmax.f32 %v1132, 0.0
  %v1271 = vmax.f32 %v1137, 0.0
  %v1272 = vmax.f32 %v1140, 0.0
  %v1273 = vmax.f32 %v1145, 0.0
  %v1274 = vmax.f32 %v1148, 0.0
  %v1275 = vmax.f32 %v1153, 0.0
  %v1276 = vmax.f32 %v1156, 0.0
  %v1277 = vmax.f32 %v1161, 0.0
  %v1278 = vmax.f32 %v1164, 0.0
  %v1279 = vmax.f32 %v1169, 0.0
  %v1280 = vmax.f32 %v1172, 0.0
  %v1281 = vmax.f32 %v1177, 0.0
  %v1282 = vmax.f32 %v1180, 0.0
  %vm1283 = vcmask 261120
  %1284 = vst.msk [vmem:[%s3] sm:$0xff] %vm1283, %v1183
  %1285 = vst.msk [vmem:[%s3 + $0x8] sm:$0xff] %vm1283, %v1184
  %1286 = vst.msk [vmem:[%s3 + $0x10] sm:$0xff] %vm1283, %v1185
  %1287 = vst.msk [vmem:[%s3 + $0x18] sm:$0xff] %vm1283, %v1186
  %1288 = vst.msk [vmem:[%s3 + $0x20] sm:$0xff] %vm1283, %v1187
  %1289 = vst.msk [vmem:[%s3 + $0x28] sm:$0xff] %vm1283, %v1188
  %1290 = vst.msk [vmem:[%s3 + $0x30] sm:$0xff] %vm1283, %v1189
  %1291 = vst.msk [vmem:[%s3 + $0x38] sm:$0xff] %vm1283, %v1190
  %1292 = vst.msk [vmem:[%s3 + $0x40] sm:$0xff] %vm1283, %v1191
  %1293 = vst.msk [vmem:[%s3 + $0x48] sm:$0xff] %vm1283, %v1192
  %1294 = vst.msk [vmem:[%s3 + $0x50] sm:$0xff] %vm1283, %v1193
  %1295 = vst.msk [vmem:[%s3 + $0x58] sm:$0xff] %vm1283, %v1194
  %1296 = vst.msk [vmem:[%s3 + $0x60] sm:$0xff] %vm1283, %v1195
  %1297 = vst.msk [vmem:[%s3 + $0x68] sm:$0xff] %vm1283, %v1196
  %1298 = vst.msk [vmem:[%s3 + $0x70] sm:$0xff] %vm1283, %v1197
  %1299 = vst.msk [vmem:[%s3 + $0x78] sm:$0xff] %vm1283, %v1198
  %1300 = vst.msk [vmem:[%s3 + $0x80] sm:$0xff] %vm1283, %v1199
  %1301 = vst.msk [vmem:[%s3 + $0x88] sm:$0xff] %vm1283, %v1200
  %1302 = vst.msk [vmem:[%s3 + $0x90] sm:$0xff] %vm1283, %v1201
  %1303 = vst.msk [vmem:[%s3 + $0x98] sm:$0xff] %vm1283, %v1202
  %1304 = vst.msk [vmem:[%s3 + $0xa0] sm:$0xff] %vm1283, %v1203
  %1305 = vst.msk [vmem:[%s3 + $0xa8] sm:$0xff] %vm1283, %v1204
  %1306 = vst.msk [vmem:[%s3 + $0xb0] sm:$0xff] %vm1283, %v1205
  %1307 = vst.msk [vmem:[%s3 + $0xb8] sm:$0xff] %vm1283, %v1206
  %1308 = vst.msk [vmem:[%s3 + $0xc0] sm:$0xff] %vm1283, %v1207
  %1309 = vst.msk [vmem:[%s3 + $0xc8] sm:$0xff] %vm1283, %v1208
  %1310 = vst.msk [vmem:[%s3 + $0xd0] sm:$0xff] %vm1283, %v1209
  %1311 = vst.msk [vmem:[%s3 + $0xd8] sm:$0xff] %vm1283, %v1210
  %1312 = vst.msk [vmem:[%s3 + $0xe0] sm:$0xff] %vm1283, %v1211
  %1313 = vst.msk [vmem:[%s3 + $0xe8] sm:$0xff] %vm1283, %v1212
  %1314 = vst.msk [vmem:[%s3 + $0xf0] sm:$0xff] %vm1283, %v1213
  %1315 = vst.msk [vmem:[%s3 + $0xf8] sm:$0xff] %vm1283, %v1214
  %1316 = vst.msk [vmem:[%s3 + $0x100] sm:$0xff] %vm1283, %v1215
  %1317 = vst.msk [vmem:[%s3 + $0x108] sm:$0xff] %vm1283, %v1216
  %1318 = vst.msk [vmem:[%s3 + $0x110] sm:$0xff] %vm1283, %v1217
  %1319 = vst.msk [vmem:[%s3 + $0x118] sm:$0xff] %vm1283, %v1218
  %1320 = vst.msk [vmem:[%s3 + $0x120] sm:$0xff] %vm1283, %v1219
  %1321 = vst.msk [vmem:[%s3 + $0x128] sm:$0xff] %vm1283, %v1220
  %1322 = vst.msk [vmem:[%s3 + $0x130] sm:$0xff] %vm1283, %v1221
  %1323 = vst.msk [vmem:[%s3 + $0x138] sm:$0xff] %vm1283, %v1222
  %1324 = vst.msk [vmem:[%s3 + $0x140] sm:$0xff] %vm1283, %v1223
  %1325 = vst.msk [vmem:[%s3 + $0x148] sm:$0xff] %vm1283, %v1224
  %1326 = vst.msk [vmem:[%s3 + $0x150] sm:$0xff] %vm1283, %v1225
  %1327 = vst.msk [vmem:[%s3 + $0x158] sm:$0xff] %vm1283, %v1226
  %1328 = vst.msk [vmem:[%s3 + $0x160] sm:$0xff] %vm1283, %v1227
  %1329 = vst.msk [vmem:[%s3 + $0x168] sm:$0xff] %vm1283, %v1228
  %1330 = vst.msk [vmem:[%s3 + $0x170] sm:$0xff] %vm1283, %v1229
  %1331 = vst.msk [vmem:[%s3 + $0x178] sm:$0xff] %vm1283, %v1230
  %1332 = vst.msk [vmem:[%s3 + $0x180] sm:$0xff] %vm1283, %v1231
  %1333 = vst.msk [vmem:[%s3 + $0x188] sm:$0xff] %vm1283, %v1232
  %1334 = vst.msk [vmem:[%s3 + $0x190] sm:$0xff] %vm1283, %v1233
  %1335 = vst.msk [vmem:[%s3 + $0x198] sm:$0xff] %vm1283, %v1234
  %1336 = vst.msk [vmem:[%s3 + $0x1a0] sm:$0xff] %vm1283, %v1235
  %1337 = vst.msk [vmem:[%s3 + $0x1a8] sm:$0xff] %vm1283, %v1236
  %1338 = vst.msk [vmem:[%s3 + $0x1b0] sm:$0xff] %vm1283, %v1237
  %1339 = vst.msk [vmem:[%s3 + $0x1b8] sm:$0xff] %vm1283, %v1238
  %1340 = vst.msk [vmem:[%s3 + $0x1c0] sm:$0xff] %vm1283, %v1239
  %1341 = vst.msk [vmem:[%s3 + $0x1c8] sm:$0xff] %vm1283, %v1240
  %1342 = vst.msk [vmem:[%s3 + $0x1d0] sm:$0xff] %vm1283, %v1241
  %1343 = vst.msk [vmem:[%s3 + $0x1d8] sm:$0xff] %vm1283, %v1242
  %1344 = vst.msk [vmem:[%s3 + $0x1e0] sm:$0xff] %vm1283, %v1243
  %1345 = vst.msk [vmem:[%s3 + $0x1e8] sm:$0xff] %vm1283, %v1244
  %1346 = vst.msk [vmem:[%s3 + $0x1f0] sm:$0xff] %vm1283, %v1245
  %1347 = vst.msk [vmem:[%s3 + $0x1f8] sm:$0xff] %vm1283, %v1246
  %1348 = vst.msk [vmem:[%s3 + $0x200] sm:$0xff] %vm1283, %v1247
  %1349 = vst.msk [vmem:[%s3 + $0x208] sm:$0xff] %vm1283, %v1248
  %1350 = vst.msk [vmem:[%s3 + $0x210] sm:$0xff] %vm1283, %v1249
  %1351 = vst.msk [vmem:[%s3 + $0x218] sm:$0xff] %vm1283, %v1250
  %1352 = vst.msk [vmem:[%s3 + $0x220] sm:$0xff] %vm1283, %v1251
  %1353 = vst.msk [vmem:[%s3 + $0x228] sm:$0xff] %vm1283, %v1252
  %1354 = vst.msk [vmem:[%s3 + $0x230] sm:$0xff] %vm1283, %v1253
  %1355 = vst.msk [vmem:[%s3 + $0x238] sm:$0xff] %vm1283, %v1254
  %1356 = vst.msk [vmem:[%s3 + $0x240] sm:$0xff] %vm1283, %v1255
  %1357 = vst.msk [vmem:[%s3 + $0x248] sm:$0xff] %vm1283, %v1256
  %1358 = vst.msk [vmem:[%s3 + $0x250] sm:$0xff] %vm1283, %v1257
  %1359 = vst.msk [vmem:[%s3 + $0x258] sm:$0xff] %vm1283, %v1258
  %1360 = vst.msk [vmem:[%s3 + $0x260] sm:$0xff] %vm1283, %v1259
  %1361 = vst.msk [vmem:[%s3 + $0x268] sm:$0xff] %vm1283, %v1260
  %1362 = vst.msk [vmem:[%s3 + $0x270] sm:$0xff] %vm1283, %v1261
  %1363 = vst.msk [vmem:[%s3 + $0x278] sm:$0xff] %vm1283, %v1262
  %1364 = vst.msk [vmem:[%s3 + $0x280] sm:$0xff] %vm1283, %v1263
  %1365 = vst.msk [vmem:[%s3 + $0x288] sm:$0xff] %vm1283, %v1264
  %1366 = vst.msk [vmem:[%s3 + $0x290] sm:$0xff] %vm1283, %v1265
  %1367 = vst.msk [vmem:[%s3 + $0x298] sm:$0xff] %vm1283, %v1266
  %1368 = vst.msk [vmem:[%s3 + $0x2a0] sm:$0xff] %vm1283, %v1267
  %1369 = vst.msk [vmem:[%s3 + $0x2a8] sm:$0xff] %vm1283, %v1268
  %1370 = vst.msk [vmem:[%s3 + $0x2b0] sm:$0xff] %vm1283, %v1269
  %1371 = vst.msk [vmem:[%s3 + $0x2b8] sm:$0xff] %vm1283, %v1270
  %1372 = vst.msk [vmem:[%s3 + $0x2c0] sm:$0xff] %vm1283, %v1271
  %1373 = vst.msk [vmem:[%s3 + $0x2c8] sm:$0xff] %vm1283, %v1272
  %1374 = vst.msk [vmem:[%s3 + $0x2d0] sm:$0xff] %vm1283, %v1273
  %1375 = vst.msk [vmem:[%s3 + $0x2d8] sm:$0xff] %vm1283, %v1274
  %1376 = vst.msk [vmem:[%s3 + $0x2e0] sm:$0xff] %vm1283, %v1275
  %1377 = vst.msk [vmem:[%s3 + $0x2e8] sm:$0xff] %vm1283, %v1276
  %1378 = vst.msk [vmem:[%s3 + $0x2f0] sm:$0xff] %vm1283, %v1277
  %1379 = vst.msk [vmem:[%s3 + $0x2f8] sm:$0xff] %vm1283, %v1278
  %1380 = vst.msk [vmem:[%s3 + $0x300] sm:$0xff] %vm1283, %v1279
  %1381 = vst.msk [vmem:[%s3 + $0x308] sm:$0xff] %vm1283, %v1280
  %1382 = vst.msk [vmem:[%s3 + $0x310] sm:$0xff] %vm1283, %v1281
  %1383 = vst.msk [vmem:[%s3 + $0x318] sm:$0xff] %vm1283, %v1282
  // Predicated region
  $region14: #{dqn_forward.4} parent=0 // pred_check
    _
  $region15: #{dqn_forward.4} parent=0 // pred_check_branch
    %1385 = sbr.rel (0) target = $region17
  $region16: #{dqn_forward.4} parent=0 // pred_region
    _
  $region17: #{dqn_forward.4} parent=0 // pred_fallthru
    _
  // Predicated region
  $region18: #{dqn_forward.4} parent=0 // pred_check
    _
  $region19: #{dqn_forward.4} parent=0 // pred_check_branch
    %1387 = sbr.rel (0) target = $region21
  $region20: #{dqn_forward.4} parent=0 // pred_region
    _
  $region21: #{dqn_forward.4} parent=0 // pred_fallthru
    _

// kernel: dqn_forward.5
$region0: #{dqn_forward.5}
  #allocation0 [shape = 'u32[]', space=smem, size = 0x4, offset = 0x4, fixed_abs, tag = 'smem constant byte address 0x4 - core index']
  #allocation1 [shape = 'u32[144,128]{1,0:T(1,128)}', space=vmem, size = 0x12000, scoped, tag = 'internal scratch']
  %s0 = inlined_call_operand.vmem [shape: bf16[168,512], index: 0, kind: input, shape index: {}]
  %s1 = inlined_call_operand.vmem [shape: bf16[512,64], index: 1, kind: input, shape index: {}]
  %s2 = inlined_call_operand.vmem [shape: f32[1,64], index: 2, kind: input, shape index: {}]
  %s3 = inlined_call_operand.vmem [shape: f32[168,64], index: 3, kind: output, shape index: {}]
  %s4 = sld [smem:[#allocation0]]
  $region22: #{dqn_forward.5} parent=0
    _
  %s6 = ssub.s32 1, %s4
  %s7 = scalar_select 0, %s6, %s4
  // Predicated region
  $region2: #{dqn_forward.5} parent=0 // pred_check
    _
  $region3: #{dqn_forward.5} parent=0 // pred_check_branch
    %9 = sbr.rel (0) target = $region5
  $region4: #{dqn_forward.5} parent=0 // pred_region
    _
  $region5: #{dqn_forward.5} parent=0 // pred_fallthru
    _
  // Predicated region
  $region6: #{dqn_forward.5} parent=0 // pred_check
    _
  $region7: #{dqn_forward.5} parent=0 // pred_check_branch
    %11 = sbr.rel (0) target = $region9
  $region8: #{dqn_forward.5} parent=0 // pred_region
    _
  $region9: #{dqn_forward.5} parent=0 // pred_fallthru
    _
  // Predicated region
  $region10: #{dqn_forward.5} parent=0 // pred_check
    _
  $region11: #{dqn_forward.5} parent=0 // pred_check_branch
    %13 = sbr.rel (0) target = $region13
  $region12: #{dqn_forward.5} parent=0 // pred_region
    _
  $region13: #{dqn_forward.5} parent=0 // pred_fallthru
    _
  %v15 = vld [vmem:[%s0] sm:$0xff]
  %v16 = vld [vmem:[%s0 + $0x8] sm:$0xff]
  %v17 = vld [vmem:[%s0 + $0x10] sm:$0xff]
  %v18 = vld [vmem:[%s0 + $0x18] sm:$0xff]
  %v19 = vld [vmem:[%s0 + $0x20] sm:$0xff]
  %v20 = vld [vmem:[%s0 + $0x28] sm:$0xff]
  %v21 = vld [vmem:[%s0 + $0x30] sm:$0xff]
  %v22 = vld [vmem:[%s0 + $0x38] sm:$0xff]
  %v23 = vld [vmem:[%s0 + $0x40] sm:$0xff]
  %v24 = vld [vmem:[%s0 + $0x48] sm:$0xff]
  %v25 = vld [vmem:[%s0 + $0x50] sm:$0xff]
  %v26 = vld [vmem:[%s0 + $0x58] sm:$0xff]
  %v27 = vld [vmem:[%s0 + $0x60] sm:$0xff]
  %v28 = vld [vmem:[%s0 + $0x68] sm:$0xff]
  %v29 = vld [vmem:[%s0 + $0x70] sm:$0xff]
  %v30 = vld [vmem:[%s0 + $0x78] sm:$0xff]
  %v31 = vld [vmem:[%s0 + $0x80] sm:$0xff]
  %v32 = vld [vmem:[%s0 + $0x88] sm:$0xff]
  %v33 = vld [vmem:[%s0 + $0x90] sm:$0xff]
  %v34 = vld [vmem:[%s0 + $0x98] sm:$0xff]
  %v35 = vld [vmem:[%s0 + $0xa0] sm:$0xff]
  %v36 = vld [vmem:[%s0 + $0xa8] sm:$0xff]
  %v37 = vld [vmem:[%s0 + $0xb0] sm:$0xff]
  %v38 = vld [vmem:[%s0 + $0xb8] sm:$0xff]
  %v39 = vld [vmem:[%s0 + $0xc0] sm:$0xff]
  %v40 = vld [vmem:[%s0 + $0xc8] sm:$0xff]
  %v41 = vld [vmem:[%s0 + $0xd0] sm:$0xff]
  %v42 = vld [vmem:[%s0 + $0xd8] sm:$0xff]
  %v43 = vld [vmem:[%s0 + $0xe0] sm:$0xff]
  %v44 = vld [vmem:[%s0 + $0xe8] sm:$0xff]
  %v45 = vld [vmem:[%s0 + $0xf0] sm:$0xff]
  %v46 = vld [vmem:[%s0 + $0xf8] sm:$0xff]
  %v47 = vld [vmem:[%s0 + $0x100] sm:$0xff]
  %v48 = vld [vmem:[%s0 + $0x108] sm:$0xff]
  %v49 = vld [vmem:[%s0 + $0x110] sm:$0xff]
  %v50 = vld [vmem:[%s0 + $0x118] sm:$0xff]
  %v51 = vld [vmem:[%s0 + $0x120] sm:$0xff]
  %v52 = vld [vmem:[%s0 + $0x128] sm:$0xff]
  %v53 = vld [vmem:[%s0 + $0x130] sm:$0xff]
  %v54 = vld [vmem:[%s0 + $0x138] sm:$0xff]
  %v55 = vld [vmem:[%s0 + $0x140] sm:$0xff]
  %v56 = vld [vmem:[%s0 + $0x148] sm:$0xff]
  %v57 = vld [vmem:[%s1] sm:$0xf]
  %v58 = vld [vmem:[%s1 + $0x4] sm:$0xf]
  %v59 = vld [vmem:[%s1 + $0x8] sm:$0xf]
  %v60 = vld [vmem:[%s1 + $0xc] sm:$0xf]
  %v61 = vld [vmem:[%s1 + $0x10] sm:$0xf]
  %v62 = vld [vmem:[%s1 + $0x14] sm:$0xf]
  %v63 = vld [vmem:[%s1 + $0x18] sm:$0xf]
  %v64 = vld [vmem:[%s1 + $0x1c] sm:$0xf]
  %v65 = vld [vmem:[%s1 + $0x20] sm:$0xf]
  %v66 = vld [vmem:[%s1 + $0x24] sm:$0xf]
  %v67 = vld [vmem:[%s1 + $0x28] sm:$0xf]
  %v68 = vld [vmem:[%s1 + $0x2c] sm:$0xf]
  %v69 = vld [vmem:[%s1 + $0x30] sm:$0xf]
  %v70 = vld [vmem:[%s1 + $0x34] sm:$0xf]
  %v71 = vld [vmem:[%s1 + $0x38] sm:$0xf]
  %v72 = vld [vmem:[%s1 + $0x3c] sm:$0xf]
  %v73 = vld [vmem:[%s1 + $0x40] sm:$0xf]
  %v74 = vld [vmem:[%s1 + $0x44] sm:$0xf]
  %v75 = vld [vmem:[%s1 + $0x48] sm:$0xf]
  %v76 = vld [vmem:[%s1 + $0x4c] sm:$0xf]
  %v77 = vld [vmem:[%s1 + $0x50] sm:$0xf]
  %v78 = vld [vmem:[%s1 + $0x54] sm:$0xf]
  %v79 = vld [vmem:[%s1 + $0x58] sm:$0xf]
  %v80 = vld [vmem:[%s1 + $0x5c] sm:$0xf]
  %v81 = vld [vmem:[%s1 + $0x60] sm:$0xf]
  %v82 = vld [vmem:[%s1 + $0x64] sm:$0xf]
  %v83 = vld [vmem:[%s1 + $0x68] sm:$0xf]
  %v84 = vld [vmem:[%s1 + $0x6c] sm:$0xf]
  %v85 = vld [vmem:[%s1 + $0x70] sm:$0xf]
  %v86 = vld [vmem:[%s1 + $0x74] sm:$0xf]
  %v87 = vld [vmem:[%s1 + $0x78] sm:$0xf]
  %v88 = vld [vmem:[%s1 + $0x7c] sm:$0xf]
  %v89 = vld [vmem:[%s1 + $0x80] sm:$0xf]
  %v90 = vld [vmem:[%s1 + $0x84] sm:$0xf]
  %v91 = vld [vmem:[%s1 + $0x88] sm:$0xf]
  %v92 = vld [vmem:[%s1 + $0x8c] sm:$0xf]
  %v93 = vld [vmem:[%s1 + $0x90] sm:$0xf]
  %v94 = vld [vmem:[%s1 + $0x94] sm:$0xf]
  %v95 = vld [vmem:[%s1 + $0x98] sm:$0xf]
  %v96 = vld [vmem:[%s1 + $0x9c] sm:$0xf]
  %v97 = vld [vmem:[%s1 + $0xa0] sm:$0xf]
  %v98 = vld [vmem:[%s1 + $0xa4] sm:$0xf]
  %v99 = vld [vmem:[%s1 + $0xa8] sm:$0xf]
  %v100 = vld [vmem:[%s1 + $0xac] sm:$0xf]
  %v101 = vld [vmem:[%s1 + $0xb0] sm:$0xf]
  %v102 = vld [vmem:[%s1 + $0xb4] sm:$0xf]
  %v103 = vld [vmem:[%s1 + $0xb8] sm:$0xf]
  %v104 = vld [vmem:[%s1 + $0xbc] sm:$0xf]
  %v105 = vld [vmem:[%s1 + $0xc0] sm:$0xf]
  %v106 = vld [vmem:[%s1 + $0xc4] sm:$0xf]
  %v107 = vld [vmem:[%s1 + $0xc8] sm:$0xf]
  %v108 = vld [vmem:[%s1 + $0xcc] sm:$0xf]
  %v109 = vld [vmem:[%s1 + $0xd0] sm:$0xf]
  %v110 = vld [vmem:[%s1 + $0xd4] sm:$0xf]
  %v111 = vld [vmem:[%s1 + $0xd8] sm:$0xf]
  %v112 = vld [vmem:[%s1 + $0xdc] sm:$0xf]
  %v113 = vld [vmem:[%s1 + $0xe0] sm:$0xf]
  %v114 = vld [vmem:[%s1 + $0xe4] sm:$0xf]
  %v115 = vld [vmem:[%s1 + $0xe8] sm:$0xf]
  %v116 = vld [vmem:[%s1 + $0xec] sm:$0xf]
  %v117 = vld [vmem:[%s1 + $0xf0] sm:$0xf]
  %v118 = vld [vmem:[%s1 + $0xf4] sm:$0xf]
  %v119 = vld [vmem:[%s1 + $0xf8] sm:$0xf]
  %v120 = vld [vmem:[%s1 + $0xfc] sm:$0xf]
  %v121 = vld [vmem:[%s2] sm:$0x1]
  %v123 = vlaneseq
  %v124 = vshrl.u32 %v123, 7
  %v125 = vsub.s32 0, %v124
  %v126 = vrot.slane %v121, %v125
  %v170 = vunpack.c.l.b16 %v15
  %v171 = vunpack.c.h.b16 %v15
  %v172 = vunpack.c.l.b16 %v16
  %v173 = vunpack.c.h.b16 %v16
  %v174 = vunpack.c.l.b16 %v17
  %v175 = vunpack.c.h.b16 %v17
  %v176 = vunpack.c.l.b16 %v18
  %v177 = vunpack.c.h.b16 %v18
  %v178 = vunpack.c.l.b16 %v19
  %v179 = vunpack.c.h.b16 %v19
  %v180 = vunpack.c.l.b16 %v20
  %v181 = vunpack.c.h.b16 %v20
  %v182 = vunpack.c.l.b16 %v21
  %v183 = vunpack.c.h.b16 %v21
  %v184 = vunpack.c.l.b16 %v22
  %v185 = vunpack.c.h.b16 %v22
  %v186 = vunpack.c.l.b16 %v23
  %v187 = vunpack.c.h.b16 %v23
  %v188 = vunpack.c.l.b16 %v24
  %v189 = vunpack.c.h.b16 %v24
  %v190 = vunpack.c.l.b16 %v25
  %v191 = vunpack.c.h.b16 %v25
  %v192 = vunpack.c.l.b16 %v26
  %v193 = vunpack.c.h.b16 %v26
  %v194 = vunpack.c.l.b16 %v27
  %v195 = vunpack.c.h.b16 %v27
  %v196 = vunpack.c.l.b16 %v28
  %v197 = vunpack.c.h.b16 %v28
  %v198 = vunpack.c.l.b16 %v29
  %v199 = vunpack.c.h.b16 %v29
  %v200 = vunpack.c.l.b16 %v30
  %v201 = vunpack.c.h.b16 %v30
  %v202 = vunpack.c.l.b16 %v31
  %v203 = vunpack.c.h.b16 %v31
  %v204 = vunpack.c.l.b16 %v32
  %v205 = vunpack.c.h.b16 %v32
  %v206 = vunpack.c.l.b16 %v33
  %v207 = vunpack.c.h.b16 %v33
  %v208 = vunpack.c.l.b16 %v34
  %v209 = vunpack.c.h.b16 %v34
  %v210 = vunpack.c.l.b16 %v35
  %v211 = vunpack.c.h.b16 %v35
  %v212 = vunpack.c.l.b16 %v36
  %v213 = vunpack.c.h.b16 %v36
  %v214 = vunpack.c.l.b16 %v37
  %v215 = vunpack.c.h.b16 %v37
  %v216 = vunpack.c.l.b16 %v38
  %v217 = vunpack.c.h.b16 %v38
  %v218 = vunpack.c.l.b16 %v39
  %v219 = vunpack.c.h.b16 %v39
  %v220 = vunpack.c.l.b16 %v40
  %v221 = vunpack.c.h.b16 %v40
  %v222 = vunpack.c.l.b16 %v41
  %v223 = vunpack.c.h.b16 %v41
  %v224 = vunpack.c.l.b16 %v42
  %v225 = vunpack.c.h.b16 %v42
  %v226 = vunpack.c.l.b16 %v43
  %v227 = vunpack.c.h.b16 %v43
  %v228 = vunpack.c.l.b16 %v44
  %v229 = vunpack.c.h.b16 %v44
  %v230 = vunpack.c.l.b16 %v45
  %v231 = vunpack.c.h.b16 %v45
  %v232 = vunpack.c.l.b16 %v46
  %v233 = vunpack.c.h.b16 %v46
  %v234 = vunpack.c.l.b16 %v47
  %v235 = vunpack.c.h.b16 %v47
  %v236 = vunpack.c.l.b16 %v48
  %v237 = vunpack.c.h.b16 %v48
  %v238 = vunpack.c.l.b16 %v49
  %v239 = vunpack.c.h.b16 %v49
  %v240 = vunpack.c.l.b16 %v50
  %v241 = vunpack.c.h.b16 %v50
  %v242 = vunpack.c.l.b16 %v51
  %v243 = vunpack.c.h.b16 %v51
  %v244 = vunpack.c.l.b16 %v52
  %v245 = vunpack.c.h.b16 %v52
  %v246 = vunpack.c.l.b16 %v53
  %v247 = vunpack.c.h.b16 %v53
  %v248 = vunpack.c.l.b16 %v54
  %v249 = vunpack.c.h.b16 %v54
  %v250 = vunpack.c.l.b16 %v55
  %v251 = vunpack.c.h.b16 %v55
  %v252 = vunpack.c.l.b16 %v56
  %v253 = vunpack.c.h.b16 %v56
  %v254 = vpack.c.b16 %v174, %v170
  %v255 = vpack.c.b16 %v175, %v171
  %v256 = vpack.c.b16 %v176, %v172
  %v257 = vpack.c.b16 %v177, %v173
  %v258 = vpack.c.b16 %v182, %v178
  %v259 = vpack.c.b16 %v183, %v179
  %v260 = vpack.c.b16 %v184, %v180
  %v261 = vpack.c.b16 %v185, %v181
  %v262 = vpack.c.b16 %v190, %v186
  %v263 = vpack.c.b16 %v191, %v187
  %v264 = vpack.c.b16 %v192, %v188
  %v265 = vpack.c.b16 %v193, %v189
  %v266 = vpack.c.b16 %v198, %v194
  %v267 = vpack.c.b16 %v199, %v195
  %v268 = vpack.c.b16 %v200, %v196
  %v269 = vpack.c.b16 %v201, %v197
  %v270 = vpack.c.b16 %v206, %v202
  %v271 = vpack.c.b16 %v207, %v203
  %v272 = vpack.c.b16 %v208, %v204
  %v273 = vpack.c.b16 %v209, %v205
  %v274 = vpack.c.b16 %v214, %v210
  %v275 = vpack.c.b16 %v215, %v211
  %v276 = vpack.c.b16 %v216, %v212
  %v277 = vpack.c.b16 %v217, %v213
  %v278 = vpack.c.b16 %v222, %v218
  %v279 = vpack.c.b16 %v223, %v219
  %v280 = vpack.c.b16 %v224, %v220
  %v281 = vpack.c.b16 %v225, %v221
  %v282 = vpack.c.b16 %v230, %v226
  %v283 = vpack.c.b16 %v231, %v227
  %v284 = vpack.c.b16 %v232, %v228
  %v285 = vpack.c.b16 %v233, %v229
  %v286 = vpack.c.b16 %v238, %v234
  %v287 = vpack.c.b16 %v239, %v235
  %v288 = vpack.c.b16 %v240, %v236
  %v289 = vpack.c.b16 %v241, %v237
  %v290 = vpack.c.b16 %v246, %v242
  %v291 = vpack.c.b16 %v247, %v243
  %v292 = vpack.c.b16 %v248, %v244
  %v293 = vpack.c.b16 %v249, %v245
  %v294 = vpack.c.b16 %v250, %v250
  %v295 = vpack.c.b16 %v251, %v251
  %v296 = vpack.c.b16 %v252, %v252
  %v297 = vpack.c.b16 %v253, %v253
  %v406 = vunpack.c.l.b16 %v57
  %v407 = vunpack.c.l.b16 %v58
  %v408 = vunpack.c.l.b16 %v59
  %v409 = vunpack.c.l.b16 %v60
  %v410 = vunpack.c.l.b16 %v61
  %v411 = vunpack.c.l.b16 %v62
  %v412 = vunpack.c.l.b16 %v63
  %v413 = vunpack.c.l.b16 %v64
  %v414 = vunpack.c.l.b16 %v65
  %v415 = vunpack.c.l.b16 %v66
  %v416 = vunpack.c.l.b16 %v67
  %v417 = vunpack.c.l.b16 %v68
  %v418 = vunpack.c.l.b16 %v69
  %v419 = vunpack.c.l.b16 %v70
  %v420 = vunpack.c.l.b16 %v71
  %v421 = vunpack.c.l.b16 %v72
  %v422 = vunpack.c.l.b16 %v73
  %v423 = vunpack.c.l.b16 %v74
  %v424 = vunpack.c.l.b16 %v75
  %v425 = vunpack.c.l.b16 %v76
  %v426 = vunpack.c.l.b16 %v77
  %v427 = vunpack.c.l.b16 %v78
  %v428 = vunpack.c.l.b16 %v79
  %v429 = vunpack.c.l.b16 %v80
  %v430 = vunpack.c.l.b16 %v81
  %v431 = vunpack.c.l.b16 %v82
  %v432 = vunpack.c.l.b16 %v83
  %v433 = vunpack.c.l.b16 %v84
  %v434 = vunpack.c.l.b16 %v85
  %v435 = vunpack.c.l.b16 %v86
  %v436 = vunpack.c.l.b16 %v87
  %v437 = vunpack.c.l.b16 %v88
  %v438 = vunpack.c.l.b16 %v89
  %v439 = vunpack.c.l.b16 %v90
  %v440 = vunpack.c.l.b16 %v91
  %v441 = vunpack.c.l.b16 %v92
  %v442 = vunpack.c.l.b16 %v93
  %v443 = vunpack.c.l.b16 %v94
  %v444 = vunpack.c.l.b16 %v95
  %v445 = vunpack.c.l.b16 %v96
  %v446 = vunpack.c.l.b16 %v97
  %v447 = vunpack.c.l.b16 %v98
  %v448 = vunpack.c.l.b16 %v99
  %v449 = vunpack.c.l.b16 %v100
  %v450 = vunpack.c.l.b16 %v101
  %v451 = vunpack.c.l.b16 %v102
  %v452 = vunpack.c.l.b16 %v103
  %v453 = vunpack.c.l.b16 %v104
  %v454 = vunpack.c.l.b16 %v105
  %v455 = vunpack.c.l.b16 %v106
  %v456 = vunpack.c.l.b16 %v107
  %v457 = vunpack.c.l.b16 %v108
  %v458 = vunpack.c.l.b16 %v109
  %v459 = vunpack.c.l.b16 %v110
  %v460 = vunpack.c.l.b16 %v111
  %v461 = vunpack.c.l.b16 %v112
  %v462 = vunpack.c.l.b16 %v113
  %v463 = vunpack.c.l.b16 %v114
  %v464 = vunpack.c.l.b16 %v115
  %v465 = vunpack.c.l.b16 %v116
  %v466 = vunpack.c.l.b16 %v117
  %v467 = vunpack.c.l.b16 %v118
  %v468 = vunpack.c.l.b16 %v119
  %v469 = vunpack.c.l.b16 %v120
  %v470 = vpack.c.b16 %v407, %v406
  %v471 = vpack.c.b16 %v409, %v408
  %v472 = vpack.c.b16 %v411, %v410
  %v473 = vpack.c.b16 %v413, %v412
  %v474 = vpack.c.b16 %v415, %v414
  %v475 = vpack.c.b16 %v417, %v416
  %v476 = vpack.c.b16 %v419, %v418
  %v477 = vpack.c.b16 %v421, %v420
  %v478 = vpack.c.b16 %v423, %v422
  %v479 = vpack.c.b16 %v425, %v424
  %v480 = vpack.c.b16 %v427, %v426
  %v481 = vpack.c.b16 %v429, %v428
  %v482 = vpack.c.b16 %v431, %v430
  %v483 = vpack.c.b16 %v433, %v432
  %v484 = vpack.c.b16 %v435, %v434
  %v485 = vpack.c.b16 %v437, %v436
  %v486 = vpack.c.b16 %v439, %v438
  %v487 = vpack.c.b16 %v441, %v440
  %v488 = vpack.c.b16 %v443, %v442
  %v489 = vpack.c.b16 %v445, %v444
  %v490 = vpack.c.b16 %v447, %v446
  %v491 = vpack.c.b16 %v449, %v448
  %v492 = vpack.c.b16 %v451, %v450
  %v493 = vpack.c.b16 %v453, %v452
  %v494 = vpack.c.b16 %v455, %v454
  %v495 = vpack.c.b16 %v457, %v456
  %v496 = vpack.c.b16 %v459, %v458
  %v497 = vpack.c.b16 %v461, %v460
  %v498 = vpack.c.b16 %v463, %v462
  %v499 = vpack.c.b16 %v465, %v464
  %v500 = vpack.c.b16 %v467, %v466
  %v501 = vpack.c.b16 %v469, %v468
  %534 = vmatprep.subr.bf16.mxu0 0
  %535 = vmatpush1.bf16.msra.mxu0 %v477
  %536 = vmatprep.subr.bf16.mxu0 0
  %537 = vmatpush1.bf16.msra.mxu0 %v476
  %538 = vmatprep.subr.bf16.mxu0 0
  %539 = vmatpush1.bf16.msra.mxu0 %v475
  %540 = vmatprep.subr.bf16.mxu0 0
  %541 = vmatpush1.bf16.msra.mxu0 %v474
  %542 = vmatprep.subr.bf16.mxu0 0
  %543 = vmatpush1.bf16.msra.mxu0 %v473
  %544 = vmatprep.subr.bf16.mxu0 0
  %545 = vmatpush1.bf16.msra.mxu0 %v472
  %546 = vmatprep.subr.bf16.mxu0 0
  %547 = vmatpush1.bf16.msra.mxu0 %v471
  %548 = vmatprep.subr.bf16.mxu0 0
  %549 = vmatpush1.bf16.msra.mxu0 %v470
  %550 = vmatprep.subr.bf16.mxu0 0
  %551 = vmatpush2.bf16.msra.mxu0 %v485
  %552 = vmatprep.subr.bf16.mxu0 0
  %553 = vmatpush2.bf16.msra.mxu0 %v484
  %554 = vmatprep.subr.bf16.mxu0 0
  %555 = vmatpush2.bf16.msra.mxu0 %v483
  %556 = vmatprep.subr.bf16.mxu0 0
  %557 = vmatpush2.bf16.msra.mxu0 %v482
  %558 = vmatprep.subr.bf16.mxu0 0
  %559 = vmatpush2.bf16.msra.mxu0 %v481
  %560 = vmatprep.subr.bf16.mxu0 0
  %561 = vmatpush2.bf16.msra.mxu0 %v480
  %562 = vmatprep.subr.bf16.mxu0 0
  %563 = vmatpush2.bf16.msra.mxu0 %v479
  %564 = vmatprep.subr.bf16.mxu0 0
  %565 = vmatpush2.bf16.msra.mxu0 %v478
  %566 = vmatprep.mubr.bf16.mxu0 %v255
  %567 = vmatmul.mubr.bf16.gmra.mxu0 %v254
  %v568 = vpop.f32.mrf.mxu0
  %v569 = vadd.f32 %v126, %v568
  %v570 = vpop.f32.mrf.mxu0
  %v571 = vpop.f32.mrf.mxu0
  %v572 = vadd.f32 %v126, %v571
  %v573 = vpop.f32.mrf.mxu0
  %574 = vmatprep.mubr.bf16.mxu0 %v259
  %575 = vmatmul.mubr.bf16.gmra.mxu0 %v258
  %v576 = vpop.f32.mrf.mxu0
  %v577 = vadd.f32 %v126, %v576
  %v578 = vpop.f32.mrf.mxu0
  %v579 = vpop.f32.mrf.mxu0
  %v580 = vadd.f32 %v126, %v579
  %v581 = vpop.f32.mrf.mxu0
  %582 = vmatprep.mubr.bf16.mxu0 %v263
  %583 = vmatmul.mubr.bf16.gmra.mxu0 %v262
  %v584 = vpop.f32.mrf.mxu0
  %v585 = vadd.f32 %v126, %v584
  %v586 = vpop.f32.mrf.mxu0
  %v587 = vpop.f32.mrf.mxu0
  %v588 = vadd.f32 %v126, %v587
  %v589 = vpop.f32.mrf.mxu0
  %590 = vmatprep.mubr.bf16.mxu0 %v267
  %591 = vmatmul.mubr.bf16.gmra.mxu0 %v266
  %v592 = vpop.f32.mrf.mxu0
  %v593 = vadd.f32 %v126, %v592
  %v594 = vpop.f32.mrf.mxu0
  %v595 = vpop.f32.mrf.mxu0
  %v596 = vadd.f32 %v126, %v595
  %v597 = vpop.f32.mrf.mxu0
  %598 = vmatprep.mubr.bf16.mxu0 %v271
  %599 = vmatmul.mubr.bf16.gmra.mxu0 %v270
  %v600 = vpop.f32.mrf.mxu0
  %v601 = vadd.f32 %v126, %v600
  %v602 = vpop.f32.mrf.mxu0
  %v603 = vpop.f32.mrf.mxu0
  %v604 = vadd.f32 %v126, %v603
  %v605 = vpop.f32.mrf.mxu0
  %606 = vmatprep.mubr.bf16.mxu0 %v275
  %607 = vmatmul.mubr.bf16.gmra.mxu0 %v274
  %v608 = vpop.f32.mrf.mxu0
  %v609 = vadd.f32 %v126, %v608
  %v610 = vpop.f32.mrf.mxu0
  %v611 = vpop.f32.mrf.mxu0
  %v612 = vadd.f32 %v126, %v611
  %v613 = vpop.f32.mrf.mxu0
  %614 = vmatprep.mubr.bf16.mxu0 %v279
  %615 = vmatmul.mubr.bf16.gmra.mxu0 %v278
  %v616 = vpop.f32.mrf.mxu0
  %v617 = vadd.f32 %v126, %v616
  %v618 = vpop.f32.mrf.mxu0
  %v619 = vpop.f32.mrf.mxu0
  %v620 = vadd.f32 %v126, %v619
  %v621 = vpop.f32.mrf.mxu0
  %622 = vmatprep.mubr.bf16.mxu0 %v283
  %623 = vmatmul.mubr.bf16.gmra.mxu0 %v282
  %v624 = vpop.f32.mrf.mxu0
  %v625 = vadd.f32 %v126, %v624
  %v626 = vpop.f32.mrf.mxu0
  %v627 = vpop.f32.mrf.mxu0
  %v628 = vadd.f32 %v126, %v627
  %v629 = vpop.f32.mrf.mxu0
  %630 = vmatprep.mubr.bf16.mxu0 %v287
  %631 = vmatmul.mubr.bf16.gmra.mxu0 %v286
  %v632 = vpop.f32.mrf.mxu0
  %v633 = vadd.f32 %v126, %v632
  %v634 = vpop.f32.mrf.mxu0
  %v635 = vpop.f32.mrf.mxu0
  %v636 = vadd.f32 %v126, %v635
  %v637 = vpop.f32.mrf.mxu0
  %638 = vmatprep.mubr.bf16.mxu0 %v291
  %639 = vmatmul.mubr.bf16.gmra.mxu0 %v290
  %v640 = vpop.f32.mrf.mxu0
  %v641 = vadd.f32 %v126, %v640
  %v642 = vpop.f32.mrf.mxu0
  %v643 = vpop.f32.mrf.mxu0
  %v644 = vadd.f32 %v126, %v643
  %v645 = vpop.f32.mrf.mxu0
  %646 = vmatprep.mubr.bf16.mxu0 %v295
  %647 = vmatmul.mubr.bf16.gmra.mxu0 %v294
  %v648 = vpop.f32.mrf.mxu0
  %v649 = vadd.f32 %v126, %v648
  %v650 = vpop.f32.mrf.mxu0
  %v651 = vpop.f32.mrf.mxu0
  %v652 = vpop.f32.mrf.mxu0
  %653 = vdwg.mxu0
  %654 = vmatprep.subr.bf16.mxu0 0
  %655 = vmatpush1.bf16.msra.mxu0 %v493
  %656 = vmatprep.subr.bf16.mxu0 0
  %657 = vmatpush1.bf16.msra.mxu0 %v492
  %658 = vmatprep.subr.bf16.mxu0 0
  %659 = vmatpush1.bf16.msra.mxu0 %v491
  %660 = vmatprep.subr.bf16.mxu0 0
  %661 = vmatpush1.bf16.msra.mxu0 %v490
  %662 = vmatprep.subr.bf16.mxu0 0
  %663 = vmatpush1.bf16.msra.mxu0 %v489
  %664 = vmatprep.subr.bf16.mxu0 0
  %665 = vmatpush1.bf16.msra.mxu0 %v488
  %666 = vmatprep.subr.bf16.mxu0 0
  %667 = vmatpush1.bf16.msra.mxu0 %v487
  %668 = vmatprep.subr.bf16.mxu0 0
  %669 = vmatpush1.bf16.msra.mxu0 %v486
  %670 = vmatprep.subr.bf16.mxu0 0
  %671 = vmatpush2.bf16.msra.mxu0 %v501
  %672 = vmatprep.subr.bf16.mxu0 0
  %673 = vmatpush2.bf16.msra.mxu0 %v500
  %674 = vmatprep.subr.bf16.mxu0 0
  %675 = vmatpush2.bf16.msra.mxu0 %v499
  %676 = vmatprep.subr.bf16.mxu0 0
  %677 = vmatpush2.bf16.msra.mxu0 %v498
  %678 = vmatprep.subr.bf16.mxu0 0
  %679 = vmatpush2.bf16.msra.mxu0 %v497
  %680 = vmatprep.subr.bf16.mxu0 0
  %681 = vmatpush2.bf16.msra.mxu0 %v496
  %682 = vmatprep.subr.bf16.mxu0 0
  %683 = vmatpush2.bf16.msra.mxu0 %v495
  %684 = vmatprep.subr.bf16.mxu0 0
  %685 = vmatpush2.bf16.msra.mxu0 %v494
  %686 = vmatprep.mubr.bf16.mxu0 %v257
  %687 = vmatmul.mubr.bf16.gmra.mxu0 %v256
  %v688 = vpop.f32.mrf.mxu0
  %v689 = vadd.f32 %v569, %v688
  %v690 = vpop.f32.mrf.mxu0
  %v691 = vpop.f32.mrf.mxu0
  %v692 = vadd.f32 %v572, %v691
  %v693 = vpop.f32.mrf.mxu0
  %694 = vmatprep.mubr.bf16.mxu0 %v261
  %695 = vmatmul.mubr.bf16.gmra.mxu0 %v260
  %v696 = vpop.f32.mrf.mxu0
  %v697 = vadd.f32 %v577, %v696
  %v698 = vpop.f32.mrf.mxu0
  %v699 = vpop.f32.mrf.mxu0
  %v700 = vadd.f32 %v580, %v699
  %v701 = vpop.f32.mrf.mxu0
  %702 = vmatprep.mubr.bf16.mxu0 %v265
  %703 = vmatmul.mubr.bf16.gmra.mxu0 %v264
  %v704 = vpop.f32.mrf.mxu0
  %v705 = vadd.f32 %v585, %v704
  %v706 = vpop.f32.mrf.mxu0
  %v707 = vpop.f32.mrf.mxu0
  %v708 = vadd.f32 %v588, %v707
  %v709 = vpop.f32.mrf.mxu0
  %710 = vmatprep.mubr.bf16.mxu0 %v269
  %711 = vmatmul.mubr.bf16.gmra.mxu0 %v268
  %v712 = vpop.f32.mrf.mxu0
  %v713 = vadd.f32 %v593, %v712
  %v714 = vpop.f32.mrf.mxu0
  %v715 = vpop.f32.mrf.mxu0
  %v716 = vadd.f32 %v596, %v715
  %v717 = vpop.f32.mrf.mxu0
  %718 = vmatprep.mubr.bf16.mxu0 %v273
  %719 = vmatmul.mubr.bf16.gmra.mxu0 %v272
  %v720 = vpop.f32.mrf.mxu0
  %v721 = vadd.f32 %v601, %v720
  %v722 = vpop.f32.mrf.mxu0
  %v723 = vpop.f32.mrf.mxu0
  %v724 = vadd.f32 %v604, %v723
  %v725 = vpop.f32.mrf.mxu0
  %726 = vmatprep.mubr.bf16.mxu0 %v277
  %727 = vmatmul.mubr.bf16.gmra.mxu0 %v276
  %v728 = vpop.f32.mrf.mxu0
  %v729 = vadd.f32 %v609, %v728
  %v730 = vpop.f32.mrf.mxu0
  %v731 = vpop.f32.mrf.mxu0
  %v732 = vadd.f32 %v612, %v731
  %v733 = vpop.f32.mrf.mxu0
  %734 = vmatprep.mubr.bf16.mxu0 %v281
  %735 = vmatmul.mubr.bf16.gmra.mxu0 %v280
  %v736 = vpop.f32.mrf.mxu0
  %v737 = vadd.f32 %v617, %v736
  %v738 = vpop.f32.mrf.mxu0
  %v739 = vpop.f32.mrf.mxu0
  %v740 = vadd.f32 %v620, %v739
  %v741 = vpop.f32.mrf.mxu0
  %742 = vmatprep.mubr.bf16.mxu0 %v285
  %743 = vmatmul.mubr.bf16.gmra.mxu0 %v284
  %v744 = vpop.f32.mrf.mxu0
  %v745 = vadd.f32 %v625, %v744
  %v746 = vpop.f32.mrf.mxu0
  %v747 = vpop.f32.mrf.mxu0
  %v748 = vadd.f32 %v628, %v747
  %v749 = vpop.f32.mrf.mxu0
  %750 = vmatprep.mubr.bf16.mxu0 %v289
  %751 = vmatmul.mubr.bf16.gmra.mxu0 %v288
  %v752 = vpop.f32.mrf.mxu0
  %v753 = vadd.f32 %v633, %v752
  %v754 = vpop.f32.mrf.mxu0
  %v755 = vpop.f32.mrf.mxu0
  %v756 = vadd.f32 %v636, %v755
  %v757 = vpop.f32.mrf.mxu0
  %758 = vmatprep.mubr.bf16.mxu0 %v293
  %759 = vmatmul.mubr.bf16.gmra.mxu0 %v292
  %v760 = vpop.f32.mrf.mxu0
  %v761 = vadd.f32 %v641, %v760
  %v762 = vpop.f32.mrf.mxu0
  %v763 = vpop.f32.mrf.mxu0
  %v764 = vadd.f32 %v644, %v763
  %v765 = vpop.f32.mrf.mxu0
  %766 = vmatprep.mubr.bf16.mxu0 %v297
  %767 = vmatmul.mubr.bf16.gmra.mxu0 %v296
  %v768 = vpop.f32.mrf.mxu0
  %v769 = vadd.f32 %v649, %v768
  %v770 = vpop.f32.mrf.mxu0
  %v771 = vpop.f32.mrf.mxu0
  %v772 = vpop.f32.mrf.mxu0
  %773 = vdwg.mxu0
  %v774 = vmax.f32 %v689, 0.0
  %v775 = vmax.f32 %v692, 0.0
  %v776 = vmax.f32 %v697, 0.0
  %v777 = vmax.f32 %v700, 0.0
  %v778 = vmax.f32 %v705, 0.0
  %v779 = vmax.f32 %v708, 0.0
  %v780 = vmax.f32 %v713, 0.0
  %v781 = vmax.f32 %v716, 0.0
  %v782 = vmax.f32 %v721, 0.0
  %v783 = vmax.f32 %v724, 0.0
  %v784 = vmax.f32 %v729, 0.0
  %v785 = vmax.f32 %v732, 0.0
  %v786 = vmax.f32 %v737, 0.0
  %v787 = vmax.f32 %v740, 0.0
  %v788 = vmax.f32 %v745, 0.0
  %v789 = vmax.f32 %v748, 0.0
  %v790 = vmax.f32 %v753, 0.0
  %v791 = vmax.f32 %v756, 0.0
  %v792 = vmax.f32 %v761, 0.0
  %v793 = vmax.f32 %v764, 0.0
  %v794 = vmax.f32 %v769, 0.0
  %vm795 = vcmask 523264
  %796 = vst.msk [vmem:[%s3] sm:$0xff] %vm795, %v774
  %797 = vst.msk [vmem:[%s3 + $0x8] sm:$0xff] %vm795, %v775
  %798 = vst.msk [vmem:[%s3 + $0x10] sm:$0xff] %vm795, %v776
  %799 = vst.msk [vmem:[%s3 + $0x18] sm:$0xff] %vm795, %v777
  %800 = vst.msk [vmem:[%s3 + $0x20] sm:$0xff] %vm795, %v778
  %801 = vst.msk [vmem:[%s3 + $0x28] sm:$0xff] %vm795, %v779
  %802 = vst.msk [vmem:[%s3 + $0x30] sm:$0xff] %vm795, %v780
  %803 = vst.msk [vmem:[%s3 + $0x38] sm:$0xff] %vm795, %v781
  %804 = vst.msk [vmem:[%s3 + $0x40] sm:$0xff] %vm795, %v782
  %805 = vst.msk [vmem:[%s3 + $0x48] sm:$0xff] %vm795, %v783
  %806 = vst.msk [vmem:[%s3 + $0x50] sm:$0xff] %vm795, %v784
  %807 = vst.msk [vmem:[%s3 + $0x58] sm:$0xff] %vm795, %v785
  %808 = vst.msk [vmem:[%s3 + $0x60] sm:$0xff] %vm795, %v786
  %809 = vst.msk [vmem:[%s3 + $0x68] sm:$0xff] %vm795, %v787
  %810 = vst.msk [vmem:[%s3 + $0x70] sm:$0xff] %vm795, %v788
  %811 = vst.msk [vmem:[%s3 + $0x78] sm:$0xff] %vm795, %v789
  %812 = vst.msk [vmem:[%s3 + $0x80] sm:$0xff] %vm795, %v790
  %813 = vst.msk [vmem:[%s3 + $0x88] sm:$0xff] %vm795, %v791
  %814 = vst.msk [vmem:[%s3 + $0x90] sm:$0xff] %vm795, %v792
  %815 = vst.msk [vmem:[%s3 + $0x98] sm:$0xff] %vm795, %v793
  %816 = vst.msk [vmem:[%s3 + $0xa0] sm:$0xff] %vm795, %v794
  // Predicated region
  $region14: #{dqn_forward.5} parent=0 // pred_check
    _
  $region15: #{dqn_forward.5} parent=0 // pred_check_branch
    %818 = sbr.rel (0) target = $region17
  $region16: #{dqn_forward.5} parent=0 // pred_region
    _
  $region17: #{dqn_forward.5} parent=0 // pred_fallthru
    _
  // Predicated region
  $region18: #{dqn_forward.5} parent=0 // pred_check
    _
  $region19: #{dqn_forward.5} parent=0 // pred_check_branch
    %820 = sbr.rel (0) target = $region21
  $region20: #{dqn_forward.5} parent=0 // pred_region
    _
  $region21: #{dqn_forward.5} parent=0 // pred_fallthru
    _

// kernel: dqn_forward.6
$region0: #{dqn_forward.6}
  #allocation0 [shape = 'u32[]', space=smem, size = 0x4, offset = 0x4, fixed_abs, tag = 'smem constant byte address 0x4 - core index']
  #allocation1 [shape = 'u32[144,128]{1,0:T(1,128)}', space=vmem, size = 0x12000, scoped, tag = 'internal scratch']
  %s0 = inlined_call_operand.vmem [shape: bf16[104,576], index: 0, kind: input, shape index: {}]
  %s1 = inlined_call_operand.vmem [shape: bf16[576,64], index: 1, kind: input, shape index: {}]
  %s2 = inlined_call_operand.vmem [shape: f32[1,64], index: 2, kind: input, shape index: {}]
  %s3 = inlined_call_operand.vmem [shape: f32[104,64], index: 3, kind: output, shape index: {}]
  %s4 = sld [smem:[#allocation0]]
  $region22: #{dqn_forward.6} parent=0
    _
  %s6 = ssub.s32 1, %s4
  %s7 = scalar_select 0, %s6, %s4
  // Predicated region
  $region2: #{dqn_forward.6} parent=0 // pred_check
    _
  $region3: #{dqn_forward.6} parent=0 // pred_check_branch
    %9 = sbr.rel (0) target = $region5
  $region4: #{dqn_forward.6} parent=0 // pred_region
    _
  $region5: #{dqn_forward.6} parent=0 // pred_fallthru
    _
  // Predicated region
  $region6: #{dqn_forward.6} parent=0 // pred_check
    _
  $region7: #{dqn_forward.6} parent=0 // pred_check_branch
    %11 = sbr.rel (0) target = $region9
  $region8: #{dqn_forward.6} parent=0 // pred_region
    _
  $region9: #{dqn_forward.6} parent=0 // pred_fallthru
    _
  // Predicated region
  $region10: #{dqn_forward.6} parent=0 // pred_check
    _
  $region11: #{dqn_forward.6} parent=0 // pred_check_branch
    %13 = sbr.rel (0) target = $region13
  $region12: #{dqn_forward.6} parent=0 // pred_region
    _
  $region13: #{dqn_forward.6} parent=0 // pred_fallthru
    _
  %v15 = vld [vmem:[%s0] sm:$0xff]
  %v16 = vld [vmem:[%s0 + $0x8] sm:$0xff]
  %v17 = vld [vmem:[%s0 + $0x10] sm:$0xf]
  %v18 = vld [vmem:[%s0 + $0x14] sm:$0xff]
  %v19 = vld [vmem:[%s0 + $0x1c] sm:$0xff]
  %v20 = vld [vmem:[%s0 + $0x24] sm:$0xf]
  %v21 = vld [vmem:[%s0 + $0x28] sm:$0xff]
  %v22 = vld [vmem:[%s0 + $0x30] sm:$0xff]
  %v23 = vld [vmem:[%s0 + $0x38] sm:$0xf]
  %v24 = vld [vmem:[%s0 + $0x3c] sm:$0xff]
  %v25 = vld [vmem:[%s0 + $0x44] sm:$0xff]
  %v26 = vld [vmem:[%s0 + $0x4c] sm:$0xf]
  %v27 = vld [vmem:[%s0 + $0x50] sm:$0xff]
  %v28 = vld [vmem:[%s0 + $0x58] sm:$0xff]
  %v29 = vld [vmem:[%s0 + $0x60] sm:$0xf]
  %v30 = vld [vmem:[%s0 + $0x64] sm:$0xff]
  %v31 = vld [vmem:[%s0 + $0x6c] sm:$0xff]
  %v32 = vld [vmem:[%s0 + $0x74] sm:$0xf]
  %v33 = vld [vmem:[%s0 + $0x78] sm:$0xff]
  %v34 = vld [vmem:[%s0 + $0x80] sm:$0xff]
  %v35 = vld [vmem:[%s0 + $0x88] sm:$0xf]
  %v36 = vld [vmem:[%s0 + $0x8c] sm:$0xff]
  %v37 = vld [vmem:[%s0 + $0x94] sm:$0xff]
  %v38 = vld [vmem:[%s0 + $0x9c] sm:$0xf]
  %v39 = vld [vmem:[%s0 + $0xa0] sm:$0xff]
  %v40 = vld [vmem:[%s0 + $0xa8] sm:$0xff]
  %v41 = vld [vmem:[%s0 + $0xb0] sm:$0xf]
  %v42 = vld [vmem:[%s0 + $0xb4] sm:$0xff]
  %v43 = vld [vmem:[%s0 + $0xbc] sm:$0xff]
  %v44 = vld [vmem:[%s0 + $0xc4] sm:$0xf]
  %v45 = vld [vmem:[%s0 + $0xc8] sm:$0xff]
  %v46 = vld [vmem:[%s0 + $0xd0] sm:$0xff]
  %v47 = vld [vmem:[%s0 + $0xd8] sm:$0xf]
  %v48 = vld [vmem:[%s0 + $0xdc] sm:$0xff]
  %v49 = vld [vmem:[%s0 + $0xe4] sm:$0xff]
  %v50 = vld [vmem:[%s0 + $0xec] sm:$0xf]
  %v51 = vld [vmem:[%s0 + $0xf0] sm:$0xff]
  %v52 = vld [vmem:[%s0 + $0xf8] sm:$0xff]
  %v53 = vld [vmem:[%s0 + $0x100] sm:$0xf]
  %v54 = vld [vmem:[%s1] sm:$0xf]
  %v55 = vld [vmem:[%s1 + $0x4] sm:$0xf]
  %v56 = vld [vmem:[%s1 + $0x8] sm:$0xf]
  %v57 = vld [vmem:[%s1 + $0xc] sm:$0xf]
  %v58 = vld [vmem:[%s1 + $0x10] sm:$0xf]
  %v59 = vld [vmem:[%s1 + $0x14] sm:$0xf]
  %v60 = vld [vmem:[%s1 + $0x18] sm:$0xf]
  %v61 = vld [vmem:[%s1 + $0x1c] sm:$0xf]
  %v62 = vld [vmem:[%s1 + $0x20] sm:$0xf]
  %v63 = vld [vmem:[%s1 + $0x24] sm:$0xf]
  %v64 = vld [vmem:[%s1 + $0x28] sm:$0xf]
  %v65 = vld [vmem:[%s1 + $0x2c] sm:$0xf]
  %v66 = vld [vmem:[%s1 + $0x30] sm:$0xf]
  %v67 = vld [vmem:[%s1 + $0x34] sm:$0xf]
  %v68 = vld [vmem:[%s1 + $0x38] sm:$0xf]
  %v69 = vld [vmem:[%s1 + $0x3c] sm:$0xf]
  %v70 = vld [vmem:[%s1 + $0x40] sm:$0xf]
  %v71 = vld [vmem:[%s1 + $0x44] sm:$0xf]
  %v72 = vld [vmem:[%s1 + $0x48] sm:$0xf]
  %v73 = vld [vmem:[%s1 + $0x4c] sm:$0xf]
  %v74 = vld [vmem:[%s1 + $0x50] sm:$0xf]
  %v75 = vld [vmem:[%s1 + $0x54] sm:$0xf]
  %v76 = vld [vmem:[%s1 + $0x58] sm:$0xf]
  %v77 = vld [vmem:[%s1 + $0x5c] sm:$0xf]
  %v78 = vld [vmem:[%s1 + $0x60] sm:$0xf]
  %v79 = vld [vmem:[%s1 + $0x64] sm:$0xf]
  %v80 = vld [vmem:[%s1 + $0x68] sm:$0xf]
  %v81 = vld [vmem:[%s1 + $0x6c] sm:$0xf]
  %v82 = vld [vmem:[%s1 + $0x70] sm:$0xf]
  %v83 = vld [vmem:[%s1 + $0x74] sm:$0xf]
  %v84 = vld [vmem:[%s1 + $0x78] sm:$0xf]
  %v85 = vld [vmem:[%s1 + $0x7c] sm:$0xf]
  %v86 = vld [vmem:[%s1 + $0x80] sm:$0xf]
  %v87 = vld [vmem:[%s1 + $0x84] sm:$0xf]
  %v88 = vld [vmem:[%s1 + $0x88] sm:$0xf]
  %v89 = vld [vmem:[%s1 + $0x8c] sm:$0xf]
  %v90 = vld [vmem:[%s1 + $0x90] sm:$0xf]
  %v91 = vld [vmem:[%s1 + $0x94] sm:$0xf]
  %v92 = vld [vmem:[%s1 + $0x98] sm:$0xf]
  %v93 = vld [vmem:[%s1 + $0x9c] sm:$0xf]
  %v94 = vld [vmem:[%s1 + $0xa0] sm:$0xf]
  %v95 = vld [vmem:[%s1 + $0xa4] sm:$0xf]
  %v96 = vld [vmem:[%s1 + $0xa8] sm:$0xf]
  %v97 = vld [vmem:[%s1 + $0xac] sm:$0xf]
  %v98 = vld [vmem:[%s1 + $0xb0] sm:$0xf]
  %v99 = vld [vmem:[%s1 + $0xb4] sm:$0xf]
  %v100 = vld [vmem:[%s1 + $0xb8] sm:$0xf]
  %v101 = vld [vmem:[%s1 + $0xbc] sm:$0xf]
  %v102 = vld [vmem:[%s1 + $0xc0] sm:$0xf]
  %v103 = vld [vmem:[%s1 + $0xc4] sm:$0xf]
  %v104 = vld [vmem:[%s1 + $0xc8] sm:$0xf]
  %v105 = vld [vmem:[%s1 + $0xcc] sm:$0xf]
  %v106 = vld [vmem:[%s1 + $0xd0] sm:$0xf]
  %v107 = vld [vmem:[%s1 + $0xd4] sm:$0xf]
  %v108 = vld [vmem:[%s1 + $0xd8] sm:$0xf]
  %v109 = vld [vmem:[%s1 + $0xdc] sm:$0xf]
  %v110 = vld [vmem:[%s1 + $0xe0] sm:$0xf]
  %v111 = vld [vmem:[%s1 + $0xe4] sm:$0xf]
  %v112 = vld [vmem:[%s1 + $0xe8] sm:$0xf]
  %v113 = vld [vmem:[%s1 + $0xec] sm:$0xf]
  %v114 = vld [vmem:[%s1 + $0xf0] sm:$0xf]
  %v115 = vld [vmem:[%s1 + $0xf4] sm:$0xf]
  %v116 = vld [vmem:[%s1 + $0xf8] sm:$0xf]
  %v117 = vld [vmem:[%s1 + $0xfc] sm:$0xf]
  %v118 = vld [vmem:[%s1 + $0x100] sm:$0xf]
  %v119 = vld [vmem:[%s1 + $0x104] sm:$0xf]
  %v120 = vld [vmem:[%s1 + $0x108] sm:$0xf]
  %v121 = vld [vmem:[%s1 + $0x10c] sm:$0xf]
  %v122 = vld [vmem:[%s1 + $0x110] sm:$0xf]
  %v123 = vld [vmem:[%s1 + $0x114] sm:$0xf]
  %v124 = vld [vmem:[%s1 + $0x118] sm:$0xf]
  %v125 = vld [vmem:[%s1 + $0x11c] sm:$0xf]
  %v126 = vld [vmem:[%s2] sm:$0x1]
  %v128 = vlaneseq
  %v129 = vshrl.u32 %v128, 7
  %v130 = vsub.s32 0, %v129
  %v131 = vrot.slane %v126, %v130
  %v172 = vunpack.c.l.b16 %v15
  %v173 = vunpack.c.h.b16 %v15
  %v174 = vunpack.c.l.b16 %v16
  %v175 = vunpack.c.h.b16 %v16
  %v176 = vunpack.c.l.b16 %v17
  %v177 = vunpack.c.l.b16 %v18
  %v178 = vunpack.c.h.b16 %v18
  %v179 = vunpack.c.l.b16 %v19
  %v180 = vunpack.c.h.b16 %v19
  %v181 = vunpack.c.l.b16 %v20
  %v182 = vunpack.c.l.b16 %v21
  %v183 = vunpack.c.h.b16 %v21
  %v184 = vunpack.c.l.b16 %v22
  %v185 = vunpack.c.h.b16 %v22
  %v186 = vunpack.c.l.b16 %v23
  %v187 = vunpack.c.l.b16 %v24
  %v188 = vunpack.c.h.b16 %v24
  %v189 = vunpack.c.l.b16 %v25
  %v190 = vunpack.c.h.b16 %v25
  %v191 = vunpack.c.l.b16 %v26
  %v192 = vunpack.c.l.b16 %v27
  %v193 = vunpack.c.h.b16 %v27
  %v194 = vunpack.c.l.b16 %v28
  %v195 = vunpack.c.h.b16 %v28
  %v196 = vunpack.c.l.b16 %v29
  %v197 = vunpack.c.l.b16 %v30
  %v198 = vunpack.c.h.b16 %v30
  %v199 = vunpack.c.l.b16 %v31
  %v200 = vunpack.c.h.b16 %v31
  %v201 = vunpack.c.l.b16 %v32
  %v202 = vunpack.c.l.b16 %v33
  %v203 = vunpack.c.h.b16 %v33
  %v204 = vunpack.c.l.b16 %v34
  %v205 = vunpack.c.h.b16 %v34
  %v206 = vunpack.c.l.b16 %v35
  %v207 = vunpack.c.l.b16 %v36
  %v208 = vunpack.c.h.b16 %v36
  %v209 = vunpack.c.l.b16 %v37
  %v210 = vunpack.c.h.b16 %v37
  %v211 = vunpack.c.l.b16 %v38
  %v212 = vunpack.c.l.b16 %v39
  %v213 = vunpack.c.h.b16 %v39
  %v214 = vunpack.c.l.b16 %v40
  %v215 = vunpack.c.h.b16 %v40
  %v216 = vunpack.c.l.b16 %v41
  %v217 = vunpack.c.l.b16 %v42
  %v218 = vunpack.c.h.b16 %v42
  %v219 = vunpack.c.l.b16 %v43
  %v220 = vunpack.c.h.b16 %v43
  %v221 = vunpack.c.l.b16 %v44
  %v222 = vunpack.c.l.b16 %v45
  %v223 = vunpack.c.h.b16 %v45
  %v224 = vunpack.c.l.b16 %v46
  %v225 = vunpack.c.h.b16 %v46
  %v226 = vunpack.c.l.b16 %v47
  %v227 = vunpack.c.l.b16 %v48
  %v228 = vunpack.c.h.b16 %v48
  %v229 = vunpack.c.l.b16 %v49
  %v230 = vunpack.c.h.b16 %v49
  %v231 = vunpack.c.l.b16 %v50
  %v232 = vunpack.c.l.b16 %v51
  %v233 = vunpack.c.h.b16 %v51
  %v234 = vunpack.c.l.b16 %v52
  %v235 = vunpack.c.h.b16 %v52
  %v236 = vunpack.c.l.b16 %v53
  %v237 = vpack.c.b16 %v177, %v172
  %v238 = vpack.c.b16 %v178, %v173
  %v239 = vpack.c.b16 %v179, %v174
  %v240 = vpack.c.b16 %v180, %v175
  %v241 = vpack.c.b16 %v181, %v176
  %v242 = vpack.c.b16 %v187, %v182
  %v243 = vpack.c.b16 %v188, %v183
  %v244 = vpack.c.b16 %v189, %v184
  %v245 = vpack.c.b16 %v190, %v185
  %v246 = vpack.c.b16 %v191, %v186
  %v247 = vpack.c.b16 %v197, %v192
  %v248 = vpack.c.b16 %v198, %v193
  %v249 = vpack.c.b16 %v199, %v194
  %v250 = vpack.c.b16 %v200, %v195
  %v251 = vpack.c.b16 %v201, %v196
  %v252 = vpack.c.b16 %v207, %v202
  %v253 = vpack.c.b16 %v208, %v203
  %v254 = vpack.c.b16 %v209, %v204
  %v255 = vpack.c.b16 %v210, %v205
  %v256 = vpack.c.b16 %v211, %v206
  %v257 = vpack.c.b16 %v217, %v212
  %v258 = vpack.c.b16 %v218, %v213
  %v259 = vpack.c.b16 %v219, %v214
  %v260 = vpack.c.b16 %v220, %v215
  %v261 = vpack.c.b16 %v221, %v216
  %v262 = vpack.c.b16 %v227, %v222
  %v263 = vpack.c.b16 %v228, %v223
  %v264 = vpack.c.b16 %v229, %v224
  %v265 = vpack.c.b16 %v230, %v225
  %v266 = vpack.c.b16 %v231, %v226
  %v267 = vpack.c.b16 %v232, %v232
  %v268 = vpack.c.b16 %v233, %v233
  %v269 = vpack.c.b16 %v234, %v234
  %v270 = vpack.c.b16 %v235, %v235
  %v271 = vpack.c.b16 %v236, %v236
  %v372 = vunpack.c.l.b16 %v54
  %v373 = vunpack.c.l.b16 %v55
  %v374 = vunpack.c.l.b16 %v56
  %v375 = vunpack.c.l.b16 %v57
  %v376 = vunpack.c.l.b16 %v58
  %v377 = vunpack.c.l.b16 %v59
  %v378 = vunpack.c.l.b16 %v60
  %v379 = vunpack.c.l.b16 %v61
  %v380 = vunpack.c.l.b16 %v62
  %v381 = vunpack.c.l.b16 %v63
  %v382 = vunpack.c.l.b16 %v64
  %v383 = vunpack.c.l.b16 %v65
  %v384 = vunpack.c.l.b16 %v66
  %v385 = vunpack.c.l.b16 %v67
  %v386 = vunpack.c.l.b16 %v68
  %v387 = vunpack.c.l.b16 %v69
  %v388 = vunpack.c.l.b16 %v70
  %v389 = vunpack.c.l.b16 %v71
  %v390 = vunpack.c.l.b16 %v72
  %v391 = vunpack.c.l.b16 %v73
  %v392 = vunpack.c.l.b16 %v74
  %v393 = vunpack.c.l.b16 %v75
  %v394 = vunpack.c.l.b16 %v76
  %v395 = vunpack.c.l.b16 %v77
  %v396 = vunpack.c.l.b16 %v78
  %v397 = vunpack.c.l.b16 %v79
  %v398 = vunpack.c.l.b16 %v80
  %v399 = vunpack.c.l.b16 %v81
  %v400 = vunpack.c.l.b16 %v82
  %v401 = vunpack.c.l.b16 %v83
  %v402 = vunpack.c.l.b16 %v84
  %v403 = vunpack.c.l.b16 %v85
  %v404 = vunpack.c.l.b16 %v86
  %v405 = vunpack.c.l.b16 %v87
  %v406 = vunpack.c.l.b16 %v88
  %v407 = vunpack.c.l.b16 %v89
  %v408 = vunpack.c.l.b16 %v90
  %v409 = vunpack.c.l.b16 %v91
  %v410 = vunpack.c.l.b16 %v92
  %v411 = vunpack.c.l.b16 %v93
  %v412 = vunpack.c.l.b16 %v94
  %v413 = vunpack.c.l.b16 %v95
  %v414 = vunpack.c.l.b16 %v96
  %v415 = vunpack.c.l.b16 %v97
  %v416 = vunpack.c.l.b16 %v98
  %v417 = vunpack.c.l.b16 %v99
  %v418 = vunpack.c.l.b16 %v100
  %v419 = vunpack.c.l.b16 %v101
  %v420 = vunpack.c.l.b16 %v102
  %v421 = vunpack.c.l.b16 %v103
  %v422 = vunpack.c.l.b16 %v104
  %v423 = vunpack.c.l.b16 %v105
  %v424 = vunpack.c.l.b16 %v106
  %v425 = vunpack.c.l.b16 %v107
  %v426 = vunpack.c.l.b16 %v108
  %v427 = vunpack.c.l.b16 %v109
  %v428 = vunpack.c.l.b16 %v110
  %v429 = vunpack.c.l.b16 %v111
  %v430 = vunpack.c.l.b16 %v112
  %v431 = vunpack.c.l.b16 %v113
  %v432 = vunpack.c.l.b16 %v114
  %v433 = vunpack.c.l.b16 %v115
  %v434 = vunpack.c.l.b16 %v116
  %v435 = vunpack.c.l.b16 %v117
  %v436 = vunpack.c.l.b16 %v118
  %v437 = vunpack.c.l.b16 %v119
  %v438 = vunpack.c.l.b16 %v120
  %v439 = vunpack.c.l.b16 %v121
  %v440 = vunpack.c.l.b16 %v122
  %v441 = vunpack.c.l.b16 %v123
  %v442 = vunpack.c.l.b16 %v124
  %v443 = vunpack.c.l.b16 %v125
  %v444 = vpack.c.b16 %v373, %v372
  %v445 = vpack.c.b16 %v375, %v374
  %v446 = vpack.c.b16 %v377, %v376
  %v447 = vpack.c.b16 %v379, %v378
  %v448 = vpack.c.b16 %v381, %v380
  %v449 = vpack.c.b16 %v383, %v382
  %v450 = vpack.c.b16 %v385, %v384
  %v451 = vpack.c.b16 %v387, %v386
  %v452 = vpack.c.b16 %v389, %v388
  %v453 = vpack.c.b16 %v391, %v390
  %v454 = vpack.c.b16 %v393, %v392
  %v455 = vpack.c.b16 %v395, %v394
  %v456 = vpack.c.b16 %v397, %v396
  %v457 = vpack.c.b16 %v399, %v398
  %v458 = vpack.c.b16 %v401, %v400
  %v459 = vpack.c.b16 %v403, %v402
  %v460 = vpack.c.b16 %v405, %v404
  %v461 = vpack.c.b16 %v407, %v406
  %v462 = vpack.c.b16 %v409, %v408
  %v463 = vpack.c.b16 %v411, %v410
  %v464 = vpack.c.b16 %v413, %v412
  %v465 = vpack.c.b16 %v415, %v414
  %v466 = vpack.c.b16 %v417, %v416
  %v467 = vpack.c.b16 %v419, %v418
  %v468 = vpack.c.b16 %v421, %v420
  %v469 = vpack.c.b16 %v423, %v422
  %v470 = vpack.c.b16 %v425, %v424
  %v471 = vpack.c.b16 %v427, %v426
  %v472 = vpack.c.b16 %v429, %v428
  %v473 = vpack.c.b16 %v431, %v430
  %v474 = vpack.c.b16 %v433, %v432
  %v475 = vpack.c.b16 %v435, %v434
  %v476 = vpack.c.b16 %v437, %v436
  %v477 = vpack.c.b16 %v439, %v438
  %v478 = vpack.c.b16 %v441, %v440
  %v479 = vpack.c.b16 %v443, %v442
  %vm516 = vcmask 523264
  %v518 = vsel %vm516, %v241, 0
  %v521 = vsel %vm516, %v246, 0
  %v524 = vsel %vm516, %v251, 0
  %v527 = vsel %vm516, %v256, 0
  %v530 = vsel %vm516, %v261, 0
  %v533 = vsel %vm516, %v266, 0
  %v536 = vsel %vm516, %v271, 0
  %538 = vmatprep.subr.bf16.mxu0 0
  %539 = vmatpush1.bf16.msra.mxu0 %v451
  %540 = vmatprep.subr.bf16.mxu0 0
  %541 = vmatpush1.bf16.msra.mxu0 %v450
  %542 = vmatprep.subr.bf16.mxu0 0
  %543 = vmatpush1.bf16.msra.mxu0 %v449
  %544 = vmatprep.subr.bf16.mxu0 0
  %545 = vmatpush1.bf16.msra.mxu0 %v448
  %546 = vmatprep.subr.bf16.mxu0 0
  %547 = vmatpush1.bf16.msra.mxu0 %v447
  %548 = vmatprep.subr.bf16.mxu0 0
  %549 = vmatpush1.bf16.msra.mxu0 %v446
  %550 = vmatprep.subr.bf16.mxu0 0
  %551 = vmatpush1.bf16.msra.mxu0 %v445
  %552 = vmatprep.subr.bf16.mxu0 0
  %553 = vmatpush1.bf16.msra.mxu0 %v444
  %554 = vmatprep.subr.bf16.mxu0 0
  %555 = vmatpush2.bf16.msra.mxu0 %v459
  %556 = vmatprep.subr.bf16.mxu0 0
  %557 = vmatpush2.bf16.msra.mxu0 %v458
  %558 = vmatprep.subr.bf16.mxu0 0
  %559 = vmatpush2.bf16.msra.mxu0 %v457
  %560 = vmatprep.subr.bf16.mxu0 0
  %561 = vmatpush2.bf16.msra.mxu0 %v456
  %562 = vmatprep.subr.bf16.mxu0 0
  %563 = vmatpush2.bf16.msra.mxu0 %v455
  %564 = vmatprep.subr.bf16.mxu0 0
  %565 = vmatpush2.bf16.msra.mxu0 %v454
  %566 = vmatprep.subr.bf16.mxu0 0
  %567 = vmatpush2.bf16.msra.mxu0 %v453
  %568 = vmatprep.subr.bf16.mxu0 0
  %569 = vmatpush2.bf16.msra.mxu0 %v452
  %570 = vmatprep.mubr.bf16.mxu0 %v238
  %571 = vmatmul.mubr.bf16.gmra.mxu0 %v237
  %v572 = vpop.f32.mrf.mxu0
  %v573 = vadd.f32 %v131, %v572
  %v574 = vpop.f32.mrf.mxu0
  %v575 = vpop.f32.mrf.mxu0
  %v576 = vadd.f32 %v131, %v575
  %v577 = vpop.f32.mrf.mxu0
  %578 = vmatprep.mubr.bf16.mxu0 %v243
  %579 = vmatmul.mubr.bf16.gmra.mxu0 %v242
  %v580 = vpop.f32.mrf.mxu0
  %v581 = vadd.f32 %v131, %v580
  %v582 = vpop.f32.mrf.mxu0
  %v583 = vpop.f32.mrf.mxu0
  %v584 = vadd.f32 %v131, %v583
  %v585 = vpop.f32.mrf.mxu0
  %586 = vmatprep.mubr.bf16.mxu0 %v248
  %587 = vmatmul.mubr.bf16.gmra.mxu0 %v247
  %v588 = vpop.f32.mrf.mxu0
  %v589 = vadd.f32 %v131, %v588
  %v590 = vpop.f32.mrf.mxu0
  %v591 = vpop.f32.mrf.mxu0
  %v592 = vadd.f32 %v131, %v591
  %v593 = vpop.f32.mrf.mxu0
  %594 = vmatprep.mubr.bf16.mxu0 %v253
  %595 = vmatmul.mubr.bf16.gmra.mxu0 %v252
  %v596 = vpop.f32.mrf.mxu0
  %v597 = vadd.f32 %v131, %v596
  %v598 = vpop.f32.mrf.mxu0
  %v599 = vpop.f32.mrf.mxu0
  %v600 = vadd.f32 %v131, %v599
  %v601 = vpop.f32.mrf.mxu0
  %602 = vmatprep.mubr.bf16.mxu0 %v258
  %603 = vmatmul.mubr.bf16.gmra.mxu0 %v257
  %v604 = vpop.f32.mrf.mxu0
  %v605 = vadd.f32 %v131, %v604
  %v606 = vpop.f32.mrf.mxu0
  %v607 = vpop.f32.mrf.mxu0
  %v608 = vadd.f32 %v131, %v607
  %v609 = vpop.f32.mrf.mxu0
  %610 = vmatprep.mubr.bf16.mxu0 %v263
  %611 = vmatmul.mubr.bf16.gmra.mxu0 %v262
  %v612 = vpop.f32.mrf.mxu0
  %v613 = vadd.f32 %v131, %v612
  %v614 = vpop.f32.mrf.mxu0
  %v615 = vpop.f32.mrf.mxu0
  %v616 = vadd.f32 %v131, %v615
  %v617 = vpop.f32.mrf.mxu0
  %618 = vmatprep.mubr.bf16.mxu0 %v268
  %619 = vmatmul.mubr.bf16.gmra.mxu0 %v267
  %v620 = vpop.f32.mrf.mxu0
  %v621 = vadd.f32 %v131, %v620
  %v622 = vpop.f32.mrf.mxu0
  %v623 = vpop.f32.mrf.mxu0
  %v624 = vpop.f32.mrf.mxu0
  %625 = vdwg.mxu0
  %626 = vmatprep.subr.bf16.mxu0 0
  %627 = vmatpush1.bf16.msra.mxu0 %v467
  %628 = vmatprep.subr.bf16.mxu0 0
  %629 = vmatpush1.bf16.msra.mxu0 %v466
  %630 = vmatprep.subr.bf16.mxu0 0
  %631 = vmatpush1.bf16.msra.mxu0 %v465
  %632 = vmatprep.subr.bf16.mxu0 0
  %633 = vmatpush1.bf16.msra.mxu0 %v464
  %634 = vmatprep.subr.bf16.mxu0 0
  %635 = vmatpush1.bf16.msra.mxu0 %v463
  %636 = vmatprep.subr.bf16.mxu0 0
  %637 = vmatpush1.bf16.msra.mxu0 %v462
  %638 = vmatprep.subr.bf16.mxu0 0
  %639 = vmatpush1.bf16.msra.mxu0 %v461
  %640 = vmatprep.subr.bf16.mxu0 0
  %641 = vmatpush1.bf16.msra.mxu0 %v460
  %642 = vmatprep.subr.bf16.mxu0 0
  %643 = vmatpush2.bf16.msra.mxu0 %v475
  %644 = vmatprep.subr.bf16.mxu0 0
  %645 = vmatpush2.bf16.msra.mxu0 %v474
  %646 = vmatprep.subr.bf16.mxu0 0
  %647 = vmatpush2.bf16.msra.mxu0 %v473
  %648 = vmatprep.subr.bf16.mxu0 0
  %649 = vmatpush2.bf16.msra.mxu0 %v472
  %650 = vmatprep.subr.bf16.mxu0 0
  %651 = vmatpush2.bf16.msra.mxu0 %v471
  %652 = vmatprep.subr.bf16.mxu0 0
  %653 = vmatpush2.bf16.msra.mxu0 %v470
  %654 = vmatprep.subr.bf16.mxu0 0
  %655 = vmatpush2.bf16.msra.mxu0 %v469
  %656 = vmatprep.subr.bf16.mxu0 0
  %657 = vmatpush2.bf16.msra.mxu0 %v468
  %658 = vmatprep.mubr.bf16.mxu0 %v240
  %659 = vmatmul.mubr.bf16.gmra.mxu0 %v239
  %v660 = vpop.f32.mrf.mxu0
  %v661 = vadd.f32 %v573, %v660
  %v662 = vpop.f32.mrf.mxu0
  %v663 = vpop.f32.mrf.mxu0
  %v664 = vadd.f32 %v576, %v663
  %v665 = vpop.f32.mrf.mxu0
  %666 = vmatprep.mubr.bf16.mxu0 %v245
  %667 = vmatmul.mubr.bf16.gmra.mxu0 %v244
  %v668 = vpop.f32.mrf.mxu0
  %v669 = vadd.f32 %v581, %v668
  %v670 = vpop.f32.mrf.mxu0
  %v671 = vpop.f32.mrf.mxu0
  %v672 = vadd.f32 %v584, %v671
  %v673 = vpop.f32.mrf.mxu0
  %674 = vmatprep.mubr.bf16.mxu0 %v250
  %675 = vmatmul.mubr.bf16.gmra.mxu0 %v249
  %v676 = vpop.f32.mrf.mxu0
  %v677 = vadd.f32 %v589, %v676
  %v678 = vpop.f32.mrf.mxu0
  %v679 = vpop.f32.mrf.mxu0
  %v680 = vadd.f32 %v592, %v679
  %v681 = vpop.f32.mrf.mxu0
  %682 = vmatprep.mubr.bf16.mxu0 %v255
  %683 = vmatmul.mubr.bf16.gmra.mxu0 %v254
  %v684 = vpop.f32.mrf.mxu0
  %v685 = vadd.f32 %v597, %v684
  %v686 = vpop.f32.mrf.mxu0
  %v687 = vpop.f32.mrf.mxu0
  %v688 = vadd.f32 %v600, %v687
  %v689 = vpop.f32.mrf.mxu0
  %690 = vmatprep.mubr.bf16.mxu0 %v260
  %691 = vmatmul.mubr.bf16.gmra.mxu0 %v259
  %v692 = vpop.f32.mrf.mxu0
  %v693 = vadd.f32 %v605, %v692
  %v694 = vpop.f32.mrf.mxu0
  %v695 = vpop.f32.mrf.mxu0
  %v696 = vadd.f32 %v608, %v695
  %v697 = vpop.f32.mrf.mxu0
  %698 = vmatprep.mubr.bf16.mxu0 %v265
  %699 = vmatmul.mubr.bf16.gmra.mxu0 %v264
  %v700 = vpop.f32.mrf.mxu0
  %v701 = vadd.f32 %v613, %v700
  %v702 = vpop.f32.mrf.mxu0
  %v703 = vpop.f32.mrf.mxu0
  %v704 = vadd.f32 %v616, %v703
  %v705 = vpop.f32.mrf.mxu0
  %706 = vmatprep.mubr.bf16.mxu0 %v270
  %707 = vmatmul.mubr.bf16.gmra.mxu0 %v269
  %v708 = vpop.f32.mrf.mxu0
  %v709 = vadd.f32 %v621, %v708
  %v710 = vpop.f32.mrf.mxu0
  %v711 = vpop.f32.mrf.mxu0
  %v712 = vpop.f32.mrf.mxu0
  %713 = vdwg.mxu0
  %714 = vmatprep.subr.bf16.mxu0 0
  %715 = vmatpush1.bf16.msra.mxu0 0
  %716 = vmatprep.subr.bf16.mxu0 0
  %717 = vmatpush1.bf16.msra.mxu0 0
  %718 = vmatprep.subr.bf16.mxu0 0
  %719 = vmatpush1.bf16.msra.mxu0 0
  %720 = vmatprep.subr.bf16.mxu0 0
  %721 = vmatpush1.bf16.msra.mxu0 0
  %722 = vmatprep.subr.bf16.mxu0 0
  %723 = vmatpush1.bf16.msra.mxu0 %v479
  %724 = vmatprep.subr.bf16.mxu0 0
  %725 = vmatpush1.bf16.msra.mxu0 %v478
  %726 = vmatprep.subr.bf16.mxu0 0
  %727 = vmatpush1.bf16.msra.mxu0 %v477
  %728 = vmatprep.subr.bf16.mxu0 0
  %729 = vmatpush1.bf16.msra.mxu0 %v476
  %730 = vmatprep.subr.bf16.mxu0 0
  %731 = vmatpush2.bf16.msra.mxu0 0
  %732 = vmatprep.subr.bf16.mxu0 0
  %733 = vmatpush2.bf16.msra.mxu0 0
  %734 = vmatprep.subr.bf16.mxu0 0
  %735 = vmatpush2.bf16.msra.mxu0 0
  %736 = vmatprep.subr.bf16.mxu0 0
  %737 = vmatpush2.bf16.msra.mxu0 0
  %738 = vmatprep.subr.bf16.mxu0 0
  %739 = vmatpush2.bf16.msra.mxu0 0
  %740 = vmatprep.subr.bf16.mxu0 0
  %741 = vmatpush2.bf16.msra.mxu0 0
  %742 = vmatprep.subr.bf16.mxu0 0
  %743 = vmatpush2.bf16.msra.mxu0 0
  %744 = vmatprep.subr.bf16.mxu0 0
  %745 = vmatpush2.bf16.msra.mxu0 0
  %746 = vmatprep.mubr.bf16.mxu0 0
  %747 = vmatmul.mubr.bf16.gmra.mxu0 %v518
  %v748 = vpop.f32.mrf.mxu0
  %v749 = vadd.f32 %v661, %v748
  %v750 = vpop.f32.mrf.mxu0
  %v751 = vpop.f32.mrf.mxu0
  %v752 = vadd.f32 %v664, %v751
  %v753 = vpop.f32.mrf.mxu0
  %754 = vmatprep.mubr.bf16.mxu0 0
  %755 = vmatmul.mubr.bf16.gmra.mxu0 %v521
  %v756 = vpop.f32.mrf.mxu0
  %v757 = vadd.f32 %v669, %v756
  %v758 = vpop.f32.mrf.mxu0
  %v759 = vpop.f32.mrf.mxu0
  %v760 = vadd.f32 %v672, %v759
  %v761 = vpop.f32.mrf.mxu0
  %762 = vmatprep.mubr.bf16.mxu0 0
  %763 = vmatmul.mubr.bf16.gmra.mxu0 %v524
  %v764 = vpop.f32.mrf.mxu0
  %v765 = vadd.f32 %v677, %v764
  %v766 = vpop.f32.mrf.mxu0
  %v767 = vpop.f32.mrf.mxu0
  %v768 = vadd.f32 %v680, %v767
  %v769 = vpop.f32.mrf.mxu0
  %770 = vmatprep.mubr.bf16.mxu0 0
  %771 = vmatmul.mubr.bf16.gmra.mxu0 %v527
  %v772 = vpop.f32.mrf.mxu0
  %v773 = vadd.f32 %v685, %v772
  %v774 = vpop.f32.mrf.mxu0
  %v775 = vpop.f32.mrf.mxu0
  %v776 = vadd.f32 %v688, %v775
  %v777 = vpop.f32.mrf.mxu0
  %778 = vmatprep.mubr.bf16.mxu0 0
  %779 = vmatmul.mubr.bf16.gmra.mxu0 %v530
  %v780 = vpop.f32.mrf.mxu0
  %v781 = vadd.f32 %v693, %v780
  %v782 = vpop.f32.mrf.mxu0
  %v783 = vpop.f32.mrf.mxu0
  %v784 = vadd.f32 %v696, %v783
  %v785 = vpop.f32.mrf.mxu0
  %786 = vmatprep.mubr.bf16.mxu0 0
  %787 = vmatmul.mubr.bf16.gmra.mxu0 %v533
  %v788 = vpop.f32.mrf.mxu0
  %v789 = vadd.f32 %v701, %v788
  %v790 = vpop.f32.mrf.mxu0
  %v791 = vpop.f32.mrf.mxu0
  %v792 = vadd.f32 %v704, %v791
  %v793 = vpop.f32.mrf.mxu0
  %794 = vmatprep.mubr.bf16.mxu0 0
  %795 = vmatmul.mubr.bf16.gmra.mxu0 %v536
  %v796 = vpop.f32.mrf.mxu0
  %v797 = vadd.f32 %v709, %v796
  %v798 = vpop.f32.mrf.mxu0
  %v799 = vpop.f32.mrf.mxu0
  %v800 = vpop.f32.mrf.mxu0
  %801 = vdwg.mxu0
  %v802 = vmax.f32 %v749, 0.0
  %v803 = vmax.f32 %v752, 0.0
  %v804 = vmax.f32 %v757, 0.0
  %v805 = vmax.f32 %v760, 0.0
  %v806 = vmax.f32 %v765, 0.0
  %v807 = vmax.f32 %v768, 0.0
  %v808 = vmax.f32 %v773, 0.0
  %v809 = vmax.f32 %v776, 0.0
  %v810 = vmax.f32 %v781, 0.0
  %v811 = vmax.f32 %v784, 0.0
  %v812 = vmax.f32 %v789, 0.0
  %v813 = vmax.f32 %v792, 0.0
  %v814 = vmax.f32 %v797, 0.0
  %815 = vst.msk [vmem:[%s3] sm:$0xff] %vm516, %v802
  %816 = vst.msk [vmem:[%s3 + $0x8] sm:$0xff] %vm516, %v803
  %817 = vst.msk [vmem:[%s3 + $0x10] sm:$0xff] %vm516, %v804
  %818 = vst.msk [vmem:[%s3 + $0x18] sm:$0xff] %vm516, %v805
  %819 = vst.msk [vmem:[%s3 + $0x20] sm:$0xff] %vm516, %v806
  %820 = vst.msk [vmem:[%s3 + $0x28] sm:$0xff] %vm516, %v807
  %821 = vst.msk [vmem:[%s3 + $0x30] sm:$0xff] %vm516, %v808
  %822 = vst.msk [vmem:[%s3 + $0x38] sm:$0xff] %vm516, %v809
  %823 = vst.msk [vmem:[%s3 + $0x40] sm:$0xff] %vm516, %v810
  %824 = vst.msk [vmem:[%s3 + $0x48] sm:$0xff] %vm516, %v811
  %825 = vst.msk [vmem:[%s3 + $0x50] sm:$0xff] %vm516, %v812
  %826 = vst.msk [vmem:[%s3 + $0x58] sm:$0xff] %vm516, %v813
  %827 = vst.msk [vmem:[%s3 + $0x60] sm:$0xff] %vm516, %v814
  // Predicated region
  $region14: #{dqn_forward.6} parent=0 // pred_check
    _
  $region15: #{dqn_forward.6} parent=0 // pred_check_branch
    %829 = sbr.rel (0) target = $region17
  $region16: #{dqn_forward.6} parent=0 // pred_region
    _
  $region17: #{dqn_forward.6} parent=0 // pred_fallthru
    _
  // Predicated region
  $region18: #{dqn_forward.6} parent=0 // pred_check
    _
  $region19: #{dqn_forward.6} parent=0 // pred_check_branch
    %831 = sbr.rel (0) target = $region21
  $region20: #{dqn_forward.6} parent=0 // pred_region
    _
  $region21: #{dqn_forward.6} parent=0 // pred_fallthru
    _

// kernel: dqn_forward.7
$region0: #{dqn_forward.7}
  #allocation0 [shape = 'u32[]', space=smem, size = 0x4, offset = 0x4, fixed_abs, tag = 'smem constant byte address 0x4 - core index']
  #allocation1 [shape = 'u32[144,128]{1,0:T(1,128)}', space=vmem, size = 0x12000, scoped, tag = 'internal scratch']
  %s0 = inlined_call_operand.vmem [shape: bf16[2,3136], index: 0, kind: input, shape index: {}]
  %s1 = inlined_call_operand.vmem [shape: bf16[3136,512], index: 1, kind: input, shape index: {}]
  %s2 = inlined_call_operand.vmem [shape: f32[1,512], index: 2, kind: input, shape index: {}]
  %s3 = inlined_call_operand.vmem [shape: bf16[512,4], index: 3, kind: input, shape index: {}]
  %s4 = inlined_call_operand.vmem [shape: f32[1,4], index: 4, kind: input, shape index: {}]
  %s5 = inlined_call_operand.hbm [shape: f32[2,4], index: 5, kind: output, shape index: {}]
  %s6 = sld [smem:[#allocation0]]
  $region99: #{dqn_forward.7} parent=0
    _
  %s8 = ssub.s32 1, %s6
  %s9 = scalar_select 0, %s8, %s6
  $region1: #{dqn_forward.7} parent=0
    #allocation2 [shape = 'u8[3211264]{0}', space=vmem, size = 0x310000, scoped, tag = 'input window, operand 1']
    #allocation3 [shape = 'u8[1024]{0}', space=vmem, size = 0x400, scoped, tag = 'output window, operand 0, single buffered']
    #allocation4 [shape = 's32[2]{0}', space=sflag, size = 0x8, scoped, tag = 'scoped memory for dqn_forward.7']
    %10 = vsyncpa [#allocation4], 0
    loop: start=0, step=1, limit=4
    $region2: #{dqn_forward.7} parent=1 // loop_pre_header
      _
    $region3: #{dqn_forward.7} parent=1 // loop_header
      %s12 = sphi 0, %s16
      %p13 = scmp.ge.s32.totalorder %s12, 4
      %s20 = sphi 0, %s20
      %s22 = sphi 0, %s20
      %s23 = sphi 0, %s22
      %s37 = sphi 0, %s23
      %s43 = sphi 0, %s45
      %s46 = sphi 0, %s43
      %s47 = sphi 0, %s46
      %s63 = sphi 0, %s47
      %s69 = sphi 0, %s71
      %s72 = sphi 0, %s69
      %s73 = sphi 0, %s72
      %s89 = sphi 0, %s73
      %s95 = sphi 0, %s97
      %s98 = sphi 0, %s95
      %s99 = sphi 0, %s98
      %s115 = sphi 0, %s99
      %s119 = sphi 0, %s119
      %s121 = sphi 0, %s119
      %s122 = sphi 0, %s121
      %s136 = sphi 0, %s122
      %s140 = sphi 0, %s140
      %s142 = sphi 0, %s140
      %s143 = sphi 0, %s142
      %s157 = sphi 0, %s143
    $region4: #{dqn_forward.7} parent=1 // loop_header_branch
      %15 = sbr.rel (%p13) target = $region8
    $region5: #{dqn_forward.7} parent=1 // loop_body
      %s17 = ssub.s32 %s12, 1
      %s18 = ssub.s32 %s12, 2
      %s19 = sadd.s32 %s12, 1
      %s21 = sadd.s32 %s20, 1
      %p24 = scmp.eq.s32.totalorder %s12, 1
      %p25 = scmp.ne.s32.totalorder %s20, %s22
      %p26 = scmp.eq.s32.totalorder %s12, 0
      %p27 = por %p25, %p26
      %p28 = scmp.ne.s32.totalorder %s20, %s22
      %p29 = scmp.eq.s32.totalorder %s17, 1
      %p30 = por %p28, %p29
      %p31 = scmp.ne.s32.totalorder %s22, %s23
      %p32 = scmp.eq.s32.totalorder %s17, 0
      %p33 = por %p31, %p32
      %p34 = scmp.ne.s32.totalorder %s22, %s23
      %p35 = scmp.eq.s32.totalorder %s18, 1
      %p36 = por %p34, %p35
      %p38 = scmp.ne.s32.totalorder %s23, %s37
      %p39 = scmp.eq.s32.totalorder %s18, 0
      %p40 = por %p38, %p39
      %s41 = ssub.s32 %s12, %s19
      %p42 = scmp.eq.s32.totalorder %s41, 0
      %s44 = sadd.s32 %s43, 1
      %s45 = scalar_select %p42, %s43, %s44
      %p48 = pneg %p42
      %p49 = scmp.eq.s32.totalorder %s12, 1
      %p50 = por %p48, %p49
      %p51 = scmp.ne.s32.totalorder %s43, %s46
      %p52 = scmp.eq.s32.totalorder %s12, 0
      %p53 = por %p51, %p52
      %p54 = scmp.ne.s32.totalorder %s43, %s46
      %p55 = scmp.eq.s32.totalorder %s17, 1
      %p56 = por %p54, %p55
      %p57 = scmp.ne.s32.totalorder %s46, %s47
      %p58 = scmp.eq.s32.totalorder %s17, 0
      %p59 = por %p57, %p58
      %p60 = scmp.ne.s32.totalorder %s46, %s47
      %p61 = scmp.eq.s32.totalorder %s18, 1
      %p62 = por %p60, %p61
      %p64 = scmp.ne.s32.totalorder %s47, %s63
      %p65 = scmp.eq.s32.totalorder %s18, 0
      %p66 = por %p64, %p65
      %s67 = ssub.s32 %s12, %s19
      %p68 = scmp.eq.s32.totalorder %s67, 0
      %s70 = sadd.s32 %s69, 1
      %s71 = scalar_select %p68, %s69, %s70
      %p74 = pneg %p68
      %p75 = scmp.eq.s32.totalorder %s12, 1
      %p76 = por %p74, %p75
      %p77 = scmp.ne.s32.totalorder %s69, %s72
      %p78 = scmp.eq.s32.totalorder %s12, 0
      %p79 = por %p77, %p78
      %p80 = scmp.ne.s32.totalorder %s69, %s72
      %p81 = scmp.eq.s32.totalorder %s17, 1
      %p82 = por %p80, %p81
      %p83 = scmp.ne.s32.totalorder %s72, %s73
      %p84 = scmp.eq.s32.totalorder %s17, 0
      %p85 = por %p83, %p84
      %p86 = scmp.ne.s32.totalorder %s72, %s73
      %p87 = scmp.eq.s32.totalorder %s18, 1
      %p88 = por %p86, %p87
      %p90 = scmp.ne.s32.totalorder %s73, %s89
      %p91 = scmp.eq.s32.totalorder %s18, 0
      %p92 = por %p90, %p91
      %s93 = ssub.s32 %s12, %s19
      %p94 = scmp.eq.s32.totalorder %s93, 0
      %s96 = sadd.s32 %s95, 1
      %s97 = scalar_select %p94, %s95, %s96
      %p100 = pneg %p94
      %p101 = scmp.eq.s32.totalorder %s12, 1
      %p102 = por %p100, %p101
      %p103 = scmp.ne.s32.totalorder %s95, %s98
      %p104 = scmp.eq.s32.totalorder %s12, 0
      %p105 = por %p103, %p104
      %p106 = scmp.ne.s32.totalorder %s95, %s98
      %p107 = scmp.eq.s32.totalorder %s17, 1
      %p108 = por %p106, %p107
      %p109 = scmp.ne.s32.totalorder %s98, %s99
      %p110 = scmp.eq.s32.totalorder %s17, 0
      %p111 = por %p109, %p110
      %p112 = scmp.ne.s32.totalorder %s98, %s99
      %p113 = scmp.eq.s32.totalorder %s18, 1
      %p114 = por %p112, %p113
      %p116 = scmp.ne.s32.totalorder %s99, %s115
      %p117 = scmp.eq.s32.totalorder %s18, 0
      %p118 = por %p116, %p117
      %s120 = sadd.s32 %s119, 1
      %p123 = scmp.eq.s32.totalorder %s12, 1
      %p124 = scmp.ne.s32.totalorder %s119, %s121
      %p125 = scmp.eq.s32.totalorder %s12, 0
      %p126 = por %p124, %p125
      %p127 = scmp.ne.s32.totalorder %s119, %s121
      %p128 = scmp.eq.s32.totalorder %s17, 1
      %p129 = por %p127, %p128
      %p130 = scmp.ne.s32.totalorder %s121, %s122
      %p131 = scmp.eq.s32.totalorder %s17, 0
      %p132 = por %p130, %p131
      %p133 = scmp.ne.s32.totalorder %s121, %s122
      %p134 = scmp.eq.s32.totalorder %s18, 1
      %p135 = por %p133, %p134
      %p137 = scmp.ne.s32.totalorder %s122, %s136
      %p138 = scmp.eq.s32.totalorder %s18, 0
      %p139 = por %p137, %p138
      %s141 = sadd.s32 %s140, 1
      %p144 = scmp.eq.s32.totalorder %s12, 1
      %p145 = scmp.ne.s32.totalorder %s140, %s142
      %p146 = scmp.eq.s32.totalorder %s12, 0
      %p147 = por %p145, %p146
      %p148 = scmp.ne.s32.totalorder %s140, %s142
      %p149 = scmp.eq.s32.totalorder %s17, 1
      %p150 = por %p148, %p149
      %p151 = scmp.ne.s32.totalorder %s142, %s143
      %p152 = scmp.eq.s32.totalorder %s17, 0
      %p153 = por %p151, %p152
      %p154 = scmp.ne.s32.totalorder %s142, %s143
      %p155 = scmp.eq.s32.totalorder %s18, 1
      %p156 = por %p154, %p155
      %p158 = scmp.ne.s32.totalorder %s143, %s157
      %p159 = scmp.eq.s32.totalorder %s18, 0
      %p160 = por %p158, %p159
      %p161 = scmp.le.s32.totalorder 1, %s12
      %p162 = scmp.lt.s32.totalorder %s12, 3
      %p163 = pnand %p161, %p162
      %p164 = pneg %p163
      // Predicated region
      $region9: #{dqn_forward.7} parent=5 // pred_check
        _
      $region10: #{dqn_forward.7} parent=5 // pred_check_branch
        %166 = sbr.rel (%p163) target = $region12
      $region11: #{dqn_forward.7} parent=5 // pred_region
        %s167 = ssub.s32 %s12, 1
        // Predicated region
        $region13: #{dqn_forward.7} parent=11 // pred_check
          %p168 = pneg %p33
        $region14: #{dqn_forward.7} parent=11 // pred_check_branch
          %170 = sbr.rel (%p168) target = $region16
        $region15: #{dqn_forward.7} parent=11 // pred_region
          _
        $region16: #{dqn_forward.7} parent=11 // pred_fallthru
          _
        // Predicated region
        $region17: #{dqn_forward.7} parent=11 // pred_check
          %p171 = pneg %p132
        $region18: #{dqn_forward.7} parent=11 // pred_check_branch
          %173 = sbr.rel (%p171) target = $region20
        $region19: #{dqn_forward.7} parent=11 // pred_region
          _
        $region20: #{dqn_forward.7} parent=11 // pred_fallthru
          _
      $region12: #{dqn_forward.7} parent=5 // pred_fallthru
        _
      %p174 = scmp.lt.s32.totalorder %s12, 2
      // Predicated region
      $region21: #{dqn_forward.7} parent=5 // pred_check
        %p175 = pneg %p174
      $region22: #{dqn_forward.7} parent=5 // pred_check_branch
        %177 = sbr.rel (%p175) target = $region24
      $region23: #{dqn_forward.7} parent=5 // pred_region
        // Predicated region
        $region25: #{dqn_forward.7} parent=23 // pred_check
          %p178 = pneg %p53
        $region26: #{dqn_forward.7} parent=23 // pred_check_branch
          %180 = sbr.rel (%p178) target = $region28
        $region27: #{dqn_forward.7} parent=23 // pred_region
          %s181 = sand.u32 %s43, 1
          %s182 = sand.u32 %s43, 1
          %s183 = smul.addr %s182, 3136
          %s184 = scalar_lea.vmem [#allocation2], %s183
          %s185 = smul.u32 2, %s12
          %s186 = smul.addr %s185, 4
          %s187 = scalar_lea.vmem %s1, %s186
          // Predicated region
          $region29: #{dqn_forward.7} parent=27 // pred_check
            _
          $region30: #{dqn_forward.7} parent=27 // pred_check_branch
            %189 = sbr.rel (0) target = $region32
          $region31: #{dqn_forward.7} parent=27 // pred_region
            // Predicated region
            $region33: #{dqn_forward.7} parent=31 // pred_check
              _
            $region34: #{dqn_forward.7} parent=31 // pred_check_branch
              %191 = sbr.rel (0) target = $region36
            $region35: #{dqn_forward.7} parent=31 // pred_region
              // Predicated region
              $region48: #{dqn_forward.7} parent=35 // pred_check
                _
              $region49: #{dqn_forward.7} parent=35 // pred_check_branch
                %989 = sbr.rel (0) target = $region51
              $region50: #{dqn_forward.7} parent=35 // pred_region
                loop: start=0, step=1, limit=1
                $region52: #{dqn_forward.7} parent=50 // loop_pre_header
                  _
                $region53: #{dqn_forward.7} parent=50 // loop_header
                  %s991 = sphi 0, %s995
                  %p992 = scmp.ge.s32.totalorder %s991, 1
                  %s996 = sphi %s187, %s187
                  %s997 = sphi %s184, %s184
                $region54: #{dqn_forward.7} parent=50 // loop_header_branch
                  %994 = sbr.rel (%p992) target = $region58
                $region55: #{dqn_forward.7} parent=50 // loop_body
                  %v998 = vld [vmem:[%s996] sm:$0xff]
                  %999 = vst [vmem:[%s997] sm:$0xff] %v998
                  %v1000 = vld [vmem:[%s996 + $0x10] sm:$0xff]
                  %1001 = vst [vmem:[%s997 + $0x8] sm:$0xff] %v1000
                  %v1002 = vld [vmem:[%s996 + $0x20] sm:$0xff]
                  %1003 = vst [vmem:[%s997 + $0x10] sm:$0xff] %v1002
                  %v1004 = vld [vmem:[%s996 + $0x30] sm:$0xff]
                  %1005 = vst [vmem:[%s997 + $0x18] sm:$0xff] %v1004
                  %v1006 = vld [vmem:[%s996 + $0x40] sm:$0xff]
                  %1007 = vst [vmem:[%s997 + $0x20] sm:$0xff] %v1006
                  %v1008 = vld [vmem:[%s996 + $0x50] sm:$0xff]
                  %1009 = vst [vmem:[%s997 + $0x28] sm:$0xff] %v1008
                  %v1010 = vld [vmem:[%s996 + $0x60] sm:$0xff]
                  %1011 = vst [vmem:[%s997 + $0x30] sm:$0xff] %v1010
                  %v1012 = vld [vmem:[%s996 + $0x70] sm:$0xff]
                  %1013 = vst [vmem:[%s997 + $0x38] sm:$0xff] %v1012
                  %v1014 = vld [vmem:[%s996 + $0x80] sm:$0xff]
                  %1015 = vst [vmem:[%s997 + $0x40] sm:$0xff] %v1014
                  %v1016 = vld [vmem:[%s996 + $0x90] sm:$0xff]
                  %1017 = vst [vmem:[%s997 + $0x48] sm:$0xff] %v1016
                  %v1018 = vld [vmem:[%s996 + $0xa0] sm:$0xff]
                  %1019 = vst [vmem:[%s997 + $0x50] sm:$0xff] %v1018
                  %v1020 = vld [vmem:[%s996 + $0xb0] sm:$0xff]
                  %1021 = vst [vmem:[%s997 + $0x58] sm:$0xff] %v1020
                  %v1022 = vld [vmem:[%s996 + $0xc0] sm:$0xff]
                  %1023 = vst [vmem:[%s997 + $0x60] sm:$0xff] %v1022
                  %v1024 = vld [vmem:[%s996 + $0xd0] sm:$0xff]
                  %1025 = vst [vmem:[%s997 + $0x68] sm:$0xff] %v1024
                  %v1026 = vld [vmem:[%s996 + $0xe0] sm:$0xff]
                  %1027 = vst [vmem:[%s997 + $0x70] sm:$0xff] %v1026
                  %v1028 = vld [vmem:[%s996 + $0xf0] sm:$0xff]
                  %1029 = vst [vmem:[%s997 + $0x78] sm:$0xff] %v1028
                  %v1030 = vld [vmem:[%s996 + $0x100] sm:$0xff]
                  %1031 = vst [vmem:[%s997 + $0x80] sm:$0xff] %v1030
                  %v1032 = vld [vmem:[%s996 + $0x110] sm:$0xff]
                  %1033 = vst [vmem:[%s997 + $0x88] sm:$0xff] %v1032
                  %v1034 = vld [vmem:[%s996 + $0x120] sm:$0xff]
                  %1035 = vst [vmem:[%s997 + $0x90] sm:$0xff] %v1034
                  %v1036 = vld [vmem:[%s996 + $0x130] sm:$0xff]
                  %1037 = vst [vmem:[%s997 + $0x98] sm:$0xff] %v1036
                  %v1038 = vld [vmem:[%s996 + $0x140] sm:$0xff]
                  %1039 = vst [vmem:[%s997 + $0xa0] sm:$0xff] %v1038
                  %v1040 = vld [vmem:[%s996 + $0x150] sm:$0xff]
                  %1041 = vst [vmem:[%s997 + $0xa8] sm:$0xff] %v1040
                  %v1042 = vld [vmem:[%s996 + $0x160] sm:$0xff]
                  %1043 = vst [vmem:[%s997 + $0xb0] sm:$0xff] %v1042
                  %v1044 = vld [vmem:[%s996 + $0x170] sm:$0xff]
                  %1045 = vst [vmem:[%s997 + $0xb8] sm:$0xff] %v1044
                  %v1046 = vld [vmem:[%s996 + $0x180] sm:$0xff]
                  %1047 = vst [vmem:[%s997 + $0xc0] sm:$0xff] %v1046
                  %v1048 = vld [vmem:[%s996 + $0x190] sm:$0xff]
                  %1049 = vst [vmem:[%s997 + $0xc8] sm:$0xff] %v1048
                  %v1050 = vld [vmem:[%s996 + $0x1a0] sm:$0xff]
                  %1051 = vst [vmem:[%s997 + $0xd0] sm:$0xff] %v1050
                  %v1052 = vld [vmem:[%s996 + $0x1b0] sm:$0xff]
                  %1053 = vst [vmem:[%s997 + $0xd8] sm:$0xff] %v1052
                  %v1054 = vld [vmem:[%s996 + $0x1c0] sm:$0xff]
                  %1055 = vst [vmem:[%s997 + $0xe0] sm:$0xff] %v1054
                  %v1056 = vld [vmem:[%s996 + $0x1d0] sm:$0xff]
                  %1057 = vst [vmem:[%s997 + $0xe8] sm:$0xff] %v1056
                  %v1058 = vld [vmem:[%s996 + $0x1e0] sm:$0xff]
                  %1059 = vst [vmem:[%s997 + $0xf0] sm:$0xff] %v1058
                  %v1060 = vld [vmem:[%s996 + $0x1f0] sm:$0xff]
                  %1061 = vst [vmem:[%s997 + $0xf8] sm:$0xff] %v1060
                  %v1062 = vld [vmem:[%s996 + $0x200] sm:$0xff]
                  %1063 = vst [vmem:[%s997 + $0x100] sm:$0xff] %v1062
                  %v1064 = vld [vmem:[%s996 + $0x210] sm:$0xff]
                  %1065 = vst [vmem:[%s997 + $0x108] sm:$0xff] %v1064
                  %v1066 = vld [vmem:[%s996 + $0x220] sm:$0xff]
                  %1067 = vst [vmem:[%s997 + $0x110] sm:$0xff] %v1066
                  %v1068 = vld [vmem:[%s996 + $0x230] sm:$0xff]
                  %1069 = vst [vmem:[%s997 + $0x118] sm:$0xff] %v1068
                  %v1070 = vld [vmem:[%s996 + $0x240] sm:$0xff]
                  %1071 = vst [vmem:[%s997 + $0x120] sm:$0xff] %v1070
                  %v1072 = vld [vmem:[%s996 + $0x250] sm:$0xff]
                  %1073 = vst [vmem:[%s997 + $0x128] sm:$0xff] %v1072
                  %v1074 = vld [vmem:[%s996 + $0x260] sm:$0xff]
                  %1075 = vst [vmem:[%s997 + $0x130] sm:$0xff] %v1074
                  %v1076 = vld [vmem:[%s996 + $0x270] sm:$0xff]
                  %1077 = vst [vmem:[%s997 + $0x138] sm:$0xff] %v1076
                  %v1078 = vld [vmem:[%s996 + $0x280] sm:$0xff]
                  %1079 = vst [vmem:[%s997 + $0x140] sm:$0xff] %v1078
                  %v1080 = vld [vmem:[%s996 + $0x290] sm:$0xff]
                  %1081 = vst [vmem:[%s997 + $0x148] sm:$0xff] %v1080
                  %v1082 = vld [vmem:[%s996 + $0x2a0] sm:$0xff]
                  %1083 = vst [vmem:[%s997 + $0x150] sm:$0xff] %v1082
                  %v1084 = vld [vmem:[%s996 + $0x2b0] sm:$0xff]
                  %1085 = vst [vmem:[%s997 + $0x158] sm:$0xff] %v1084
                  %v1086 = vld [vmem:[%s996 + $0x2c0] sm:$0xff]
                  %1087 = vst [vmem:[%s997 + $0x160] sm:$0xff] %v1086
                  %v1088 = vld [vmem:[%s996 + $0x2d0] sm:$0xff]
                  %1089 = vst [vmem:[%s997 + $0x168] sm:$0xff] %v1088
                  %v1090 = vld [vmem:[%s996 + $0x2e0] sm:$0xff]
                  %1091 = vst [vmem:[%s997 + $0x170] sm:$0xff] %v1090
                  %v1092 = vld [vmem:[%s996 + $0x2f0] sm:$0xff]
                  %1093 = vst [vmem:[%s997 + $0x178] sm:$0xff] %v1092
                  %v1094 = vld [vmem:[%s996 + $0x300] sm:$0xff]
                  %1095 = vst [vmem:[%s997 + $0x180] sm:$0xff] %v1094
                  %v1096 = vld [vmem:[%s996 + $0x310] sm:$0xff]
                  %1097 = vst [vmem:[%s997 + $0x188] sm:$0xff] %v1096
                  %v1098 = vld [vmem:[%s996 + $0x320] sm:$0xff]
                  %1099 = vst [vmem:[%s997 + $0x190] sm:$0xff] %v1098
                  %v1100 = vld [vmem:[%s996 + $0x330] sm:$0xff]
                  %1101 = vst [vmem:[%s997 + $0x198] sm:$0xff] %v1100
                  %v1102 = vld [vmem:[%s996 + $0x340] sm:$0xff]
                  %1103 = vst [vmem:[%s997 + $0x1a0] sm:$0xff] %v1102
                  %v1104 = vld [vmem:[%s996 + $0x350] sm:$0xff]
                  %1105 = vst [vmem:[%s997 + $0x1a8] sm:$0xff] %v1104
                  %v1106 = vld [vmem:[%s996 + $0x360] sm:$0xff]
                  %1107 = vst [vmem:[%s997 + $0x1b0] sm:$0xff] %v1106
                  %v1108 = vld [vmem:[%s996 + $0x370] sm:$0xff]
                  %1109 = vst [vmem:[%s997 + $0x1b8] sm:$0xff] %v1108
                  %v1110 = vld [vmem:[%s996 + $0x380] sm:$0xff]
                  %1111 = vst [vmem:[%s997 + $0x1c0] sm:$0xff] %v1110
                  %v1112 = vld [vmem:[%s996 + $0x390] sm:$0xff]
                  %1113 = vst [vmem:[%s997 + $0x1c8] sm:$0xff] %v1112
                  %v1114 = vld [vmem:[%s996 + $0x3a0] sm:$0xff]
                  %1115 = vst [vmem:[%s997 + $0x1d0] sm:$0xff] %v1114
                  %v1116 = vld [vmem:[%s996 + $0x3b0] sm:$0xff]
                  %1117 = vst [vmem:[%s997 + $0x1d8] sm:$0xff] %v1116
                  %v1118 = vld [vmem:[%s996 + $0x3c0] sm:$0xff]
                  %1119 = vst [vmem:[%s997 + $0x1e0] sm:$0xff] %v1118
                  %v1120 = vld [vmem:[%s996 + $0x3d0] sm:$0xff]
                  %1121 = vst [vmem:[%s997 + $0x1e8] sm:$0xff] %v1120
                  %v1122 = vld [vmem:[%s996 + $0x3e0] sm:$0xff]
                  %1123 = vst [vmem:[%s997 + $0x1f0] sm:$0xff] %v1122
                  %v1124 = vld [vmem:[%s996 + $0x3f0] sm:$0xff]
                  %1125 = vst [vmem:[%s997 + $0x1f8] sm:$0xff] %v1124
                  %v1126 = vld [vmem:[%s996 + $0x400] sm:$0xff]
                  %1127 = vst [vmem:[%s997 + $0x200] sm:$0xff] %v1126
                  %v1128 = vld [vmem:[%s996 + $0x410] sm:$0xff]
                  %1129 = vst [vmem:[%s997 + $0x208] sm:$0xff] %v1128
                  %v1130 = vld [vmem:[%s996 + $0x420] sm:$0xff]
                  %1131 = vst [vmem:[%s997 + $0x210] sm:$0xff] %v1130
                  %v1132 = vld [vmem:[%s996 + $0x430] sm:$0xff]
                  %1133 = vst [vmem:[%s997 + $0x218] sm:$0xff] %v1132
                  %v1134 = vld [vmem:[%s996 + $0x440] sm:$0xff]
                  %1135 = vst [vmem:[%s997 + $0x220] sm:$0xff] %v1134
                  %v1136 = vld [vmem:[%s996 + $0x450] sm:$0xff]
                  %1137 = vst [vmem:[%s997 + $0x228] sm:$0xff] %v1136
                  %v1138 = vld [vmem:[%s996 + $0x460] sm:$0xff]
                  %1139 = vst [vmem:[%s997 + $0x230] sm:$0xff] %v1138
                  %v1140 = vld [vmem:[%s996 + $0x470] sm:$0xff]
                  %1141 = vst [vmem:[%s997 + $0x238] sm:$0xff] %v1140
                  %v1142 = vld [vmem:[%s996 + $0x480] sm:$0xff]
                  %1143 = vst [vmem:[%s997 + $0x240] sm:$0xff] %v1142
                  %v1144 = vld [vmem:[%s996 + $0x490] sm:$0xff]
                  %1145 = vst [vmem:[%s997 + $0x248] sm:$0xff] %v1144
                  %v1146 = vld [vmem:[%s996 + $0x4a0] sm:$0xff]
                  %1147 = vst [vmem:[%s997 + $0x250] sm:$0xff] %v1146
                  %v1148 = vld [vmem:[%s996 + $0x4b0] sm:$0xff]
                  %1149 = vst [vmem:[%s997 + $0x258] sm:$0xff] %v1148
                  %v1150 = vld [vmem:[%s996 + $0x4c0] sm:$0xff]
                  %1151 = vst [vmem:[%s997 + $0x260] sm:$0xff] %v1150
                  %v1152 = vld [vmem:[%s996 + $0x4d0] sm:$0xff]
                  %1153 = vst [vmem:[%s997 + $0x268] sm:$0xff] %v1152
                  %v1154 = vld [vmem:[%s996 + $0x4e0] sm:$0xff]
                  %1155 = vst [vmem:[%s997 + $0x270] sm:$0xff] %v1154
                  %v1156 = vld [vmem:[%s996 + $0x4f0] sm:$0xff]
                  %1157 = vst [vmem:[%s997 + $0x278] sm:$0xff] %v1156
                  %v1158 = vld [vmem:[%s996 + $0x500] sm:$0xff]
                  %1159 = vst [vmem:[%s997 + $0x280] sm:$0xff] %v1158
                  %v1160 = vld [vmem:[%s996 + $0x510] sm:$0xff]
                  %1161 = vst [vmem:[%s997 + $0x288] sm:$0xff] %v1160
                  %v1162 = vld [vmem:[%s996 + $0x520] sm:$0xff]
                  %1163 = vst [vmem:[%s997 + $0x290] sm:$0xff] %v1162
                  %v1164 = vld [vmem:[%s996 + $0x530] sm:$0xff]
                  %1165 = vst [vmem:[%s997 + $0x298] sm:$0xff] %v1164
                  %v1166 = vld [vmem:[%s996 + $0x540] sm:$0xff]
                  %1167 = vst [vmem:[%s997 + $0x2a0] sm:$0xff] %v1166
                  %v1168 = vld [vmem:[%s996 + $0x550] sm:$0xff]
                  %1169 = vst [vmem:[%s997 + $0x2a8] sm:$0xff] %v1168
                  %v1170 = vld [vmem:[%s996 + $0x560] sm:$0xff]
                  %1171 = vst [vmem:[%s997 + $0x2b0] sm:$0xff] %v1170
                  %v1172 = vld [vmem:[%s996 + $0x570] sm:$0xff]
                  %1173 = vst [vmem:[%s997 + $0x2b8] sm:$0xff] %v1172
                  %v1174 = vld [vmem:[%s996 + $0x580] sm:$0xff]
                  %1175 = vst [vmem:[%s997 + $0x2c0] sm:$0xff] %v1174
                  %v1176 = vld [vmem:[%s996 + $0x590] sm:$0xff]
                  %1177 = vst [vmem:[%s997 + $0x2c8] sm:$0xff] %v1176
                  %v1178 = vld [vmem:[%s996 + $0x5a0] sm:$0xff]
                  %1179 = vst [vmem:[%s997 + $0x2d0] sm:$0xff] %v1178
                  %v1180 = vld [vmem:[%s996 + $0x5b0] sm:$0xff]
                  %1181 = vst [vmem:[%s997 + $0x2d8] sm:$0xff] %v1180
                  %v1182 = vld [vmem:[%s996 + $0x5c0] sm:$0xff]
                  %1183 = vst [vmem:[%s997 + $0x2e0] sm:$0xff] %v1182
                  %v1184 = vld [vmem:[%s996 + $0x5d0] sm:$0xff]
                  %1185 = vst [vmem:[%s997 + $0x2e8] sm:$0xff] %v1184
                  %v1186 = vld [vmem:[%s996 + $0x5e0] sm:$0xff]
                  %1187 = vst [vmem:[%s997 + $0x2f0] sm:$0xff] %v1186
                  %v1188 = vld [vmem:[%s996 + $0x5f0] sm:$0xff]
                  %1189 = vst [vmem:[%s997 + $0x2f8] sm:$0xff] %v1188
                  %v1190 = vld [vmem:[%s996 + $0x600] sm:$0xff]
                  %1191 = vst [vmem:[%s997 + $0x300] sm:$0xff] %v1190
                  %v1192 = vld [vmem:[%s996 + $0x610] sm:$0xff]
                  %1193 = vst [vmem:[%s997 + $0x308] sm:$0xff] %v1192
                  %v1194 = vld [vmem:[%s996 + $0x620] sm:$0xff]
                  %1195 = vst [vmem:[%s997 + $0x310] sm:$0xff] %v1194
                  %v1196 = vld [vmem:[%s996 + $0x630] sm:$0xff]
                  %1197 = vst [vmem:[%s997 + $0x318] sm:$0xff] %v1196
                  %v1198 = vld [vmem:[%s996 + $0x640] sm:$0xff]
                  %1199 = vst [vmem:[%s997 + $0x320] sm:$0xff] %v1198
                  %v1200 = vld [vmem:[%s996 + $0x650] sm:$0xff]
                  %1201 = vst [vmem:[%s997 + $0x328] sm:$0xff] %v1200
                  %v1202 = vld [vmem:[%s996 + $0x660] sm:$0xff]
                  %1203 = vst [vmem:[%s997 + $0x330] sm:$0xff] %v1202
                  %v1204 = vld [vmem:[%s996 + $0x670] sm:$0xff]
                  %1205 = vst [vmem:[%s997 + $0x338] sm:$0xff] %v1204
                  %v1206 = vld [vmem:[%s996 + $0x680] sm:$0xff]
                  %1207 = vst [vmem:[%s997 + $0x340] sm:$0xff] %v1206
                  %v1208 = vld [vmem:[%s996 + $0x690] sm:$0xff]
                  %1209 = vst [vmem:[%s997 + $0x348] sm:$0xff] %v1208
                  %v1210 = vld [vmem:[%s996 + $0x6a0] sm:$0xff]
                  %1211 = vst [vmem:[%s997 + $0x350] sm:$0xff] %v1210
                  %v1212 = vld [vmem:[%s996 + $0x6b0] sm:$0xff]
                  %1213 = vst [vmem:[%s997 + $0x358] sm:$0xff] %v1212
                  %v1214 = vld [vmem:[%s996 + $0x6c0] sm:$0xff]
                  %1215 = vst [vmem:[%s997 + $0x360] sm:$0xff] %v1214
                  %v1216 = vld [vmem:[%s996 + $0x6d0] sm:$0xff]
                  %1217 = vst [vmem:[%s997 + $0x368] sm:$0xff] %v1216
                  %v1218 = vld [vmem:[%s996 + $0x6e0] sm:$0xff]
                  %1219 = vst [vmem:[%s997 + $0x370] sm:$0xff] %v1218
                  %v1220 = vld [vmem:[%s996 + $0x6f0] sm:$0xff]
                  %1221 = vst [vmem:[%s997 + $0x378] sm:$0xff] %v1220
                  %v1222 = vld [vmem:[%s996 + $0x700] sm:$0xff]
                  %1223 = vst [vmem:[%s997 + $0x380] sm:$0xff] %v1222
                  %v1224 = vld [vmem:[%s996 + $0x710] sm:$0xff]
                  %1225 = vst [vmem:[%s997 + $0x388] sm:$0xff] %v1224
                  %v1226 = vld [vmem:[%s996 + $0x720] sm:$0xff]
                  %1227 = vst [vmem:[%s997 + $0x390] sm:$0xff] %v1226
                  %v1228 = vld [vmem:[%s996 + $0x730] sm:$0xff]
                  %1229 = vst [vmem:[%s997 + $0x398] sm:$0xff] %v1228
                  %v1230 = vld [vmem:[%s996 + $0x740] sm:$0xff]
                  %1231 = vst [vmem:[%s997 + $0x3a0] sm:$0xff] %v1230
                  %v1232 = vld [vmem:[%s996 + $0x750] sm:$0xff]
                  %1233 = vst [vmem:[%s997 + $0x3a8] sm:$0xff] %v1232
                  %v1234 = vld [vmem:[%s996 + $0x760] sm:$0xff]
                  %1235 = vst [vmem:[%s997 + $0x3b0] sm:$0xff] %v1234
                  %v1236 = vld [vmem:[%s996 + $0x770] sm:$0xff]
                  %1237 = vst [vmem:[%s997 + $0x3b8] sm:$0xff] %v1236
                  %v1238 = vld [vmem:[%s996 + $0x780] sm:$0xff]
                  %1239 = vst [vmem:[%s997 + $0x3c0] sm:$0xff] %v1238
                  %v1240 = vld [vmem:[%s996 + $0x790] sm:$0xff]
                  %1241 = vst [vmem:[%s997 + $0x3c8] sm:$0xff] %v1240
                  %v1242 = vld [vmem:[%s996 + $0x7a0] sm:$0xff]
                  %1243 = vst [vmem:[%s997 + $0x3d0] sm:$0xff] %v1242
                  %v1244 = vld [vmem:[%s996 + $0x7b0] sm:$0xff]
                  %1245 = vst [vmem:[%s997 + $0x3d8] sm:$0xff] %v1244
                  %v1246 = vld [vmem:[%s996 + $0x7c0] sm:$0xff]
                  %1247 = vst [vmem:[%s997 + $0x3e0] sm:$0xff] %v1246
                  %v1248 = vld [vmem:[%s996 + $0x7d0] sm:$0xff]
                  %1249 = vst [vmem:[%s997 + $0x3e8] sm:$0xff] %v1248
                  %v1250 = vld [vmem:[%s996 + $0x7e0] sm:$0xff]
                  %1251 = vst [vmem:[%s997 + $0x3f0] sm:$0xff] %v1250
                  %v1252 = vld [vmem:[%s996 + $0x7f0] sm:$0xff]
                  %1253 = vst [vmem:[%s997 + $0x3f8] sm:$0xff] %v1252
                  %v1254 = vld [vmem:[%s996 + $0x800] sm:$0xff]
                  %1255 = vst [vmem:[%s997 + $0x400] sm:$0xff] %v1254
                  %v1256 = vld [vmem:[%s996 + $0x810] sm:$0xff]
                  %1257 = vst [vmem:[%s997 + $0x408] sm:$0xff] %v1256
                  %v1258 = vld [vmem:[%s996 + $0x820] sm:$0xff]
                  %1259 = vst [vmem:[%s997 + $0x410] sm:$0xff] %v1258
                  %v1260 = vld [vmem:[%s996 + $0x830] sm:$0xff]
                  %1261 = vst [vmem:[%s997 + $0x418] sm:$0xff] %v1260
                  %v1262 = vld [vmem:[%s996 + $0x840] sm:$0xff]
                  %1263 = vst [vmem:[%s997 + $0x420] sm:$0xff] %v1262
                  %v1264 = vld [vmem:[%s996 + $0x850] sm:$0xff]
                  %1265 = vst [vmem:[%s997 + $0x428] sm:$0xff] %v1264
                  %v1266 = vld [vmem:[%s996 + $0x860] sm:$0xff]
                  %1267 = vst [vmem:[%s997 + $0x430] sm:$0xff] %v1266
                  %v1268 = vld [vmem:[%s996 + $0x870] sm:$0xff]
                  %1269 = vst [vmem:[%s997 + $0x438] sm:$0xff] %v1268
                  %v1270 = vld [vmem:[%s996 + $0x880] sm:$0xff]
                  %1271 = vst [vmem:[%s997 + $0x440] sm:$0xff] %v1270
                  %v1272 = vld [vmem:[%s996 + $0x890] sm:$0xff]
                  %1273 = vst [vmem:[%s997 + $0x448] sm:$0xff] %v1272
                  %v1274 = vld [vmem:[%s996 + $0x8a0] sm:$0xff]
                  %1275 = vst [vmem:[%s997 + $0x450] sm:$0xff] %v1274
                  %v1276 = vld [vmem:[%s996 + $0x8b0] sm:$0xff]
                  %1277 = vst [vmem:[%s997 + $0x458] sm:$0xff] %v1276
                  %v1278 = vld [vmem:[%s996 + $0x8c0] sm:$0xff]
                  %1279 = vst [vmem:[%s997 + $0x460] sm:$0xff] %v1278
                  %v1280 = vld [vmem:[%s996 + $0x8d0] sm:$0xff]
                  %1281 = vst [vmem:[%s997 + $0x468] sm:$0xff] %v1280
                  %v1282 = vld [vmem:[%s996 + $0x8e0] sm:$0xff]
                  %1283 = vst [vmem:[%s997 + $0x470] sm:$0xff] %v1282
                  %v1284 = vld [vmem:[%s996 + $0x8f0] sm:$0xff]
                  %1285 = vst [vmem:[%s997 + $0x478] sm:$0xff] %v1284
                  %v1286 = vld [vmem:[%s996 + $0x900] sm:$0xff]
                  %1287 = vst [vmem:[%s997 + $0x480] sm:$0xff] %v1286
                  %v1288 = vld [vmem:[%s996 + $0x910] sm:$0xff]
                  %1289 = vst [vmem:[%s997 + $0x488] sm:$0xff] %v1288
                  %v1290 = vld [vmem:[%s996 + $0x920] sm:$0xff]
                  %1291 = vst [vmem:[%s997 + $0x490] sm:$0xff] %v1290
                  %v1292 = vld [vmem:[%s996 + $0x930] sm:$0xff]
                  %1293 = vst [vmem:[%s997 + $0x498] sm:$0xff] %v1292
                  %v1294 = vld [vmem:[%s996 + $0x940] sm:$0xff]
                  %1295 = vst [vmem:[%s997 + $0x4a0] sm:$0xff] %v1294
                  %v1296 = vld [vmem:[%s996 + $0x950] sm:$0xff]
                  %1297 = vst [vmem:[%s997 + $0x4a8] sm:$0xff] %v1296
                  %v1298 = vld [vmem:[%s996 + $0x960] sm:$0xff]
                  %1299 = vst [vmem:[%s997 + $0x4b0] sm:$0xff] %v1298
                  %v1300 = vld [vmem:[%s996 + $0x970] sm:$0xff]
                  %1301 = vst [vmem:[%s997 + $0x4b8] sm:$0xff] %v1300
                  %v1302 = vld [vmem:[%s996 + $0x980] sm:$0xff]
                  %1303 = vst [vmem:[%s997 + $0x4c0] sm:$0xff] %v1302
                  %v1304 = vld [vmem:[%s996 + $0x990] sm:$0xff]
                  %1305 = vst [vmem:[%s997 + $0x4c8] sm:$0xff] %v1304
                  %v1306 = vld [vmem:[%s996 + $0x9a0] sm:$0xff]
                  %1307 = vst [vmem:[%s997 + $0x4d0] sm:$0xff] %v1306
                  %v1308 = vld [vmem:[%s996 + $0x9b0] sm:$0xff]
                  %1309 = vst [vmem:[%s997 + $0x4d8] sm:$0xff] %v1308
                  %v1310 = vld [vmem:[%s996 + $0x9c0] sm:$0xff]
                  %1311 = vst [vmem:[%s997 + $0x4e0] sm:$0xff] %v1310
                  %v1312 = vld [vmem:[%s996 + $0x9d0] sm:$0xff]
                  %1313 = vst [vmem:[%s997 + $0x4e8] sm:$0xff] %v1312
                  %v1314 = vld [vmem:[%s996 + $0x9e0] sm:$0xff]
                  %1315 = vst [vmem:[%s997 + $0x4f0] sm:$0xff] %v1314
                  %v1316 = vld [vmem:[%s996 + $0x9f0] sm:$0xff]
                  %1317 = vst [vmem:[%s997 + $0x4f8] sm:$0xff] %v1316
                  %v1318 = vld [vmem:[%s996 + $0xa00] sm:$0xff]
                  %1319 = vst [vmem:[%s997 + $0x500] sm:$0xff] %v1318
                  %v1320 = vld [vmem:[%s996 + $0xa10] sm:$0xff]
                  %1321 = vst [vmem:[%s997 + $0x508] sm:$0xff] %v1320
                  %v1322 = vld [vmem:[%s996 + $0xa20] sm:$0xff]
                  %1323 = vst [vmem:[%s997 + $0x510] sm:$0xff] %v1322
                  %v1324 = vld [vmem:[%s996 + $0xa30] sm:$0xff]
                  %1325 = vst [vmem:[%s997 + $0x518] sm:$0xff] %v1324
                  %v1326 = vld [vmem:[%s996 + $0xa40] sm:$0xff]
                  %1327 = vst [vmem:[%s997 + $0x520] sm:$0xff] %v1326
                  %v1328 = vld [vmem:[%s996 + $0xa50] sm:$0xff]
                  %1329 = vst [vmem:[%s997 + $0x528] sm:$0xff] %v1328
                  %v1330 = vld [vmem:[%s996 + $0xa60] sm:$0xff]
                  %1331 = vst [vmem:[%s997 + $0x530] sm:$0xff] %v1330
                  %v1332 = vld [vmem:[%s996 + $0xa70] sm:$0xff]
                  %1333 = vst [vmem:[%s997 + $0x538] sm:$0xff] %v1332
                  %v1334 = vld [vmem:[%s996 + $0xa80] sm:$0xff]
                  %1335 = vst [vmem:[%s997 + $0x540] sm:$0xff] %v1334
                  %v1336 = vld [vmem:[%s996 + $0xa90] sm:$0xff]
                  %1337 = vst [vmem:[%s997 + $0x548] sm:$0xff] %v1336
                  %v1338 = vld [vmem:[%s996 + $0xaa0] sm:$0xff]
                  %1339 = vst [vmem:[%s997 + $0x550] sm:$0xff] %v1338
                  %v1340 = vld [vmem:[%s996 + $0xab0] sm:$0xff]
                  %1341 = vst [vmem:[%s997 + $0x558] sm:$0xff] %v1340
                  %v1342 = vld [vmem:[%s996 + $0xac0] sm:$0xff]
                  %1343 = vst [vmem:[%s997 + $0x560] sm:$0xff] %v1342
                  %v1344 = vld [vmem:[%s996 + $0xad0] sm:$0xff]
                  %1345 = vst [vmem:[%s997 + $0x568] sm:$0xff] %v1344
                  %v1346 = vld [vmem:[%s996 + $0xae0] sm:$0xff]
                  %1347 = vst [vmem:[%s997 + $0x570] sm:$0xff] %v1346
                  %v1348 = vld [vmem:[%s996 + $0xaf0] sm:$0xff]
                  %1349 = vst [vmem:[%s997 + $0x578] sm:$0xff] %v1348
                  %v1350 = vld [vmem:[%s996 + $0xb00] sm:$0xff]
                  %1351 = vst [vmem:[%s997 + $0x580] sm:$0xff] %v1350
                  %v1352 = vld [vmem:[%s996 + $0xb10] sm:$0xff]
                  %1353 = vst [vmem:[%s997 + $0x588] sm:$0xff] %v1352
                  %v1354 = vld [vmem:[%s996 + $0xb20] sm:$0xff]
                  %1355 = vst [vmem:[%s997 + $0x590] sm:$0xff] %v1354
                  %v1356 = vld [vmem:[%s996 + $0xb30] sm:$0xff]
                  %1357 = vst [vmem:[%s997 + $0x598] sm:$0xff] %v1356
                  %v1358 = vld [vmem:[%s996 + $0xb40] sm:$0xff]
                  %1359 = vst [vmem:[%s997 + $0x5a0] sm:$0xff] %v1358
                  %v1360 = vld [vmem:[%s996 + $0xb50] sm:$0xff]
                  %1361 = vst [vmem:[%s997 + $0x5a8] sm:$0xff] %v1360
                  %v1362 = vld [vmem:[%s996 + $0xb60] sm:$0xff]
                  %1363 = vst [vmem:[%s997 + $0x5b0] sm:$0xff] %v1362
                  %v1364 = vld [vmem:[%s996 + $0xb70] sm:$0xff]
                  %1365 = vst [vmem:[%s997 + $0x5b8] sm:$0xff] %v1364
                  %v1366 = vld [vmem:[%s996 + $0xb80] sm:$0xff]
                  %1367 = vst [vmem:[%s997 + $0x5c0] sm:$0xff] %v1366
                  %v1368 = vld [vmem:[%s996 + $0xb90] sm:$0xff]
                  %1369 = vst [vmem:[%s997 + $0x5c8] sm:$0xff] %v1368
                  %v1370 = vld [vmem:[%s996 + $0xba0] sm:$0xff]
                  %1371 = vst [vmem:[%s997 + $0x5d0] sm:$0xff] %v1370
                  %v1372 = vld [vmem:[%s996 + $0xbb0] sm:$0xff]
                  %1373 = vst [vmem:[%s997 + $0x5d8] sm:$0xff] %v1372
                  %v1374 = vld [vmem:[%s996 + $0xbc0] sm:$0xff]
                  %1375 = vst [vmem:[%s997 + $0x5e0] sm:$0xff] %v1374
                  %v1376 = vld [vmem:[%s996 + $0xbd0] sm:$0xff]
                  %1377 = vst [vmem:[%s997 + $0x5e8] sm:$0xff] %v1376
                  %v1378 = vld [vmem:[%s996 + $0xbe0] sm:$0xff]
                  %1379 = vst [vmem:[%s997 + $0x5f0] sm:$0xff] %v1378
                  %v1380 = vld [vmem:[%s996 + $0xbf0] sm:$0xff]
                  %1381 = vst [vmem:[%s997 + $0x5f8] sm:$0xff] %v1380
                  %v1382 = vld [vmem:[%s996 + $0xc00] sm:$0xff]
                  %1383 = vst [vmem:[%s997 + $0x600] sm:$0xff] %v1382
                  %v1384 = vld [vmem:[%s996 + $0xc10] sm:$0xff]
                  %1385 = vst [vmem:[%s997 + $0x608] sm:$0xff] %v1384
                  %v1386 = vld [vmem:[%s996 + $0xc20] sm:$0xff]
                  %1387 = vst [vmem:[%s997 + $0x610] sm:$0xff] %v1386
                  %v1388 = vld [vmem:[%s996 + $0xc30] sm:$0xff]
                  %1389 = vst [vmem:[%s997 + $0x618] sm:$0xff] %v1388
                  %v1390 = vld [vmem:[%s996 + $0xc40] sm:$0xff]
                  %1391 = vst [vmem:[%s997 + $0x620] sm:$0xff] %v1390
                  %v1392 = vld [vmem:[%s996 + $0xc50] sm:$0xff]
                  %1393 = vst [vmem:[%s997 + $0x628] sm:$0xff] %v1392
                  %v1394 = vld [vmem:[%s996 + $0xc60] sm:$0xff]
                  %1395 = vst [vmem:[%s997 + $0x630] sm:$0xff] %v1394
                  %v1396 = vld [vmem:[%s996 + $0xc70] sm:$0xff]
                  %1397 = vst [vmem:[%s997 + $0x638] sm:$0xff] %v1396
                  %v1398 = vld [vmem:[%s996 + $0xc80] sm:$0xff]
                  %1399 = vst [vmem:[%s997 + $0x640] sm:$0xff] %v1398
                  %v1400 = vld [vmem:[%s996 + $0xc90] sm:$0xff]
                  %1401 = vst [vmem:[%s997 + $0x648] sm:$0xff] %v1400
                  %v1402 = vld [vmem:[%s996 + $0xca0] sm:$0xff]
                  %1403 = vst [vmem:[%s997 + $0x650] sm:$0xff] %v1402
                  %v1404 = vld [vmem:[%s996 + $0xcb0] sm:$0xff]
                  %1405 = vst [vmem:[%s997 + $0x658] sm:$0xff] %v1404
                  %v1406 = vld [vmem:[%s996 + $0xcc0] sm:$0xff]
                  %1407 = vst [vmem:[%s997 + $0x660] sm:$0xff] %v1406
                  %v1408 = vld [vmem:[%s996 + $0xcd0] sm:$0xff]
                  %1409 = vst [vmem:[%s997 + $0x668] sm:$0xff] %v1408
                  %v1410 = vld [vmem:[%s996 + $0xce0] sm:$0xff]
                  %1411 = vst [vmem:[%s997 + $0x670] sm:$0xff] %v1410
                  %v1412 = vld [vmem:[%s996 + $0xcf0] sm:$0xff]
                  %1413 = vst [vmem:[%s997 + $0x678] sm:$0xff] %v1412
                  %v1414 = vld [vmem:[%s996 + $0xd00] sm:$0xff]
                  %1415 = vst [vmem:[%s997 + $0x680] sm:$0xff] %v1414
                  %v1416 = vld [vmem:[%s996 + $0xd10] sm:$0xff]
                  %1417 = vst [vmem:[%s997 + $0x688] sm:$0xff] %v1416
                  %v1418 = vld [vmem:[%s996 + $0xd20] sm:$0xff]
                  %1419 = vst [vmem:[%s997 + $0x690] sm:$0xff] %v1418
                  %v1420 = vld [vmem:[%s996 + $0xd30] sm:$0xff]
                  %1421 = vst [vmem:[%s997 + $0x698] sm:$0xff] %v1420
                  %v1422 = vld [vmem:[%s996 + $0xd40] sm:$0xff]
                  %1423 = vst [vmem:[%s997 + $0x6a0] sm:$0xff] %v1422
                  %v1424 = vld [vmem:[%s996 + $0xd50] sm:$0xff]
                  %1425 = vst [vmem:[%s997 + $0x6a8] sm:$0xff] %v1424
                  %v1426 = vld [vmem:[%s996 + $0xd60] sm:$0xff]
                  %1427 = vst [vmem:[%s997 + $0x6b0] sm:$0xff] %v1426
                  %v1428 = vld [vmem:[%s996 + $0xd70] sm:$0xff]
                  %1429 = vst [vmem:[%s997 + $0x6b8] sm:$0xff] %v1428
                  %v1430 = vld [vmem:[%s996 + $0xd80] sm:$0xff]
                  %1431 = vst [vmem:[%s997 + $0x6c0] sm:$0xff] %v1430
                  %v1432 = vld [vmem:[%s996 + $0xd90] sm:$0xff]
                  %1433 = vst [vmem:[%s997 + $0x6c8] sm:$0xff] %v1432
                  %v1434 = vld [vmem:[%s996 + $0xda0] sm:$0xff]
                  %1435 = vst [vmem:[%s997 + $0x6d0] sm:$0xff] %v1434
                  %v1436 = vld [vmem:[%s996 + $0xdb0] sm:$0xff]
                  %1437 = vst [vmem:[%s997 + $0x6d8] sm:$0xff] %v1436
                  %v1438 = vld [vmem:[%s996 + $0xdc0] sm:$0xff]
                  %1439 = vst [vmem:[%s997 + $0x6e0] sm:$0xff] %v1438
                  %v1440 = vld [vmem:[%s996 + $0xdd0] sm:$0xff]
                  %1441 = vst [vmem:[%s997 + $0x6e8] sm:$0xff] %v1440
                  %v1442 = vld [vmem:[%s996 + $0xde0] sm:$0xff]
                  %1443 = vst [vmem:[%s997 + $0x6f0] sm:$0xff] %v1442
                  %v1444 = vld [vmem:[%s996 + $0xdf0] sm:$0xff]
                  %1445 = vst [vmem:[%s997 + $0x6f8] sm:$0xff] %v1444
                  %v1446 = vld [vmem:[%s996 + $0xe00] sm:$0xff]
                  %1447 = vst [vmem:[%s997 + $0x700] sm:$0xff] %v1446
                  %v1448 = vld [vmem:[%s996 + $0xe10] sm:$0xff]
                  %1449 = vst [vmem:[%s997 + $0x708] sm:$0xff] %v1448
                  %v1450 = vld [vmem:[%s996 + $0xe20] sm:$0xff]
                  %1451 = vst [vmem:[%s997 + $0x710] sm:$0xff] %v1450
                  %v1452 = vld [vmem:[%s996 + $0xe30] sm:$0xff]
                  %1453 = vst [vmem:[%s997 + $0x718] sm:$0xff] %v1452
                  %v1454 = vld [vmem:[%s996 + $0xe40] sm:$0xff]
                  %1455 = vst [vmem:[%s997 + $0x720] sm:$0xff] %v1454
                  %v1456 = vld [vmem:[%s996 + $0xe50] sm:$0xff]
                  %1457 = vst [vmem:[%s997 + $0x728] sm:$0xff] %v1456
                  %v1458 = vld [vmem:[%s996 + $0xe60] sm:$0xff]
                  %1459 = vst [vmem:[%s997 + $0x730] sm:$0xff] %v1458
                  %v1460 = vld [vmem:[%s996 + $0xe70] sm:$0xff]
                  %1461 = vst [vmem:[%s997 + $0x738] sm:$0xff] %v1460
                  %v1462 = vld [vmem:[%s996 + $0xe80] sm:$0xff]
                  %1463 = vst [vmem:[%s997 + $0x740] sm:$0xff] %v1462
                  %v1464 = vld [vmem:[%s996 + $0xe90] sm:$0xff]
                  %1465 = vst [vmem:[%s997 + $0x748] sm:$0xff] %v1464
                  %v1466 = vld [vmem:[%s996 + $0xea0] sm:$0xff]
                  %1467 = vst [vmem:[%s997 + $0x750] sm:$0xff] %v1466
                  %v1468 = vld [vmem:[%s996 + $0xeb0] sm:$0xff]
                  %1469 = vst [vmem:[%s997 + $0x758] sm:$0xff] %v1468
                  %v1470 = vld [vmem:[%s996 + $0xec0] sm:$0xff]
                  %1471 = vst [vmem:[%s997 + $0x760] sm:$0xff] %v1470
                  %v1472 = vld [vmem:[%s996 + $0xed0] sm:$0xff]
                  %1473 = vst [vmem:[%s997 + $0x768] sm:$0xff] %v1472
                  %v1474 = vld [vmem:[%s996 + $0xee0] sm:$0xff]
                  %1475 = vst [vmem:[%s997 + $0x770] sm:$0xff] %v1474
                  %v1476 = vld [vmem:[%s996 + $0xef0] sm:$0xff]
                  %1477 = vst [vmem:[%s997 + $0x778] sm:$0xff] %v1476
                  %v1478 = vld [vmem:[%s996 + $0xf00] sm:$0xff]
                  %1479 = vst [vmem:[%s997 + $0x780] sm:$0xff] %v1478
                  %v1480 = vld [vmem:[%s996 + $0xf10] sm:$0xff]
                  %1481 = vst [vmem:[%s997 + $0x788] sm:$0xff] %v1480
                  %v1482 = vld [vmem:[%s996 + $0xf20] sm:$0xff]
                  %1483 = vst [vmem:[%s997 + $0x790] sm:$0xff] %v1482
                  %v1484 = vld [vmem:[%s996 + $0xf30] sm:$0xff]
                  %1485 = vst [vmem:[%s997 + $0x798] sm:$0xff] %v1484
                  %v1486 = vld [vmem:[%s996 + $0xf40] sm:$0xff]
                  %1487 = vst [vmem:[%s997 + $0x7a0] sm:$0xff] %v1486
                  %v1488 = vld [vmem:[%s996 + $0xf50] sm:$0xff]
                  %1489 = vst [vmem:[%s997 + $0x7a8] sm:$0xff] %v1488
                  %v1490 = vld [vmem:[%s996 + $0xf60] sm:$0xff]
                  %1491 = vst [vmem:[%s997 + $0x7b0] sm:$0xff] %v1490
                  %v1492 = vld [vmem:[%s996 + $0xf70] sm:$0xff]
                  %1493 = vst [vmem:[%s997 + $0x7b8] sm:$0xff] %v1492
                  %v1494 = vld [vmem:[%s996 + $0xf80] sm:$0xff]
                  %1495 = vst [vmem:[%s997 + $0x7c0] sm:$0xff] %v1494
                  %v1496 = vld [vmem:[%s996 + $0xf90] sm:$0xff]
                  %1497 = vst [vmem:[%s997 + $0x7c8] sm:$0xff] %v1496
                  %v1498 = vld [vmem:[%s996 + $0xfa0] sm:$0xff]
                  %1499 = vst [vmem:[%s997 + $0x7d0] sm:$0xff] %v1498
                  %v1500 = vld [vmem:[%s996 + $0xfb0] sm:$0xff]
                  %1501 = vst [vmem:[%s997 + $0x7d8] sm:$0xff] %v1500
                  %v1502 = vld [vmem:[%s996 + $0xfc0] sm:$0xff]
                  %1503 = vst [vmem:[%s997 + $0x7e0] sm:$0xff] %v1502
                  %v1504 = vld [vmem:[%s996 + $0xfd0] sm:$0xff]
                  %1505 = vst [vmem:[%s997 + $0x7e8] sm:$0xff] %v1504
                  %v1506 = vld [vmem:[%s996 + $0xfe0] sm:$0xff]
                  %1507 = vst [vmem:[%s997 + $0x7f0] sm:$0xff] %v1506
                  %v1508 = vld [vmem:[%s996 + $0xff0] sm:$0xff]
                  %1509 = vst [vmem:[%s997 + $0x7f8] sm:$0xff] %v1508
                  %v1510 = vld [vmem:[%s996 + $0x1000] sm:$0xff]
                  %1511 = vst [vmem:[%s997 + $0x800] sm:$0xff] %v1510
                  %v1512 = vld [vmem:[%s996 + $0x1010] sm:$0xff]
                  %1513 = vst [vmem:[%s997 + $0x808] sm:$0xff] %v1512
                  %v1514 = vld [vmem:[%s996 + $0x1020] sm:$0xff]
                  %1515 = vst [vmem:[%s997 + $0x810] sm:$0xff] %v1514
                  %v1516 = vld [vmem:[%s996 + $0x1030] sm:$0xff]
                  %1517 = vst [vmem:[%s997 + $0x818] sm:$0xff] %v1516
                  %v1518 = vld [vmem:[%s996 + $0x1040] sm:$0xff]
                  %1519 = vst [vmem:[%s997 + $0x820] sm:$0xff] %v1518
                  %v1520 = vld [vmem:[%s996 + $0x1050] sm:$0xff]
                  %1521 = vst [vmem:[%s997 + $0x828] sm:$0xff] %v1520
                  %v1522 = vld [vmem:[%s996 + $0x1060] sm:$0xff]
                  %1523 = vst [vmem:[%s997 + $0x830] sm:$0xff] %v1522
                  %v1524 = vld [vmem:[%s996 + $0x1070] sm:$0xff]
                  %1525 = vst [vmem:[%s997 + $0x838] sm:$0xff] %v1524
                  %v1526 = vld [vmem:[%s996 + $0x1080] sm:$0xff]
                  %1527 = vst [vmem:[%s997 + $0x840] sm:$0xff] %v1526
                  %v1528 = vld [vmem:[%s996 + $0x1090] sm:$0xff]
                  %1529 = vst [vmem:[%s997 + $0x848] sm:$0xff] %v1528
                  %v1530 = vld [vmem:[%s996 + $0x10a0] sm:$0xff]
                  %1531 = vst [vmem:[%s997 + $0x850] sm:$0xff] %v1530
                  %v1532 = vld [vmem:[%s996 + $0x10b0] sm:$0xff]
                  %1533 = vst [vmem:[%s997 + $0x858] sm:$0xff] %v1532
                  %v1534 = vld [vmem:[%s996 + $0x10c0] sm:$0xff]
                  %1535 = vst [vmem:[%s997 + $0x860] sm:$0xff] %v1534
                  %v1536 = vld [vmem:[%s996 + $0x10d0] sm:$0xff]
                  %1537 = vst [vmem:[%s997 + $0x868] sm:$0xff] %v1536
                  %v1538 = vld [vmem:[%s996 + $0x10e0] sm:$0xff]
                  %1539 = vst [vmem:[%s997 + $0x870] sm:$0xff] %v1538
                  %v1540 = vld [vmem:[%s996 + $0x10f0] sm:$0xff]
                  %1541 = vst [vmem:[%s997 + $0x878] sm:$0xff] %v1540
                  %v1542 = vld [vmem:[%s996 + $0x1100] sm:$0xff]
                  %1543 = vst [vmem:[%s997 + $0x880] sm:$0xff] %v1542
                  %v1544 = vld [vmem:[%s996 + $0x1110] sm:$0xff]
                  %1545 = vst [vmem:[%s997 + $0x888] sm:$0xff] %v1544
                  %v1546 = vld [vmem:[%s996 + $0x1120] sm:$0xff]
                  %1547 = vst [vmem:[%s997 + $0x890] sm:$0xff] %v1546
                  %v1548 = vld [vmem:[%s996 + $0x1130] sm:$0xff]
                  %1549 = vst [vmem:[%s997 + $0x898] sm:$0xff] %v1548
                  %v1550 = vld [vmem:[%s996 + $0x1140] sm:$0xff]
                  %1551 = vst [vmem:[%s997 + $0x8a0] sm:$0xff] %v1550
                  %v1552 = vld [vmem:[%s996 + $0x1150] sm:$0xff]
                  %1553 = vst [vmem:[%s997 + $0x8a8] sm:$0xff] %v1552
                  %v1554 = vld [vmem:[%s996 + $0x1160] sm:$0xff]
                  %1555 = vst [vmem:[%s997 + $0x8b0] sm:$0xff] %v1554
                  %v1556 = vld [vmem:[%s996 + $0x1170] sm:$0xff]
                  %1557 = vst [vmem:[%s997 + $0x8b8] sm:$0xff] %v1556
                  %v1558 = vld [vmem:[%s996 + $0x1180] sm:$0xff]
                  %1559 = vst [vmem:[%s997 + $0x8c0] sm:$0xff] %v1558
                  %v1560 = vld [vmem:[%s996 + $0x1190] sm:$0xff]
                  %1561 = vst [vmem:[%s997 + $0x8c8] sm:$0xff] %v1560
                  %v1562 = vld [vmem:[%s996 + $0x11a0] sm:$0xff]
                  %1563 = vst [vmem:[%s997 + $0x8d0] sm:$0xff] %v1562
                  %v1564 = vld [vmem:[%s996 + $0x11b0] sm:$0xff]
                  %1565 = vst [vmem:[%s997 + $0x8d8] sm:$0xff] %v1564
                  %v1566 = vld [vmem:[%s996 + $0x11c0] sm:$0xff]
                  %1567 = vst [vmem:[%s997 + $0x8e0] sm:$0xff] %v1566
                  %v1568 = vld [vmem:[%s996 + $0x11d0] sm:$0xff]
                  %1569 = vst [vmem:[%s997 + $0x8e8] sm:$0xff] %v1568
                  %v1570 = vld [vmem:[%s996 + $0x11e0] sm:$0xff]
                  %1571 = vst [vmem:[%s997 + $0x8f0] sm:$0xff] %v1570
                  %v1572 = vld [vmem:[%s996 + $0x11f0] sm:$0xff]
                  %1573 = vst [vmem:[%s997 + $0x8f8] sm:$0xff] %v1572
                  %v1574 = vld [vmem:[%s996 + $0x1200] sm:$0xff]
                  %1575 = vst [vmem:[%s997 + $0x900] sm:$0xff] %v1574
                  %v1576 = vld [vmem:[%s996 + $0x1210] sm:$0xff]
                  %1577 = vst [vmem:[%s997 + $0x908] sm:$0xff] %v1576
                  %v1578 = vld [vmem:[%s996 + $0x1220] sm:$0xff]
                  %1579 = vst [vmem:[%s997 + $0x910] sm:$0xff] %v1578
                  %v1580 = vld [vmem:[%s996 + $0x1230] sm:$0xff]
                  %1581 = vst [vmem:[%s997 + $0x918] sm:$0xff] %v1580
                  %v1582 = vld [vmem:[%s996 + $0x1240] sm:$0xff]
                  %1583 = vst [vmem:[%s997 + $0x920] sm:$0xff] %v1582
                  %v1584 = vld [vmem:[%s996 + $0x1250] sm:$0xff]
                  %1585 = vst [vmem:[%s997 + $0x928] sm:$0xff] %v1584
                  %v1586 = vld [vmem:[%s996 + $0x1260] sm:$0xff]
                  %1587 = vst [vmem:[%s997 + $0x930] sm:$0xff] %v1586
                  %v1588 = vld [vmem:[%s996 + $0x1270] sm:$0xff]
                  %1589 = vst [vmem:[%s997 + $0x938] sm:$0xff] %v1588
                  %v1590 = vld [vmem:[%s996 + $0x1280] sm:$0xff]
                  %1591 = vst [vmem:[%s997 + $0x940] sm:$0xff] %v1590
                  %v1592 = vld [vmem:[%s996 + $0x1290] sm:$0xff]
                  %1593 = vst [vmem:[%s997 + $0x948] sm:$0xff] %v1592
                  %v1594 = vld [vmem:[%s996 + $0x12a0] sm:$0xff]
                  %1595 = vst [vmem:[%s997 + $0x950] sm:$0xff] %v1594
                  %v1596 = vld [vmem:[%s996 + $0x12b0] sm:$0xff]
                  %1597 = vst [vmem:[%s997 + $0x958] sm:$0xff] %v1596
                  %v1598 = vld [vmem:[%s996 + $0x12c0] sm:$0xff]
                  %1599 = vst [vmem:[%s997 + $0x960] sm:$0xff] %v1598
                  %v1600 = vld [vmem:[%s996 + $0x12d0] sm:$0xff]
                  %1601 = vst [vmem:[%s997 + $0x968] sm:$0xff] %v1600
                  %v1602 = vld [vmem:[%s996 + $0x12e0] sm:$0xff]
                  %1603 = vst [vmem:[%s997 + $0x970] sm:$0xff] %v1602
                  %v1604 = vld [vmem:[%s996 + $0x12f0] sm:$0xff]
                  %1605 = vst [vmem:[%s997 + $0x978] sm:$0xff] %v1604
                  %v1606 = vld [vmem:[%s996 + $0x1300] sm:$0xff]
                  %1607 = vst [vmem:[%s997 + $0x980] sm:$0xff] %v1606
                  %v1608 = vld [vmem:[%s996 + $0x1310] sm:$0xff]
                  %1609 = vst [vmem:[%s997 + $0x988] sm:$0xff] %v1608
                  %v1610 = vld [vmem:[%s996 + $0x1320] sm:$0xff]
                  %1611 = vst [vmem:[%s997 + $0x990] sm:$0xff] %v1610
                  %v1612 = vld [vmem:[%s996 + $0x1330] sm:$0xff]
                  %1613 = vst [vmem:[%s997 + $0x998] sm:$0xff] %v1612
                  %v1614 = vld [vmem:[%s996 + $0x1340] sm:$0xff]
                  %1615 = vst [vmem:[%s997 + $0x9a0] sm:$0xff] %v1614
                  %v1616 = vld [vmem:[%s996 + $0x1350] sm:$0xff]
                  %1617 = vst [vmem:[%s997 + $0x9a8] sm:$0xff] %v1616
                  %v1618 = vld [vmem:[%s996 + $0x1360] sm:$0xff]
                  %1619 = vst [vmem:[%s997 + $0x9b0] sm:$0xff] %v1618
                  %v1620 = vld [vmem:[%s996 + $0x1370] sm:$0xff]
                  %1621 = vst [vmem:[%s997 + $0x9b8] sm:$0xff] %v1620
                  %v1622 = vld [vmem:[%s996 + $0x1380] sm:$0xff]
                  %1623 = vst [vmem:[%s997 + $0x9c0] sm:$0xff] %v1622
                  %v1624 = vld [vmem:[%s996 + $0x1390] sm:$0xff]
                  %1625 = vst [vmem:[%s997 + $0x9c8] sm:$0xff] %v1624
                  %v1626 = vld [vmem:[%s996 + $0x13a0] sm:$0xff]
                  %1627 = vst [vmem:[%s997 + $0x9d0] sm:$0xff] %v1626
                  %v1628 = vld [vmem:[%s996 + $0x13b0] sm:$0xff]
                  %1629 = vst [vmem:[%s997 + $0x9d8] sm:$0xff] %v1628
                  %v1630 = vld [vmem:[%s996 + $0x13c0] sm:$0xff]
                  %1631 = vst [vmem:[%s997 + $0x9e0] sm:$0xff] %v1630
                  %v1632 = vld [vmem:[%s996 + $0x13d0] sm:$0xff]
                  %1633 = vst [vmem:[%s997 + $0x9e8] sm:$0xff] %v1632
                  %v1634 = vld [vmem:[%s996 + $0x13e0] sm:$0xff]
                  %1635 = vst [vmem:[%s997 + $0x9f0] sm:$0xff] %v1634
                  %v1636 = vld [vmem:[%s996 + $0x13f0] sm:$0xff]
                  %1637 = vst [vmem:[%s997 + $0x9f8] sm:$0xff] %v1636
                  %v1638 = vld [vmem:[%s996 + $0x1400] sm:$0xff]
                  %1639 = vst [vmem:[%s997 + $0xa00] sm:$0xff] %v1638
                  %v1640 = vld [vmem:[%s996 + $0x1410] sm:$0xff]
                  %1641 = vst [vmem:[%s997 + $0xa08] sm:$0xff] %v1640
                  %v1642 = vld [vmem:[%s996 + $0x1420] sm:$0xff]
                  %1643 = vst [vmem:[%s997 + $0xa10] sm:$0xff] %v1642
                  %v1644 = vld [vmem:[%s996 + $0x1430] sm:$0xff]
                  %1645 = vst [vmem:[%s997 + $0xa18] sm:$0xff] %v1644
                  %v1646 = vld [vmem:[%s996 + $0x1440] sm:$0xff]
                  %1647 = vst [vmem:[%s997 + $0xa20] sm:$0xff] %v1646
                  %v1648 = vld [vmem:[%s996 + $0x1450] sm:$0xff]
                  %1649 = vst [vmem:[%s997 + $0xa28] sm:$0xff] %v1648
                  %v1650 = vld [vmem:[%s996 + $0x1460] sm:$0xff]
                  %1651 = vst [vmem:[%s997 + $0xa30] sm:$0xff] %v1650
                  %v1652 = vld [vmem:[%s996 + $0x1470] sm:$0xff]
                  %1653 = vst [vmem:[%s997 + $0xa38] sm:$0xff] %v1652
                  %v1654 = vld [vmem:[%s996 + $0x1480] sm:$0xff]
                  %1655 = vst [vmem:[%s997 + $0xa40] sm:$0xff] %v1654
                  %v1656 = vld [vmem:[%s996 + $0x1490] sm:$0xff]
                  %1657 = vst [vmem:[%s997 + $0xa48] sm:$0xff] %v1656
                  %v1658 = vld [vmem:[%s996 + $0x14a0] sm:$0xff]
                  %1659 = vst [vmem:[%s997 + $0xa50] sm:$0xff] %v1658
                  %v1660 = vld [vmem:[%s996 + $0x14b0] sm:$0xff]
                  %1661 = vst [vmem:[%s997 + $0xa58] sm:$0xff] %v1660
                  %v1662 = vld [vmem:[%s996 + $0x14c0] sm:$0xff]
                  %1663 = vst [vmem:[%s997 + $0xa60] sm:$0xff] %v1662
                  %v1664 = vld [vmem:[%s996 + $0x14d0] sm:$0xff]
                  %1665 = vst [vmem:[%s997 + $0xa68] sm:$0xff] %v1664
                  %v1666 = vld [vmem:[%s996 + $0x14e0] sm:$0xff]
                  %1667 = vst [vmem:[%s997 + $0xa70] sm:$0xff] %v1666
                  %v1668 = vld [vmem:[%s996 + $0x14f0] sm:$0xff]
                  %1669 = vst [vmem:[%s997 + $0xa78] sm:$0xff] %v1668
                  %v1670 = vld [vmem:[%s996 + $0x1500] sm:$0xff]
                  %1671 = vst [vmem:[%s997 + $0xa80] sm:$0xff] %v1670
                  %v1672 = vld [vmem:[%s996 + $0x1510] sm:$0xff]
                  %1673 = vst [vmem:[%s997 + $0xa88] sm:$0xff] %v1672
                  %v1674 = vld [vmem:[%s996 + $0x1520] sm:$0xff]
                  %1675 = vst [vmem:[%s997 + $0xa90] sm:$0xff] %v1674
                  %v1676 = vld [vmem:[%s996 + $0x1530] sm:$0xff]
                  %1677 = vst [vmem:[%s997 + $0xa98] sm:$0xff] %v1676
                  %v1678 = vld [vmem:[%s996 + $0x1540] sm:$0xff]
                  %1679 = vst [vmem:[%s997 + $0xaa0] sm:$0xff] %v1678
                  %v1680 = vld [vmem:[%s996 + $0x1550] sm:$0xff]
                  %1681 = vst [vmem:[%s997 + $0xaa8] sm:$0xff] %v1680
                  %v1682 = vld [vmem:[%s996 + $0x1560] sm:$0xff]
                  %1683 = vst [vmem:[%s997 + $0xab0] sm:$0xff] %v1682
                  %v1684 = vld [vmem:[%s996 + $0x1570] sm:$0xff]
                  %1685 = vst [vmem:[%s997 + $0xab8] sm:$0xff] %v1684
                  %v1686 = vld [vmem:[%s996 + $0x1580] sm:$0xff]
                  %1687 = vst [vmem:[%s997 + $0xac0] sm:$0xff] %v1686
                  %v1688 = vld [vmem:[%s996 + $0x1590] sm:$0xff]
                  %1689 = vst [vmem:[%s997 + $0xac8] sm:$0xff] %v1688
                  %v1690 = vld [vmem:[%s996 + $0x15a0] sm:$0xff]
                  %1691 = vst [vmem:[%s997 + $0xad0] sm:$0xff] %v1690
                  %v1692 = vld [vmem:[%s996 + $0x15b0] sm:$0xff]
                  %1693 = vst [vmem:[%s997 + $0xad8] sm:$0xff] %v1692
                  %v1694 = vld [vmem:[%s996 + $0x15c0] sm:$0xff]
                  %1695 = vst [vmem:[%s997 + $0xae0] sm:$0xff] %v1694
                  %v1696 = vld [vmem:[%s996 + $0x15d0] sm:$0xff]
                  %1697 = vst [vmem:[%s997 + $0xae8] sm:$0xff] %v1696
                  %v1698 = vld [vmem:[%s996 + $0x15e0] sm:$0xff]
                  %1699 = vst [vmem:[%s997 + $0xaf0] sm:$0xff] %v1698
                  %v1700 = vld [vmem:[%s996 + $0x15f0] sm:$0xff]
                  %1701 = vst [vmem:[%s997 + $0xaf8] sm:$0xff] %v1700
                  %v1702 = vld [vmem:[%s996 + $0x1600] sm:$0xff]
                  %1703 = vst [vmem:[%s997 + $0xb00] sm:$0xff] %v1702
                  %v1704 = vld [vmem:[%s996 + $0x1610] sm:$0xff]
                  %1705 = vst [vmem:[%s997 + $0xb08] sm:$0xff] %v1704
                  %v1706 = vld [vmem:[%s996 + $0x1620] sm:$0xff]
                  %1707 = vst [vmem:[%s997 + $0xb10] sm:$0xff] %v1706
                  %v1708 = vld [vmem:[%s996 + $0x1630] sm:$0xff]
                  %1709 = vst [vmem:[%s997 + $0xb18] sm:$0xff] %v1708
                  %v1710 = vld [vmem:[%s996 + $0x1640] sm:$0xff]
                  %1711 = vst [vmem:[%s997 + $0xb20] sm:$0xff] %v1710
                  %v1712 = vld [vmem:[%s996 + $0x1650] sm:$0xff]
                  %1713 = vst [vmem:[%s997 + $0xb28] sm:$0xff] %v1712
                  %v1714 = vld [vmem:[%s996 + $0x1660] sm:$0xff]
                  %1715 = vst [vmem:[%s997 + $0xb30] sm:$0xff] %v1714
                  %v1716 = vld [vmem:[%s996 + $0x1670] sm:$0xff]
                  %1717 = vst [vmem:[%s997 + $0xb38] sm:$0xff] %v1716
                  %v1718 = vld [vmem:[%s996 + $0x1680] sm:$0xff]
                  %1719 = vst [vmem:[%s997 + $0xb40] sm:$0xff] %v1718
                  %v1720 = vld [vmem:[%s996 + $0x1690] sm:$0xff]
                  %1721 = vst [vmem:[%s997 + $0xb48] sm:$0xff] %v1720
                  %v1722 = vld [vmem:[%s996 + $0x16a0] sm:$0xff]
                  %1723 = vst [vmem:[%s997 + $0xb50] sm:$0xff] %v1722
                  %v1724 = vld [vmem:[%s996 + $0x16b0] sm:$0xff]
                  %1725 = vst [vmem:[%s997 + $0xb58] sm:$0xff] %v1724
                  %v1726 = vld [vmem:[%s996 + $0x16c0] sm:$0xff]
                  %1727 = vst [vmem:[%s997 + $0xb60] sm:$0xff] %v1726
                  %v1728 = vld [vmem:[%s996 + $0x16d0] sm:$0xff]
                  %1729 = vst [vmem:[%s997 + $0xb68] sm:$0xff] %v1728
                  %v1730 = vld [vmem:[%s996 + $0x16e0] sm:$0xff]
                  %1731 = vst [vmem:[%s997 + $0xb70] sm:$0xff] %v1730
                  %v1732 = vld [vmem:[%s996 + $0x16f0] sm:$0xff]
                  %1733 = vst [vmem:[%s997 + $0xb78] sm:$0xff] %v1732
                  %v1734 = vld [vmem:[%s996 + $0x1700] sm:$0xff]
                  %1735 = vst [vmem:[%s997 + $0xb80] sm:$0xff] %v1734
                  %v1736 = vld [vmem:[%s996 + $0x1710] sm:$0xff]
                  %1737 = vst [vmem:[%s997 + $0xb88] sm:$0xff] %v1736
                  %v1738 = vld [vmem:[%s996 + $0x1720] sm:$0xff]
                  %1739 = vst [vmem:[%s997 + $0xb90] sm:$0xff] %v1738
                  %v1740 = vld [vmem:[%s996 + $0x1730] sm:$0xff]
                  %1741 = vst [vmem:[%s997 + $0xb98] sm:$0xff] %v1740
                  %v1742 = vld [vmem:[%s996 + $0x1740] sm:$0xff]
                  %1743 = vst [vmem:[%s997 + $0xba0] sm:$0xff] %v1742
                  %v1744 = vld [vmem:[%s996 + $0x1750] sm:$0xff]
                  %1745 = vst [vmem:[%s997 + $0xba8] sm:$0xff] %v1744
                  %v1746 = vld [vmem:[%s996 + $0x1760] sm:$0xff]
                  %1747 = vst [vmem:[%s997 + $0xbb0] sm:$0xff] %v1746
                  %v1748 = vld [vmem:[%s996 + $0x1770] sm:$0xff]
                  %1749 = vst [vmem:[%s997 + $0xbb8] sm:$0xff] %v1748
                  %v1750 = vld [vmem:[%s996 + $0x1780] sm:$0xff]
                  %1751 = vst [vmem:[%s997 + $0xbc0] sm:$0xff] %v1750
                  %v1752 = vld [vmem:[%s996 + $0x1790] sm:$0xff]
                  %1753 = vst [vmem:[%s997 + $0xbc8] sm:$0xff] %v1752
                  %v1754 = vld [vmem:[%s996 + $0x17a0] sm:$0xff]
                  %1755 = vst [vmem:[%s997 + $0xbd0] sm:$0xff] %v1754
                  %v1756 = vld [vmem:[%s996 + $0x17b0] sm:$0xff]
                  %1757 = vst [vmem:[%s997 + $0xbd8] sm:$0xff] %v1756
                  %v1758 = vld [vmem:[%s996 + $0x17c0] sm:$0xff]
                  %1759 = vst [vmem:[%s997 + $0xbe0] sm:$0xff] %v1758
                  %v1760 = vld [vmem:[%s996 + $0x17d0] sm:$0xff]
                  %1761 = vst [vmem:[%s997 + $0xbe8] sm:$0xff] %v1760
                  %v1762 = vld [vmem:[%s996 + $0x17e0] sm:$0xff]
                  %1763 = vst [vmem:[%s997 + $0xbf0] sm:$0xff] %v1762
                  %v1764 = vld [vmem:[%s996 + $0x17f0] sm:$0xff]
                  %1765 = vst [vmem:[%s997 + $0xbf8] sm:$0xff] %v1764
                  %v1766 = vld [vmem:[%s996 + $0x1800] sm:$0xff]
                  %1767 = vst [vmem:[%s997 + $0xc00] sm:$0xff] %v1766
                  %v1768 = vld [vmem:[%s996 + $0x1810] sm:$0xff]
                  %1769 = vst [vmem:[%s997 + $0xc08] sm:$0xff] %v1768
                  %v1770 = vld [vmem:[%s996 + $0x1820] sm:$0xff]
                  %1771 = vst [vmem:[%s997 + $0xc10] sm:$0xff] %v1770
                  %v1772 = vld [vmem:[%s996 + $0x1830] sm:$0xff]
                  %1773 = vst [vmem:[%s997 + $0xc18] sm:$0xff] %v1772
                  %v1774 = vld [vmem:[%s996 + $0x1840] sm:$0xff]
                  %1775 = vst [vmem:[%s997 + $0xc20] sm:$0xff] %v1774
                  %v1776 = vld [vmem:[%s996 + $0x1850] sm:$0xff]
                  %1777 = vst [vmem:[%s997 + $0xc28] sm:$0xff] %v1776
                  %v1778 = vld [vmem:[%s996 + $0x1860] sm:$0xff]
                  %1779 = vst [vmem:[%s997 + $0xc30] sm:$0xff] %v1778
                  %v1780 = vld [vmem:[%s996 + $0x1870] sm:$0xff]
                  %1781 = vst [vmem:[%s997 + $0xc38] sm:$0xff] %v1780
                $region56: #{dqn_forward.7} parent=50 // loop_footer
                  %s995 = sadd.s32 1, %s991
                $region57: #{dqn_forward.7} parent=50 // loop_footer_branch
                  %990 = sbr.rel target = $region53
                $region58: #{dqn_forward.7} parent=50 // loop_exit
                  _
              $region51: #{dqn_forward.7} parent=35 // pred_fallthru
                _
              // Predicated region
              $region59: #{dqn_forward.7} parent=35 // pred_check
                _
              $region60: #{dqn_forward.7} parent=35 // pred_check_branch
                %1783 = sbr.rel target = $region62
              $region61: #{dqn_forward.7} parent=35 // pred_region
                _
              $region62: #{dqn_forward.7} parent=35 // pred_fallthru
                _
            $region36: #{dqn_forward.7} parent=31 // pred_fallthru
              _
            // Predicated region
            $region37: #{dqn_forward.7} parent=31 // pred_check
              _
            $region38: #{dqn_forward.7} parent=31 // pred_check_branch
              %193 = sbr.rel target = $region40
            $region39: #{dqn_forward.7} parent=31 // pred_region
              %s195 = ssub.s32 256, 1
              loop: start=0, step=1, limit=1
              $region41: #{dqn_forward.7} parent=39 // loop_pre_header
                _
              $region42: #{dqn_forward.7} parent=39 // loop_header
                %s197 = sphi 0, %s201
                %p198 = scmp.ge.s32.totalorder %s197, 1
                %s202 = sphi %s187, %s187
                %s203 = sphi %s184, %s184
              $region43: #{dqn_forward.7} parent=39 // loop_header_branch
                %200 = sbr.rel (%p198) target = $region47
              $region44: #{dqn_forward.7} parent=39 // loop_body
                %v204 = vld [vmem:[%s202] sm:%s195]
                %205 = vst [vmem:[%s203] sm:%s195] %v204
                %v206 = vld [vmem:[%s202 + $0x10] sm:%s195]
                %207 = vst [vmem:[%s203 + $0x8] sm:%s195] %v206
                %v208 = vld [vmem:[%s202 + $0x20] sm:%s195]
                %209 = vst [vmem:[%s203 + $0x10] sm:%s195] %v208
                %v210 = vld [vmem:[%s202 + $0x30] sm:%s195]
                %211 = vst [vmem:[%s203 + $0x18] sm:%s195] %v210
                %v212 = vld [vmem:[%s202 + $0x40] sm:%s195]
                %213 = vst [vmem:[%s203 + $0x20] sm:%s195] %v212
                %v214 = vld [vmem:[%s202 + $0x50] sm:%s195]
                %215 = vst [vmem:[%s203 + $0x28] sm:%s195] %v214
                %v216 = vld [vmem:[%s202 + $0x60] sm:%s195]
                %217 = vst [vmem:[%s203 + $0x30] sm:%s195] %v216
                %v218 = vld [vmem:[%s202 + $0x70] sm:%s195]
                %219 = vst [vmem:[%s203 + $0x38] sm:%s195] %v218
                %v220 = vld [vmem:[%s202 + $0x80] sm:%s195]
                %221 = vst [vmem:[%s203 + $0x40] sm:%s195] %v220
                %v222 = vld [vmem:[%s202 + $0x90] sm:%s195]
                %223 = vst [vmem:[%s203 + $0x48] sm:%s195] %v222
                %v224 = vld [vmem:[%s202 + $0xa0] sm:%s195]
                %225 = vst [vmem:[%s203 + $0x50] sm:%s195] %v224
                %v226 = vld [vmem:[%s202 + $0xb0] sm:%s195]
                %227 = vst [vmem:[%s203 + $0x58] sm:%s195] %v226
                %v228 = vld [vmem:[%s202 + $0xc0] sm:%s195]
                %229 = vst [vmem:[%s203 + $0x60] sm:%s195] %v228
                %v230 = vld [vmem:[%s202 + $0xd0] sm:%s195]
                %231 = vst [vmem:[%s203 + $0x68] sm:%s195] %v230
                %v232 = vld [vmem:[%s202 + $0xe0] sm:%s195]
                %233 = vst [vmem:[%s203 + $0x70] sm:%s195] %v232
                %v234 = vld [vmem:[%s202 + $0xf0] sm:%s195]
                %235 = vst [vmem:[%s203 + $0x78] sm:%s195] %v234
                %v236 = vld [vmem:[%s202 + $0x100] sm:%s195]
                %237 = vst [vmem:[%s203 + $0x80] sm:%s195] %v236
                %v238 = vld [vmem:[%s202 + $0x110] sm:%s195]
                %239 = vst [vmem:[%s203 + $0x88] sm:%s195] %v238
                %v240 = vld [vmem:[%s202 + $0x120] sm:%s195]
                %241 = vst [vmem:[%s203 + $0x90] sm:%s195] %v240
                %v242 = vld [vmem:[%s202 + $0x130] sm:%s195]
                %243 = vst [vmem:[%s203 + $0x98] sm:%s195] %v242
                %v244 = vld [vmem:[%s202 + $0x140] sm:%s195]
                %245 = vst [vmem:[%s203 + $0xa0] sm:%s195] %v244
                %v246 = vld [vmem:[%s202 + $0x150] sm:%s195]
                %247 = vst [vmem:[%s203 + $0xa8] sm:%s195] %v246
                %v248 = vld [vmem:[%s202 + $0x160] sm:%s195]
                %249 = vst [vmem:[%s203 + $0xb0] sm:%s195] %v248
                %v250 = vld [vmem:[%s202 + $0x170] sm:%s195]
                %251 = vst [vmem:[%s203 + $0xb8] sm:%s195] %v250
                %v252 = vld [vmem:[%s202 + $0x180] sm:%s195]
                %253 = vst [vmem:[%s203 + $0xc0] sm:%s195] %v252
                %v254 = vld [vmem:[%s202 + $0x190] sm:%s195]
                %255 = vst [vmem:[%s203 + $0xc8] sm:%s195] %v254
                %v256 = vld [vmem:[%s202 + $0x1a0] sm:%s195]
                %257 = vst [vmem:[%s203 + $0xd0] sm:%s195] %v256
                %v258 = vld [vmem:[%s202 + $0x1b0] sm:%s195]
                %259 = vst [vmem:[%s203 + $0xd8] sm:%s195] %v258
                %v260 = vld [vmem:[%s202 + $0x1c0] sm:%s195]
                %261 = vst [vmem:[%s203 + $0xe0] sm:%s195] %v260
                %v262 = vld [vmem:[%s202 + $0x1d0] sm:%s195]
                %263 = vst [vmem:[%s203 + $0xe8] sm:%s195] %v262
                %v264 = vld [vmem:[%s202 + $0x1e0] sm:%s195]
                %265 = vst [vmem:[%s203 + $0xf0] sm:%s195] %v264
                %v266 = vld [vmem:[%s202 + $0x1f0] sm:%s195]
                %267 = vst [vmem:[%s203 + $0xf8] sm:%s195] %v266
                %v268 = vld [vmem:[%s202 + $0x200] sm:%s195]
                %269 = vst [vmem:[%s203 + $0x100] sm:%s195] %v268
                %v270 = vld [vmem:[%s202 + $0x210] sm:%s195]
                %271 = vst [vmem:[%s203 + $0x108] sm:%s195] %v270
                %v272 = vld [vmem:[%s202 + $0x220] sm:%s195]
                %273 = vst [vmem:[%s203 + $0x110] sm:%s195] %v272
                %v274 = vld [vmem:[%s202 + $0x230] sm:%s195]
                %275 = vst [vmem:[%s203 + $0x118] sm:%s195] %v274
                %v276 = vld [vmem:[%s202 + $0x240] sm:%s195]
                %277 = vst [vmem:[%s203 + $0x120] sm:%s195] %v276
                %v278 = vld [vmem:[%s202 + $0x250] sm:%s195]
                %279 = vst [vmem:[%s203 + $0x128] sm:%s195] %v278
                %v280 = vld [vmem:[%s202 + $0x260] sm:%s195]
                %281 = vst [vmem:[%s203 + $0x130] sm:%s195] %v280
                %v282 = vld [vmem:[%s202 + $0x270] sm:%s195]
                %283 = vst [vmem:[%s203 + $0x138] sm:%s195] %v282
                %v284 = vld [vmem:[%s202 + $0x280] sm:%s195]
                %285 = vst [vmem:[%s203 + $0x140] sm:%s195] %v284
                %v286 = vld [vmem:[%s202 + $0x290] sm:%s195]
                %287 = vst [vmem:[%s203 + $0x148] sm:%s195] %v286
                %v288 = vld [vmem:[%s202 + $0x2a0] sm:%s195]
                %289 = vst [vmem:[%s203 + $0x150] sm:%s195] %v288
                %v290 = vld [vmem:[%s202 + $0x2b0] sm:%s195]
                %291 = vst [vmem:[%s203 + $0x158] sm:%s195] %v290
                %v292 = vld [vmem:[%s202 + $0x2c0] sm:%s195]
                %293 = vst [vmem:[%s203 + $0x160] sm:%s195] %v292
                %v294 = vld [vmem:[%s202 + $0x2d0] sm:%s195]
                %295 = vst [vmem:[%s203 + $0x168] sm:%s195] %v294
                %v296 = vld [vmem:[%s202 + $0x2e0] sm:%s195]
                %297 = vst [vmem:[%s203 + $0x170] sm:%s195] %v296
                %v298 = vld [vmem:[%s202 + $0x2f0] sm:%s195]
                %299 = vst [vmem:[%s203 + $0x178] sm:%s195] %v298
                %v300 = vld [vmem:[%s202 + $0x300] sm:%s195]
                %301 = vst [vmem:[%s203 + $0x180] sm:%s195] %v300
                %v302 = vld [vmem:[%s202 + $0x310] sm:%s195]
                %303 = vst [vmem:[%s203 + $0x188] sm:%s195] %v302
                %v304 = vld [vmem:[%s202 + $0x320] sm:%s195]
                %305 = vst [vmem:[%s203 + $0x190] sm:%s195] %v304
                %v306 = vld [vmem:[%s202 + $0x330] sm:%s195]
                %307 = vst [vmem:[%s203 + $0x198] sm:%s195] %v306
                %v308 = vld [vmem:[%s202 + $0x340] sm:%s195]
                %309 = vst [vmem:[%s203 + $0x1a0] sm:%s195] %v308
                %v310 = vld [vmem:[%s202 + $0x350] sm:%s195]
                %311 = vst [vmem:[%s203 + $0x1a8] sm:%s195] %v310
                %v312 = vld [vmem:[%s202 + $0x360] sm:%s195]
                %313 = vst [vmem:[%s203 + $0x1b0] sm:%s195] %v312
                %v314 = vld [vmem:[%s202 + $0x370] sm:%s195]
                %315 = vst [vmem:[%s203 + $0x1b8] sm:%s195] %v314
                %v316 = vld [vmem:[%s202 + $0x380] sm:%s195]
                %317 = vst [vmem:[%s203 + $0x1c0] sm:%s195] %v316
                %v318 = vld [vmem:[%s202 + $0x390] sm:%s195]
                %319 = vst [vmem:[%s203 + $0x1c8] sm:%s195] %v318
                %v320 = vld [vmem:[%s202 + $0x3a0] sm:%s195]
                %321 = vst [vmem:[%s203 + $0x1d0] sm:%s195] %v320
                %v322 = vld [vmem:[%s202 + $0x3b0] sm:%s195]
                %323 = vst [vmem:[%s203 + $0x1d8] sm:%s195] %v322
                %v324 = vld [vmem:[%s202 + $0x3c0] sm:%s195]
                %325 = vst [vmem:[%s203 + $0x1e0] sm:%s195] %v324
                %v326 = vld [vmem:[%s202 + $0x3d0] sm:%s195]
                %327 = vst [vmem:[%s203 + $0x1e8] sm:%s195] %v326
                %v328 = vld [vmem:[%s202 + $0x3e0] sm:%s195]
                %329 = vst [vmem:[%s203 + $0x1f0] sm:%s195] %v328
                %v330 = vld [vmem:[%s202 + $0x3f0] sm:%s195]
                %331 = vst [vmem:[%s203 + $0x1f8] sm:%s195] %v330
                %v332 = vld [vmem:[%s202 + $0x400] sm:%s195]
                %333 = vst [vmem:[%s203 + $0x200] sm:%s195] %v332
                %v334 = vld [vmem:[%s202 + $0x410] sm:%s195]
                %335 = vst [vmem:[%s203 + $0x208] sm:%s195] %v334
                %v336 = vld [vmem:[%s202 + $0x420] sm:%s195]
                %337 = vst [vmem:[%s203 + $0x210] sm:%s195] %v336
                %v338 = vld [vmem:[%s202 + $0x430] sm:%s195]
                %339 = vst [vmem:[%s203 + $0x218] sm:%s195] %v338
                %v340 = vld [vmem:[%s202 + $0x440] sm:%s195]
                %341 = vst [vmem:[%s203 + $0x220] sm:%s195] %v340
                %v342 = vld [vmem:[%s202 + $0x450] sm:%s195]
                %343 = vst [vmem:[%s203 + $0x228] sm:%s195] %v342
                %v344 = vld [vmem:[%s202 + $0x460] sm:%s195]
                %345 = vst [vmem:[%s203 + $0x230] sm:%s195] %v344
                %v346 = vld [vmem:[%s202 + $0x470] sm:%s195]
                %347 = vst [vmem:[%s203 + $0x238] sm:%s195] %v346
                %v348 = vld [vmem:[%s202 + $0x480] sm:%s195]
                %349 = vst [vmem:[%s203 + $0x240] sm:%s195] %v348
                %v350 = vld [vmem:[%s202 + $0x490] sm:%s195]
                %351 = vst [vmem:[%s203 + $0x248] sm:%s195] %v350
                %v352 = vld [vmem:[%s202 + $0x4a0] sm:%s195]
                %353 = vst [vmem:[%s203 + $0x250] sm:%s195] %v352
                %v354 = vld [vmem:[%s202 + $0x4b0] sm:%s195]
                %355 = vst [vmem:[%s203 + $0x258] sm:%s195] %v354
                %v356 = vld [vmem:[%s202 + $0x4c0] sm:%s195]
                %357 = vst [vmem:[%s203 + $0x260] sm:%s195] %v356
                %v358 = vld [vmem:[%s202 + $0x4d0] sm:%s195]
                %359 = vst [vmem:[%s203 + $0x268] sm:%s195] %v358
                %v360 = vld [vmem:[%s202 + $0x4e0] sm:%s195]
                %361 = vst [vmem:[%s203 + $0x270] sm:%s195] %v360
                %v362 = vld [vmem:[%s202 + $0x4f0] sm:%s195]
                %363 = vst [vmem:[%s203 + $0x278] sm:%s195] %v362
                %v364 = vld [vmem:[%s202 + $0x500] sm:%s195]
                %365 = vst [vmem:[%s203 + $0x280] sm:%s195] %v364
                %v366 = vld [vmem:[%s202 + $0x510] sm:%s195]
                %367 = vst [vmem:[%s203 + $0x288] sm:%s195] %v366
                %v368 = vld [vmem:[%s202 + $0x520] sm:%s195]
                %369 = vst [vmem:[%s203 + $0x290] sm:%s195] %v368
                %v370 = vld [vmem:[%s202 + $0x530] sm:%s195]
                %371 = vst [vmem:[%s203 + $0x298] sm:%s195] %v370
                %v372 = vld [vmem:[%s202 + $0x540] sm:%s195]
                %373 = vst [vmem:[%s203 + $0x2a0] sm:%s195] %v372
                %v374 = vld [vmem:[%s202 + $0x550] sm:%s195]
                %375 = vst [vmem:[%s203 + $0x2a8] sm:%s195] %v374
                %v376 = vld [vmem:[%s202 + $0x560] sm:%s195]
                %377 = vst [vmem:[%s203 + $0x2b0] sm:%s195] %v376
                %v378 = vld [vmem:[%s202 + $0x570] sm:%s195]
                %379 = vst [vmem:[%s203 + $0x2b8] sm:%s195] %v378
                %v380 = vld [vmem:[%s202 + $0x580] sm:%s195]
                %381 = vst [vmem:[%s203 + $0x2c0] sm:%s195] %v380
                %v382 = vld [vmem:[%s202 + $0x590] sm:%s195]
                %383 = vst [vmem:[%s203 + $0x2c8] sm:%s195] %v382
                %v384 = vld [vmem:[%s202 + $0x5a0] sm:%s195]
                %385 = vst [vmem:[%s203 + $0x2d0] sm:%s195] %v384
                %v386 = vld [vmem:[%s202 + $0x5b0] sm:%s195]
                %387 = vst [vmem:[%s203 + $0x2d8] sm:%s195] %v386
                %v388 = vld [vmem:[%s202 + $0x5c0] sm:%s195]
                %389 = vst [vmem:[%s203 + $0x2e0] sm:%s195] %v388
                %v390 = vld [vmem:[%s202 + $0x5d0] sm:%s195]
                %391 = vst [vmem:[%s203 + $0x2e8] sm:%s195] %v390
                %v392 = vld [vmem:[%s202 + $0x5e0] sm:%s195]
                %393 = vst [vmem:[%s203 + $0x2f0] sm:%s195] %v392
                %v394 = vld [vmem:[%s202 + $0x5f0] sm:%s195]
                %395 = vst [vmem:[%s203 + $0x2f8] sm:%s195] %v394
                %v396 = vld [vmem:[%s202 + $0x600] sm:%s195]
                %397 = vst [vmem:[%s203 + $0x300] sm:%s195] %v396
                %v398 = vld [vmem:[%s202 + $0x610] sm:%s195]
                %399 = vst [vmem:[%s203 + $0x308] sm:%s195] %v398
                %v400 = vld [vmem:[%s202 + $0x620] sm:%s195]
                %401 = vst [vmem:[%s203 + $0x310] sm:%s195] %v400
                %v402 = vld [vmem:[%s202 + $0x630] sm:%s195]
                %403 = vst [vmem:[%s203 + $0x318] sm:%s195] %v402
                %v404 = vld [vmem:[%s202 + $0x640] sm:%s195]
                %405 = vst [vmem:[%s203 + $0x320] sm:%s195] %v404
                %v406 = vld [vmem:[%s202 + $0x650] sm:%s195]
                %407 = vst [vmem:[%s203 + $0x328] sm:%s195] %v406
                %v408 = vld [vmem:[%s202 + $0x660] sm:%s195]
                %409 = vst [vmem:[%s203 + $0x330] sm:%s195] %v408
                %v410 = vld [vmem:[%s202 + $0x670] sm:%s195]
                %411 = vst [vmem:[%s203 + $0x338] sm:%s195] %v410
                %v412 = vld [vmem:[%s202 + $0x680] sm:%s195]
                %413 = vst [vmem:[%s203 + $0x340] sm:%s195] %v412
                %v414 = vld [vmem:[%s202 + $0x690] sm:%s195]
                %415 = vst [vmem:[%s203 + $0x348] sm:%s195] %v414
                %v416 = vld [vmem:[%s202 + $0x6a0] sm:%s195]
                %417 = vst [vmem:[%s203 + $0x350] sm:%s195] %v416
                %v418 = vld [vmem:[%s202 + $0x6b0] sm:%s195]
                %419 = vst [vmem:[%s203 + $0x358] sm:%s195] %v418
                %v420 = vld [vmem:[%s202 + $0x6c0] sm:%s195]
                %421 = vst [vmem:[%s203 + $0x360] sm:%s195] %v420
                %v422 = vld [vmem:[%s202 + $0x6d0] sm:%s195]
                %423 = vst [vmem:[%s203 + $0x368] sm:%s195] %v422
                %v424 = vld [vmem:[%s202 + $0x6e0] sm:%s195]
                %425 = vst [vmem:[%s203 + $0x370] sm:%s195] %v424
                %v426 = vld [vmem:[%s202 + $0x6f0] sm:%s195]
                %427 = vst [vmem:[%s203 + $0x378] sm:%s195] %v426
                %v428 = vld [vmem:[%s202 + $0x700] sm:%s195]
                %429 = vst [vmem:[%s203 + $0x380] sm:%s195] %v428
                %v430 = vld [vmem:[%s202 + $0x710] sm:%s195]
                %431 = vst [vmem:[%s203 + $0x388] sm:%s195] %v430
                %v432 = vld [vmem:[%s202 + $0x720] sm:%s195]
                %433 = vst [vmem:[%s203 + $0x390] sm:%s195] %v432
                %v434 = vld [vmem:[%s202 + $0x730] sm:%s195]
                %435 = vst [vmem:[%s203 + $0x398] sm:%s195] %v434
                %v436 = vld [vmem:[%s202 + $0x740] sm:%s195]
                %437 = vst [vmem:[%s203 + $0x3a0] sm:%s195] %v436
                %v438 = vld [vmem:[%s202 + $0x750] sm:%s195]
                %439 = vst [vmem:[%s203 + $0x3a8] sm:%s195] %v438
                %v440 = vld [vmem:[%s202 + $0x760] sm:%s195]
                %441 = vst [vmem:[%s203 + $0x3b0] sm:%s195] %v440
                %v442 = vld [vmem:[%s202 + $0x770] sm:%s195]
                %443 = vst [vmem:[%s203 + $0x3b8] sm:%s195] %v442
                %v444 = vld [vmem:[%s202 + $0x780] sm:%s195]
                %445 = vst [vmem:[%s203 + $0x3c0] sm:%s195] %v444
                %v446 = vld [vmem:[%s202 + $0x790] sm:%s195]
                %447 = vst [vmem:[%s203 + $0x3c8] sm:%s195] %v446
                %v448 = vld [vmem:[%s202 + $0x7a0] sm:%s195]
                %449 = vst [vmem:[%s203 + $0x3d0] sm:%s195] %v448
                %v450 = vld [vmem:[%s202 + $0x7b0] sm:%s195]
                %451 = vst [vmem:[%s203 + $0x3d8] sm:%s195] %v450
                %v452 = vld [vmem:[%s202 + $0x7c0] sm:%s195]
                %453 = vst [vmem:[%s203 + $0x3e0] sm:%s195] %v452
                %v454 = vld [vmem:[%s202 + $0x7d0] sm:%s195]
                %455 = vst [vmem:[%s203 + $0x3e8] sm:%s195] %v454
                %v456 = vld [vmem:[%s202 + $0x7e0] sm:%s195]
                %457 = vst [vmem:[%s203 + $0x3f0] sm:%s195] %v456
                %v458 = vld [vmem:[%s202 + $0x7f0] sm:%s195]
                %459 = vst [vmem:[%s203 + $0x3f8] sm:%s195] %v458
                %v460 = vld [vmem:[%s202 + $0x800] sm:%s195]
                %461 = vst [vmem:[%s203 + $0x400] sm:%s195] %v460
                %v462 = vld [vmem:[%s202 + $0x810] sm:%s195]
                %463 = vst [vmem:[%s203 + $0x408] sm:%s195] %v462
                %v464 = vld [vmem:[%s202 + $0x820] sm:%s195]
                %465 = vst [vmem:[%s203 + $0x410] sm:%s195] %v464
                %v466 = vld [vmem:[%s202 + $0x830] sm:%s195]
                %467 = vst [vmem:[%s203 + $0x418] sm:%s195] %v466
                %v468 = vld [vmem:[%s202 + $0x840] sm:%s195]
                %469 = vst [vmem:[%s203 + $0x420] sm:%s195] %v468
                %v470 = vld [vmem:[%s202 + $0x850] sm:%s195]
                %471 = vst [vmem:[%s203 + $0x428] sm:%s195] %v470
                %v472 = vld [vmem:[%s202 + $0x860] sm:%s195]
                %473 = vst [vmem:[%s203 + $0x430] sm:%s195] %v472
                %v474 = vld [vmem:[%s202 + $0x870] sm:%s195]
                %475 = vst [vmem:[%s203 + $0x438] sm:%s195] %v474
                %v476 = vld [vmem:[%s202 + $0x880] sm:%s195]
                %477 = vst [vmem:[%s203 + $0x440] sm:%s195] %v476
                %v478 = vld [vmem:[%s202 + $0x890] sm:%s195]
                %479 = vst [vmem:[%s203 + $0x448] sm:%s195] %v478
                %v480 = vld [vmem:[%s202 + $0x8a0] sm:%s195]
                %481 = vst [vmem:[%s203 + $0x450] sm:%s195] %v480
                %v482 = vld [vmem:[%s202 + $0x8b0] sm:%s195]
                %483 = vst [vmem:[%s203 + $0x458] sm:%s195] %v482
                %v484 = vld [vmem:[%s202 + $0x8c0] sm:%s195]
                %485 = vst [vmem:[%s203 + $0x460] sm:%s195] %v484
                %v486 = vld [vmem:[%s202 + $0x8d0] sm:%s195]
                %487 = vst [vmem:[%s203 + $0x468] sm:%s195] %v486
                %v488 = vld [vmem:[%s202 + $0x8e0] sm:%s195]
                %489 = vst [vmem:[%s203 + $0x470] sm:%s195] %v488
                %v490 = vld [vmem:[%s202 + $0x8f0] sm:%s195]
                %491 = vst [vmem:[%s203 + $0x478] sm:%s195] %v490
                %v492 = vld [vmem:[%s202 + $0x900] sm:%s195]
                %493 = vst [vmem:[%s203 + $0x480] sm:%s195] %v492
                %v494 = vld [vmem:[%s202 + $0x910] sm:%s195]
                %495 = vst [vmem:[%s203 + $0x488] sm:%s195] %v494
                %v496 = vld [vmem:[%s202 + $0x920] sm:%s195]
                %497 = vst [vmem:[%s203 + $0x490] sm:%s195] %v496
                %v498 = vld [vmem:[%s202 + $0x930] sm:%s195]
                %499 = vst [vmem:[%s203 + $0x498] sm:%s195] %v498
                %v500 = vld [vmem:[%s202 + $0x940] sm:%s195]
                %501 = vst [vmem:[%s203 + $0x4a0] sm:%s195] %v500
                %v502 = vld [vmem:[%s202 + $0x950] sm:%s195]
                %503 = vst [vmem:[%s203 + $0x4a8] sm:%s195] %v502
                %v504 = vld [vmem:[%s202 + $0x960] sm:%s195]
                %505 = vst [vmem:[%s203 + $0x4b0] sm:%s195] %v504
                %v506 = vld [vmem:[%s202 + $0x970] sm:%s195]
                %507 = vst [vmem:[%s203 + $0x4b8] sm:%s195] %v506
                %v508 = vld [vmem:[%s202 + $0x980] sm:%s195]
                %509 = vst [vmem:[%s203 + $0x4c0] sm:%s195] %v508
                %v510 = vld [vmem:[%s202 + $0x990] sm:%s195]
                %511 = vst [vmem:[%s203 + $0x4c8] sm:%s195] %v510
                %v512 = vld [vmem:[%s202 + $0x9a0] sm:%s195]
                %513 = vst [vmem:[%s203 + $0x4d0] sm:%s195] %v512
                %v514 = vld [vmem:[%s202 + $0x9b0] sm:%s195]
                %515 = vst [vmem:[%s203 + $0x4d8] sm:%s195] %v514
                %v516 = vld [vmem:[%s202 + $0x9c0] sm:%s195]
                %517 = vst [vmem:[%s203 + $0x4e0] sm:%s195] %v516
                %v518 = vld [vmem:[%s202 + $0x9d0] sm:%s195]
                %519 = vst [vmem:[%s203 + $0x4e8] sm:%s195] %v518
                %v520 = vld [vmem:[%s202 + $0x9e0] sm:%s195]
                %521 = vst [vmem:[%s203 + $0x4f0] sm:%s195] %v520
                %v522 = vld [vmem:[%s202 + $0x9f0] sm:%s195]
                %523 = vst [vmem:[%s203 + $0x4f8] sm:%s195] %v522
                %v524 = vld [vmem:[%s202 + $0xa00] sm:%s195]
                %525 = vst [vmem:[%s203 + $0x500] sm:%s195] %v524
                %v526 = vld [vmem:[%s202 + $0xa10] sm:%s195]
                %527 = vst [vmem:[%s203 + $0x508] sm:%s195] %v526
                %v528 = vld [vmem:[%s202 + $0xa20] sm:%s195]
                %529 = vst [vmem:[%s203 + $0x510] sm:%s195] %v528
                %v530 = vld [vmem:[%s202 + $0xa30] sm:%s195]
                %531 = vst [vmem:[%s203 + $0x518] sm:%s195] %v530
                %v532 = vld [vmem:[%s202 + $0xa40] sm:%s195]
                %533 = vst [vmem:[%s203 + $0x520] sm:%s195] %v532
                %v534 = vld [vmem:[%s202 + $0xa50] sm:%s195]
                %535 = vst [vmem:[%s203 + $0x528] sm:%s195] %v534
                %v536 = vld [vmem:[%s202 + $0xa60] sm:%s195]
                %537 = vst [vmem:[%s203 + $0x530] sm:%s195] %v536
                %v538 = vld [vmem:[%s202 + $0xa70] sm:%s195]
                %539 = vst [vmem:[%s203 + $0x538] sm:%s195] %v538
                %v540 = vld [vmem:[%s202 + $0xa80] sm:%s195]
                %541 = vst [vmem:[%s203 + $0x540] sm:%s195] %v540
                %v542 = vld [vmem:[%s202 + $0xa90] sm:%s195]
                %543 = vst [vmem:[%s203 + $0x548] sm:%s195] %v542
                %v544 = vld [vmem:[%s202 + $0xaa0] sm:%s195]
                %545 = vst [vmem:[%s203 + $0x550] sm:%s195] %v544
                %v546 = vld [vmem:[%s202 + $0xab0] sm:%s195]
                %547 = vst [vmem:[%s203 + $0x558] sm:%s195] %v546
                %v548 = vld [vmem:[%s202 + $0xac0] sm:%s195]
                %549 = vst [vmem:[%s203 + $0x560] sm:%s195] %v548
                %v550 = vld [vmem:[%s202 + $0xad0] sm:%s195]
                %551 = vst [vmem:[%s203 + $0x568] sm:%s195] %v550
                %v552 = vld [vmem:[%s202 + $0xae0] sm:%s195]
                %553 = vst [vmem:[%s203 + $0x570] sm:%s195] %v552
                %v554 = vld [vmem:[%s202 + $0xaf0] sm:%s195]
                %555 = vst [vmem:[%s203 + $0x578] sm:%s195] %v554
                %v556 = vld [vmem:[%s202 + $0xb00] sm:%s195]
                %557 = vst [vmem:[%s203 + $0x580] sm:%s195] %v556
                %v558 = vld [vmem:[%s202 + $0xb10] sm:%s195]
                %559 = vst [vmem:[%s203 + $0x588] sm:%s195] %v558
                %v560 = vld [vmem:[%s202 + $0xb20] sm:%s195]
                %561 = vst [vmem:[%s203 + $0x590] sm:%s195] %v560
                %v562 = vld [vmem:[%s202 + $0xb30] sm:%s195]
                %563 = vst [vmem:[%s203 + $0x598] sm:%s195] %v562
                %v564 = vld [vmem:[%s202 + $0xb40] sm:%s195]
                %565 = vst [vmem:[%s203 + $0x5a0] sm:%s195] %v564
                %v566 = vld [vmem:[%s202 + $0xb50] sm:%s195]
                %567 = vst [vmem:[%s203 + $0x5a8] sm:%s195] %v566
                %v568 = vld [vmem:[%s202 + $0xb60] sm:%s195]
                %569 = vst [vmem:[%s203 + $0x5b0] sm:%s195] %v568
                %v570 = vld [vmem:[%s202 + $0xb70] sm:%s195]
                %571 = vst [vmem:[%s203 + $0x5b8] sm:%s195] %v570
                %v572 = vld [vmem:[%s202 + $0xb80] sm:%s195]
                %573 = vst [vmem:[%s203 + $0x5c0] sm:%s195] %v572
                %v574 = vld [vmem:[%s202 + $0xb90] sm:%s195]
                %575 = vst [vmem:[%s203 + $0x5c8] sm:%s195] %v574
                %v576 = vld [vmem:[%s202 + $0xba0] sm:%s195]
                %577 = vst [vmem:[%s203 + $0x5d0] sm:%s195] %v576
                %v578 = vld [vmem:[%s202 + $0xbb0] sm:%s195]
                %579 = vst [vmem:[%s203 + $0x5d8] sm:%s195] %v578
                %v580 = vld [vmem:[%s202 + $0xbc0] sm:%s195]
                %581 = vst [vmem:[%s203 + $0x5e0] sm:%s195] %v580
                %v582 = vld [vmem:[%s202 + $0xbd0] sm:%s195]
                %583 = vst [vmem:[%s203 + $0x5e8] sm:%s195] %v582
                %v584 = vld [vmem:[%s202 + $0xbe0] sm:%s195]
                %585 = vst [vmem:[%s203 + $0x5f0] sm:%s195] %v584
                %v586 = vld [vmem:[%s202 + $0xbf0] sm:%s195]
                %587 = vst [vmem:[%s203 + $0x5f8] sm:%s195] %v586
                %v588 = vld [vmem:[%s202 + $0xc00] sm:%s195]
                %589 = vst [vmem:[%s203 + $0x600] sm:%s195] %v588
                %v590 = vld [vmem:[%s202 + $0xc10] sm:%s195]
                %591 = vst [vmem:[%s203 + $0x608] sm:%s195] %v590
                %v592 = vld [vmem:[%s202 + $0xc20] sm:%s195]
                %593 = vst [vmem:[%s203 + $0x610] sm:%s195] %v592
                %v594 = vld [vmem:[%s202 + $0xc30] sm:%s195]
                %595 = vst [vmem:[%s203 + $0x618] sm:%s195] %v594
                %v596 = vld [vmem:[%s202 + $0xc40] sm:%s195]
                %597 = vst [vmem:[%s203 + $0x620] sm:%s195] %v596
                %v598 = vld [vmem:[%s202 + $0xc50] sm:%s195]
                %599 = vst [vmem:[%s203 + $0x628] sm:%s195] %v598
                %v600 = vld [vmem:[%s202 + $0xc60] sm:%s195]
                %601 = vst [vmem:[%s203 + $0x630] sm:%s195] %v600
                %v602 = vld [vmem:[%s202 + $0xc70] sm:%s195]
                %603 = vst [vmem:[%s203 + $0x638] sm:%s195] %v602
                %v604 = vld [vmem:[%s202 + $0xc80] sm:%s195]
                %605 = vst [vmem:[%s203 + $0x640] sm:%s195] %v604
                %v606 = vld [vmem:[%s202 + $0xc90] sm:%s195]
                %607 = vst [vmem:[%s203 + $0x648] sm:%s195] %v606
                %v608 = vld [vmem:[%s202 + $0xca0] sm:%s195]
                %609 = vst [vmem:[%s203 + $0x650] sm:%s195] %v608
                %v610 = vld [vmem:[%s202 + $0xcb0] sm:%s195]
                %611 = vst [vmem:[%s203 + $0x658] sm:%s195] %v610
                %v612 = vld [vmem:[%s202 + $0xcc0] sm:%s195]
                %613 = vst [vmem:[%s203 + $0x660] sm:%s195] %v612
                %v614 = vld [vmem:[%s202 + $0xcd0] sm:%s195]
                %615 = vst [vmem:[%s203 + $0x668] sm:%s195] %v614
                %v616 = vld [vmem:[%s202 + $0xce0] sm:%s195]
                %617 = vst [vmem:[%s203 + $0x670] sm:%s195] %v616
                %v618 = vld [vmem:[%s202 + $0xcf0] sm:%s195]
                %619 = vst [vmem:[%s203 + $0x678] sm:%s195] %v618
                %v620 = vld [vmem:[%s202 + $0xd00] sm:%s195]
                %621 = vst [vmem:[%s203 + $0x680] sm:%s195] %v620
                %v622 = vld [vmem:[%s202 + $0xd10] sm:%s195]
                %623 = vst [vmem:[%s203 + $0x688] sm:%s195] %v622
                %v624 = vld [vmem:[%s202 + $0xd20] sm:%s195]
                %625 = vst [vmem:[%s203 + $0x690] sm:%s195] %v624
                %v626 = vld [vmem:[%s202 + $0xd30] sm:%s195]
                %627 = vst [vmem:[%s203 + $0x698] sm:%s195] %v626
                %v628 = vld [vmem:[%s202 + $0xd40] sm:%s195]
                %629 = vst [vmem:[%s203 + $0x6a0] sm:%s195] %v628
                %v630 = vld [vmem:[%s202 + $0xd50] sm:%s195]
                %631 = vst [vmem:[%s203 + $0x6a8] sm:%s195] %v630
                %v632 = vld [vmem:[%s202 + $0xd60] sm:%s195]
                %633 = vst [vmem:[%s203 + $0x6b0] sm:%s195] %v632
                %v634 = vld [vmem:[%s202 + $0xd70] sm:%s195]
                %635 = vst [vmem:[%s203 + $0x6b8] sm:%s195] %v634
                %v636 = vld [vmem:[%s202 + $0xd80] sm:%s195]
                %637 = vst [vmem:[%s203 + $0x6c0] sm:%s195] %v636
                %v638 = vld [vmem:[%s202 + $0xd90] sm:%s195]
                %639 = vst [vmem:[%s203 + $0x6c8] sm:%s195] %v638
                %v640 = vld [vmem:[%s202 + $0xda0] sm:%s195]
                %641 = vst [vmem:[%s203 + $0x6d0] sm:%s195] %v640
                %v642 = vld [vmem:[%s202 + $0xdb0] sm:%s195]
                %643 = vst [vmem:[%s203 + $0x6d8] sm:%s195] %v642
                %v644 = vld [vmem:[%s202 + $0xdc0] sm:%s195]
                %645 = vst [vmem:[%s203 + $0x6e0] sm:%s195] %v644
                %v646 = vld [vmem:[%s202 + $0xdd0] sm:%s195]
                %647 = vst [vmem:[%s203 + $0x6e8] sm:%s195] %v646
                %v648 = vld [vmem:[%s202 + $0xde0] sm:%s195]
                %649 = vst [vmem:[%s203 + $0x6f0] sm:%s195] %v648
                %v650 = vld [vmem:[%s202 + $0xdf0] sm:%s195]
                %651 = vst [vmem:[%s203 + $0x6f8] sm:%s195] %v650
                %v652 = vld [vmem:[%s202 + $0xe00] sm:%s195]
                %653 = vst [vmem:[%s203 + $0x700] sm:%s195] %v652
                %v654 = vld [vmem:[%s202 + $0xe10] sm:%s195]
                %655 = vst [vmem:[%s203 + $0x708] sm:%s195] %v654
                %v656 = vld [vmem:[%s202 + $0xe20] sm:%s195]
                %657 = vst [vmem:[%s203 + $0x710] sm:%s195] %v656
                %v658 = vld [vmem:[%s202 + $0xe30] sm:%s195]
                %659 = vst [vmem:[%s203 + $0x718] sm:%s195] %v658
                %v660 = vld [vmem:[%s202 + $0xe40] sm:%s195]
                %661 = vst [vmem:[%s203 + $0x720] sm:%s195] %v660
                %v662 = vld [vmem:[%s202 + $0xe50] sm:%s195]
                %663 = vst [vmem:[%s203 + $0x728] sm:%s195] %v662
                %v664 = vld [vmem:[%s202 + $0xe60] sm:%s195]
                %665 = vst [vmem:[%s203 + $0x730] sm:%s195] %v664
                %v666 = vld [vmem:[%s202 + $0xe70] sm:%s195]
                %667 = vst [vmem:[%s203 + $0x738] sm:%s195] %v666
                %v668 = vld [vmem:[%s202 + $0xe80] sm:%s195]
                %669 = vst [vmem:[%s203 + $0x740] sm:%s195] %v668
                %v670 = vld [vmem:[%s202 + $0xe90] sm:%s195]
                %671 = vst [vmem:[%s203 + $0x748] sm:%s195] %v670
                %v672 = vld [vmem:[%s202 + $0xea0] sm:%s195]
                %673 = vst [vmem:[%s203 + $0x750] sm:%s195] %v672
                %v674 = vld [vmem:[%s202 + $0xeb0] sm:%s195]
                %675 = vst [vmem:[%s203 + $0x758] sm:%s195] %v674
                %v676 = vld [vmem:[%s202 + $0xec0] sm:%s195]
                %677 = vst [vmem:[%s203 + $0x760] sm:%s195] %v676
                %v678 = vld [vmem:[%s202 + $0xed0] sm:%s195]
                %679 = vst [vmem:[%s203 + $0x768] sm:%s195] %v678
                %v680 = vld [vmem:[%s202 + $0xee0] sm:%s195]
                %681 = vst [vmem:[%s203 + $0x770] sm:%s195] %v680
                %v682 = vld [vmem:[%s202 + $0xef0] sm:%s195]
                %683 = vst [vmem:[%s203 + $0x778] sm:%s195] %v682
                %v684 = vld [vmem:[%s202 + $0xf00] sm:%s195]
                %685 = vst [vmem:[%s203 + $0x780] sm:%s195] %v684
                %v686 = vld [vmem:[%s202 + $0xf10] sm:%s195]
                %687 = vst [vmem:[%s203 + $0x788] sm:%s195] %v686
                %v688 = vld [vmem:[%s202 + $0xf20] sm:%s195]
                %689 = vst [vmem:[%s203 + $0x790] sm:%s195] %v688
                %v690 = vld [vmem:[%s202 + $0xf30] sm:%s195]
                %691 = vst [vmem:[%s203 + $0x798] sm:%s195] %v690
                %v692 = vld [vmem:[%s202 + $0xf40] sm:%s195]
                %693 = vst [vmem:[%s203 + $0x7a0] sm:%s195] %v692
                %v694 = vld [vmem:[%s202 + $0xf50] sm:%s195]
                %695 = vst [vmem:[%s203 + $0x7a8] sm:%s195] %v694
                %v696 = vld [vmem:[%s202 + $0xf60] sm:%s195]
                %697 = vst [vmem:[%s203 + $0x7b0] sm:%s195] %v696
                %v698 = vld [vmem:[%s202 + $0xf70] sm:%s195]
                %699 = vst [vmem:[%s203 + $0x7b8] sm:%s195] %v698
                %v700 = vld [vmem:[%s202 + $0xf80] sm:%s195]
                %701 = vst [vmem:[%s203 + $0x7c0] sm:%s195] %v700
                %v702 = vld [vmem:[%s202 + $0xf90] sm:%s195]
                %703 = vst [vmem:[%s203 + $0x7c8] sm:%s195] %v702
                %v704 = vld [vmem:[%s202 + $0xfa0] sm:%s195]
                %705 = vst [vmem:[%s203 + $0x7d0] sm:%s195] %v704
                %v706 = vld [vmem:[%s202 + $0xfb0] sm:%s195]
                %707 = vst [vmem:[%s203 + $0x7d8] sm:%s195] %v706
                %v708 = vld [vmem:[%s202 + $0xfc0] sm:%s195]
                %709 = vst [vmem:[%s203 + $0x7e0] sm:%s195] %v708
                %v710 = vld [vmem:[%s202 + $0xfd0] sm:%s195]
                %711 = vst [vmem:[%s203 + $0x7e8] sm:%s195] %v710
                %v712 = vld [vmem:[%s202 + $0xfe0] sm:%s195]
                %713 = vst [vmem:[%s203 + $0x7f0] sm:%s195] %v712
                %v714 = vld [vmem:[%s202 + $0xff0] sm:%s195]
                %715 = vst [vmem:[%s203 + $0x7f8] sm:%s195] %v714
                %v716 = vld [vmem:[%s202 + $0x1000] sm:%s195]
                %717 = vst [vmem:[%s203 + $0x800] sm:%s195] %v716
                %v718 = vld [vmem:[%s202 + $0x1010] sm:%s195]
                %719 = vst [vmem:[%s203 + $0x808] sm:%s195] %v718
                %v720 = vld [vmem:[%s202 + $0x1020] sm:%s195]
                %721 = vst [vmem:[%s203 + $0x810] sm:%s195] %v720
                %v722 = vld [vmem:[%s202 + $0x1030] sm:%s195]
                %723 = vst [vmem:[%s203 + $0x818] sm:%s195] %v722
                %v724 = vld [vmem:[%s202 + $0x1040] sm:%s195]
                %725 = vst [vmem:[%s203 + $0x820] sm:%s195] %v724
                %v726 = vld [vmem:[%s202 + $0x1050] sm:%s195]
                %727 = vst [vmem:[%s203 + $0x828] sm:%s195] %v726
                %v728 = vld [vmem:[%s202 + $0x1060] sm:%s195]
                %729 = vst [vmem:[%s203 + $0x830] sm:%s195] %v728
                %v730 = vld [vmem:[%s202 + $0x1070] sm:%s195]
                %731 = vst [vmem:[%s203 + $0x838] sm:%s195] %v730
                %v732 = vld [vmem:[%s202 + $0x1080] sm:%s195]
                %733 = vst [vmem:[%s203 + $0x840] sm:%s195] %v732
                %v734 = vld [vmem:[%s202 + $0x1090] sm:%s195]
                %735 = vst [vmem:[%s203 + $0x848] sm:%s195] %v734
                %v736 = vld [vmem:[%s202 + $0x10a0] sm:%s195]
                %737 = vst [vmem:[%s203 + $0x850] sm:%s195] %v736
                %v738 = vld [vmem:[%s202 + $0x10b0] sm:%s195]
                %739 = vst [vmem:[%s203 + $0x858] sm:%s195] %v738
                %v740 = vld [vmem:[%s202 + $0x10c0] sm:%s195]
                %741 = vst [vmem:[%s203 + $0x860] sm:%s195] %v740
                %v742 = vld [vmem:[%s202 + $0x10d0] sm:%s195]
                %743 = vst [vmem:[%s203 + $0x868] sm:%s195] %v742
                %v744 = vld [vmem:[%s202 + $0x10e0] sm:%s195]
                %745 = vst [vmem:[%s203 + $0x870] sm:%s195] %v744
                %v746 = vld [vmem:[%s202 + $0x10f0] sm:%s195]
                %747 = vst [vmem:[%s203 + $0x878] sm:%s195] %v746
                %v748 = vld [vmem:[%s202 + $0x1100] sm:%s195]
                %749 = vst [vmem:[%s203 + $0x880] sm:%s195] %v748
                %v750 = vld [vmem:[%s202 + $0x1110] sm:%s195]
                %751 = vst [vmem:[%s203 + $0x888] sm:%s195] %v750
                %v752 = vld [vmem:[%s202 + $0x1120] sm:%s195]
                %753 = vst [vmem:[%s203 + $0x890] sm:%s195] %v752
                %v754 = vld [vmem:[%s202 + $0x1130] sm:%s195]
                %755 = vst [vmem:[%s203 + $0x898] sm:%s195] %v754
                %v756 = vld [vmem:[%s202 + $0x1140] sm:%s195]
                %757 = vst [vmem:[%s203 + $0x8a0] sm:%s195] %v756
                %v758 = vld [vmem:[%s202 + $0x1150] sm:%s195]
                %759 = vst [vmem:[%s203 + $0x8a8] sm:%s195] %v758
                %v760 = vld [vmem:[%s202 + $0x1160] sm:%s195]
                %761 = vst [vmem:[%s203 + $0x8b0] sm:%s195] %v760
                %v762 = vld [vmem:[%s202 + $0x1170] sm:%s195]
                %763 = vst [vmem:[%s203 + $0x8b8] sm:%s195] %v762
                %v764 = vld [vmem:[%s202 + $0x1180] sm:%s195]
                %765 = vst [vmem:[%s203 + $0x8c0] sm:%s195] %v764
                %v766 = vld [vmem:[%s202 + $0x1190] sm:%s195]
                %767 = vst [vmem:[%s203 + $0x8c8] sm:%s195] %v766
                %v768 = vld [vmem:[%s202 + $0x11a0] sm:%s195]
                %769 = vst [vmem:[%s203 + $0x8d0] sm:%s195] %v768
                %v770 = vld [vmem:[%s202 + $0x11b0] sm:%s195]
                %771 = vst [vmem:[%s203 + $0x8d8] sm:%s195] %v770
                %v772 = vld [vmem:[%s202 + $0x11c0] sm:%s195]
                %773 = vst [vmem:[%s203 + $0x8e0] sm:%s195] %v772
                %v774 = vld [vmem:[%s202 + $0x11d0] sm:%s195]
                %775 = vst [vmem:[%s203 + $0x8e8] sm:%s195] %v774
                %v776 = vld [vmem:[%s202 + $0x11e0] sm:%s195]
                %777 = vst [vmem:[%s203 + $0x8f0] sm:%s195] %v776
                %v778 = vld [vmem:[%s202 + $0x11f0] sm:%s195]
                %779 = vst [vmem:[%s203 + $0x8f8] sm:%s195] %v778
                %v780 = vld [vmem:[%s202 + $0x1200] sm:%s195]
                %781 = vst [vmem:[%s203 + $0x900] sm:%s195] %v780
                %v782 = vld [vmem:[%s202 + $0x1210] sm:%s195]
                %783 = vst [vmem:[%s203 + $0x908] sm:%s195] %v782
                %v784 = vld [vmem:[%s202 + $0x1220] sm:%s195]
                %785 = vst [vmem:[%s203 + $0x910] sm:%s195] %v784
                %v786 = vld [vmem:[%s202 + $0x1230] sm:%s195]
                %787 = vst [vmem:[%s203 + $0x918] sm:%s195] %v786
                %v788 = vld [vmem:[%s202 + $0x1240] sm:%s195]
                %789 = vst [vmem:[%s203 + $0x920] sm:%s195] %v788
                %v790 = vld [vmem:[%s202 + $0x1250] sm:%s195]
                %791 = vst [vmem:[%s203 + $0x928] sm:%s195] %v790
                %v792 = vld [vmem:[%s202 + $0x1260] sm:%s195]
                %793 = vst [vmem:[%s203 + $0x930] sm:%s195] %v792
                %v794 = vld [vmem:[%s202 + $0x1270] sm:%s195]
                %795 = vst [vmem:[%s203 + $0x938] sm:%s195] %v794
                %v796 = vld [vmem:[%s202 + $0x1280] sm:%s195]
                %797 = vst [vmem:[%s203 + $0x940] sm:%s195] %v796
                %v798 = vld [vmem:[%s202 + $0x1290] sm:%s195]
                %799 = vst [vmem:[%s203 + $0x948] sm:%s195] %v798
                %v800 = vld [vmem:[%s202 + $0x12a0] sm:%s195]
                %801 = vst [vmem:[%s203 + $0x950] sm:%s195] %v800
                %v802 = vld [vmem:[%s202 + $0x12b0] sm:%s195]
                %803 = vst [vmem:[%s203 + $0x958] sm:%s195] %v802
                %v804 = vld [vmem:[%s202 + $0x12c0] sm:%s195]
                %805 = vst [vmem:[%s203 + $0x960] sm:%s195] %v804
                %v806 = vld [vmem:[%s202 + $0x12d0] sm:%s195]
                %807 = vst [vmem:[%s203 + $0x968] sm:%s195] %v806
                %v808 = vld [vmem:[%s202 + $0x12e0] sm:%s195]
                %809 = vst [vmem:[%s203 + $0x970] sm:%s195] %v808
                %v810 = vld [vmem:[%s202 + $0x12f0] sm:%s195]
                %811 = vst [vmem:[%s203 + $0x978] sm:%s195] %v810
                %v812 = vld [vmem:[%s202 + $0x1300] sm:%s195]
                %813 = vst [vmem:[%s203 + $0x980] sm:%s195] %v812
                %v814 = vld [vmem:[%s202 + $0x1310] sm:%s195]
                %815 = vst [vmem:[%s203 + $0x988] sm:%s195] %v814
                %v816 = vld [vmem:[%s202 + $0x1320] sm:%s195]
                %817 = vst [vmem:[%s203 + $0x990] sm:%s195] %v816
                %v818 = vld [vmem:[%s202 + $0x1330] sm:%s195]
                %819 = vst [vmem:[%s203 + $0x998] sm:%s195] %v818
                %v820 = vld [vmem:[%s202 + $0x1340] sm:%s195]
                %821 = vst [vmem:[%s203 + $0x9a0] sm:%s195] %v820
                %v822 = vld [vmem:[%s202 + $0x1350] sm:%s195]
                %823 = vst [vmem:[%s203 + $0x9a8] sm:%s195] %v822
                %v824 = vld [vmem:[%s202 + $0x1360] sm:%s195]
                %825 = vst [vmem:[%s203 + $0x9b0] sm:%s195] %v824
                %v826 = vld [vmem:[%s202 + $0x1370] sm:%s195]
                %827 = vst [vmem:[%s203 + $0x9b8] sm:%s195] %v826
                %v828 = vld [vmem:[%s202 + $0x1380] sm:%s195]
                %829 = vst [vmem:[%s203 + $0x9c0] sm:%s195] %v828
                %v830 = vld [vmem:[%s202 + $0x1390] sm:%s195]
                %831 = vst [vmem:[%s203 + $0x9c8] sm:%s195] %v830
                %v832 = vld [vmem:[%s202 + $0x13a0] sm:%s195]
                %833 = vst [vmem:[%s203 + $0x9d0] sm:%s195] %v832
                %v834 = vld [vmem:[%s202 + $0x13b0] sm:%s195]
                %835 = vst [vmem:[%s203 + $0x9d8] sm:%s195] %v834
                %v836 = vld [vmem:[%s202 + $0x13c0] sm:%s195]
                %837 = vst [vmem:[%s203 + $0x9e0] sm:%s195] %v836
                %v838 = vld [vmem:[%s202 + $0x13d0] sm:%s195]
                %839 = vst [vmem:[%s203 + $0x9e8] sm:%s195] %v838
                %v840 = vld [vmem:[%s202 + $0x13e0] sm:%s195]
                %841 = vst [vmem:[%s203 + $0x9f0] sm:%s195] %v840
                %v842 = vld [vmem:[%s202 + $0x13f0] sm:%s195]
                %843 = vst [vmem:[%s203 + $0x9f8] sm:%s195] %v842
                %v844 = vld [vmem:[%s202 + $0x1400] sm:%s195]
                %845 = vst [vmem:[%s203 + $0xa00] sm:%s195] %v844
                %v846 = vld [vmem:[%s202 + $0x1410] sm:%s195]
                %847 = vst [vmem:[%s203 + $0xa08] sm:%s195] %v846
                %v848 = vld [vmem:[%s202 + $0x1420] sm:%s195]
                %849 = vst [vmem:[%s203 + $0xa10] sm:%s195] %v848
                %v850 = vld [vmem:[%s202 + $0x1430] sm:%s195]
                %851 = vst [vmem:[%s203 + $0xa18] sm:%s195] %v850
                %v852 = vld [vmem:[%s202 + $0x1440] sm:%s195]
                %853 = vst [vmem:[%s203 + $0xa20] sm:%s195] %v852
                %v854 = vld [vmem:[%s202 + $0x1450] sm:%s195]
                %855 = vst [vmem:[%s203 + $0xa28] sm:%s195] %v854
                %v856 = vld [vmem:[%s202 + $0x1460] sm:%s195]
                %857 = vst [vmem:[%s203 + $0xa30] sm:%s195] %v856
                %v858 = vld [vmem:[%s202 + $0x1470] sm:%s195]
                %859 = vst [vmem:[%s203 + $0xa38] sm:%s195] %v858
                %v860 = vld [vmem:[%s202 + $0x1480] sm:%s195]
                %861 = vst [vmem:[%s203 + $0xa40] sm:%s195] %v860
                %v862 = vld [vmem:[%s202 + $0x1490] sm:%s195]
                %863 = vst [vmem:[%s203 + $0xa48] sm:%s195] %v862
                %v864 = vld [vmem:[%s202 + $0x14a0] sm:%s195]
                %865 = vst [vmem:[%s203 + $0xa50] sm:%s195] %v864
                %v866 = vld [vmem:[%s202 + $0x14b0] sm:%s195]
                %867 = vst [vmem:[%s203 + $0xa58] sm:%s195] %v866
                %v868 = vld [vmem:[%s202 + $0x14c0] sm:%s195]
                %869 = vst [vmem:[%s203 + $0xa60] sm:%s195] %v868
                %v870 = vld [vmem:[%s202 + $0x14d0] sm:%s195]
                %871 = vst [vmem:[%s203 + $0xa68] sm:%s195] %v870
                %v872 = vld [vmem:[%s202 + $0x14e0] sm:%s195]
                %873 = vst [vmem:[%s203 + $0xa70] sm:%s195] %v872
                %v874 = vld [vmem:[%s202 + $0x14f0] sm:%s195]
                %875 = vst [vmem:[%s203 + $0xa78] sm:%s195] %v874
                %v876 = vld [vmem:[%s202 + $0x1500] sm:%s195]
                %877 = vst [vmem:[%s203 + $0xa80] sm:%s195] %v876
                %v878 = vld [vmem:[%s202 + $0x1510] sm:%s195]
                %879 = vst [vmem:[%s203 + $0xa88] sm:%s195] %v878
                %v880 = vld [vmem:[%s202 + $0x1520] sm:%s195]
                %881 = vst [vmem:[%s203 + $0xa90] sm:%s195] %v880
                %v882 = vld [vmem:[%s202 + $0x1530] sm:%s195]
                %883 = vst [vmem:[%s203 + $0xa98] sm:%s195] %v882
                %v884 = vld [vmem:[%s202 + $0x1540] sm:%s195]
                %885 = vst [vmem:[%s203 + $0xaa0] sm:%s195] %v884
                %v886 = vld [vmem:[%s202 + $0x1550] sm:%s195]
                %887 = vst [vmem:[%s203 + $0xaa8] sm:%s195] %v886
                %v888 = vld [vmem:[%s202 + $0x1560] sm:%s195]
                %889 = vst [vmem:[%s203 + $0xab0] sm:%s195] %v888
                %v890 = vld [vmem:[%s202 + $0x1570] sm:%s195]
                %891 = vst [vmem:[%s203 + $0xab8] sm:%s195] %v890
                %v892 = vld [vmem:[%s202 + $0x1580] sm:%s195]
                %893 = vst [vmem:[%s203 + $0xac0] sm:%s195] %v892
                %v894 = vld [vmem:[%s202 + $0x1590] sm:%s195]
                %895 = vst [vmem:[%s203 + $0xac8] sm:%s195] %v894
                %v896 = vld [vmem:[%s202 + $0x15a0] sm:%s195]
                %897 = vst [vmem:[%s203 + $0xad0] sm:%s195] %v896
                %v898 = vld [vmem:[%s202 + $0x15b0] sm:%s195]
                %899 = vst [vmem:[%s203 + $0xad8] sm:%s195] %v898
                %v900 = vld [vmem:[%s202 + $0x15c0] sm:%s195]
                %901 = vst [vmem:[%s203 + $0xae0] sm:%s195] %v900
                %v902 = vld [vmem:[%s202 + $0x15d0] sm:%s195]
                %903 = vst [vmem:[%s203 + $0xae8] sm:%s195] %v902
                %v904 = vld [vmem:[%s202 + $0x15e0] sm:%s195]
                %905 = vst [vmem:[%s203 + $0xaf0] sm:%s195] %v904
                %v906 = vld [vmem:[%s202 + $0x15f0] sm:%s195]
                %907 = vst [vmem:[%s203 + $0xaf8] sm:%s195] %v906
                %v908 = vld [vmem:[%s202 + $0x1600] sm:%s195]
                %909 = vst [vmem:[%s203 + $0xb00] sm:%s195] %v908
                %v910 = vld [vmem:[%s202 + $0x1610] sm:%s195]
                %911 = vst [vmem:[%s203 + $0xb08] sm:%s195] %v910
                %v912 = vld [vmem:[%s202 + $0x1620] sm:%s195]
                %913 = vst [vmem:[%s203 + $0xb10] sm:%s195] %v912
                %v914 = vld [vmem:[%s202 + $0x1630] sm:%s195]
                %915 = vst [vmem:[%s203 + $0xb18] sm:%s195] %v914
                %v916 = vld [vmem:[%s202 + $0x1640] sm:%s195]
                %917 = vst [vmem:[%s203 + $0xb20] sm:%s195] %v916
                %v918 = vld [vmem:[%s202 + $0x1650] sm:%s195]
                %919 = vst [vmem:[%s203 + $0xb28] sm:%s195] %v918
                %v920 = vld [vmem:[%s202 + $0x1660] sm:%s195]
                %921 = vst [vmem:[%s203 + $0xb30] sm:%s195] %v920
                %v922 = vld [vmem:[%s202 + $0x1670] sm:%s195]
                %923 = vst [vmem:[%s203 + $0xb38] sm:%s195] %v922
                %v924 = vld [vmem:[%s202 + $0x1680] sm:%s195]
                %925 = vst [vmem:[%s203 + $0xb40] sm:%s195] %v924
                %v926 = vld [vmem:[%s202 + $0x1690] sm:%s195]
                %927 = vst [vmem:[%s203 + $0xb48] sm:%s195] %v926
                %v928 = vld [vmem:[%s202 + $0x16a0] sm:%s195]
                %929 = vst [vmem:[%s203 + $0xb50] sm:%s195] %v928
                %v930 = vld [vmem:[%s202 + $0x16b0] sm:%s195]
                %931 = vst [vmem:[%s203 + $0xb58] sm:%s195] %v930
                %v932 = vld [vmem:[%s202 + $0x16c0] sm:%s195]
                %933 = vst [vmem:[%s203 + $0xb60] sm:%s195] %v932
                %v934 = vld [vmem:[%s202 + $0x16d0] sm:%s195]
                %935 = vst [vmem:[%s203 + $0xb68] sm:%s195] %v934
                %v936 = vld [vmem:[%s202 + $0x16e0] sm:%s195]
                %937 = vst [vmem:[%s203 + $0xb70] sm:%s195] %v936
                %v938 = vld [vmem:[%s202 + $0x16f0] sm:%s195]
                %939 = vst [vmem:[%s203 + $0xb78] sm:%s195] %v938
                %v940 = vld [vmem:[%s202 + $0x1700] sm:%s195]
                %941 = vst [vmem:[%s203 + $0xb80] sm:%s195] %v940
                %v942 = vld [vmem:[%s202 + $0x1710] sm:%s195]
                %943 = vst [vmem:[%s203 + $0xb88] sm:%s195] %v942
                %v944 = vld [vmem:[%s202 + $0x1720] sm:%s195]
                %945 = vst [vmem:[%s203 + $0xb90] sm:%s195] %v944
                %v946 = vld [vmem:[%s202 + $0x1730] sm:%s195]
                %947 = vst [vmem:[%s203 + $0xb98] sm:%s195] %v946
                %v948 = vld [vmem:[%s202 + $0x1740] sm:%s195]
                %949 = vst [vmem:[%s203 + $0xba0] sm:%s195] %v948
                %v950 = vld [vmem:[%s202 + $0x1750] sm:%s195]
                %951 = vst [vmem:[%s203 + $0xba8] sm:%s195] %v950
                %v952 = vld [vmem:[%s202 + $0x1760] sm:%s195]
                %953 = vst [vmem:[%s203 + $0xbb0] sm:%s195] %v952
                %v954 = vld [vmem:[%s202 + $0x1770] sm:%s195]
                %955 = vst [vmem:[%s203 + $0xbb8] sm:%s195] %v954
                %v956 = vld [vmem:[%s202 + $0x1780] sm:%s195]
                %957 = vst [vmem:[%s203 + $0xbc0] sm:%s195] %v956
                %v958 = vld [vmem:[%s202 + $0x1790] sm:%s195]
                %959 = vst [vmem:[%s203 + $0xbc8] sm:%s195] %v958
                %v960 = vld [vmem:[%s202 + $0x17a0] sm:%s195]
                %961 = vst [vmem:[%s203 + $0xbd0] sm:%s195] %v960
                %v962 = vld [vmem:[%s202 + $0x17b0] sm:%s195]
                %963 = vst [vmem:[%s203 + $0xbd8] sm:%s195] %v962
                %v964 = vld [vmem:[%s202 + $0x17c0] sm:%s195]
                %965 = vst [vmem:[%s203 + $0xbe0] sm:%s195] %v964
                %v966 = vld [vmem:[%s202 + $0x17d0] sm:%s195]
                %967 = vst [vmem:[%s203 + $0xbe8] sm:%s195] %v966
                %v968 = vld [vmem:[%s202 + $0x17e0] sm:%s195]
                %969 = vst [vmem:[%s203 + $0xbf0] sm:%s195] %v968
                %v970 = vld [vmem:[%s202 + $0x17f0] sm:%s195]
                %971 = vst [vmem:[%s203 + $0xbf8] sm:%s195] %v970
                %v972 = vld [vmem:[%s202 + $0x1800] sm:%s195]
                %973 = vst [vmem:[%s203 + $0xc00] sm:%s195] %v972
                %v974 = vld [vmem:[%s202 + $0x1810] sm:%s195]
                %975 = vst [vmem:[%s203 + $0xc08] sm:%s195] %v974
                %v976 = vld [vmem:[%s202 + $0x1820] sm:%s195]
                %977 = vst [vmem:[%s203 + $0xc10] sm:%s195] %v976
                %v978 = vld [vmem:[%s202 + $0x1830] sm:%s195]
                %979 = vst [vmem:[%s203 + $0xc18] sm:%s195] %v978
                %v980 = vld [vmem:[%s202 + $0x1840] sm:%s195]
                %981 = vst [vmem:[%s203 + $0xc20] sm:%s195] %v980
                %v982 = vld [vmem:[%s202 + $0x1850] sm:%s195]
                %983 = vst [vmem:[%s203 + $0xc28] sm:%s195] %v982
                %v984 = vld [vmem:[%s202 + $0x1860] sm:%s195]
                %985 = vst [vmem:[%s203 + $0xc30] sm:%s195] %v984
                %v986 = vld [vmem:[%s202 + $0x1870] sm:%s195]
                %987 = vst [vmem:[%s203 + $0xc38] sm:%s195] %v986
              $region45: #{dqn_forward.7} parent=39 // loop_footer
                %s201 = sadd.s32 1, %s197
              $region46: #{dqn_forward.7} parent=39 // loop_footer_branch
                %196 = sbr.rel target = $region42
              $region47: #{dqn_forward.7} parent=39 // loop_exit
                _
            $region40: #{dqn_forward.7} parent=31 // pred_fallthru
              _
          $region32: #{dqn_forward.7} parent=27 // pred_fallthru
            _
          %1784 = vnop
        $region28: #{dqn_forward.7} parent=23 // pred_fallthru
          _
        // Predicated region
        $region63: #{dqn_forward.7} parent=23 // pred_check
          %p1785 = pneg %p79
        $region64: #{dqn_forward.7} parent=23 // pred_check_branch
          %1787 = sbr.rel (%p1785) target = $region66
        $region65: #{dqn_forward.7} parent=23 // pred_region
          %s1788 = smul.u32 2, %s12
          %p1789 = scmp.lt.s32.totalorder %s1788, 3
          %s1790 = scalar_select %p1789, %s1788, 3
          %s1791 = scalar_lea.vmem %s2, %s1790
          %s1792 = smul.u32 2, %s12
        $region66: #{dqn_forward.7} parent=23 // pred_fallthru
          _
        // Predicated region
        $region67: #{dqn_forward.7} parent=23 // pred_check
          %p1793 = pneg %p105
        $region68: #{dqn_forward.7} parent=23 // pred_check_branch
          %1795 = sbr.rel (%p1793) target = $region70
        $region69: #{dqn_forward.7} parent=23 // pred_region
          %s1796 = smul.u32 32, %s12
          %p1797 = scmp.lt.s32.totalorder %s1796, 63
          %s1798 = scalar_select %p1797, %s1796, 63
          %s1799 = smul.addr %s1798, 4
          %s1800 = scalar_lea.vmem %s3, %s1799
          %s1801 = smul.u32 32, %s12
        $region70: #{dqn_forward.7} parent=23 // pred_fallthru
          _
      $region24: #{dqn_forward.7} parent=5 // pred_fallthru
        _
      %p1802 = scmp.le.s32.totalorder 1, %s12
      %p1803 = scmp.lt.s32.totalorder %s12, 3
      %p1804 = pnand %p1802, %p1803
      %p1805 = pneg %p1804
      // Predicated region
      $region71: #{dqn_forward.7} parent=5 // pred_check
        _
      $region72: #{dqn_forward.7} parent=5 // pred_check_branch
        %1807 = sbr.rel (%p1804) target = $region74
      $region73: #{dqn_forward.7} parent=5 // pred_region
        %s1808 = ssub.s32 %s12, 1
        %s1809 = sand.u32 %s46, 1
        %s1810 = sand.u32 %s46, 1
        %s1811 = smul.addr %s1810, 3136
        %s1812 = scalar_lea.vmem [#allocation2], %s1811
        // Predicated region
        $region75: #{dqn_forward.7} parent=73 // pred_check
          %p1813 = pneg %p59
        $region76: #{dqn_forward.7} parent=73 // pred_check_branch
          %1815 = sbr.rel (%p1813) target = $region78
        $region77: #{dqn_forward.7} parent=73 // pred_region
          _
        $region78: #{dqn_forward.7} parent=73 // pred_fallthru
          _
        %p1816 = pneg %p33
        %p1817 = pneg %p30
        %s1818 = sand.u32 %s46, 1
        %s1819 = sand.u32 %s46, 1
        %s1820 = smul.addr %s1819, 3136
        %s1821 = scalar_lea.vmem [#allocation2], %s1820
        %p1822 = pneg %p59
        %p1823 = pneg %p56
        %s1824 = smul.u32 2, %s17
        %p1825 = scmp.lt.s32.totalorder %s1824, 3
        %s1826 = scalar_select %p1825, %s1824, 3
        %s1827 = scalar_lea.vmem %s2, %s1826
        %p1828 = pneg %p85
        %p1829 = pneg %p82
        %s1830 = smul.u32 32, %s17
        %p1831 = scmp.lt.s32.totalorder %s1830, 63
        %s1832 = scalar_select %p1831, %s1830, 63
        %s1833 = smul.addr %s1832, 4
        %s1834 = scalar_lea.vmem %s3, %s1833
        %p1835 = pneg %p111
        %p1836 = pneg %p108
        %p1837 = pneg %p132
        %p1838 = pneg %p129
        %p1839 = pneg %p153
        %p1840 = pneg %p150
        %s1841 = smul.u32 2, %s17
        %s1842 = smul.u32 2, %s17
        %p1843 = scmp.lt.s32.totalorder %s1842, 3
        %s1844 = scalar_select %p1843, %s1842, 3
        %s1845 = scalar_lea.vmem %s2, %s1844
        %s1846 = smul.u32 2, %s17
        %s1847 = smul.u32 32, %s17
        %p1848 = scmp.lt.s32.totalorder %s1847, 63
        %s1849 = scalar_select %p1848, %s1847, 63
        %s1850 = smul.addr %s1849, 4
        %s1851 = scalar_lea.vmem %s3, %s1850
        %s1852 = smul.u32 32, %s17
        %v1854 = vld [vmem:[%s0] sm:$0xff]
        %v1855 = vld [vmem:[%s0 + $0x8] sm:$0xff]
        %v1856 = vld [vmem:[%s0 + $0x10] sm:$0xff]
        %v1857 = vld [vmem:[%s0 + $0x18] sm:$0x1]
        %v1858 = vld [vmem:[%s1812] sm:$0xff]
        %v1859 = vld [vmem:[%s1812 + $0x8] sm:$0xff]
        %v1860 = vld [vmem:[%s1812 + $0x10] sm:$0xff]
        %v1861 = vld [vmem:[%s1812 + $0x18] sm:$0xff]
        %v1862 = vld [vmem:[%s1812 + $0x20] sm:$0xff]
        %v1863 = vld [vmem:[%s1812 + $0x28] sm:$0xff]
        %v1864 = vld [vmem:[%s1812 + $0x30] sm:$0xff]
        %v1865 = vld [vmem:[%s1812 + $0x38] sm:$0xff]
        %v1866 = vld [vmem:[%s1812 + $0x40] sm:$0xff]
        %v1867 = vld [vmem:[%s1812 + $0x48] sm:$0xff]
        %v1868 = vld [vmem:[%s1812 + $0x50] sm:$0xff]
        %v1869 = vld [vmem:[%s1812 + $0x58] sm:$0xff]
        %v1870 = vld [vmem:[%s1812 + $0x60] sm:$0xff]
        %v1871 = vld [vmem:[%s1812 + $0x68] sm:$0xff]
        %v1872 = vld [vmem:[%s1812 + $0x70] sm:$0xff]
        %v1873 = vld [vmem:[%s1812 + $0x78] sm:$0xff]
        %v1874 = vld [vmem:[%s1812 + $0x80] sm:$0xff]
        %v1875 = vld [vmem:[%s1812 + $0x88] sm:$0xff]
        %v1876 = vld [vmem:[%s1812 + $0x90] sm:$0xff]
        %v1877 = vld [vmem:[%s1812 + $0x98] sm:$0xff]
        %v1878 = vld [vmem:[%s1812 + $0xa0] sm:$0xff]
        %v1879 = vld [vmem:[%s1812 + $0xa8] sm:$0xff]
        %v1880 = vld [vmem:[%s1812 + $0xb0] sm:$0xff]
        %v1881 = vld [vmem:[%s1812 + $0xb8] sm:$0xff]
        %v1882 = vld [vmem:[%s1812 + $0xc0] sm:$0xff]
        %v1883 = vld [vmem:[%s1812 + $0xc8] sm:$0xff]
        %v1884 = vld [vmem:[%s1812 + $0xd0] sm:$0xff]
        %v1885 = vld [vmem:[%s1812 + $0xd8] sm:$0xff]
        %v1886 = vld [vmem:[%s1812 + $0xe0] sm:$0xff]
        %v1887 = vld [vmem:[%s1812 + $0xe8] sm:$0xff]
        %v1888 = vld [vmem:[%s1812 + $0xf0] sm:$0xff]
        %v1889 = vld [vmem:[%s1812 + $0xf8] sm:$0xff]
        %v1890 = vld [vmem:[%s1812 + $0x100] sm:$0xff]
        %v1891 = vld [vmem:[%s1812 + $0x108] sm:$0xff]
        %v1892 = vld [vmem:[%s1812 + $0x110] sm:$0xff]
        %v1893 = vld [vmem:[%s1812 + $0x118] sm:$0xff]
        %v1894 = vld [vmem:[%s1812 + $0x120] sm:$0xff]
        %v1895 = vld [vmem:[%s1812 + $0x128] sm:$0xff]
        %v1896 = vld [vmem:[%s1812 + $0x130] sm:$0xff]
        %v1897 = vld [vmem:[%s1812 + $0x138] sm:$0xff]
        %v1898 = vld [vmem:[%s1812 + $0x140] sm:$0xff]
        %v1899 = vld [vmem:[%s1812 + $0x148] sm:$0xff]
        %v1900 = vld [vmem:[%s1812 + $0x150] sm:$0xff]
        %v1901 = vld [vmem:[%s1812 + $0x158] sm:$0xff]
        %v1902 = vld [vmem:[%s1812 + $0x160] sm:$0xff]
        %v1903 = vld [vmem:[%s1812 + $0x168] sm:$0xff]
        %v1904 = vld [vmem:[%s1812 + $0x170] sm:$0xff]
        %v1905 = vld [vmem:[%s1812 + $0x178] sm:$0xff]
        %v1906 = vld [vmem:[%s1812 + $0x180] sm:$0xff]
        %v1907 = vld [vmem:[%s1812 + $0x188] sm:$0xff]
        %v1908 = vld [vmem:[%s1812 + $0x190] sm:$0xff]
        %v1909 = vld [vmem:[%s1812 + $0x198] sm:$0xff]
        %v1910 = vld [vmem:[%s1812 + $0x1a0] sm:$0xff]
        %v1911 = vld [vmem:[%s1812 + $0x1a8] sm:$0xff]
        %v1912 = vld [vmem:[%s1812 + $0x1b0] sm:$0xff]
        %v1913 = vld [vmem:[%s1812 + $0x1b8] sm:$0xff]
        %v1914 = vld [vmem:[%s1812 + $0x1c0] sm:$0xff]
        %v1915 = vld [vmem:[%s1812 + $0x1c8] sm:$0xff]
        %v1916 = vld [vmem:[%s1812 + $0x1d0] sm:$0xff]
        %v1917 = vld [vmem:[%s1812 + $0x1d8] sm:$0xff]
        %v1918 = vld [vmem:[%s1812 + $0x1e0] sm:$0xff]
        %v1919 = vld [vmem:[%s1812 + $0x1e8] sm:$0xff]
        %v1920 = vld [vmem:[%s1812 + $0x1f0] sm:$0xff]
        %v1921 = vld [vmem:[%s1812 + $0x1f8] sm:$0xff]
        %v1922 = vld [vmem:[%s1812 + $0x200] sm:$0xff]
        %v1923 = vld [vmem:[%s1812 + $0x208] sm:$0xff]
        %v1924 = vld [vmem:[%s1812 + $0x210] sm:$0xff]
        %v1925 = vld [vmem:[%s1812 + $0x218] sm:$0xff]
        %v1926 = vld [vmem:[%s1812 + $0x220] sm:$0xff]
        %v1927 = vld [vmem:[%s1812 + $0x228] sm:$0xff]
        %v1928 = vld [vmem:[%s1812 + $0x230] sm:$0xff]
        %v1929 = vld [vmem:[%s1812 + $0x238] sm:$0xff]
        %v1930 = vld [vmem:[%s1812 + $0x240] sm:$0xff]
        %v1931 = vld [vmem:[%s1812 + $0x248] sm:$0xff]
        %v1932 = vld [vmem:[%s1812 + $0x250] sm:$0xff]
        %v1933 = vld [vmem:[%s1812 + $0x258] sm:$0xff]
        %v1934 = vld [vmem:[%s1812 + $0x260] sm:$0xff]
        %v1935 = vld [vmem:[%s1812 + $0x268] sm:$0xff]
        %v1936 = vld [vmem:[%s1812 + $0x270] sm:$0xff]
        %v1937 = vld [vmem:[%s1812 + $0x278] sm:$0xff]
        %v1938 = vld [vmem:[%s1812 + $0x280] sm:$0xff]
        %v1939 = vld [vmem:[%s1812 + $0x288] sm:$0xff]
        %v1940 = vld [vmem:[%s1812 + $0x290] sm:$0xff]
        %v1941 = vld [vmem:[%s1812 + $0x298] sm:$0xff]
        %v1942 = vld [vmem:[%s1812 + $0x2a0] sm:$0xff]
        %v1943 = vld [vmem:[%s1812 + $0x2a8] sm:$0xff]
        %v1944 = vld [vmem:[%s1812 + $0x2b0] sm:$0xff]
        %v1945 = vld [vmem:[%s1812 + $0x2b8] sm:$0xff]
        %v1946 = vld [vmem:[%s1812 + $0x2c0] sm:$0xff]
        %v1947 = vld [vmem:[%s1812 + $0x2c8] sm:$0xff]
        %v1948 = vld [vmem:[%s1812 + $0x2d0] sm:$0xff]
        %v1949 = vld [vmem:[%s1812 + $0x2d8] sm:$0xff]
        %v1950 = vld [vmem:[%s1812 + $0x2e0] sm:$0xff]
        %v1951 = vld [vmem:[%s1812 + $0x2e8] sm:$0xff]
        %v1952 = vld [vmem:[%s1812 + $0x2f0] sm:$0xff]
        %v1953 = vld [vmem:[%s1812 + $0x2f8] sm:$0xff]
        %v1954 = vld [vmem:[%s1812 + $0x300] sm:$0xff]
        %v1955 = vld [vmem:[%s1812 + $0x308] sm:$0xff]
        %v1956 = vld [vmem:[%s1812 + $0x310] sm:$0xff]
        %v1957 = vld [vmem:[%s1812 + $0x318] sm:$0xff]
        %v1958 = vld [vmem:[%s1812 + $0x320] sm:$0xff]
        %v1959 = vld [vmem:[%s1812 + $0x328] sm:$0xff]
        %v1960 = vld [vmem:[%s1812 + $0x330] sm:$0xff]
        %v1961 = vld [vmem:[%s1812 + $0x338] sm:$0xff]
        %v1962 = vld [vmem:[%s1812 + $0x340] sm:$0xff]
        %v1963 = vld [vmem:[%s1812 + $0x348] sm:$0xff]
        %v1964 = vld [vmem:[%s1812 + $0x350] sm:$0xff]
        %v1965 = vld [vmem:[%s1812 + $0x358] sm:$0xff]
        %v1966 = vld [vmem:[%s1812 + $0x360] sm:$0xff]
        %v1967 = vld [vmem:[%s1812 + $0x368] sm:$0xff]
        %v1968 = vld [vmem:[%s1812 + $0x370] sm:$0xff]
        %v1969 = vld [vmem:[%s1812 + $0x378] sm:$0xff]
        %v1970 = vld [vmem:[%s1812 + $0x380] sm:$0xff]
        %v1971 = vld [vmem:[%s1812 + $0x388] sm:$0xff]
        %v1972 = vld [vmem:[%s1812 + $0x390] sm:$0xff]
        %v1973 = vld [vmem:[%s1812 + $0x398] sm:$0xff]
        %v1974 = vld [vmem:[%s1812 + $0x3a0] sm:$0xff]
        %v1975 = vld [vmem:[%s1812 + $0x3a8] sm:$0xff]
        %v1976 = vld [vmem:[%s1812 + $0x3b0] sm:$0xff]
        %v1977 = vld [vmem:[%s1812 + $0x3b8] sm:$0xff]
        %v1978 = vld [vmem:[%s1812 + $0x3c0] sm:$0xff]
        %v1979 = vld [vmem:[%s1812 + $0x3c8] sm:$0xff]
        %v1980 = vld [vmem:[%s1812 + $0x3d0] sm:$0xff]
        %v1981 = vld [vmem:[%s1812 + $0x3d8] sm:$0xff]
        %v1982 = vld [vmem:[%s1812 + $0x3e0] sm:$0xff]
        %v1983 = vld [vmem:[%s1812 + $0x3e8] sm:$0xff]
        %v1984 = vld [vmem:[%s1812 + $0x3f0] sm:$0xff]
        %v1985 = vld [vmem:[%s1812 + $0x3f8] sm:$0xff]
        %v1986 = vld [vmem:[%s1812 + $0x400] sm:$0xff]
        %v1987 = vld [vmem:[%s1812 + $0x408] sm:$0xff]
        %v1988 = vld [vmem:[%s1812 + $0x410] sm:$0xff]
        %v1989 = vld [vmem:[%s1812 + $0x418] sm:$0xff]
        %v1990 = vld [vmem:[%s1812 + $0x420] sm:$0xff]
        %v1991 = vld [vmem:[%s1812 + $0x428] sm:$0xff]
        %v1992 = vld [vmem:[%s1812 + $0x430] sm:$0xff]
        %v1993 = vld [vmem:[%s1812 + $0x438] sm:$0xff]
        %v1994 = vld [vmem:[%s1812 + $0x440] sm:$0xff]
        %v1995 = vld [vmem:[%s1812 + $0x448] sm:$0xff]
        %v1996 = vld [vmem:[%s1812 + $0x450] sm:$0xff]
        %v1997 = vld [vmem:[%s1812 + $0x458] sm:$0xff]
        %v1998 = vld [vmem:[%s1812 + $0x460] sm:$0xff]
        %v1999 = vld [vmem:[%s1812 + $0x468] sm:$0xff]
        %v2000 = vld [vmem:[%s1812 + $0x470] sm:$0xff]
        %v2001 = vld [vmem:[%s1812 + $0x478] sm:$0xff]
        %v2002 = vld [vmem:[%s1812 + $0x480] sm:$0xff]
        %v2003 = vld [vmem:[%s1812 + $0x488] sm:$0xff]
        %v2004 = vld [vmem:[%s1812 + $0x490] sm:$0xff]
        %v2005 = vld [vmem:[%s1812 + $0x498] sm:$0xff]
        %v2006 = vld [vmem:[%s1812 + $0x4a0] sm:$0xff]
        %v2007 = vld [vmem:[%s1812 + $0x4a8] sm:$0xff]
        %v2008 = vld [vmem:[%s1812 + $0x4b0] sm:$0xff]
        %v2009 = vld [vmem:[%s1812 + $0x4b8] sm:$0xff]
        %v2010 = vld [vmem:[%s1812 + $0x4c0] sm:$0xff]
        %v2011 = vld [vmem:[%s1812 + $0x4c8] sm:$0xff]
        %v2012 = vld [vmem:[%s1812 + $0x4d0] sm:$0xff]
        %v2013 = vld [vmem:[%s1812 + $0x4d8] sm:$0xff]
        %v2014 = vld [vmem:[%s1812 + $0x4e0] sm:$0xff]
        %v2015 = vld [vmem:[%s1812 + $0x4e8] sm:$0xff]
        %v2016 = vld [vmem:[%s1812 + $0x4f0] sm:$0xff]
        %v2017 = vld [vmem:[%s1812 + $0x4f8] sm:$0xff]
        %v2018 = vld [vmem:[%s1812 + $0x500] sm:$0xff]
        %v2019 = vld [vmem:[%s1812 + $0x508] sm:$0xff]
        %v2020 = vld [vmem:[%s1812 + $0x510] sm:$0xff]
        %v2021 = vld [vmem:[%s1812 + $0x518] sm:$0xff]
        %v2022 = vld [vmem:[%s1812 + $0x520] sm:$0xff]
        %v2023 = vld [vmem:[%s1812 + $0x528] sm:$0xff]
        %v2024 = vld [vmem:[%s1812 + $0x530] sm:$0xff]
        %v2025 = vld [vmem:[%s1812 + $0x538] sm:$0xff]
        %v2026 = vld [vmem:[%s1812 + $0x540] sm:$0xff]
        %v2027 = vld [vmem:[%s1812 + $0x548] sm:$0xff]
        %v2028 = vld [vmem:[%s1812 + $0x550] sm:$0xff]
        %v2029 = vld [vmem:[%s1812 + $0x558] sm:$0xff]
        %v2030 = vld [vmem:[%s1812 + $0x560] sm:$0xff]
        %v2031 = vld [vmem:[%s1812 + $0x568] sm:$0xff]
        %v2032 = vld [vmem:[%s1812 + $0x570] sm:$0xff]
        %v2033 = vld [vmem:[%s1812 + $0x578] sm:$0xff]
        %v2034 = vld [vmem:[%s1812 + $0x580] sm:$0xff]
        %v2035 = vld [vmem:[%s1812 + $0x588] sm:$0xff]
        %v2036 = vld [vmem:[%s1812 + $0x590] sm:$0xff]
        %v2037 = vld [vmem:[%s1812 + $0x598] sm:$0xff]
        %v2038 = vld [vmem:[%s1812 + $0x5a0] sm:$0xff]
        %v2039 = vld [vmem:[%s1812 + $0x5a8] sm:$0xff]
        %v2040 = vld [vmem:[%s1812 + $0x5b0] sm:$0xff]
        %v2041 = vld [vmem:[%s1812 + $0x5b8] sm:$0xff]
        %v2042 = vld [vmem:[%s1812 + $0x5c0] sm:$0xff]
        %v2043 = vld [vmem:[%s1812 + $0x5c8] sm:$0xff]
        %v2044 = vld [vmem:[%s1812 + $0x5d0] sm:$0xff]
        %v2045 = vld [vmem:[%s1812 + $0x5d8] sm:$0xff]
        %v2046 = vld [vmem:[%s1812 + $0x5e0] sm:$0xff]
        %v2047 = vld [vmem:[%s1812 + $0x5e8] sm:$0xff]
        %v2048 = vld [vmem:[%s1812 + $0x5f0] sm:$0xff]
        %v2049 = vld [vmem:[%s1812 + $0x5f8] sm:$0xff]
        %v2050 = vld [vmem:[%s1812 + $0x600] sm:$0xff]
        %v2051 = vld [vmem:[%s1812 + $0x608] sm:$0xff]
        %v2052 = vld [vmem:[%s1812 + $0x610] sm:$0xff]
        %v2053 = vld [vmem:[%s1812 + $0x618] sm:$0xff]
        %v2054 = vld [vmem:[%s1812 + $0x620] sm:$0xff]
        %v2055 = vld [vmem:[%s1812 + $0x628] sm:$0xff]
        %v2056 = vld [vmem:[%s1812 + $0x630] sm:$0xff]
        %v2057 = vld [vmem:[%s1812 + $0x638] sm:$0xff]
        %v2058 = vld [vmem:[%s1812 + $0x640] sm:$0xff]
        %v2059 = vld [vmem:[%s1812 + $0x648] sm:$0xff]
        %v2060 = vld [vmem:[%s1812 + $0x650] sm:$0xff]
        %v2061 = vld [vmem:[%s1812 + $0x658] sm:$0xff]
        %v2062 = vld [vmem:[%s1812 + $0x660] sm:$0xff]
        %v2063 = vld [vmem:[%s1812 + $0x668] sm:$0xff]
        %v2064 = vld [vmem:[%s1812 + $0x670] sm:$0xff]
        %v2065 = vld [vmem:[%s1812 + $0x678] sm:$0xff]
        %v2066 = vld [vmem:[%s1812 + $0x680] sm:$0xff]
        %v2067 = vld [vmem:[%s1812 + $0x688] sm:$0xff]
        %v2068 = vld [vmem:[%s1812 + $0x690] sm:$0xff]
        %v2069 = vld [vmem:[%s1812 + $0x698] sm:$0xff]
        %v2070 = vld [vmem:[%s1812 + $0x6a0] sm:$0xff]
        %v2071 = vld [vmem:[%s1812 + $0x6a8] sm:$0xff]
        %v2072 = vld [vmem:[%s1812 + $0x6b0] sm:$0xff]
        %v2073 = vld [vmem:[%s1812 + $0x6b8] sm:$0xff]
        %v2074 = vld [vmem:[%s1812 + $0x6c0] sm:$0xff]
        %v2075 = vld [vmem:[%s1812 + $0x6c8] sm:$0xff]
        %v2076 = vld [vmem:[%s1812 + $0x6d0] sm:$0xff]
        %v2077 = vld [vmem:[%s1812 + $0x6d8] sm:$0xff]
        %v2078 = vld [vmem:[%s1812 + $0x6e0] sm:$0xff]
        %v2079 = vld [vmem:[%s1812 + $0x6e8] sm:$0xff]
        %v2080 = vld [vmem:[%s1812 + $0x6f0] sm:$0xff]
        %v2081 = vld [vmem:[%s1812 + $0x6f8] sm:$0xff]
        %v2082 = vld [vmem:[%s1812 + $0x700] sm:$0xff]
        %v2083 = vld [vmem:[%s1812 + $0x708] sm:$0xff]
        %v2084 = vld [vmem:[%s1812 + $0x710] sm:$0xff]
        %v2085 = vld [vmem:[%s1812 + $0x718] sm:$0xff]
        %v2086 = vld [vmem:[%s1812 + $0x720] sm:$0xff]
        %v2087 = vld [vmem:[%s1812 + $0x728] sm:$0xff]
        %v2088 = vld [vmem:[%s1812 + $0x730] sm:$0xff]
        %v2089 = vld [vmem:[%s1812 + $0x738] sm:$0xff]
        %v2090 = vld [vmem:[%s1812 + $0x740] sm:$0xff]
        %v2091 = vld [vmem:[%s1812 + $0x748] sm:$0xff]
        %v2092 = vld [vmem:[%s1812 + $0x750] sm:$0xff]
        %v2093 = vld [vmem:[%s1812 + $0x758] sm:$0xff]
        %v2094 = vld [vmem:[%s1812 + $0x760] sm:$0xff]
        %v2095 = vld [vmem:[%s1812 + $0x768] sm:$0xff]
        %v2096 = vld [vmem:[%s1812 + $0x770] sm:$0xff]
        %v2097 = vld [vmem:[%s1812 + $0x778] sm:$0xff]
        %v2098 = vld [vmem:[%s1812 + $0x780] sm:$0xff]
        %v2099 = vld [vmem:[%s1812 + $0x788] sm:$0xff]
        %v2100 = vld [vmem:[%s1812 + $0x790] sm:$0xff]
        %v2101 = vld [vmem:[%s1812 + $0x798] sm:$0xff]
        %v2102 = vld [vmem:[%s1812 + $0x7a0] sm:$0xff]
        %v2103 = vld [vmem:[%s1812 + $0x7a8] sm:$0xff]
        %v2104 = vld [vmem:[%s1812 + $0x7b0] sm:$0xff]
        %v2105 = vld [vmem:[%s1812 + $0x7b8] sm:$0xff]
        %v2106 = vld [vmem:[%s1812 + $0x7c0] sm:$0xff]
        %v2107 = vld [vmem:[%s1812 + $0x7c8] sm:$0xff]
        %v2108 = vld [vmem:[%s1812 + $0x7d0] sm:$0xff]
        %v2109 = vld [vmem:[%s1812 + $0x7d8] sm:$0xff]
        %v2110 = vld [vmem:[%s1812 + $0x7e0] sm:$0xff]
        %v2111 = vld [vmem:[%s1812 + $0x7e8] sm:$0xff]
        %v2112 = vld [vmem:[%s1812 + $0x7f0] sm:$0xff]
        %v2113 = vld [vmem:[%s1812 + $0x7f8] sm:$0xff]
        %v2114 = vld [vmem:[%s1812 + $0x800] sm:$0xff]
        %v2115 = vld [vmem:[%s1812 + $0x808] sm:$0xff]
        %v2116 = vld [vmem:[%s1812 + $0x810] sm:$0xff]
        %v2117 = vld [vmem:[%s1812 + $0x818] sm:$0xff]
        %v2118 = vld [vmem:[%s1812 + $0x820] sm:$0xff]
        %v2119 = vld [vmem:[%s1812 + $0x828] sm:$0xff]
        %v2120 = vld [vmem:[%s1812 + $0x830] sm:$0xff]
        %v2121 = vld [vmem:[%s1812 + $0x838] sm:$0xff]
        %v2122 = vld [vmem:[%s1812 + $0x840] sm:$0xff]
        %v2123 = vld [vmem:[%s1812 + $0x848] sm:$0xff]
        %v2124 = vld [vmem:[%s1812 + $0x850] sm:$0xff]
        %v2125 = vld [vmem:[%s1812 + $0x858] sm:$0xff]
        %v2126 = vld [vmem:[%s1812 + $0x860] sm:$0xff]
        %v2127 = vld [vmem:[%s1812 + $0x868] sm:$0xff]
        %v2128 = vld [vmem:[%s1812 + $0x870] sm:$0xff]
        %v2129 = vld [vmem:[%s1812 + $0x878] sm:$0xff]
        %v2130 = vld [vmem:[%s1812 + $0x880] sm:$0xff]
        %v2131 = vld [vmem:[%s1812 + $0x888] sm:$0xff]
        %v2132 = vld [vmem:[%s1812 + $0x890] sm:$0xff]
        %v2133 = vld [vmem:[%s1812 + $0x898] sm:$0xff]
        %v2134 = vld [vmem:[%s1812 + $0x8a0] sm:$0xff]
        %v2135 = vld [vmem:[%s1812 + $0x8a8] sm:$0xff]
        %v2136 = vld [vmem:[%s1812 + $0x8b0] sm:$0xff]
        %v2137 = vld [vmem:[%s1812 + $0x8b8] sm:$0xff]
        %v2138 = vld [vmem:[%s1812 + $0x8c0] sm:$0xff]
        %v2139 = vld [vmem:[%s1812 + $0x8c8] sm:$0xff]
        %v2140 = vld [vmem:[%s1812 + $0x8d0] sm:$0xff]
        %v2141 = vld [vmem:[%s1812 + $0x8d8] sm:$0xff]
        %v2142 = vld [vmem:[%s1812 + $0x8e0] sm:$0xff]
        %v2143 = vld [vmem:[%s1812 + $0x8e8] sm:$0xff]
        %v2144 = vld [vmem:[%s1812 + $0x8f0] sm:$0xff]
        %v2145 = vld [vmem:[%s1812 + $0x8f8] sm:$0xff]
        %v2146 = vld [vmem:[%s1812 + $0x900] sm:$0xff]
        %v2147 = vld [vmem:[%s1812 + $0x908] sm:$0xff]
        %v2148 = vld [vmem:[%s1812 + $0x910] sm:$0xff]
        %v2149 = vld [vmem:[%s1812 + $0x918] sm:$0xff]
        %v2150 = vld [vmem:[%s1812 + $0x920] sm:$0xff]
        %v2151 = vld [vmem:[%s1812 + $0x928] sm:$0xff]
        %v2152 = vld [vmem:[%s1812 + $0x930] sm:$0xff]
        %v2153 = vld [vmem:[%s1812 + $0x938] sm:$0xff]
        %v2154 = vld [vmem:[%s1812 + $0x940] sm:$0xff]
        %v2155 = vld [vmem:[%s1812 + $0x948] sm:$0xff]
        %v2156 = vld [vmem:[%s1812 + $0x950] sm:$0xff]
        %v2157 = vld [vmem:[%s1812 + $0x958] sm:$0xff]
        %v2158 = vld [vmem:[%s1812 + $0x960] sm:$0xff]
        %v2159 = vld [vmem:[%s1812 + $0x968] sm:$0xff]
        %v2160 = vld [vmem:[%s1812 + $0x970] sm:$0xff]
        %v2161 = vld [vmem:[%s1812 + $0x978] sm:$0xff]
        %v2162 = vld [vmem:[%s1812 + $0x980] sm:$0xff]
        %v2163 = vld [vmem:[%s1812 + $0x988] sm:$0xff]
        %v2164 = vld [vmem:[%s1812 + $0x990] sm:$0xff]
        %v2165 = vld [vmem:[%s1812 + $0x998] sm:$0xff]
        %v2166 = vld [vmem:[%s1812 + $0x9a0] sm:$0xff]
        %v2167 = vld [vmem:[%s1812 + $0x9a8] sm:$0xff]
        %v2168 = vld [vmem:[%s1812 + $0x9b0] sm:$0xff]
        %v2169 = vld [vmem:[%s1812 + $0x9b8] sm:$0xff]
        %v2170 = vld [vmem:[%s1812 + $0x9c0] sm:$0xff]
        %v2171 = vld [vmem:[%s1812 + $0x9c8] sm:$0xff]
        %v2172 = vld [vmem:[%s1812 + $0x9d0] sm:$0xff]
        %v2173 = vld [vmem:[%s1812 + $0x9d8] sm:$0xff]
        %v2174 = vld [vmem:[%s1812 + $0x9e0] sm:$0xff]
        %v2175 = vld [vmem:[%s1812 + $0x9e8] sm:$0xff]
        %v2176 = vld [vmem:[%s1812 + $0x9f0] sm:$0xff]
        %v2177 = vld [vmem:[%s1812 + $0x9f8] sm:$0xff]
        %v2178 = vld [vmem:[%s1812 + $0xa00] sm:$0xff]
        %v2179 = vld [vmem:[%s1812 + $0xa08] sm:$0xff]
        %v2180 = vld [vmem:[%s1812 + $0xa10] sm:$0xff]
        %v2181 = vld [vmem:[%s1812 + $0xa18] sm:$0xff]
        %v2182 = vld [vmem:[%s1812 + $0xa20] sm:$0xff]
        %v2183 = vld [vmem:[%s1812 + $0xa28] sm:$0xff]
        %v2184 = vld [vmem:[%s1812 + $0xa30] sm:$0xff]
        %v2185 = vld [vmem:[%s1812 + $0xa38] sm:$0xff]
        %v2186 = vld [vmem:[%s1812 + $0xa40] sm:$0xff]
        %v2187 = vld [vmem:[%s1812 + $0xa48] sm:$0xff]
        %v2188 = vld [vmem:[%s1812 + $0xa50] sm:$0xff]
        %v2189 = vld [vmem:[%s1812 + $0xa58] sm:$0xff]
        %v2190 = vld [vmem:[%s1812 + $0xa60] sm:$0xff]
        %v2191 = vld [vmem:[%s1812 + $0xa68] sm:$0xff]
        %v2192 = vld [vmem:[%s1812 + $0xa70] sm:$0xff]
        %v2193 = vld [vmem:[%s1812 + $0xa78] sm:$0xff]
        %v2194 = vld [vmem:[%s1812 + $0xa80] sm:$0xff]
        %v2195 = vld [vmem:[%s1812 + $0xa88] sm:$0xff]
        %v2196 = vld [vmem:[%s1812 + $0xa90] sm:$0xff]
        %v2197 = vld [vmem:[%s1812 + $0xa98] sm:$0xff]
        %v2198 = vld [vmem:[%s1812 + $0xaa0] sm:$0xff]
        %v2199 = vld [vmem:[%s1812 + $0xaa8] sm:$0xff]
        %v2200 = vld [vmem:[%s1812 + $0xab0] sm:$0xff]
        %v2201 = vld [vmem:[%s1812 + $0xab8] sm:$0xff]
        %v2202 = vld [vmem:[%s1812 + $0xac0] sm:$0xff]
        %v2203 = vld [vmem:[%s1812 + $0xac8] sm:$0xff]
        %v2204 = vld [vmem:[%s1812 + $0xad0] sm:$0xff]
        %v2205 = vld [vmem:[%s1812 + $0xad8] sm:$0xff]
        %v2206 = vld [vmem:[%s1812 + $0xae0] sm:$0xff]
        %v2207 = vld [vmem:[%s1812 + $0xae8] sm:$0xff]
        %v2208 = vld [vmem:[%s1812 + $0xaf0] sm:$0xff]
        %v2209 = vld [vmem:[%s1812 + $0xaf8] sm:$0xff]
        %v2210 = vld [vmem:[%s1812 + $0xb00] sm:$0xff]
        %v2211 = vld [vmem:[%s1812 + $0xb08] sm:$0xff]
        %v2212 = vld [vmem:[%s1812 + $0xb10] sm:$0xff]
        %v2213 = vld [vmem:[%s1812 + $0xb18] sm:$0xff]
        %v2214 = vld [vmem:[%s1812 + $0xb20] sm:$0xff]
        %v2215 = vld [vmem:[%s1812 + $0xb28] sm:$0xff]
        %v2216 = vld [vmem:[%s1812 + $0xb30] sm:$0xff]
        %v2217 = vld [vmem:[%s1812 + $0xb38] sm:$0xff]
        %v2218 = vld [vmem:[%s1812 + $0xb40] sm:$0xff]
        %v2219 = vld [vmem:[%s1812 + $0xb48] sm:$0xff]
        %v2220 = vld [vmem:[%s1812 + $0xb50] sm:$0xff]
        %v2221 = vld [vmem:[%s1812 + $0xb58] sm:$0xff]
        %v2222 = vld [vmem:[%s1812 + $0xb60] sm:$0xff]
        %v2223 = vld [vmem:[%s1812 + $0xb68] sm:$0xff]
        %v2224 = vld [vmem:[%s1812 + $0xb70] sm:$0xff]
        %v2225 = vld [vmem:[%s1812 + $0xb78] sm:$0xff]
        %v2226 = vld [vmem:[%s1812 + $0xb80] sm:$0xff]
        %v2227 = vld [vmem:[%s1812 + $0xb88] sm:$0xff]
        %v2228 = vld [vmem:[%s1812 + $0xb90] sm:$0xff]
        %v2229 = vld [vmem:[%s1812 + $0xb98] sm:$0xff]
        %v2230 = vld [vmem:[%s1812 + $0xba0] sm:$0xff]
        %v2231 = vld [vmem:[%s1812 + $0xba8] sm:$0xff]
        %v2232 = vld [vmem:[%s1812 + $0xbb0] sm:$0xff]
        %v2233 = vld [vmem:[%s1812 + $0xbb8] sm:$0xff]
        %v2234 = vld [vmem:[%s1812 + $0xbc0] sm:$0xff]
        %v2235 = vld [vmem:[%s1812 + $0xbc8] sm:$0xff]
        %v2236 = vld [vmem:[%s1812 + $0xbd0] sm:$0xff]
        %v2237 = vld [vmem:[%s1812 + $0xbd8] sm:$0xff]
        %v2238 = vld [vmem:[%s1812 + $0xbe0] sm:$0xff]
        %v2239 = vld [vmem:[%s1812 + $0xbe8] sm:$0xff]
        %v2240 = vld [vmem:[%s1812 + $0xbf0] sm:$0xff]
        %v2241 = vld [vmem:[%s1812 + $0xbf8] sm:$0xff]
        %v2242 = vld [vmem:[%s1812 + $0xc00] sm:$0xff]
        %v2243 = vld [vmem:[%s1812 + $0xc08] sm:$0xff]
        %v2244 = vld [vmem:[%s1812 + $0xc10] sm:$0xff]
        %v2245 = vld [vmem:[%s1812 + $0xc18] sm:$0xff]
        %v2246 = vld [vmem:[%s1812 + $0xc20] sm:$0xff]
        %v2247 = vld [vmem:[%s1812 + $0xc28] sm:$0xff]
        %v2248 = vld [vmem:[%s1812 + $0xc30] sm:$0xff]
        %v2249 = vld [vmem:[%s1812 + $0xc38] sm:$0xff]
        %v2250 = vld [vmem:[%s1845] sm:$0x3]
        %v2252 = vlaneseq
        %v2253 = vshrl.u32 %v2252, 7
        %v2254 = vsub.s32 0, %v2253
        %v2255 = vrot.slane %v2250, %v2254
        %v2256 = vlaneseq
        %v2257 = vshrl.u32 %v2256, 7
        %v2258 = vsub.s32 1, %v2257
        %v2259 = vrot.slane %v2250, %v2258
        %v2266 = vcombine.high %v1854, %v1854
        %v2268 = vunpack.c.l.s4 1966171168
        %v2269 = vunpack.c.0.s8 %v2268
        %v2270 = vlaneseq
        %v2271 = vshrl.u32 %v2270, 7
        %v2272 = vsub.s32 %v2269, %v2271
        %v2273 = vrot.slane %v1854, %v2272
        %v2275 = vunpack.c.l.s4 1966171168
        %v2276 = vunpack.c.0.s8 %v2275
        %v2277 = vlaneseq
        %v2278 = vshrl.u32 %v2277, 7
        %v2279 = vsub.s32 %v2276, %v2278
        %v2280 = vrot.slane %v2266, %v2279
        %v2281 = vcombine.high %v2273, %v2273
        %v2282 = vcombine.high %v2280, %v2280
        %v2284 = vunpack.c.l.s4 1966171168
        %v2285 = vunpack.c.0.s8 %v2284
        %v2286 = vlaneseq
        %v2287 = vshrl.u32 %v2286, 7
        %v2288 = vsub.s32 %v2285, %v2287
        %v2289 = vrot.slane %v2273, %v2288
        %v2291 = vunpack.c.l.s4 1966171168
        %v2292 = vunpack.c.0.s8 %v2291
        %v2293 = vlaneseq
        %v2294 = vshrl.u32 %v2293, 7
        %v2295 = vsub.s32 %v2292, %v2294
        %v2296 = vrot.slane %v2280, %v2295
        %v2298 = vunpack.c.l.s4 1966171168
        %v2299 = vunpack.c.0.s8 %v2298
        %v2300 = vlaneseq
        %v2301 = vshrl.u32 %v2300, 7
        %v2302 = vsub.s32 %v2299, %v2301
        %v2303 = vrot.slane %v2281, %v2302
        %v2305 = vunpack.c.l.s4 1966171168
        %v2306 = vunpack.c.0.s8 %v2305
        %v2307 = vlaneseq
        %v2308 = vshrl.u32 %v2307, 7
        %v2309 = vsub.s32 %v2306, %v2308
        %v2310 = vrot.slane %v2282, %v2309
        %v2311 = vcombine.high %v2289, %v2289
        %v2312 = vcombine.high %v2296, %v2296
        %v2313 = vcombine.high %v2303, %v2303
        %v2314 = vcombine.high %v2310, %v2310
        %v2315 = vcombine.high %v1855, %v1855
        %v2317 = vunpack.c.l.s4 1966171168
        %v2318 = vunpack.c.0.s8 %v2317
        %v2319 = vlaneseq
        %v2320 = vshrl.u32 %v2319, 7
        %v2321 = vsub.s32 %v2318, %v2320
        %v2322 = vrot.slane %v1855, %v2321
        %v2324 = vunpack.c.l.s4 1966171168
        %v2325 = vunpack.c.0.s8 %v2324
        %v2326 = vlaneseq
        %v2327 = vshrl.u32 %v2326, 7
        %v2328 = vsub.s32 %v2325, %v2327
        %v2329 = vrot.slane %v2315, %v2328
        %v2330 = vcombine.high %v2322, %v2322
        %v2331 = vcombine.high %v2329, %v2329
        %v2333 = vunpack.c.l.s4 1966171168
        %v2334 = vunpack.c.0.s8 %v2333
        %v2335 = vlaneseq
        %v2336 = vshrl.u32 %v2335, 7
        %v2337 = vsub.s32 %v2334, %v2336
        %v2338 = vrot.slane %v2322, %v2337
        %v2340 = vunpack.c.l.s4 1966171168
        %v2341 = vunpack.c.0.s8 %v2340
        %v2342 = vlaneseq
        %v2343 = vshrl.u32 %v2342, 7
        %v2344 = vsub.s32 %v2341, %v2343
        %v2345 = vrot.slane %v2329, %v2344
        %v2347 = vunpack.c.l.s4 1966171168
        %v2348 = vunpack.c.0.s8 %v2347
        %v2349 = vlaneseq
        %v2350 = vshrl.u32 %v2349, 7
        %v2351 = vsub.s32 %v2348, %v2350
        %v2352 = vrot.slane %v2330, %v2351
        %v2354 = vunpack.c.l.s4 1966171168
        %v2355 = vunpack.c.0.s8 %v2354
        %v2356 = vlaneseq
        %v2357 = vshrl.u32 %v2356, 7
        %v2358 = vsub.s32 %v2355, %v2357
        %v2359 = vrot.slane %v2331, %v2358
        %v2360 = vcombine.high %v2338, %v2338
        %v2361 = vcombine.high %v2345, %v2345
        %v2362 = vcombine.high %v2352, %v2352
        %v2363 = vcombine.high %v2359, %v2359
        %v2364 = vcombine.high %v1856, %v1856
        %v2366 = vunpack.c.l.s4 1966171168
        %v2367 = vunpack.c.0.s8 %v2366
        %v2368 = vlaneseq
        %v2369 = vshrl.u32 %v2368, 7
        %v2370 = vsub.s32 %v2367, %v2369
        %v2371 = vrot.slane %v1856, %v2370
        %v2373 = vunpack.c.l.s4 1966171168
        %v2374 = vunpack.c.0.s8 %v2373
        %v2375 = vlaneseq
        %v2376 = vshrl.u32 %v2375, 7
        %v2377 = vsub.s32 %v2374, %v2376
        %v2378 = vrot.slane %v2364, %v2377
        %v2379 = vcombine.high %v2371, %v2371
        %v2380 = vcombine.high %v2378, %v2378
        %v2382 = vunpack.c.l.s4 1966171168
        %v2383 = vunpack.c.0.s8 %v2382
        %v2384 = vlaneseq
        %v2385 = vshrl.u32 %v2384, 7
        %v2386 = vsub.s32 %v2383, %v2385
        %v2387 = vrot.slane %v2371, %v2386
        %v2389 = vunpack.c.l.s4 1966171168
        %v2390 = vunpack.c.0.s8 %v2389
        %v2391 = vlaneseq
        %v2392 = vshrl.u32 %v2391, 7
        %v2393 = vsub.s32 %v2390, %v2392
        %v2394 = vrot.slane %v2378, %v2393
        %v2396 = vunpack.c.l.s4 1966171168
        %v2397 = vunpack.c.0.s8 %v2396
        %v2398 = vlaneseq
        %v2399 = vshrl.u32 %v2398, 7
        %v2400 = vsub.s32 %v2397, %v2399
        %v2401 = vrot.slane %v2379, %v2400
        %v2403 = vunpack.c.l.s4 1966171168
        %v2404 = vunpack.c.0.s8 %v2403
        %v2405 = vlaneseq
        %v2406 = vshrl.u32 %v2405, 7
        %v2407 = vsub.s32 %v2404, %v2406
        %v2408 = vrot.slane %v2380, %v2407
        %v2409 = vcombine.high %v2387, %v2387
        %v2410 = vcombine.high %v2394, %v2394
        %v2411 = vcombine.high %v2401, %v2401
        %v2412 = vcombine.high %v2408, %v2408
        %v2414 = vunpack.c.l.s4 1966171168
        %v2415 = vunpack.c.0.s8 %v2414
        %v2416 = vlaneseq
        %v2417 = vshrl.u32 %v2416, 7
        %v2418 = vsub.s32 %v2415, %v2417
        %v2419 = vrot.slane %v1857, %v2418
        %v2421 = vunpack.c.l.s4 1966171168
        %v2422 = vunpack.c.0.s8 %v2421
        %v2423 = vlaneseq
        %v2424 = vshrl.u32 %v2423, 7
        %v2425 = vsub.s32 %v2422, %v2424
        %v2426 = vrot.slane %v2419, %v2425
        %v2843 = vunpack.c.l.b16 %v1858
        %v2844 = vunpack.c.h.b16 %v1858
        %v2845 = vunpack.c.l.b16 %v1859
        %v2846 = vunpack.c.h.b16 %v1859
        %v2847 = vunpack.c.l.b16 %v1860
        %v2848 = vunpack.c.h.b16 %v1860
        %v2849 = vunpack.c.l.b16 %v1861
        %v2850 = vunpack.c.h.b16 %v1861
        %v2851 = vunpack.c.l.b16 %v1862
        %v2852 = vunpack.c.h.b16 %v1862
        %v2853 = vunpack.c.l.b16 %v1863
        %v2854 = vunpack.c.h.b16 %v1863
        %v2855 = vunpack.c.l.b16 %v1864
        %v2856 = vunpack.c.h.b16 %v1864
        %v2857 = vunpack.c.l.b16 %v1865
        %v2858 = vunpack.c.h.b16 %v1865
        %v2859 = vunpack.c.l.b16 %v1866
        %v2860 = vunpack.c.h.b16 %v1866
        %v2861 = vunpack.c.l.b16 %v1867
        %v2862 = vunpack.c.h.b16 %v1867
        %v2863 = vunpack.c.l.b16 %v1868
        %v2864 = vunpack.c.h.b16 %v1868
        %v2865 = vunpack.c.l.b16 %v1869
        %v2866 = vunpack.c.h.b16 %v1869
        %v2867 = vunpack.c.l.b16 %v1870
        %v2868 = vunpack.c.h.b16 %v1870
        %v2869 = vunpack.c.l.b16 %v1871
        %v2870 = vunpack.c.h.b16 %v1871
        %v2871 = vunpack.c.l.b16 %v1872
        %v2872 = vunpack.c.h.b16 %v1872
        %v2873 = vunpack.c.l.b16 %v1873
        %v2874 = vunpack.c.h.b16 %v1873
        %v2875 = vunpack.c.l.b16 %v1874
        %v2876 = vunpack.c.h.b16 %v1874
        %v2877 = vunpack.c.l.b16 %v1875
        %v2878 = vunpack.c.h.b16 %v1875
        %v2879 = vunpack.c.l.b16 %v1876
        %v2880 = vunpack.c.h.b16 %v1876
        %v2881 = vunpack.c.l.b16 %v1877
        %v2882 = vunpack.c.h.b16 %v1877
        %v2883 = vunpack.c.l.b16 %v1878
        %v2884 = vunpack.c.h.b16 %v1878
        %v2885 = vunpack.c.l.b16 %v1879
        %v2886 = vunpack.c.h.b16 %v1879
        %v2887 = vunpack.c.l.b16 %v1880
        %v2888 = vunpack.c.h.b16 %v1880
        %v2889 = vunpack.c.l.b16 %v1881
        %v2890 = vunpack.c.h.b16 %v1881
        %v2891 = vunpack.c.l.b16 %v1882
        %v2892 = vunpack.c.h.b16 %v1882
        %v2893 = vunpack.c.l.b16 %v1883
        %v2894 = vunpack.c.h.b16 %v1883
        %v2895 = vunpack.c.l.b16 %v1884
        %v2896 = vunpack.c.h.b16 %v1884
        %v2897 = vunpack.c.l.b16 %v1885
        %v2898 = vunpack.c.h.b16 %v1885
        %v2899 = vunpack.c.l.b16 %v1886
        %v2900 = vunpack.c.h.b16 %v1886
        %v2901 = vunpack.c.l.b16 %v1887
        %v2902 = vunpack.c.h.b16 %v1887
        %v2903 = vunpack.c.l.b16 %v1888
        %v2904 = vunpack.c.h.b16 %v1888
        %v2905 = vunpack.c.l.b16 %v1889
        %v2906 = vunpack.c.h.b16 %v1889
        %v2907 = vunpack.c.l.b16 %v1890
        %v2908 = vunpack.c.h.b16 %v1890
        %v2909 = vunpack.c.l.b16 %v1891
        %v2910 = vunpack.c.h.b16 %v1891
        %v2911 = vunpack.c.l.b16 %v1892
        %v2912 = vunpack.c.h.b16 %v1892
        %v2913 = vunpack.c.l.b16 %v1893
        %v2914 = vunpack.c.h.b16 %v1893
        %v2915 = vunpack.c.l.b16 %v1894
        %v2916 = vunpack.c.h.b16 %v1894
        %v2917 = vunpack.c.l.b16 %v1895
        %v2918 = vunpack.c.h.b16 %v1895
        %v2919 = vunpack.c.l.b16 %v1896
        %v2920 = vunpack.c.h.b16 %v1896
        %v2921 = vunpack.c.l.b16 %v1897
        %v2922 = vunpack.c.h.b16 %v1897
        %v2923 = vunpack.c.l.b16 %v1898
        %v2924 = vunpack.c.h.b16 %v1898
        %v2925 = vunpack.c.l.b16 %v1899
        %v2926 = vunpack.c.h.b16 %v1899
        %v2927 = vunpack.c.l.b16 %v1900
        %v2928 = vunpack.c.h.b16 %v1900
        %v2929 = vunpack.c.l.b16 %v1901
        %v2930 = vunpack.c.h.b16 %v1901
        %v2931 = vunpack.c.l.b16 %v1902
        %v2932 = vunpack.c.h.b16 %v1902
        %v2933 = vunpack.c.l.b16 %v1903
        %v2934 = vunpack.c.h.b16 %v1903
        %v2935 = vunpack.c.l.b16 %v1904
        %v2936 = vunpack.c.h.b16 %v1904
        %v2937 = vunpack.c.l.b16 %v1905
        %v2938 = vunpack.c.h.b16 %v1905
        %v2939 = vunpack.c.l.b16 %v1906
        %v2940 = vunpack.c.h.b16 %v1906
        %v2941 = vunpack.c.l.b16 %v1907
        %v2942 = vunpack.c.h.b16 %v1907
        %v2943 = vunpack.c.l.b16 %v1908
        %v2944 = vunpack.c.h.b16 %v1908
        %v2945 = vunpack.c.l.b16 %v1909
        %v2946 = vunpack.c.h.b16 %v1909
        %v2947 = vunpack.c.l.b16 %v1910
        %v2948 = vunpack.c.h.b16 %v1910
        %v2949 = vunpack.c.l.b16 %v1911
        %v2950 = vunpack.c.h.b16 %v1911
        %v2951 = vunpack.c.l.b16 %v1912
        %v2952 = vunpack.c.h.b16 %v1912
        %v2953 = vunpack.c.l.b16 %v1913
        %v2954 = vunpack.c.h.b16 %v1913
        %v2955 = vunpack.c.l.b16 %v1914
        %v2956 = vunpack.c.h.b16 %v1914
        %v2957 = vunpack.c.l.b16 %v1915
        %v2958 = vunpack.c.h.b16 %v1915
        %v2959 = vunpack.c.l.b16 %v1916
        %v2960 = vunpack.c.h.b16 %v1916
        %v2961 = vunpack.c.l.b16 %v1917
        %v2962 = vunpack.c.h.b16 %v1917
        %v2963 = vunpack.c.l.b16 %v1918
        %v2964 = vunpack.c.h.b16 %v1918
        %v2965 = vunpack.c.l.b16 %v1919
        %v2966 = vunpack.c.h.b16 %v1919
        %v2967 = vunpack.c.l.b16 %v1920
        %v2968 = vunpack.c.h.b16 %v1920
        %v2969 = vunpack.c.l.b16 %v1921
        %v2970 = vunpack.c.h.b16 %v1921
        %v2971 = vunpack.c.l.b16 %v1922
        %v2972 = vunpack.c.h.b16 %v1922
        %v2973 = vunpack.c.l.b16 %v1923
        %v2974 = vunpack.c.h.b16 %v1923
        %v2975 = vunpack.c.l.b16 %v1924
        %v2976 = vunpack.c.h.b16 %v1924
        %v2977 = vunpack.c.l.b16 %v1925
        %v2978 = vunpack.c.h.b16 %v1925
        %v2979 = vunpack.c.l.b16 %v1926
        %v2980 = vunpack.c.h.b16 %v1926
        %v2981 = vunpack.c.l.b16 %v1927
        %v2982 = vunpack.c.h.b16 %v1927
        %v2983 = vunpack.c.l.b16 %v1928
        %v2984 = vunpack.c.h.b16 %v1928
        %v2985 = vunpack.c.l.b16 %v1929
        %v2986 = vunpack.c.h.b16 %v1929
        %v2987 = vunpack.c.l.b16 %v1930
        %v2988 = vunpack.c.h.b16 %v1930
        %v2989 = vunpack.c.l.b16 %v1931
        %v2990 = vunpack.c.h.b16 %v1931
        %v2991 = vunpack.c.l.b16 %v1932
        %v2992 = vunpack.c.h.b16 %v1932
        %v2993 = vunpack.c.l.b16 %v1933
        %v2994 = vunpack.c.h.b16 %v1933
        %v2995 = vunpack.c.l.b16 %v1934
        %v2996 = vunpack.c.h.b16 %v1934
        %v2997 = vunpack.c.l.b16 %v1935
        %v2998 = vunpack.c.h.b16 %v1935
        %v2999 = vunpack.c.l.b16 %v1936
        %v3000 = vunpack.c.h.b16 %v1936
        %v3001 = vunpack.c.l.b16 %v1937
        %v3002 = vunpack.c.h.b16 %v1937
        %v3003 = vunpack.c.l.b16 %v1938
        %v3004 = vunpack.c.h.b16 %v1938
        %v3005 = vunpack.c.l.b16 %v1939
        %v3006 = vunpack.c.h.b16 %v1939
        %v3007 = vunpack.c.l.b16 %v1940
        %v3008 = vunpack.c.h.b16 %v1940
        %v3009 = vunpack.c.l.b16 %v1941
        %v3010 = vunpack.c.h.b16 %v1941
        %v3011 = vunpack.c.l.b16 %v1942
        %v3012 = vunpack.c.h.b16 %v1942
        %v3013 = vunpack.c.l.b16 %v1943
        %v3014 = vunpack.c.h.b16 %v1943
        %v3015 = vunpack.c.l.b16 %v1944
        %v3016 = vunpack.c.h.b16 %v1944
        %v3017 = vunpack.c.l.b16 %v1945
        %v3018 = vunpack.c.h.b16 %v1945
        %v3019 = vunpack.c.l.b16 %v1946
        %v3020 = vunpack.c.h.b16 %v1946
        %v3021 = vunpack.c.l.b16 %v1947
        %v3022 = vunpack.c.h.b16 %v1947
        %v3023 = vunpack.c.l.b16 %v1948
        %v3024 = vunpack.c.h.b16 %v1948
        %v3025 = vunpack.c.l.b16 %v1949
        %v3026 = vunpack.c.h.b16 %v1949
        %v3027 = vunpack.c.l.b16 %v1950
        %v3028 = vunpack.c.h.b16 %v1950
        %v3029 = vunpack.c.l.b16 %v1951
        %v3030 = vunpack.c.h.b16 %v1951
        %v3031 = vunpack.c.l.b16 %v1952
        %v3032 = vunpack.c.h.b16 %v1952
        %v3033 = vunpack.c.l.b16 %v1953
        %v3034 = vunpack.c.h.b16 %v1953
        %v3035 = vunpack.c.l.b16 %v1954
        %v3036 = vunpack.c.h.b16 %v1954
        %v3037 = vunpack.c.l.b16 %v1955
        %v3038 = vunpack.c.h.b16 %v1955
        %v3039 = vunpack.c.l.b16 %v1956
        %v3040 = vunpack.c.h.b16 %v1956
        %v3041 = vunpack.c.l.b16 %v1957
        %v3042 = vunpack.c.h.b16 %v1957
        %v3043 = vunpack.c.l.b16 %v1958
        %v3044 = vunpack.c.h.b16 %v1958
        %v3045 = vunpack.c.l.b16 %v1959
        %v3046 = vunpack.c.h.b16 %v1959
        %v3047 = vunpack.c.l.b16 %v1960
        %v3048 = vunpack.c.h.b16 %v1960
        %v3049 = vunpack.c.l.b16 %v1961
        %v3050 = vunpack.c.h.b16 %v1961
        %v3051 = vunpack.c.l.b16 %v1962
        %v3052 = vunpack.c.h.b16 %v1962
        %v3053 = vunpack.c.l.b16 %v1963
        %v3054 = vunpack.c.h.b16 %v1963
        %v3055 = vunpack.c.l.b16 %v1964
        %v3056 = vunpack.c.h.b16 %v1964
        %v3057 = vunpack.c.l.b16 %v1965
        %v3058 = vunpack.c.h.b16 %v1965
        %v3059 = vunpack.c.l.b16 %v1966
        %v3060 = vunpack.c.h.b16 %v1966
        %v3061 = vunpack.c.l.b16 %v1967
        %v3062 = vunpack.c.h.b16 %v1967
        %v3063 = vunpack.c.l.b16 %v1968
        %v3064 = vunpack.c.h.b16 %v1968
        %v3065 = vunpack.c.l.b16 %v1969
        %v3066 = vunpack.c.h.b16 %v1969
        %v3067 = vunpack.c.l.b16 %v1970
        %v3068 = vunpack.c.h.b16 %v1970
        %v3069 = vunpack.c.l.b16 %v1971
        %v3070 = vunpack.c.h.b16 %v1971
        %v3071 = vunpack.c.l.b16 %v1972
        %v3072 = vunpack.c.h.b16 %v1972
        %v3073 = vunpack.c.l.b16 %v1973
        %v3074 = vunpack.c.h.b16 %v1973
        %v3075 = vunpack.c.l.b16 %v1974
        %v3076 = vunpack.c.h.b16 %v1974
        %v3077 = vunpack.c.l.b16 %v1975
        %v3078 = vunpack.c.h.b16 %v1975
        %v3079 = vunpack.c.l.b16 %v1976
        %v3080 = vunpack.c.h.b16 %v1976
        %v3081 = vunpack.c.l.b16 %v1977
        %v3082 = vunpack.c.h.b16 %v1977
        %v3083 = vunpack.c.l.b16 %v1978
        %v3084 = vunpack.c.h.b16 %v1978
        %v3085 = vunpack.c.l.b16 %v1979
        %v3086 = vunpack.c.h.b16 %v1979
        %v3087 = vunpack.c.l.b16 %v1980
        %v3088 = vunpack.c.h.b16 %v1980
        %v3089 = vunpack.c.l.b16 %v1981
        %v3090 = vunpack.c.h.b16 %v1981
        %v3091 = vunpack.c.l.b16 %v1982
        %v3092 = vunpack.c.h.b16 %v1982
        %v3093 = vunpack.c.l.b16 %v1983
        %v3094 = vunpack.c.h.b16 %v1983
        %v3095 = vunpack.c.l.b16 %v1984
        %v3096 = vunpack.c.h.b16 %v1984
        %v3097 = vunpack.c.l.b16 %v1985
        %v3098 = vunpack.c.h.b16 %v1985
        %v3099 = vunpack.c.l.b16 %v1986
        %v3100 = vunpack.c.h.b16 %v1986
        %v3101 = vunpack.c.l.b16 %v1987
        %v3102 = vunpack.c.h.b16 %v1987
        %v3103 = vunpack.c.l.b16 %v1988
        %v3104 = vunpack.c.h.b16 %v1988
        %v3105 = vunpack.c.l.b16 %v1989
        %v3106 = vunpack.c.h.b16 %v1989
        %v3107 = vunpack.c.l.b16 %v1990
        %v3108 = vunpack.c.h.b16 %v1990
        %v3109 = vunpack.c.l.b16 %v1991
        %v3110 = vunpack.c.h.b16 %v1991
        %v3111 = vunpack.c.l.b16 %v1992
        %v3112 = vunpack.c.h.b16 %v1992
        %v3113 = vunpack.c.l.b16 %v1993
        %v3114 = vunpack.c.h.b16 %v1993
        %v3115 = vunpack.c.l.b16 %v1994
        %v3116 = vunpack.c.h.b16 %v1994
        %v3117 = vunpack.c.l.b16 %v1995
        %v3118 = vunpack.c.h.b16 %v1995
        %v3119 = vunpack.c.l.b16 %v1996
        %v3120 = vunpack.c.h.b16 %v1996
        %v3121 = vunpack.c.l.b16 %v1997
        %v3122 = vunpack.c.h.b16 %v1997
        %v3123 = vunpack.c.l.b16 %v1998
        %v3124 = vunpack.c.h.b16 %v1998
        %v3125 = vunpack.c.l.b16 %v1999
        %v3126 = vunpack.c.h.b16 %v1999
        %v3127 = vunpack.c.l.b16 %v2000
        %v3128 = vunpack.c.h.b16 %v2000
        %v3129 = vunpack.c.l.b16 %v2001
        %v3130 = vunpack.c.h.b16 %v2001
        %v3131 = vunpack.c.l.b16 %v2002
        %v3132 = vunpack.c.h.b16 %v2002
        %v3133 = vunpack.c.l.b16 %v2003
        %v3134 = vunpack.c.h.b16 %v2003
        %v3135 = vunpack.c.l.b16 %v2004
        %v3136 = vunpack.c.h.b16 %v2004
        %v3137 = vunpack.c.l.b16 %v2005
        %v3138 = vunpack.c.h.b16 %v2005
        %v3139 = vunpack.c.l.b16 %v2006
        %v3140 = vunpack.c.h.b16 %v2006
        %v3141 = vunpack.c.l.b16 %v2007
        %v3142 = vunpack.c.h.b16 %v2007
        %v3143 = vunpack.c.l.b16 %v2008
        %v3144 = vunpack.c.h.b16 %v2008
        %v3145 = vunpack.c.l.b16 %v2009
        %v3146 = vunpack.c.h.b16 %v2009
        %v3147 = vunpack.c.l.b16 %v2010
        %v3148 = vunpack.c.h.b16 %v2010
        %v3149 = vunpack.c.l.b16 %v2011
        %v3150 = vunpack.c.h.b16 %v2011
        %v3151 = vunpack.c.l.b16 %v2012
        %v3152 = vunpack.c.h.b16 %v2012
        %v3153 = vunpack.c.l.b16 %v2013
        %v3154 = vunpack.c.h.b16 %v2013
        %v3155 = vunpack.c.l.b16 %v2014
        %v3156 = vunpack.c.h.b16 %v2014
        %v3157 = vunpack.c.l.b16 %v2015
        %v3158 = vunpack.c.h.b16 %v2015
        %v3159 = vunpack.c.l.b16 %v2016
        %v3160 = vunpack.c.h.b16 %v2016
        %v3161 = vunpack.c.l.b16 %v2017
        %v3162 = vunpack.c.h.b16 %v2017
        %v3163 = vunpack.c.l.b16 %v2018
        %v3164 = vunpack.c.h.b16 %v2018
        %v3165 = vunpack.c.l.b16 %v2019
        %v3166 = vunpack.c.h.b16 %v2019
        %v3167 = vunpack.c.l.b16 %v2020
        %v3168 = vunpack.c.h.b16 %v2020
        %v3169 = vunpack.c.l.b16 %v2021
        %v3170 = vunpack.c.h.b16 %v2021
        %v3171 = vunpack.c.l.b16 %v2022
        %v3172 = vunpack.c.h.b16 %v2022
        %v3173 = vunpack.c.l.b16 %v2023
        %v3174 = vunpack.c.h.b16 %v2023
        %v3175 = vunpack.c.l.b16 %v2024
        %v3176 = vunpack.c.h.b16 %v2024
        %v3177 = vunpack.c.l.b16 %v2025
        %v3178 = vunpack.c.h.b16 %v2025
        %v3179 = vunpack.c.l.b16 %v2026
        %v3180 = vunpack.c.h.b16 %v2026
        %v3181 = vunpack.c.l.b16 %v2027
        %v3182 = vunpack.c.h.b16 %v2027
        %v3183 = vunpack.c.l.b16 %v2028
        %v3184 = vunpack.c.h.b16 %v2028
        %v3185 = vunpack.c.l.b16 %v2029
        %v3186 = vunpack.c.h.b16 %v2029
        %v3187 = vunpack.c.l.b16 %v2030
        %v3188 = vunpack.c.h.b16 %v2030
        %v3189 = vunpack.c.l.b16 %v2031
        %v3190 = vunpack.c.h.b16 %v2031
        %v3191 = vunpack.c.l.b16 %v2032
        %v3192 = vunpack.c.h.b16 %v2032
        %v3193 = vunpack.c.l.b16 %v2033
        %v3194 = vunpack.c.h.b16 %v2033
        %v3195 = vunpack.c.l.b16 %v2034
        %v3196 = vunpack.c.h.b16 %v2034
        %v3197 = vunpack.c.l.b16 %v2035
        %v3198 = vunpack.c.h.b16 %v2035
        %v3199 = vunpack.c.l.b16 %v2036
        %v3200 = vunpack.c.h.b16 %v2036
        %v3201 = vunpack.c.l.b16 %v2037
        %v3202 = vunpack.c.h.b16 %v2037
        %v3203 = vunpack.c.l.b16 %v2038
        %v3204 = vunpack.c.h.b16 %v2038
        %v3205 = vunpack.c.l.b16 %v2039
        %v3206 = vunpack.c.h.b16 %v2039
        %v3207 = vunpack.c.l.b16 %v2040
        %v3208 = vunpack.c.h.b16 %v2040
        %v3209 = vunpack.c.l.b16 %v2041
        %v3210 = vunpack.c.h.b16 %v2041
        %v3211 = vunpack.c.l.b16 %v2042
        %v3212 = vunpack.c.h.b16 %v2042
        %v3213 = vunpack.c.l.b16 %v2043
        %v3214 = vunpack.c.h.b16 %v2043
        %v3215 = vunpack.c.l.b16 %v2044
        %v3216 = vunpack.c.h.b16 %v2044
        %v3217 = vunpack.c.l.b16 %v2045
        %v3218 = vunpack.c.h.b16 %v2045
        %v3219 = vunpack.c.l.b16 %v2046
        %v3220 = vunpack.c.h.b16 %v2046
        %v3221 = vunpack.c.l.b16 %v2047
        %v3222 = vunpack.c.h.b16 %v2047
        %v3223 = vunpack.c.l.b16 %v2048
        %v3224 = vunpack.c.h.b16 %v2048
        %v3225 = vunpack.c.l.b16 %v2049
        %v3226 = vunpack.c.h.b16 %v2049
        %v3227 = vunpack.c.l.b16 %v2050
        %v3228 = vunpack.c.h.b16 %v2050
        %v3229 = vunpack.c.l.b16 %v2051
        %v3230 = vunpack.c.h.b16 %v2051
        %v3231 = vunpack.c.l.b16 %v2052
        %v3232 = vunpack.c.h.b16 %v2052
        %v3233 = vunpack.c.l.b16 %v2053
        %v3234 = vunpack.c.h.b16 %v2053
        %v3235 = vunpack.c.l.b16 %v2054
        %v3236 = vunpack.c.h.b16 %v2054
        %v3237 = vunpack.c.l.b16 %v2055
        %v3238 = vunpack.c.h.b16 %v2055
        %v3239 = vunpack.c.l.b16 %v2056
        %v3240 = vunpack.c.h.b16 %v2056
        %v3241 = vunpack.c.l.b16 %v2057
        %v3242 = vunpack.c.h.b16 %v2057
        %v3243 = vunpack.c.l.b16 %v2058
        %v3244 = vunpack.c.h.b16 %v2058
        %v3245 = vunpack.c.l.b16 %v2059
        %v3246 = vunpack.c.h.b16 %v2059
        %v3247 = vunpack.c.l.b16 %v2060
        %v3248 = vunpack.c.h.b16 %v2060
        %v3249 = vunpack.c.l.b16 %v2061
        %v3250 = vunpack.c.h.b16 %v2061
        %v3251 = vunpack.c.l.b16 %v2062
        %v3252 = vunpack.c.h.b16 %v2062
        %v3253 = vunpack.c.l.b16 %v2063
        %v3254 = vunpack.c.h.b16 %v2063
        %v3255 = vunpack.c.l.b16 %v2064
        %v3256 = vunpack.c.h.b16 %v2064
        %v3257 = vunpack.c.l.b16 %v2065
        %v3258 = vunpack.c.h.b16 %v2065
        %v3259 = vunpack.c.l.b16 %v2066
        %v3260 = vunpack.c.h.b16 %v2066
        %v3261 = vunpack.c.l.b16 %v2067
        %v3262 = vunpack.c.h.b16 %v2067
        %v3263 = vunpack.c.l.b16 %v2068
        %v3264 = vunpack.c.h.b16 %v2068
        %v3265 = vunpack.c.l.b16 %v2069
        %v3266 = vunpack.c.h.b16 %v2069
        %v3267 = vunpack.c.l.b16 %v2070
        %v3268 = vunpack.c.h.b16 %v2070
        %v3269 = vunpack.c.l.b16 %v2071
        %v3270 = vunpack.c.h.b16 %v2071
        %v3271 = vunpack.c.l.b16 %v2072
        %v3272 = vunpack.c.h.b16 %v2072
        %v3273 = vunpack.c.l.b16 %v2073
        %v3274 = vunpack.c.h.b16 %v2073
        %v3275 = vunpack.c.l.b16 %v2074
        %v3276 = vunpack.c.h.b16 %v2074
        %v3277 = vunpack.c.l.b16 %v2075
        %v3278 = vunpack.c.h.b16 %v2075
        %v3279 = vunpack.c.l.b16 %v2076
        %v3280 = vunpack.c.h.b16 %v2076
        %v3281 = vunpack.c.l.b16 %v2077
        %v3282 = vunpack.c.h.b16 %v2077
        %v3283 = vunpack.c.l.b16 %v2078
        %v3284 = vunpack.c.h.b16 %v2078
        %v3285 = vunpack.c.l.b16 %v2079
        %v3286 = vunpack.c.h.b16 %v2079
        %v3287 = vunpack.c.l.b16 %v2080
        %v3288 = vunpack.c.h.b16 %v2080
        %v3289 = vunpack.c.l.b16 %v2081
        %v3290 = vunpack.c.h.b16 %v2081
        %v3291 = vunpack.c.l.b16 %v2082
        %v3292 = vunpack.c.h.b16 %v2082
        %v3293 = vunpack.c.l.b16 %v2083
        %v3294 = vunpack.c.h.b16 %v2083
        %v3295 = vunpack.c.l.b16 %v2084
        %v3296 = vunpack.c.h.b16 %v2084
        %v3297 = vunpack.c.l.b16 %v2085
        %v3298 = vunpack.c.h.b16 %v2085
        %v3299 = vunpack.c.l.b16 %v2086
        %v3300 = vunpack.c.h.b16 %v2086
        %v3301 = vunpack.c.l.b16 %v2087
        %v3302 = vunpack.c.h.b16 %v2087
        %v3303 = vunpack.c.l.b16 %v2088
        %v3304 = vunpack.c.h.b16 %v2088
        %v3305 = vunpack.c.l.b16 %v2089
        %v3306 = vunpack.c.h.b16 %v2089
        %v3307 = vunpack.c.l.b16 %v2090
        %v3308 = vunpack.c.h.b16 %v2090
        %v3309 = vunpack.c.l.b16 %v2091
        %v3310 = vunpack.c.h.b16 %v2091
        %v3311 = vunpack.c.l.b16 %v2092
        %v3312 = vunpack.c.h.b16 %v2092
        %v3313 = vunpack.c.l.b16 %v2093
        %v3314 = vunpack.c.h.b16 %v2093
        %v3315 = vunpack.c.l.b16 %v2094
        %v3316 = vunpack.c.h.b16 %v2094
        %v3317 = vunpack.c.l.b16 %v2095
        %v3318 = vunpack.c.h.b16 %v2095
        %v3319 = vunpack.c.l.b16 %v2096
        %v3320 = vunpack.c.h.b16 %v2096
        %v3321 = vunpack.c.l.b16 %v2097
        %v3322 = vunpack.c.h.b16 %v2097
        %v3323 = vunpack.c.l.b16 %v2098
        %v3324 = vunpack.c.h.b16 %v2098
        %v3325 = vunpack.c.l.b16 %v2099
        %v3326 = vunpack.c.h.b16 %v2099
        %v3327 = vunpack.c.l.b16 %v2100
        %v3328 = vunpack.c.h.b16 %v2100
        %v3329 = vunpack.c.l.b16 %v2101
        %v3330 = vunpack.c.h.b16 %v2101
        %v3331 = vunpack.c.l.b16 %v2102
        %v3332 = vunpack.c.h.b16 %v2102
        %v3333 = vunpack.c.l.b16 %v2103
        %v3334 = vunpack.c.h.b16 %v2103
        %v3335 = vunpack.c.l.b16 %v2104
        %v3336 = vunpack.c.h.b16 %v2104
        %v3337 = vunpack.c.l.b16 %v2105
        %v3338 = vunpack.c.h.b16 %v2105
        %v3339 = vunpack.c.l.b16 %v2106
        %v3340 = vunpack.c.h.b16 %v2106
        %v3341 = vunpack.c.l.b16 %v2107
        %v3342 = vunpack.c.h.b16 %v2107
        %v3343 = vunpack.c.l.b16 %v2108
        %v3344 = vunpack.c.h.b16 %v2108
        %v3345 = vunpack.c.l.b16 %v2109
        %v3346 = vunpack.c.h.b16 %v2109
        %v3347 = vunpack.c.l.b16 %v2110
        %v3348 = vunpack.c.h.b16 %v2110
        %v3349 = vunpack.c.l.b16 %v2111
        %v3350 = vunpack.c.h.b16 %v2111
        %v3351 = vunpack.c.l.b16 %v2112
        %v3352 = vunpack.c.h.b16 %v2112
        %v3353 = vunpack.c.l.b16 %v2113
        %v3354 = vunpack.c.h.b16 %v2113
        %v3355 = vunpack.c.l.b16 %v2114
        %v3356 = vunpack.c.h.b16 %v2114
        %v3357 = vunpack.c.l.b16 %v2115
        %v3358 = vunpack.c.h.b16 %v2115
        %v3359 = vunpack.c.l.b16 %v2116
        %v3360 = vunpack.c.h.b16 %v2116
        %v3361 = vunpack.c.l.b16 %v2117
        %v3362 = vunpack.c.h.b16 %v2117
        %v3363 = vunpack.c.l.b16 %v2118
        %v3364 = vunpack.c.h.b16 %v2118
        %v3365 = vunpack.c.l.b16 %v2119
        %v3366 = vunpack.c.h.b16 %v2119
        %v3367 = vunpack.c.l.b16 %v2120
        %v3368 = vunpack.c.h.b16 %v2120
        %v3369 = vunpack.c.l.b16 %v2121
        %v3370 = vunpack.c.h.b16 %v2121
        %v3371 = vunpack.c.l.b16 %v2122
        %v3372 = vunpack.c.h.b16 %v2122
        %v3373 = vunpack.c.l.b16 %v2123
        %v3374 = vunpack.c.h.b16 %v2123
        %v3375 = vunpack.c.l.b16 %v2124
        %v3376 = vunpack.c.h.b16 %v2124
        %v3377 = vunpack.c.l.b16 %v2125
        %v3378 = vunpack.c.h.b16 %v2125
        %v3379 = vunpack.c.l.b16 %v2126
        %v3380 = vunpack.c.h.b16 %v2126
        %v3381 = vunpack.c.l.b16 %v2127
        %v3382 = vunpack.c.h.b16 %v2127
        %v3383 = vunpack.c.l.b16 %v2128
        %v3384 = vunpack.c.h.b16 %v2128
        %v3385 = vunpack.c.l.b16 %v2129
        %v3386 = vunpack.c.h.b16 %v2129
        %v3387 = vunpack.c.l.b16 %v2130
        %v3388 = vunpack.c.h.b16 %v2130
        %v3389 = vunpack.c.l.b16 %v2131
        %v3390 = vunpack.c.h.b16 %v2131
        %v3391 = vunpack.c.l.b16 %v2132
        %v3392 = vunpack.c.h.b16 %v2132
        %v3393 = vunpack.c.l.b16 %v2133
        %v3394 = vunpack.c.h.b16 %v2133
        %v3395 = vunpack.c.l.b16 %v2134
        %v3396 = vunpack.c.h.b16 %v2134
        %v3397 = vunpack.c.l.b16 %v2135
        %v3398 = vunpack.c.h.b16 %v2135
        %v3399 = vunpack.c.l.b16 %v2136
        %v3400 = vunpack.c.h.b16 %v2136
        %v3401 = vunpack.c.l.b16 %v2137
        %v3402 = vunpack.c.h.b16 %v2137
        %v3403 = vunpack.c.l.b16 %v2138
        %v3404 = vunpack.c.h.b16 %v2138
        %v3405 = vunpack.c.l.b16 %v2139
        %v3406 = vunpack.c.h.b16 %v2139
        %v3407 = vunpack.c.l.b16 %v2140
        %v3408 = vunpack.c.h.b16 %v2140
        %v3409 = vunpack.c.l.b16 %v2141
        %v3410 = vunpack.c.h.b16 %v2141
        %v3411 = vunpack.c.l.b16 %v2142
        %v3412 = vunpack.c.h.b16 %v2142
        %v3413 = vunpack.c.l.b16 %v2143
        %v3414 = vunpack.c.h.b16 %v2143
        %v3415 = vunpack.c.l.b16 %v2144
        %v3416 = vunpack.c.h.b16 %v2144
        %v3417 = vunpack.c.l.b16 %v2145
        %v3418 = vunpack.c.h.b16 %v2145
        %v3419 = vunpack.c.l.b16 %v2146
        %v3420 = vunpack.c.h.b16 %v2146
        %v3421 = vunpack.c.l.b16 %v2147
        %v3422 = vunpack.c.h.b16 %v2147
        %v3423 = vunpack.c.l.b16 %v2148
        %v3424 = vunpack.c.h.b16 %v2148
        %v3425 = vunpack.c.l.b16 %v2149
        %v3426 = vunpack.c.h.b16 %v2149
        %v3427 = vunpack.c.l.b16 %v2150
        %v3428 = vunpack.c.h.b16 %v2150
        %v3429 = vunpack.c.l.b16 %v2151
        %v3430 = vunpack.c.h.b16 %v2151
        %v3431 = vunpack.c.l.b16 %v2152
        %v3432 = vunpack.c.h.b16 %v2152
        %v3433 = vunpack.c.l.b16 %v2153
        %v3434 = vunpack.c.h.b16 %v2153
        %v3435 = vunpack.c.l.b16 %v2154
        %v3436 = vunpack.c.h.b16 %v2154
        %v3437 = vunpack.c.l.b16 %v2155
        %v3438 = vunpack.c.h.b16 %v2155
        %v3439 = vunpack.c.l.b16 %v2156
        %v3440 = vunpack.c.h.b16 %v2156
        %v3441 = vunpack.c.l.b16 %v2157
        %v3442 = vunpack.c.h.b16 %v2157
        %v3443 = vunpack.c.l.b16 %v2158
        %v3444 = vunpack.c.h.b16 %v2158
        %v3445 = vunpack.c.l.b16 %v2159
        %v3446 = vunpack.c.h.b16 %v2159
        %v3447 = vunpack.c.l.b16 %v2160
        %v3448 = vunpack.c.h.b16 %v2160
        %v3449 = vunpack.c.l.b16 %v2161
        %v3450 = vunpack.c.h.b16 %v2161
        %v3451 = vunpack.c.l.b16 %v2162
        %v3452 = vunpack.c.h.b16 %v2162
        %v3453 = vunpack.c.l.b16 %v2163
        %v3454 = vunpack.c.h.b16 %v2163
        %v3455 = vunpack.c.l.b16 %v2164
        %v3456 = vunpack.c.h.b16 %v2164
        %v3457 = vunpack.c.l.b16 %v2165
        %v3458 = vunpack.c.h.b16 %v2165
        %v3459 = vunpack.c.l.b16 %v2166
        %v3460 = vunpack.c.h.b16 %v2166
        %v3461 = vunpack.c.l.b16 %v2167
        %v3462 = vunpack.c.h.b16 %v2167
        %v3463 = vunpack.c.l.b16 %v2168
        %v3464 = vunpack.c.h.b16 %v2168
        %v3465 = vunpack.c.l.b16 %v2169
        %v3466 = vunpack.c.h.b16 %v2169
        %v3467 = vunpack.c.l.b16 %v2170
        %v3468 = vunpack.c.h.b16 %v2170
        %v3469 = vunpack.c.l.b16 %v2171
        %v3470 = vunpack.c.h.b16 %v2171
        %v3471 = vunpack.c.l.b16 %v2172
        %v3472 = vunpack.c.h.b16 %v2172
        %v3473 = vunpack.c.l.b16 %v2173
        %v3474 = vunpack.c.h.b16 %v2173
        %v3475 = vunpack.c.l.b16 %v2174
        %v3476 = vunpack.c.h.b16 %v2174
        %v3477 = vunpack.c.l.b16 %v2175
        %v3478 = vunpack.c.h.b16 %v2175
        %v3479 = vunpack.c.l.b16 %v2176
        %v3480 = vunpack.c.h.b16 %v2176
        %v3481 = vunpack.c.l.b16 %v2177
        %v3482 = vunpack.c.h.b16 %v2177
        %v3483 = vunpack.c.l.b16 %v2178
        %v3484 = vunpack.c.h.b16 %v2178
        %v3485 = vunpack.c.l.b16 %v2179
        %v3486 = vunpack.c.h.b16 %v2179
        %v3487 = vunpack.c.l.b16 %v2180
        %v3488 = vunpack.c.h.b16 %v2180
        %v3489 = vunpack.c.l.b16 %v2181
        %v3490 = vunpack.c.h.b16 %v2181
        %v3491 = vunpack.c.l.b16 %v2182
        %v3492 = vunpack.c.h.b16 %v2182
        %v3493 = vunpack.c.l.b16 %v2183
        %v3494 = vunpack.c.h.b16 %v2183
        %v3495 = vunpack.c.l.b16 %v2184
        %v3496 = vunpack.c.h.b16 %v2184
        %v3497 = vunpack.c.l.b16 %v2185
        %v3498 = vunpack.c.h.b16 %v2185
        %v3499 = vunpack.c.l.b16 %v2186
        %v3500 = vunpack.c.h.b16 %v2186
        %v3501 = vunpack.c.l.b16 %v2187
        %v3502 = vunpack.c.h.b16 %v2187
        %v3503 = vunpack.c.l.b16 %v2188
        %v3504 = vunpack.c.h.b16 %v2188
        %v3505 = vunpack.c.l.b16 %v2189
        %v3506 = vunpack.c.h.b16 %v2189
        %v3507 = vunpack.c.l.b16 %v2190
        %v3508 = vunpack.c.h.b16 %v2190
        %v3509 = vunpack.c.l.b16 %v2191
        %v3510 = vunpack.c.h.b16 %v2191
        %v3511 = vunpack.c.l.b16 %v2192
        %v3512 = vunpack.c.h.b16 %v2192
        %v3513 = vunpack.c.l.b16 %v2193
        %v3514 = vunpack.c.h.b16 %v2193
        %v3515 = vunpack.c.l.b16 %v2194
        %v3516 = vunpack.c.h.b16 %v2194
        %v3517 = vunpack.c.l.b16 %v2195
        %v3518 = vunpack.c.h.b16 %v2195
        %v3519 = vunpack.c.l.b16 %v2196
        %v3520 = vunpack.c.h.b16 %v2196
        %v3521 = vunpack.c.l.b16 %v2197
        %v3522 = vunpack.c.h.b16 %v2197
        %v3523 = vunpack.c.l.b16 %v2198
        %v3524 = vunpack.c.h.b16 %v2198
        %v3525 = vunpack.c.l.b16 %v2199
        %v3526 = vunpack.c.h.b16 %v2199
        %v3527 = vunpack.c.l.b16 %v2200
        %v3528 = vunpack.c.h.b16 %v2200
        %v3529 = vunpack.c.l.b16 %v2201
        %v3530 = vunpack.c.h.b16 %v2201
        %v3531 = vunpack.c.l.b16 %v2202
        %v3532 = vunpack.c.h.b16 %v2202
        %v3533 = vunpack.c.l.b16 %v2203
        %v3534 = vunpack.c.h.b16 %v2203
        %v3535 = vunpack.c.l.b16 %v2204
        %v3536 = vunpack.c.h.b16 %v2204
        %v3537 = vunpack.c.l.b16 %v2205
        %v3538 = vunpack.c.h.b16 %v2205
        %v3539 = vunpack.c.l.b16 %v2206
        %v3540 = vunpack.c.h.b16 %v2206
        %v3541 = vunpack.c.l.b16 %v2207
        %v3542 = vunpack.c.h.b16 %v2207
        %v3543 = vunpack.c.l.b16 %v2208
        %v3544 = vunpack.c.h.b16 %v2208
        %v3545 = vunpack.c.l.b16 %v2209
        %v3546 = vunpack.c.h.b16 %v2209
        %v3547 = vunpack.c.l.b16 %v2210
        %v3548 = vunpack.c.h.b16 %v2210
        %v3549 = vunpack.c.l.b16 %v2211
        %v3550 = vunpack.c.h.b16 %v2211
        %v3551 = vunpack.c.l.b16 %v2212
        %v3552 = vunpack.c.h.b16 %v2212
        %v3553 = vunpack.c.l.b16 %v2213
        %v3554 = vunpack.c.h.b16 %v2213
        %v3555 = vunpack.c.l.b16 %v2214
        %v3556 = vunpack.c.h.b16 %v2214
        %v3557 = vunpack.c.l.b16 %v2215
        %v3558 = vunpack.c.h.b16 %v2215
        %v3559 = vunpack.c.l.b16 %v2216
        %v3560 = vunpack.c.h.b16 %v2216
        %v3561 = vunpack.c.l.b16 %v2217
        %v3562 = vunpack.c.h.b16 %v2217
        %v3563 = vunpack.c.l.b16 %v2218
        %v3564 = vunpack.c.h.b16 %v2218
        %v3565 = vunpack.c.l.b16 %v2219
        %v3566 = vunpack.c.h.b16 %v2219
        %v3567 = vunpack.c.l.b16 %v2220
        %v3568 = vunpack.c.h.b16 %v2220
        %v3569 = vunpack.c.l.b16 %v2221
        %v3570 = vunpack.c.h.b16 %v2221
        %v3571 = vunpack.c.l.b16 %v2222
        %v3572 = vunpack.c.h.b16 %v2222
        %v3573 = vunpack.c.l.b16 %v2223
        %v3574 = vunpack.c.h.b16 %v2223
        %v3575 = vunpack.c.l.b16 %v2224
        %v3576 = vunpack.c.h.b16 %v2224
        %v3577 = vunpack.c.l.b16 %v2225
        %v3578 = vunpack.c.h.b16 %v2225
        %v3579 = vunpack.c.l.b16 %v2226
        %v3580 = vunpack.c.h.b16 %v2226
        %v3581 = vunpack.c.l.b16 %v2227
        %v3582 = vunpack.c.h.b16 %v2227
        %v3583 = vunpack.c.l.b16 %v2228
        %v3584 = vunpack.c.h.b16 %v2228
        %v3585 = vunpack.c.l.b16 %v2229
        %v3586 = vunpack.c.h.b16 %v2229
        %v3587 = vunpack.c.l.b16 %v2230
        %v3588 = vunpack.c.h.b16 %v2230
        %v3589 = vunpack.c.l.b16 %v2231
        %v3590 = vunpack.c.h.b16 %v2231
        %v3591 = vunpack.c.l.b16 %v2232
        %v3592 = vunpack.c.h.b16 %v2232
        %v3593 = vunpack.c.l.b16 %v2233
        %v3594 = vunpack.c.h.b16 %v2233
        %v3595 = vunpack.c.l.b16 %v2234
        %v3596 = vunpack.c.h.b16 %v2234
        %v3597 = vunpack.c.l.b16 %v2235
        %v3598 = vunpack.c.h.b16 %v2235
        %v3599 = vunpack.c.l.b16 %v2236
        %v3600 = vunpack.c.h.b16 %v2236
        %v3601 = vunpack.c.l.b16 %v2237
        %v3602 = vunpack.c.h.b16 %v2237
        %v3603 = vunpack.c.l.b16 %v2238
        %v3604 = vunpack.c.h.b16 %v2238
        %v3605 = vunpack.c.l.b16 %v2239
        %v3606 = vunpack.c.h.b16 %v2239
        %v3607 = vunpack.c.l.b16 %v2240
        %v3608 = vunpack.c.h.b16 %v2240
        %v3609 = vunpack.c.l.b16 %v2241
        %v3610 = vunpack.c.h.b16 %v2241
        %v3611 = vunpack.c.l.b16 %v2242
        %v3612 = vunpack.c.h.b16 %v2242
        %v3613 = vunpack.c.l.b16 %v2243
        %v3614 = vunpack.c.h.b16 %v2243
        %v3615 = vunpack.c.l.b16 %v2244
        %v3616 = vunpack.c.h.b16 %v2244
        %v3617 = vunpack.c.l.b16 %v2245
        %v3618 = vunpack.c.h.b16 %v2245
        %v3619 = vunpack.c.l.b16 %v2246
        %v3620 = vunpack.c.h.b16 %v2246
        %v3621 = vunpack.c.l.b16 %v2247
        %v3622 = vunpack.c.h.b16 %v2247
        %v3623 = vunpack.c.l.b16 %v2248
        %v3624 = vunpack.c.h.b16 %v2248
        %v3625 = vunpack.c.l.b16 %v2249
        %v3626 = vunpack.c.h.b16 %v2249
        %v3627 = vpack.c.b16 %v2845, %v2843
        %v3628 = vpack.c.b16 %v2846, %v2844
        %v3629 = vpack.c.b16 %v2849, %v2847
        %v3630 = vpack.c.b16 %v2850, %v2848
        %v3631 = vpack.c.b16 %v2853, %v2851
        %v3632 = vpack.c.b16 %v2854, %v2852
        %v3633 = vpack.c.b16 %v2857, %v2855
        %v3634 = vpack.c.b16 %v2858, %v2856
        %v3635 = vpack.c.b16 %v2861, %v2859
        %v3636 = vpack.c.b16 %v2862, %v2860
        %v3637 = vpack.c.b16 %v2865, %v2863
        %v3638 = vpack.c.b16 %v2866, %v2864
        %v3639 = vpack.c.b16 %v2869, %v2867
        %v3640 = vpack.c.b16 %v2870, %v2868
        %v3641 = vpack.c.b16 %v2873, %v2871
        %v3642 = vpack.c.b16 %v2874, %v2872
        %v3643 = vpack.c.b16 %v2877, %v2875
        %v3644 = vpack.c.b16 %v2878, %v2876
        %v3645 = vpack.c.b16 %v2881, %v2879
        %v3646 = vpack.c.b16 %v2882, %v2880
        %v3647 = vpack.c.b16 %v2885, %v2883
        %v3648 = vpack.c.b16 %v2886, %v2884
        %v3649 = vpack.c.b16 %v2889, %v2887
        %v3650 = vpack.c.b16 %v2890, %v2888
        %v3651 = vpack.c.b16 %v2893, %v2891
        %v3652 = vpack.c.b16 %v2894, %v2892
        %v3653 = vpack.c.b16 %v2897, %v2895
        %v3654 = vpack.c.b16 %v2898, %v2896
        %v3655 = vpack.c.b16 %v2901, %v2899
        %v3656 = vpack.c.b16 %v2902, %v2900
        %v3657 = vpack.c.b16 %v2905, %v2903
        %v3658 = vpack.c.b16 %v2906, %v2904
        %v3659 = vpack.c.b16 %v2909, %v2907
        %v3660 = vpack.c.b16 %v2910, %v2908
        %v3661 = vpack.c.b16 %v2913, %v2911
        %v3662 = vpack.c.b16 %v2914, %v2912
        %v3663 = vpack.c.b16 %v2917, %v2915
        %v3664 = vpack.c.b16 %v2918, %v2916
        %v3665 = vpack.c.b16 %v2921, %v2919
        %v3666 = vpack.c.b16 %v2922, %v2920
        %v3667 = vpack.c.b16 %v2925, %v2923
        %v3668 = vpack.c.b16 %v2926, %v2924
        %v3669 = vpack.c.b16 %v2929, %v2927
        %v3670 = vpack.c.b16 %v2930, %v2928
        %v3671 = vpack.c.b16 %v2933, %v2931
        %v3672 = vpack.c.b16 %v2934, %v2932
        %v3673 = vpack.c.b16 %v2937, %v2935
        %v3674 = vpack.c.b16 %v2938, %v2936
        %v3675 = vpack.c.b16 %v2941, %v2939
        %v3676 = vpack.c.b16 %v2942, %v2940
        %v3677 = vpack.c.b16 %v2945, %v2943
        %v3678 = vpack.c.b16 %v2946, %v2944
        %v3679 = vpack.c.b16 %v2949, %v2947
        %v3680 = vpack.c.b16 %v2950, %v2948
        %v3681 = vpack.c.b16 %v2953, %v2951
        %v3682 = vpack.c.b16 %v2954, %v2952
        %v3683 = vpack.c.b16 %v2957, %v2955
        %v3684 = vpack.c.b16 %v2958, %v2956
        %v3685 = vpack.c.b16 %v2961, %v2959
        %v3686 = vpack.c.b16 %v2962, %v2960
        %v3687 = vpack.c.b16 %v2965, %v2963
        %v3688 = vpack.c.b16 %v2966, %v2964
        %v3689 = vpack.c.b16 %v2969, %v2967
        %v3690 = vpack.c.b16 %v2970, %v2968
        %v3691 = vpack.c.b16 %v2973, %v2971
        %v3692 = vpack.c.b16 %v2974, %v2972
        %v3693 = vpack.c.b16 %v2977, %v2975
        %v3694 = vpack.c.b16 %v2978, %v2976
        %v3695 = vpack.c.b16 %v2981, %v2979
        %v3696 = vpack.c.b16 %v2982, %v2980
        %v3697 = vpack.c.b16 %v2985, %v2983
        %v3698 = vpack.c.b16 %v2986, %v2984
        %v3699 = vpack.c.b16 %v2989, %v2987
        %v3700 = vpack.c.b16 %v2990, %v2988
        %v3701 = vpack.c.b16 %v2993, %v2991
        %v3702 = vpack.c.b16 %v2994, %v2992
        %v3703 = vpack.c.b16 %v2997, %v2995
        %v3704 = vpack.c.b16 %v2998, %v2996
        %v3705 = vpack.c.b16 %v3001, %v2999
        %v3706 = vpack.c.b16 %v3002, %v3000
        %v3707 = vpack.c.b16 %v3005, %v3003
        %v3708 = vpack.c.b16 %v3006, %v3004
        %v3709 = vpack.c.b16 %v3009, %v3007
        %v3710 = vpack.c.b16 %v3010, %v3008
        %v3711 = vpack.c.b16 %v3013, %v3011
        %v3712 = vpack.c.b16 %v3014, %v3012
        %v3713 = vpack.c.b16 %v3017, %v3015
        %v3714 = vpack.c.b16 %v3018, %v3016
        %v3715 = vpack.c.b16 %v3021, %v3019
        %v3716 = vpack.c.b16 %v3022, %v3020
        %v3717 = vpack.c.b16 %v3025, %v3023
        %v3718 = vpack.c.b16 %v3026, %v3024
        %v3719 = vpack.c.b16 %v3029, %v3027
        %v3720 = vpack.c.b16 %v3030, %v3028
        %v3721 = vpack.c.b16 %v3033, %v3031
        %v3722 = vpack.c.b16 %v3034, %v3032
        %v3723 = vpack.c.b16 %v3037, %v3035
        %v3724 = vpack.c.b16 %v3038, %v3036
        %v3725 = vpack.c.b16 %v3041, %v3039
        %v3726 = vpack.c.b16 %v3042, %v3040
        %v3727 = vpack.c.b16 %v3045, %v3043
        %v3728 = vpack.c.b16 %v3046, %v3044
        %v3729 = vpack.c.b16 %v3049, %v3047
        %v3730 = vpack.c.b16 %v3050, %v3048
        %v3731 = vpack.c.b16 %v3053, %v3051
        %v3732 = vpack.c.b16 %v3054, %v3052
        %v3733 = vpack.c.b16 %v3057, %v3055
        %v3734 = vpack.c.b16 %v3058, %v3056
        %v3735 = vpack.c.b16 %v3061, %v3059
        %v3736 = vpack.c.b16 %v3062, %v3060
        %v3737 = vpack.c.b16 %v3065, %v3063
        %v3738 = vpack.c.b16 %v3066, %v3064
        %v3739 = vpack.c.b16 %v3069, %v3067
        %v3740 = vpack.c.b16 %v3070, %v3068
        %v3741 = vpack.c.b16 %v3073, %v3071
        %v3742 = vpack.c.b16 %v3074, %v3072
        %v3743 = vpack.c.b16 %v3077, %v3075
        %v3744 = vpack.c.b16 %v3078, %v3076
        %v3745 = vpack.c.b16 %v3081, %v3079
        %v3746 = vpack.c.b16 %v3082, %v3080
        %v3747 = vpack.c.b16 %v3085, %v3083
        %v3748 = vpack.c.b16 %v3086, %v3084
        %v3749 = vpack.c.b16 %v3089, %v3087
        %v3750 = vpack.c.b16 %v3090, %v3088
        %v3751 = vpack.c.b16 %v3093, %v3091
        %v3752 = vpack.c.b16 %v3094, %v3092
        %v3753 = vpack.c.b16 %v3097, %v3095
        %v3754 = vpack.c.b16 %v3098, %v3096
        %v3755 = vpack.c.b16 %v3101, %v3099
        %v3756 = vpack.c.b16 %v3102, %v3100
        %v3757 = vpack.c.b16 %v3105, %v3103
        %v3758 = vpack.c.b16 %v3106, %v3104
        %v3759 = vpack.c.b16 %v3109, %v3107
        %v3760 = vpack.c.b16 %v3110, %v3108
        %v3761 = vpack.c.b16 %v3113, %v3111
        %v3762 = vpack.c.b16 %v3114, %v3112
        %v3763 = vpack.c.b16 %v3117, %v3115
        %v3764 = vpack.c.b16 %v3118, %v3116
        %v3765 = vpack.c.b16 %v3121, %v3119
        %v3766 = vpack.c.b16 %v3122, %v3120
        %v3767 = vpack.c.b16 %v3125, %v3123
        %v3768 = vpack.c.b16 %v3126, %v3124
        %v3769 = vpack.c.b16 %v3129, %v3127
        %v3770 = vpack.c.b16 %v3130, %v3128
        %v3771 = vpack.c.b16 %v3133, %v3131
        %v3772 = vpack.c.b16 %v3134, %v3132
        %v3773 = vpack.c.b16 %v3137, %v3135
        %v3774 = vpack.c.b16 %v3138, %v3136
        %v3775 = vpack.c.b16 %v3141, %v3139
        %v3776 = vpack.c.b16 %v3142, %v3140
        %v3777 = vpack.c.b16 %v3145, %v3143
        %v3778 = vpack.c.b16 %v3146, %v3144
        %v3779 = vpack.c.b16 %v3149, %v3147
        %v3780 = vpack.c.b16 %v3150, %v3148
        %v3781 = vpack.c.b16 %v3153, %v3151
        %v3782 = vpack.c.b16 %v3154, %v3152
        %v3783 = vpack.c.b16 %v3157, %v3155
        %v3784 = vpack.c.b16 %v3158, %v3156
        %v3785 = vpack.c.b16 %v3161, %v3159
        %v3786 = vpack.c.b16 %v3162, %v3160
        %v3787 = vpack.c.b16 %v3165, %v3163
        %v3788 = vpack.c.b16 %v3166, %v3164
        %v3789 = vpack.c.b16 %v3169, %v3167
        %v3790 = vpack.c.b16 %v3170, %v3168
        %v3791 = vpack.c.b16 %v3173, %v3171
        %v3792 = vpack.c.b16 %v3174, %v3172
        %v3793 = vpack.c.b16 %v3177, %v3175
        %v3794 = vpack.c.b16 %v3178, %v3176
        %v3795 = vpack.c.b16 %v3181, %v3179
        %v3796 = vpack.c.b16 %v3182, %v3180
        %v3797 = vpack.c.b16 %v3185, %v3183
        %v3798 = vpack.c.b16 %v3186, %v3184
        %v3799 = vpack.c.b16 %v3189, %v3187
        %v3800 = vpack.c.b16 %v3190, %v3188
        %v3801 = vpack.c.b16 %v3193, %v3191
        %v3802 = vpack.c.b16 %v3194, %v3192
        %v3803 = vpack.c.b16 %v3197, %v3195
        %v3804 = vpack.c.b16 %v3198, %v3196
        %v3805 = vpack.c.b16 %v3201, %v3199
        %v3806 = vpack.c.b16 %v3202, %v3200
        %v3807 = vpack.c.b16 %v3205, %v3203
        %v3808 = vpack.c.b16 %v3206, %v3204
        %v3809 = vpack.c.b16 %v3209, %v3207
        %v3810 = vpack.c.b16 %v3210, %v3208
        %v3811 = vpack.c.b16 %v3213, %v3211
        %v3812 = vpack.c.b16 %v3214, %v3212
        %v3813 = vpack.c.b16 %v3217, %v3215
        %v3814 = vpack.c.b16 %v3218, %v3216
        %v3815 = vpack.c.b16 %v3221, %v3219
        %v3816 = vpack.c.b16 %v3222, %v3220
        %v3817 = vpack.c.b16 %v3225, %v3223
        %v3818 = vpack.c.b16 %v3226, %v3224
        %v3819 = vpack.c.b16 %v3229, %v3227
        %v3820 = vpack.c.b16 %v3230, %v3228
        %v3821 = vpack.c.b16 %v3233, %v3231
        %v3822 = vpack.c.b16 %v3234, %v3232
        %v3823 = vpack.c.b16 %v3237, %v3235
        %v3824 = vpack.c.b16 %v3238, %v3236
        %v3825 = vpack.c.b16 %v3241, %v3239
        %v3826 = vpack.c.b16 %v3242, %v3240
        %v3827 = vpack.c.b16 %v3245, %v3243
        %v3828 = vpack.c.b16 %v3246, %v3244
        %v3829 = vpack.c.b16 %v3249, %v3247
        %v3830 = vpack.c.b16 %v3250, %v3248
        %v3831 = vpack.c.b16 %v3253, %v3251
        %v3832 = vpack.c.b16 %v3254, %v3252
        %v3833 = vpack.c.b16 %v3257, %v3255
        %v3834 = vpack.c.b16 %v3258, %v3256
        %v3835 = vpack.c.b16 %v3261, %v3259
        %v3836 = vpack.c.b16 %v3262, %v3260
        %v3837 = vpack.c.b16 %v3265, %v3263
        %v3838 = vpack.c.b16 %v3266, %v3264
        %v3839 = vpack.c.b16 %v3269, %v3267
        %v3840 = vpack.c.b16 %v3270, %v3268
        %v3841 = vpack.c.b16 %v3273, %v3271
        %v3842 = vpack.c.b16 %v3274, %v3272
        %v3843 = vpack.c.b16 %v3277, %v3275
        %v3844 = vpack.c.b16 %v3278, %v3276
        %v3845 = vpack.c.b16 %v3281, %v3279
        %v3846 = vpack.c.b16 %v3282, %v3280
        %v3847 = vpack.c.b16 %v3285, %v3283
        %v3848 = vpack.c.b16 %v3286, %v3284
        %v3849 = vpack.c.b16 %v3289, %v3287
        %v3850 = vpack.c.b16 %v3290, %v3288
        %v3851 = vpack.c.b16 %v3293, %v3291
        %v3852 = vpack.c.b16 %v3294, %v3292
        %v3853 = vpack.c.b16 %v3297, %v3295
        %v3854 = vpack.c.b16 %v3298, %v3296
        %v3855 = vpack.c.b16 %v3301, %v3299
        %v3856 = vpack.c.b16 %v3302, %v3300
        %v3857 = vpack.c.b16 %v3305, %v3303
        %v3858 = vpack.c.b16 %v3306, %v3304
        %v3859 = vpack.c.b16 %v3309, %v3307
        %v3860 = vpack.c.b16 %v3310, %v3308
        %v3861 = vpack.c.b16 %v3313, %v3311
        %v3862 = vpack.c.b16 %v3314, %v3312
        %v3863 = vpack.c.b16 %v3317, %v3315
        %v3864 = vpack.c.b16 %v3318, %v3316
        %v3865 = vpack.c.b16 %v3321, %v3319
        %v3866 = vpack.c.b16 %v3322, %v3320
        %v3867 = vpack.c.b16 %v3325, %v3323
        %v3868 = vpack.c.b16 %v3326, %v3324
        %v3869 = vpack.c.b16 %v3329, %v3327
        %v3870 = vpack.c.b16 %v3330, %v3328
        %v3871 = vpack.c.b16 %v3333, %v3331
        %v3872 = vpack.c.b16 %v3334, %v3332
        %v3873 = vpack.c.b16 %v3337, %v3335
        %v3874 = vpack.c.b16 %v3338, %v3336
        %v3875 = vpack.c.b16 %v3341, %v3339
        %v3876 = vpack.c.b16 %v3342, %v3340
        %v3877 = vpack.c.b16 %v3345, %v3343
        %v3878 = vpack.c.b16 %v3346, %v3344
        %v3879 = vpack.c.b16 %v3349, %v3347
        %v3880 = vpack.c.b16 %v3350, %v3348
        %v3881 = vpack.c.b16 %v3353, %v3351
        %v3882 = vpack.c.b16 %v3354, %v3352
        %v3883 = vpack.c.b16 %v3357, %v3355
        %v3884 = vpack.c.b16 %v3358, %v3356
        %v3885 = vpack.c.b16 %v3361, %v3359
        %v3886 = vpack.c.b16 %v3362, %v3360
        %v3887 = vpack.c.b16 %v3365, %v3363
        %v3888 = vpack.c.b16 %v3366, %v3364
        %v3889 = vpack.c.b16 %v3369, %v3367
        %v3890 = vpack.c.b16 %v3370, %v3368
        %v3891 = vpack.c.b16 %v3373, %v3371
        %v3892 = vpack.c.b16 %v3374, %v3372
        %v3893 = vpack.c.b16 %v3377, %v3375
        %v3894 = vpack.c.b16 %v3378, %v3376
        %v3895 = vpack.c.b16 %v3381, %v3379
        %v3896 = vpack.c.b16 %v3382, %v3380
        %v3897 = vpack.c.b16 %v3385, %v3383
        %v3898 = vpack.c.b16 %v3386, %v3384
        %v3899 = vpack.c.b16 %v3389, %v3387
        %v3900 = vpack.c.b16 %v3390, %v3388
        %v3901 = vpack.c.b16 %v3393, %v3391
        %v3902 = vpack.c.b16 %v3394, %v3392
        %v3903 = vpack.c.b16 %v3397, %v3395
        %v3904 = vpack.c.b16 %v3398, %v3396
        %v3905 = vpack.c.b16 %v3401, %v3399
        %v3906 = vpack.c.b16 %v3402, %v3400
        %v3907 = vpack.c.b16 %v3405, %v3403
        %v3908 = vpack.c.b16 %v3406, %v3404
        %v3909 = vpack.c.b16 %v3409, %v3407
        %v3910 = vpack.c.b16 %v3410, %v3408
        %v3911 = vpack.c.b16 %v3413, %v3411
        %v3912 = vpack.c.b16 %v3414, %v3412
        %v3913 = vpack.c.b16 %v3417, %v3415
        %v3914 = vpack.c.b16 %v3418, %v3416
        %v3915 = vpack.c.b16 %v3421, %v3419
        %v3916 = vpack.c.b16 %v3422, %v3420
        %v3917 = vpack.c.b16 %v3425, %v3423
        %v3918 = vpack.c.b16 %v3426, %v3424
        %v3919 = vpack.c.b16 %v3429, %v3427
        %v3920 = vpack.c.b16 %v3430, %v3428
        %v3921 = vpack.c.b16 %v3433, %v3431
        %v3922 = vpack.c.b16 %v3434, %v3432
        %v3923 = vpack.c.b16 %v3437, %v3435
        %v3924 = vpack.c.b16 %v3438, %v3436
        %v3925 = vpack.c.b16 %v3441, %v3439
        %v3926 = vpack.c.b16 %v3442, %v3440
        %v3927 = vpack.c.b16 %v3445, %v3443
        %v3928 = vpack.c.b16 %v3446, %v3444
        %v3929 = vpack.c.b16 %v3449, %v3447
        %v3930 = vpack.c.b16 %v3450, %v3448
        %v3931 = vpack.c.b16 %v3453, %v3451
        %v3932 = vpack.c.b16 %v3454, %v3452
        %v3933 = vpack.c.b16 %v3457, %v3455
        %v3934 = vpack.c.b16 %v3458, %v3456
        %v3935 = vpack.c.b16 %v3461, %v3459
        %v3936 = vpack.c.b16 %v3462, %v3460
        %v3937 = vpack.c.b16 %v3465, %v3463
        %v3938 = vpack.c.b16 %v3466, %v3464
        %v3939 = vpack.c.b16 %v3469, %v3467
        %v3940 = vpack.c.b16 %v3470, %v3468
        %v3941 = vpack.c.b16 %v3473, %v3471
        %v3942 = vpack.c.b16 %v3474, %v3472
        %v3943 = vpack.c.b16 %v3477, %v3475
        %v3944 = vpack.c.b16 %v3478, %v3476
        %v3945 = vpack.c.b16 %v3481, %v3479
        %v3946 = vpack.c.b16 %v3482, %v3480
        %v3947 = vpack.c.b16 %v3485, %v3483
        %v3948 = vpack.c.b16 %v3486, %v3484
        %v3949 = vpack.c.b16 %v3489, %v3487
        %v3950 = vpack.c.b16 %v3490, %v3488
        %v3951 = vpack.c.b16 %v3493, %v3491
        %v3952 = vpack.c.b16 %v3494, %v3492
        %v3953 = vpack.c.b16 %v3497, %v3495
        %v3954 = vpack.c.b16 %v3498, %v3496
        %v3955 = vpack.c.b16 %v3501, %v3499
        %v3956 = vpack.c.b16 %v3502, %v3500
        %v3957 = vpack.c.b16 %v3505, %v3503
        %v3958 = vpack.c.b16 %v3506, %v3504
        %v3959 = vpack.c.b16 %v3509, %v3507
        %v3960 = vpack.c.b16 %v3510, %v3508
        %v3961 = vpack.c.b16 %v3513, %v3511
        %v3962 = vpack.c.b16 %v3514, %v3512
        %v3963 = vpack.c.b16 %v3517, %v3515
        %v3964 = vpack.c.b16 %v3518, %v3516
        %v3965 = vpack.c.b16 %v3521, %v3519
        %v3966 = vpack.c.b16 %v3522, %v3520
        %v3967 = vpack.c.b16 %v3525, %v3523
        %v3968 = vpack.c.b16 %v3526, %v3524
        %v3969 = vpack.c.b16 %v3529, %v3527
        %v3970 = vpack.c.b16 %v3530, %v3528
        %v3971 = vpack.c.b16 %v3533, %v3531
        %v3972 = vpack.c.b16 %v3534, %v3532
        %v3973 = vpack.c.b16 %v3537, %v3535
        %v3974 = vpack.c.b16 %v3538, %v3536
        %v3975 = vpack.c.b16 %v3541, %v3539
        %v3976 = vpack.c.b16 %v3542, %v3540
        %v3977 = vpack.c.b16 %v3545, %v3543
        %v3978 = vpack.c.b16 %v3546, %v3544
        %v3979 = vpack.c.b16 %v3549, %v3547
        %v3980 = vpack.c.b16 %v3550, %v3548
        %v3981 = vpack.c.b16 %v3553, %v3551
        %v3982 = vpack.c.b16 %v3554, %v3552
        %v3983 = vpack.c.b16 %v3557, %v3555
        %v3984 = vpack.c.b16 %v3558, %v3556
        %v3985 = vpack.c.b16 %v3561, %v3559
        %v3986 = vpack.c.b16 %v3562, %v3560
        %v3987 = vpack.c.b16 %v3565, %v3563
        %v3988 = vpack.c.b16 %v3566, %v3564
        %v3989 = vpack.c.b16 %v3569, %v3567
        %v3990 = vpack.c.b16 %v3570, %v3568
        %v3991 = vpack.c.b16 %v3573, %v3571
        %v3992 = vpack.c.b16 %v3574, %v3572
        %v3993 = vpack.c.b16 %v3577, %v3575
        %v3994 = vpack.c.b16 %v3578, %v3576
        %v3995 = vpack.c.b16 %v3581, %v3579
        %v3996 = vpack.c.b16 %v3582, %v3580
        %v3997 = vpack.c.b16 %v3585, %v3583
        %v3998 = vpack.c.b16 %v3586, %v3584
        %v3999 = vpack.c.b16 %v3589, %v3587
        %v4000 = vpack.c.b16 %v3590, %v3588
        %v4001 = vpack.c.b16 %v3593, %v3591
        %v4002 = vpack.c.b16 %v3594, %v3592
        %v4003 = vpack.c.b16 %v3597, %v3595
        %v4004 = vpack.c.b16 %v3598, %v3596
        %v4005 = vpack.c.b16 %v3601, %v3599
        %v4006 = vpack.c.b16 %v3602, %v3600
        %v4007 = vpack.c.b16 %v3605, %v3603
        %v4008 = vpack.c.b16 %v3606, %v3604
        %v4009 = vpack.c.b16 %v3609, %v3607
        %v4010 = vpack.c.b16 %v3610, %v3608
        %v4011 = vpack.c.b16 %v3613, %v3611
        %v4012 = vpack.c.b16 %v3614, %v3612
        %v4013 = vpack.c.b16 %v3617, %v3615
        %v4014 = vpack.c.b16 %v3618, %v3616
        %v4015 = vpack.c.b16 %v3621, %v3619
        %v4016 = vpack.c.b16 %v3622, %v3620
        %v4017 = vpack.c.b16 %v3625, %v3623
        %v4018 = vpack.c.b16 %v3626, %v3624
        %vm4411 = vcmask 523264
        %v4413 = vsel %vm4411, %v2426, 0
        %4415 = vmatprep.subr.bf16.mxu0 %v3642
        %4416 = vmatpush1.bf16.msra.mxu0 %v3641
        %4417 = vmatprep.subr.bf16.mxu0 %v3640
        %4418 = vmatpush1.bf16.msra.mxu0 %v3639
        %4419 = vmatprep.subr.bf16.mxu0 %v3638
        %4420 = vmatpush1.bf16.msra.mxu0 %v3637
        %4421 = vmatprep.subr.bf16.mxu0 %v3636
        %4422 = vmatpush1.bf16.msra.mxu0 %v3635
        %4423 = vmatprep.subr.bf16.mxu0 %v3634
        %4424 = vmatpush1.bf16.msra.mxu0 %v3633
        %4425 = vmatprep.subr.bf16.mxu0 %v3632
        %4426 = vmatpush1.bf16.msra.mxu0 %v3631
        %4427 = vmatprep.subr.bf16.mxu0 %v3630
        %4428 = vmatpush1.bf16.msra.mxu0 %v3629
        %4429 = vmatprep.subr.bf16.mxu0 %v3628
        %4430 = vmatpush1.bf16.msra.mxu0 %v3627
        %4431 = vmatprep.subr.bf16.mxu0 %v3658
        %4432 = vmatpush2.bf16.msra.mxu0 %v3657
        %4433 = vmatprep.subr.bf16.mxu0 %v3656
        %4434 = vmatpush2.bf16.msra.mxu0 %v3655
        %4435 = vmatprep.subr.bf16.mxu0 %v3654
        %4436 = vmatpush2.bf16.msra.mxu0 %v3653
        %4437 = vmatprep.subr.bf16.mxu0 %v3652
        %4438 = vmatpush2.bf16.msra.mxu0 %v3651
        %4439 = vmatprep.subr.bf16.mxu0 %v3650
        %4440 = vmatpush2.bf16.msra.mxu0 %v3649
        %4441 = vmatprep.subr.bf16.mxu0 %v3648
        %4442 = vmatpush2.bf16.msra.mxu0 %v3647
        %4443 = vmatprep.subr.bf16.mxu0 %v3646
        %4444 = vmatpush2.bf16.msra.mxu0 %v3645
        %4445 = vmatprep.subr.bf16.mxu0 %v3644
        %4446 = vmatpush2.bf16.msra.mxu0 %v3643
        %4447 = vmatprep.mubr.bf16.mxu0 %v2303
        %4448 = vmatmul.mubr.bf16.gmra.mxu0 %v2289
        %v4449 = vpop.f32.mrf.mxu0
        %v4450 = vadd.f32 %v2255, %v4449
        %v4451 = vpop.f32.mrf.mxu0
        %v4452 = vadd.f32 %v2259, %v4451
        %v4453 = vpop.f32.mrf.mxu0
        %v4454 = vpop.f32.mrf.mxu0
        %4455 = vdwg.mxu0
        %4456 = vmatprep.subr.bf16.mxu0 %v3674
        %4457 = vmatpush1.bf16.msra.mxu0 %v3673
        %4458 = vmatprep.subr.bf16.mxu0 %v3672
        %4459 = vmatpush1.bf16.msra.mxu0 %v3671
        %4460 = vmatprep.subr.bf16.mxu0 %v3670
        %4461 = vmatpush1.bf16.msra.mxu0 %v3669
        %4462 = vmatprep.subr.bf16.mxu0 %v3668
        %4463 = vmatpush1.bf16.msra.mxu0 %v3667
        %4464 = vmatprep.subr.bf16.mxu0 %v3666
        %4465 = vmatpush1.bf16.msra.mxu0 %v3665
        %4466 = vmatprep.subr.bf16.mxu0 %v3664
        %4467 = vmatpush1.bf16.msra.mxu0 %v3663
        %4468 = vmatprep.subr.bf16.mxu0 %v3662
        %4469 = vmatpush1.bf16.msra.mxu0 %v3661
        %4470 = vmatprep.subr.bf16.mxu0 %v3660
        %4471 = vmatpush1.bf16.msra.mxu0 %v3659
        %4472 = vmatprep.subr.bf16.mxu0 %v3690
        %4473 = vmatpush2.bf16.msra.mxu0 %v3689
        %4474 = vmatprep.subr.bf16.mxu0 %v3688
        %4475 = vmatpush2.bf16.msra.mxu0 %v3687
        %4476 = vmatprep.subr.bf16.mxu0 %v3686
        %4477 = vmatpush2.bf16.msra.mxu0 %v3685
        %4478 = vmatprep.subr.bf16.mxu0 %v3684
        %4479 = vmatpush2.bf16.msra.mxu0 %v3683
        %4480 = vmatprep.subr.bf16.mxu0 %v3682
        %4481 = vmatpush2.bf16.msra.mxu0 %v3681
        %4482 = vmatprep.subr.bf16.mxu0 %v3680
        %4483 = vmatpush2.bf16.msra.mxu0 %v3679
        %4484 = vmatprep.subr.bf16.mxu0 %v3678
        %4485 = vmatpush2.bf16.msra.mxu0 %v3677
        %4486 = vmatprep.subr.bf16.mxu0 %v3676
        %4487 = vmatpush2.bf16.msra.mxu0 %v3675
        %4488 = vmatprep.mubr.bf16.mxu0 %v2313
        %4489 = vmatmul.mubr.bf16.gmra.mxu0 %v2311
        %v4490 = vpop.f32.mrf.mxu0
        %v4491 = vadd.f32 %v4450, %v4490
        %v4492 = vpop.f32.mrf.mxu0
        %v4493 = vadd.f32 %v4452, %v4492
        %v4494 = vpop.f32.mrf.mxu0
        %v4495 = vpop.f32.mrf.mxu0
        %4496 = vdwg.mxu0
        %4497 = vmatprep.subr.bf16.mxu0 %v3706
        %4498 = vmatpush1.bf16.msra.mxu0 %v3705
        %4499 = vmatprep.subr.bf16.mxu0 %v3704
        %4500 = vmatpush1.bf16.msra.mxu0 %v3703
        %4501 = vmatprep.subr.bf16.mxu0 %v3702
        %4502 = vmatpush1.bf16.msra.mxu0 %v3701
        %4503 = vmatprep.subr.bf16.mxu0 %v3700
        %4504 = vmatpush1.bf16.msra.mxu0 %v3699
        %4505 = vmatprep.subr.bf16.mxu0 %v3698
        %4506 = vmatpush1.bf16.msra.mxu0 %v3697
        %4507 = vmatprep.subr.bf16.mxu0 %v3696
        %4508 = vmatpush1.bf16.msra.mxu0 %v3695
        %4509 = vmatprep.subr.bf16.mxu0 %v3694
        %4510 = vmatpush1.bf16.msra.mxu0 %v3693
        %4511 = vmatprep.subr.bf16.mxu0 %v3692
        %4512 = vmatpush1.bf16.msra.mxu0 %v3691
        %4513 = vmatprep.subr.bf16.mxu0 %v3722
        %4514 = vmatpush2.bf16.msra.mxu0 %v3721
        %4515 = vmatprep.subr.bf16.mxu0 %v3720
        %4516 = vmatpush2.bf16.msra.mxu0 %v3719
        %4517 = vmatprep.subr.bf16.mxu0 %v3718
        %4518 = vmatpush2.bf16.msra.mxu0 %v3717
        %4519 = vmatprep.subr.bf16.mxu0 %v3716
        %4520 = vmatpush2.bf16.msra.mxu0 %v3715
        %4521 = vmatprep.subr.bf16.mxu0 %v3714
        %4522 = vmatpush2.bf16.msra.mxu0 %v3713
        %4523 = vmatprep.subr.bf16.mxu0 %v3712
        %4524 = vmatpush2.bf16.msra.mxu0 %v3711
        %4525 = vmatprep.subr.bf16.mxu0 %v3710
        %4526 = vmatpush2.bf16.msra.mxu0 %v3709
        %4527 = vmatprep.subr.bf16.mxu0 %v3708
        %4528 = vmatpush2.bf16.msra.mxu0 %v3707
        %4529 = vmatprep.mubr.bf16.mxu0 %v2310
        %4530 = vmatmul.mubr.bf16.gmra.mxu0 %v2296
        %v4531 = vpop.f32.mrf.mxu0
        %v4532 = vadd.f32 %v4491, %v4531
        %v4533 = vpop.f32.mrf.mxu0
        %v4534 = vadd.f32 %v4493, %v4533
        %v4535 = vpop.f32.mrf.mxu0
        %v4536 = vpop.f32.mrf.mxu0
        %4537 = vdwg.mxu0
        %4538 = vmatprep.subr.bf16.mxu0 %v3738
        %4539 = vmatpush1.bf16.msra.mxu0 %v3737
        %4540 = vmatprep.subr.bf16.mxu0 %v3736
        %4541 = vmatpush1.bf16.msra.mxu0 %v3735
        %4542 = vmatprep.subr.bf16.mxu0 %v3734
        %4543 = vmatpush1.bf16.msra.mxu0 %v3733
        %4544 = vmatprep.subr.bf16.mxu0 %v3732
        %4545 = vmatpush1.bf16.msra.mxu0 %v3731
        %4546 = vmatprep.subr.bf16.mxu0 %v3730
        %4547 = vmatpush1.bf16.msra.mxu0 %v3729
        %4548 = vmatprep.subr.bf16.mxu0 %v3728
        %4549 = vmatpush1.bf16.msra.mxu0 %v3727
        %4550 = vmatprep.subr.bf16.mxu0 %v3726
        %4551 = vmatpush1.bf16.msra.mxu0 %v3725
        %4552 = vmatprep.subr.bf16.mxu0 %v3724
        %4553 = vmatpush1.bf16.msra.mxu0 %v3723
        %4554 = vmatprep.subr.bf16.mxu0 %v3754
        %4555 = vmatpush2.bf16.msra.mxu0 %v3753
        %4556 = vmatprep.subr.bf16.mxu0 %v3752
        %4557 = vmatpush2.bf16.msra.mxu0 %v3751
        %4558 = vmatprep.subr.bf16.mxu0 %v3750
        %4559 = vmatpush2.bf16.msra.mxu0 %v3749
        %4560 = vmatprep.subr.bf16.mxu0 %v3748
        %4561 = vmatpush2.bf16.msra.mxu0 %v3747
        %4562 = vmatprep.subr.bf16.mxu0 %v3746
        %4563 = vmatpush2.bf16.msra.mxu0 %v3745
        %4564 = vmatprep.subr.bf16.mxu0 %v3744
        %4565 = vmatpush2.bf16.msra.mxu0 %v3743
        %4566 = vmatprep.subr.bf16.mxu0 %v3742
        %4567 = vmatpush2.bf16.msra.mxu0 %v3741
        %4568 = vmatprep.subr.bf16.mxu0 %v3740
        %4569 = vmatpush2.bf16.msra.mxu0 %v3739
        %4570 = vmatprep.mubr.bf16.mxu0 %v2314
        %4571 = vmatmul.mubr.bf16.gmra.mxu0 %v2312
        %v4572 = vpop.f32.mrf.mxu0
        %v4573 = vadd.f32 %v4532, %v4572
        %v4574 = vpop.f32.mrf.mxu0
        %v4575 = vadd.f32 %v4534, %v4574
        %v4576 = vpop.f32.mrf.mxu0
        %v4577 = vpop.f32.mrf.mxu0
        %4578 = vdwg.mxu0
        %4579 = vmatprep.subr.bf16.mxu0 %v3770
        %4580 = vmatpush1.bf16.msra.mxu0 %v3769
        %4581 = vmatprep.subr.bf16.mxu0 %v3768
        %4582 = vmatpush1.bf16.msra.mxu0 %v3767
        %4583 = vmatprep.subr.bf16.mxu0 %v3766
        %4584 = vmatpush1.bf16.msra.mxu0 %v3765
        %4585 = vmatprep.subr.bf16.mxu0 %v3764
        %4586 = vmatpush1.bf16.msra.mxu0 %v3763
        %4587 = vmatprep.subr.bf16.mxu0 %v3762
        %4588 = vmatpush1.bf16.msra.mxu0 %v3761
        %4589 = vmatprep.subr.bf16.mxu0 %v3760
        %4590 = vmatpush1.bf16.msra.mxu0 %v3759
        %4591 = vmatprep.subr.bf16.mxu0 %v3758
        %4592 = vmatpush1.bf16.msra.mxu0 %v3757
        %4593 = vmatprep.subr.bf16.mxu0 %v3756
        %4594 = vmatpush1.bf16.msra.mxu0 %v3755
        %4595 = vmatprep.subr.bf16.mxu0 %v3786
        %4596 = vmatpush2.bf16.msra.mxu0 %v3785
        %4597 = vmatprep.subr.bf16.mxu0 %v3784
        %4598 = vmatpush2.bf16.msra.mxu0 %v3783
        %4599 = vmatprep.subr.bf16.mxu0 %v3782
        %4600 = vmatpush2.bf16.msra.mxu0 %v3781
        %4601 = vmatprep.subr.bf16.mxu0 %v3780
        %4602 = vmatpush2.bf16.msra.mxu0 %v3779
        %4603 = vmatprep.subr.bf16.mxu0 %v3778
        %4604 = vmatpush2.bf16.msra.mxu0 %v3777
        %4605 = vmatprep.subr.bf16.mxu0 %v3776
        %4606 = vmatpush2.bf16.msra.mxu0 %v3775
        %4607 = vmatprep.subr.bf16.mxu0 %v3774
        %4608 = vmatpush2.bf16.msra.mxu0 %v3773
        %4609 = vmatprep.subr.bf16.mxu0 %v3772
        %4610 = vmatpush2.bf16.msra.mxu0 %v3771
        %4611 = vmatprep.mubr.bf16.mxu0 %v2352
        %4612 = vmatmul.mubr.bf16.gmra.mxu0 %v2338
        %v4613 = vpop.f32.mrf.mxu0
        %v4614 = vadd.f32 %v4573, %v4613
        %v4615 = vpop.f32.mrf.mxu0
        %v4616 = vadd.f32 %v4575, %v4615
        %v4617 = vpop.f32.mrf.mxu0
        %v4618 = vpop.f32.mrf.mxu0
        %4619 = vdwg.mxu0
        %4620 = vmatprep.subr.bf16.mxu0 %v3802
        %4621 = vmatpush1.bf16.msra.mxu0 %v3801
        %4622 = vmatprep.subr.bf16.mxu0 %v3800
        %4623 = vmatpush1.bf16.msra.mxu0 %v3799
        %4624 = vmatprep.subr.bf16.mxu0 %v3798
        %4625 = vmatpush1.bf16.msra.mxu0 %v3797
        %4626 = vmatprep.subr.bf16.mxu0 %v3796
        %4627 = vmatpush1.bf16.msra.mxu0 %v3795
        %4628 = vmatprep.subr.bf16.mxu0 %v3794
        %4629 = vmatpush1.bf16.msra.mxu0 %v3793
        %4630 = vmatprep.subr.bf16.mxu0 %v3792
        %4631 = vmatpush1.bf16.msra.mxu0 %v3791
        %4632 = vmatprep.subr.bf16.mxu0 %v3790
        %4633 = vmatpush1.bf16.msra.mxu0 %v3789
        %4634 = vmatprep.subr.bf16.mxu0 %v3788
        %4635 = vmatpush1.bf16.msra.mxu0 %v3787
        %4636 = vmatprep.subr.bf16.mxu0 %v3818
        %4637 = vmatpush2.bf16.msra.mxu0 %v3817
        %4638 = vmatprep.subr.bf16.mxu0 %v3816
        %4639 = vmatpush2.bf16.msra.mxu0 %v3815
        %4640 = vmatprep.subr.bf16.mxu0 %v3814
        %4641 = vmatpush2.bf16.msra.mxu0 %v3813
        %4642 = vmatprep.subr.bf16.mxu0 %v3812
        %4643 = vmatpush2.bf16.msra.mxu0 %v3811
        %4644 = vmatprep.subr.bf16.mxu0 %v3810
        %4645 = vmatpush2.bf16.msra.mxu0 %v3809
        %4646 = vmatprep.subr.bf16.mxu0 %v3808
        %4647 = vmatpush2.bf16.msra.mxu0 %v3807
        %4648 = vmatprep.subr.bf16.mxu0 %v3806
        %4649 = vmatpush2.bf16.msra.mxu0 %v3805
        %4650 = vmatprep.subr.bf16.mxu0 %v3804
        %4651 = vmatpush2.bf16.msra.mxu0 %v3803
        %4652 = vmatprep.mubr.bf16.mxu0 %v2362
        %4653 = vmatmul.mubr.bf16.gmra.mxu0 %v2360
        %v4654 = vpop.f32.mrf.mxu0
        %v4655 = vadd.f32 %v4614, %v4654
        %v4656 = vpop.f32.mrf.mxu0
        %v4657 = vadd.f32 %v4616, %v4656
        %v4658 = vpop.f32.mrf.mxu0
        %v4659 = vpop.f32.mrf.mxu0
        %4660 = vdwg.mxu0
        %4661 = vmatprep.subr.bf16.mxu0 %v3834
        %4662 = vmatpush1.bf16.msra.mxu0 %v3833
        %4663 = vmatprep.subr.bf16.mxu0 %v3832
        %4664 = vmatpush1.bf16.msra.mxu0 %v3831
        %4665 = vmatprep.subr.bf16.mxu0 %v3830
        %4666 = vmatpush1.bf16.msra.mxu0 %v3829
        %4667 = vmatprep.subr.bf16.mxu0 %v3828
        %4668 = vmatpush1.bf16.msra.mxu0 %v3827
        %4669 = vmatprep.subr.bf16.mxu0 %v3826
        %4670 = vmatpush1.bf16.msra.mxu0 %v3825
        %4671 = vmatprep.subr.bf16.mxu0 %v3824
        %4672 = vmatpush1.bf16.msra.mxu0 %v3823
        %4673 = vmatprep.subr.bf16.mxu0 %v3822
        %4674 = vmatpush1.bf16.msra.mxu0 %v3821
        %4675 = vmatprep.subr.bf16.mxu0 %v3820
        %4676 = vmatpush1.bf16.msra.mxu0 %v3819
        %4677 = vmatprep.subr.bf16.mxu0 %v3850
        %4678 = vmatpush2.bf16.msra.mxu0 %v3849
        %4679 = vmatprep.subr.bf16.mxu0 %v3848
        %4680 = vmatpush2.bf16.msra.mxu0 %v3847
        %4681 = vmatprep.subr.bf16.mxu0 %v3846
        %4682 = vmatpush2.bf16.msra.mxu0 %v3845
        %4683 = vmatprep.subr.bf16.mxu0 %v3844
        %4684 = vmatpush2.bf16.msra.mxu0 %v3843
        %4685 = vmatprep.subr.bf16.mxu0 %v3842
        %4686 = vmatpush2.bf16.msra.mxu0 %v3841
        %4687 = vmatprep.subr.bf16.mxu0 %v3840
        %4688 = vmatpush2.bf16.msra.mxu0 %v3839
        %4689 = vmatprep.subr.bf16.mxu0 %v3838
        %4690 = vmatpush2.bf16.msra.mxu0 %v3837
        %4691 = vmatprep.subr.bf16.mxu0 %v3836
        %4692 = vmatpush2.bf16.msra.mxu0 %v3835
        %4693 = vmatprep.mubr.bf16.mxu0 %v2359
        %4694 = vmatmul.mubr.bf16.gmra.mxu0 %v2345
        %v4695 = vpop.f32.mrf.mxu0
        %v4696 = vadd.f32 %v4655, %v4695
        %v4697 = vpop.f32.mrf.mxu0
        %v4698 = vadd.f32 %v4657, %v4697
        %v4699 = vpop.f32.mrf.mxu0
        %v4700 = vpop.f32.mrf.mxu0
        %4701 = vdwg.mxu0
        %4702 = vmatprep.subr.bf16.mxu0 %v3866
        %4703 = vmatpush1.bf16.msra.mxu0 %v3865
        %4704 = vmatprep.subr.bf16.mxu0 %v3864
        %4705 = vmatpush1.bf16.msra.mxu0 %v3863
        %4706 = vmatprep.subr.bf16.mxu0 %v3862
        %4707 = vmatpush1.bf16.msra.mxu0 %v3861
        %4708 = vmatprep.subr.bf16.mxu0 %v3860
        %4709 = vmatpush1.bf16.msra.mxu0 %v3859
        %4710 = vmatprep.subr.bf16.mxu0 %v3858
        %4711 = vmatpush1.bf16.msra.mxu0 %v3857
        %4712 = vmatprep.subr.bf16.mxu0 %v3856
        %4713 = vmatpush1.bf16.msra.mxu0 %v3855
        %4714 = vmatprep.subr.bf16.mxu0 %v3854
        %4715 = vmatpush1.bf16.msra.mxu0 %v3853
        %4716 = vmatprep.subr.bf16.mxu0 %v3852
        %4717 = vmatpush1.bf16.msra.mxu0 %v3851
        %4718 = vmatprep.subr.bf16.mxu0 %v3882
        %4719 = vmatpush2.bf16.msra.mxu0 %v3881
        %4720 = vmatprep.subr.bf16.mxu0 %v3880
        %4721 = vmatpush2.bf16.msra.mxu0 %v3879
        %4722 = vmatprep.subr.bf16.mxu0 %v3878
        %4723 = vmatpush2.bf16.msra.mxu0 %v3877
        %4724 = vmatprep.subr.bf16.mxu0 %v3876
        %4725 = vmatpush2.bf16.msra.mxu0 %v3875
        %4726 = vmatprep.subr.bf16.mxu0 %v3874
        %4727 = vmatpush2.bf16.msra.mxu0 %v3873
        %4728 = vmatprep.subr.bf16.mxu0 %v3872
        %4729 = vmatpush2.bf16.msra.mxu0 %v3871
        %4730 = vmatprep.subr.bf16.mxu0 %v3870
        %4731 = vmatpush2.bf16.msra.mxu0 %v3869
        %4732 = vmatprep.subr.bf16.mxu0 %v3868
        %4733 = vmatpush2.bf16.msra.mxu0 %v3867
        %4734 = vmatprep.mubr.bf16.mxu0 %v2363
        %4735 = vmatmul.mubr.bf16.gmra.mxu0 %v2361
        %v4736 = vpop.f32.mrf.mxu0
        %v4737 = vadd.f32 %v4696, %v4736
        %v4738 = vpop.f32.mrf.mxu0
        %v4739 = vadd.f32 %v4698, %v4738
        %v4740 = vpop.f32.mrf.mxu0
        %v4741 = vpop.f32.mrf.mxu0
        %4742 = vdwg.mxu0
        %4743 = vmatprep.subr.bf16.mxu0 %v3898
        %4744 = vmatpush1.bf16.msra.mxu0 %v3897
        %4745 = vmatprep.subr.bf16.mxu0 %v3896
        %4746 = vmatpush1.bf16.msra.mxu0 %v3895
        %4747 = vmatprep.subr.bf16.mxu0 %v3894
        %4748 = vmatpush1.bf16.msra.mxu0 %v3893
        %4749 = vmatprep.subr.bf16.mxu0 %v3892
        %4750 = vmatpush1.bf16.msra.mxu0 %v3891
        %4751 = vmatprep.subr.bf16.mxu0 %v3890
        %4752 = vmatpush1.bf16.msra.mxu0 %v3889
        %4753 = vmatprep.subr.bf16.mxu0 %v3888
        %4754 = vmatpush1.bf16.msra.mxu0 %v3887
        %4755 = vmatprep.subr.bf16.mxu0 %v3886
        %4756 = vmatpush1.bf16.msra.mxu0 %v3885
        %4757 = vmatprep.subr.bf16.mxu0 %v3884
        %4758 = vmatpush1.bf16.msra.mxu0 %v3883
        %4759 = vmatprep.subr.bf16.mxu0 %v3914
        %4760 = vmatpush2.bf16.msra.mxu0 %v3913
        %4761 = vmatprep.subr.bf16.mxu0 %v3912
        %4762 = vmatpush2.bf16.msra.mxu0 %v3911
        %4763 = vmatprep.subr.bf16.mxu0 %v3910
        %4764 = vmatpush2.bf16.msra.mxu0 %v3909
        %4765 = vmatprep.subr.bf16.mxu0 %v3908
        %4766 = vmatpush2.bf16.msra.mxu0 %v3907
        %4767 = vmatprep.subr.bf16.mxu0 %v3906
        %4768 = vmatpush2.bf16.msra.mxu0 %v3905
        %4769 = vmatprep.subr.bf16.mxu0 %v3904
        %4770 = vmatpush2.bf16.msra.mxu0 %v3903
        %4771 = vmatprep.subr.bf16.mxu0 %v3902
        %4772 = vmatpush2.bf16.msra.mxu0 %v3901
        %4773 = vmatprep.subr.bf16.mxu0 %v3900
        %4774 = vmatpush2.bf16.msra.mxu0 %v3899
        %4775 = vmatprep.mubr.bf16.mxu0 %v2401
        %4776 = vmatmul.mubr.bf16.gmra.mxu0 %v2387
        %v4777 = vpop.f32.mrf.mxu0
        %v4778 = vadd.f32 %v4737, %v4777
        %v4779 = vpop.f32.mrf.mxu0
        %v4780 = vadd.f32 %v4739, %v4779
        %v4781 = vpop.f32.mrf.mxu0
        %v4782 = vpop.f32.mrf.mxu0
        %4783 = vdwg.mxu0
        %4784 = vmatprep.subr.bf16.mxu0 %v3930
        %4785 = vmatpush1.bf16.msra.mxu0 %v3929
        %4786 = vmatprep.subr.bf16.mxu0 %v3928
        %4787 = vmatpush1.bf16.msra.mxu0 %v3927
        %4788 = vmatprep.subr.bf16.mxu0 %v3926
        %4789 = vmatpush1.bf16.msra.mxu0 %v3925
        %4790 = vmatprep.subr.bf16.mxu0 %v3924
        %4791 = vmatpush1.bf16.msra.mxu0 %v3923
        %4792 = vmatprep.subr.bf16.mxu0 %v3922
        %4793 = vmatpush1.bf16.msra.mxu0 %v3921
        %4794 = vmatprep.subr.bf16.mxu0 %v3920
        %4795 = vmatpush1.bf16.msra.mxu0 %v3919
        %4796 = vmatprep.subr.bf16.mxu0 %v3918
        %4797 = vmatpush1.bf16.msra.mxu0 %v3917
        %4798 = vmatprep.subr.bf16.mxu0 %v3916
        %4799 = vmatpush1.bf16.msra.mxu0 %v3915
        %4800 = vmatprep.subr.bf16.mxu0 %v3946
        %4801 = vmatpush2.bf16.msra.mxu0 %v3945
        %4802 = vmatprep.subr.bf16.mxu0 %v3944
        %4803 = vmatpush2.bf16.msra.mxu0 %v3943
        %4804 = vmatprep.subr.bf16.mxu0 %v3942
        %4805 = vmatpush2.bf16.msra.mxu0 %v3941
        %4806 = vmatprep.subr.bf16.mxu0 %v3940
        %4807 = vmatpush2.bf16.msra.mxu0 %v3939
        %4808 = vmatprep.subr.bf16.mxu0 %v3938
        %4809 = vmatpush2.bf16.msra.mxu0 %v3937
        %4810 = vmatprep.subr.bf16.mxu0 %v3936
        %4811 = vmatpush2.bf16.msra.mxu0 %v3935
        %4812 = vmatprep.subr.bf16.mxu0 %v3934
        %4813 = vmatpush2.bf16.msra.mxu0 %v3933
        %4814 = vmatprep.subr.bf16.mxu0 %v3932
        %4815 = vmatpush2.bf16.msra.mxu0 %v3931
        %4816 = vmatprep.mubr.bf16.mxu0 %v2411
        %4817 = vmatmul.mubr.bf16.gmra.mxu0 %v2409
        %v4818 = vpop.f32.mrf.mxu0
        %v4819 = vadd.f32 %v4778, %v4818
        %v4820 = vpop.f32.mrf.mxu0
        %v4821 = vadd.f32 %v4780, %v4820
        %v4822 = vpop.f32.mrf.mxu0
        %v4823 = vpop.f32.mrf.mxu0
        %4824 = vdwg.mxu0
        %4825 = vmatprep.subr.bf16.mxu0 %v3962
        %4826 = vmatpush1.bf16.msra.mxu0 %v3961
        %4827 = vmatprep.subr.bf16.mxu0 %v3960
        %4828 = vmatpush1.bf16.msra.mxu0 %v3959
        %4829 = vmatprep.subr.bf16.mxu0 %v3958
        %4830 = vmatpush1.bf16.msra.mxu0 %v3957
        %4831 = vmatprep.subr.bf16.mxu0 %v3956
        %4832 = vmatpush1.bf16.msra.mxu0 %v3955
        %4833 = vmatprep.subr.bf16.mxu0 %v3954
        %4834 = vmatpush1.bf16.msra.mxu0 %v3953
        %4835 = vmatprep.subr.bf16.mxu0 %v3952
        %4836 = vmatpush1.bf16.msra.mxu0 %v3951
        %4837 = vmatprep.subr.bf16.mxu0 %v3950
        %4838 = vmatpush1.bf16.msra.mxu0 %v3949
        %4839 = vmatprep.subr.bf16.mxu0 %v3948
        %4840 = vmatpush1.bf16.msra.mxu0 %v3947
        %4841 = vmatprep.subr.bf16.mxu0 %v3978
        %4842 = vmatpush2.bf16.msra.mxu0 %v3977
        %4843 = vmatprep.subr.bf16.mxu0 %v3976
        %4844 = vmatpush2.bf16.msra.mxu0 %v3975
        %4845 = vmatprep.subr.bf16.mxu0 %v3974
        %4846 = vmatpush2.bf16.msra.mxu0 %v3973
        %4847 = vmatprep.subr.bf16.mxu0 %v3972
        %4848 = vmatpush2.bf16.msra.mxu0 %v3971
        %4849 = vmatprep.subr.bf16.mxu0 %v3970
        %4850 = vmatpush2.bf16.msra.mxu0 %v3969
        %4851 = vmatprep.subr.bf16.mxu0 %v3968
        %4852 = vmatpush2.bf16.msra.mxu0 %v3967
        %4853 = vmatprep.subr.bf16.mxu0 %v3966
        %4854 = vmatpush2.bf16.msra.mxu0 %v3965
        %4855 = vmatprep.subr.bf16.mxu0 %v3964
        %4856 = vmatpush2.bf16.msra.mxu0 %v3963
        %4857 = vmatprep.mubr.bf16.mxu0 %v2408
        %4858 = vmatmul.mubr.bf16.gmra.mxu0 %v2394
        %v4859 = vpop.f32.mrf.mxu0
        %v4860 = vadd.f32 %v4819, %v4859
        %v4861 = vpop.f32.mrf.mxu0
        %v4862 = vadd.f32 %v4821, %v4861
        %v4863 = vpop.f32.mrf.mxu0
        %v4864 = vpop.f32.mrf.mxu0
        %4865 = vdwg.mxu0
        %4866 = vmatprep.subr.bf16.mxu0 %v3994
        %4867 = vmatpush1.bf16.msra.mxu0 %v3993
        %4868 = vmatprep.subr.bf16.mxu0 %v3992
        %4869 = vmatpush1.bf16.msra.mxu0 %v3991
        %4870 = vmatprep.subr.bf16.mxu0 %v3990
        %4871 = vmatpush1.bf16.msra.mxu0 %v3989
        %4872 = vmatprep.subr.bf16.mxu0 %v3988
        %4873 = vmatpush1.bf16.msra.mxu0 %v3987
        %4874 = vmatprep.subr.bf16.mxu0 %v3986
        %4875 = vmatpush1.bf16.msra.mxu0 %v3985
        %4876 = vmatprep.subr.bf16.mxu0 %v3984
        %4877 = vmatpush1.bf16.msra.mxu0 %v3983
        %4878 = vmatprep.subr.bf16.mxu0 %v3982
        %4879 = vmatpush1.bf16.msra.mxu0 %v3981
        %4880 = vmatprep.subr.bf16.mxu0 %v3980
        %4881 = vmatpush1.bf16.msra.mxu0 %v3979
        %4882 = vmatprep.subr.bf16.mxu0 %v4010
        %4883 = vmatpush2.bf16.msra.mxu0 %v4009
        %4884 = vmatprep.subr.bf16.mxu0 %v4008
        %4885 = vmatpush2.bf16.msra.mxu0 %v4007
        %4886 = vmatprep.subr.bf16.mxu0 %v4006
        %4887 = vmatpush2.bf16.msra.mxu0 %v4005
        %4888 = vmatprep.subr.bf16.mxu0 %v4004
        %4889 = vmatpush2.bf16.msra.mxu0 %v4003
        %4890 = vmatprep.subr.bf16.mxu0 %v4002
        %4891 = vmatpush2.bf16.msra.mxu0 %v4001
        %4892 = vmatprep.subr.bf16.mxu0 %v4000
        %4893 = vmatpush2.bf16.msra.mxu0 %v3999
        %4894 = vmatprep.subr.bf16.mxu0 %v3998
        %4895 = vmatpush2.bf16.msra.mxu0 %v3997
        %4896 = vmatprep.subr.bf16.mxu0 %v3996
        %4897 = vmatpush2.bf16.msra.mxu0 %v3995
        %4898 = vmatprep.mubr.bf16.mxu0 %v2412
        %4899 = vmatmul.mubr.bf16.gmra.mxu0 %v2410
        %v4900 = vpop.f32.mrf.mxu0
        %v4901 = vadd.f32 %v4860, %v4900
        %v4902 = vpop.f32.mrf.mxu0
        %v4903 = vadd.f32 %v4862, %v4902
        %v4904 = vpop.f32.mrf.mxu0
        %v4905 = vpop.f32.mrf.mxu0
        %4906 = vdwg.mxu0
        %4907 = vmatprep.subr.bf16.mxu0 0
        %4908 = vmatpush1.bf16.msra.mxu0 0
        %4909 = vmatprep.subr.bf16.mxu0 0
        %4910 = vmatpush1.bf16.msra.mxu0 0
        %4911 = vmatprep.subr.bf16.mxu0 0
        %4912 = vmatpush1.bf16.msra.mxu0 0
        %4913 = vmatprep.subr.bf16.mxu0 0
        %4914 = vmatpush1.bf16.msra.mxu0 0
        %4915 = vmatprep.subr.bf16.mxu0 %v4018
        %4916 = vmatpush1.bf16.msra.mxu0 %v4017
        %4917 = vmatprep.subr.bf16.mxu0 %v4016
        %4918 = vmatpush1.bf16.msra.mxu0 %v4015
        %4919 = vmatprep.subr.bf16.mxu0 %v4014
        %4920 = vmatpush1.bf16.msra.mxu0 %v4013
        %4921 = vmatprep.subr.bf16.mxu0 %v4012
        %4922 = vmatpush1.bf16.msra.mxu0 %v4011
        %4923 = vmatprep.subr.bf16.mxu0 0
        %4924 = vmatpush2.bf16.msra.mxu0 0
        %4925 = vmatprep.subr.bf16.mxu0 0
        %4926 = vmatpush2.bf16.msra.mxu0 0
        %4927 = vmatprep.subr.bf16.mxu0 0
        %4928 = vmatpush2.bf16.msra.mxu0 0
        %4929 = vmatprep.subr.bf16.mxu0 0
        %4930 = vmatpush2.bf16.msra.mxu0 0
        %4931 = vmatprep.subr.bf16.mxu0 0
        %4932 = vmatpush2.bf16.msra.mxu0 0
        %4933 = vmatprep.subr.bf16.mxu0 0
        %4934 = vmatpush2.bf16.msra.mxu0 0
        %4935 = vmatprep.subr.bf16.mxu0 0
        %4936 = vmatpush2.bf16.msra.mxu0 0
        %4937 = vmatprep.subr.bf16.mxu0 0
        %4938 = vmatpush2.bf16.msra.mxu0 0
        %4939 = vmatprep.mubr.bf16.mxu0 0
        %4940 = vmatmul.mubr.bf16.gmra.mxu0 %v4413
        %v4941 = vpop.f32.mrf.mxu0
        %v4942 = vadd.f32 %v4901, %v4941
        %v4943 = vpop.f32.mrf.mxu0
        %v4944 = vadd.f32 %v4903, %v4943
        %v4945 = vpop.f32.mrf.mxu0
        %v4946 = vpop.f32.mrf.mxu0
        %4947 = vdwg.mxu0
        %vm4948 = vcmp.gt.f32.partialorder %v4942, 0.0
        %vm4949 = vcmp.gt.f32.partialorder %v4944, 0.0
        %v4950 = vmul.f32 %v4942, 0.01
        %v4951 = vmul.f32 %v4944, 0.01
        %v4952 = vsel %vm4948, %v4942, %v4950
        %v4953 = vsel %vm4949, %v4944, %v4951
        %v4954 = vld [vmem:[%s1851] sm:$0xf]
        %v4955 = vld [vmem:[%s1851 + $0x4] sm:$0xf]
        %v4956 = vld [vmem:[%s1851 + $0x8] sm:$0xf]
        %v4957 = vld [vmem:[%s1851 + $0xc] sm:$0xf]
        %v4958 = vld [vmem:[%s1851 + $0x10] sm:$0xf]
        %v4959 = vld [vmem:[%s1851 + $0x14] sm:$0xf]
        %v4960 = vld [vmem:[%s1851 + $0x18] sm:$0xf]
        %v4961 = vld [vmem:[%s1851 + $0x1c] sm:$0xf]
        %v4962 = vld [vmem:[%s1851 + $0x20] sm:$0xf]
        %v4963 = vld [vmem:[%s1851 + $0x24] sm:$0xf]
        %v4964 = vld [vmem:[%s1851 + $0x28] sm:$0xf]
        %v4965 = vld [vmem:[%s1851 + $0x2c] sm:$0xf]
        %v4966 = vld [vmem:[%s1851 + $0x30] sm:$0xf]
        %v4967 = vld [vmem:[%s1851 + $0x34] sm:$0xf]
        %v4968 = vld [vmem:[%s1851 + $0x38] sm:$0xf]
        %v4969 = vld [vmem:[%s1851 + $0x3c] sm:$0xf]
        %v4970 = vld [vmem:[%s1851 + $0x40] sm:$0xf]
        %v4971 = vld [vmem:[%s1851 + $0x44] sm:$0xf]
        %v4972 = vld [vmem:[%s1851 + $0x48] sm:$0xf]
        %v4973 = vld [vmem:[%s1851 + $0x4c] sm:$0xf]
        %v4974 = vld [vmem:[%s1851 + $0x50] sm:$0xf]
        %v4975 = vld [vmem:[%s1851 + $0x54] sm:$0xf]
        %v4976 = vld [vmem:[%s1851 + $0x58] sm:$0xf]
        %v4977 = vld [vmem:[%s1851 + $0x5c] sm:$0xf]
        %v4978 = vld [vmem:[%s1851 + $0x60] sm:$0xf]
        %v4979 = vld [vmem:[%s1851 + $0x64] sm:$0xf]
        %v4980 = vld [vmem:[%s1851 + $0x68] sm:$0xf]
        %v4981 = vld [vmem:[%s1851 + $0x6c] sm:$0xf]
        %v4982 = vld [vmem:[%s1851 + $0x70] sm:$0xf]
        %v4983 = vld [vmem:[%s1851 + $0x74] sm:$0xf]
        %v4984 = vld [vmem:[%s1851 + $0x78] sm:$0xf]
        %v4985 = vld [vmem:[%s1851 + $0x7c] sm:$0xf]
        %v4986 = vunpack.c.l.bf16 %v4954
        %v4987 = vunpack.c.l.bf16 %v4955
        %v4988 = vunpack.c.l.bf16 %v4956
        %v4989 = vunpack.c.l.bf16 %v4957
        %v4990 = vunpack.c.l.bf16 %v4958
        %v4991 = vunpack.c.l.bf16 %v4959
        %v4992 = vunpack.c.l.bf16 %v4960
        %v4993 = vunpack.c.l.bf16 %v4961
        %v4994 = vunpack.c.l.bf16 %v4962
        %v4995 = vunpack.c.l.bf16 %v4963
        %v4996 = vunpack.c.l.bf16 %v4964
        %v4997 = vunpack.c.l.bf16 %v4965
        %v4998 = vunpack.c.l.bf16 %v4966
        %v4999 = vunpack.c.l.bf16 %v4967
        %v5000 = vunpack.c.l.bf16 %v4968
        %v5001 = vunpack.c.l.bf16 %v4969
        %v5002 = vunpack.c.l.bf16 %v4970
        %v5003 = vunpack.c.l.bf16 %v4971
        %v5004 = vunpack.c.l.bf16 %v4972
        %v5005 = vunpack.c.l.bf16 %v4973
        %v5006 = vunpack.c.l.bf16 %v4974
        %v5007 = vunpack.c.l.bf16 %v4975
        %v5008 = vunpack.c.l.bf16 %v4976
        %v5009 = vunpack.c.l.bf16 %v4977
        %v5010 = vunpack.c.l.bf16 %v4978
        %v5011 = vunpack.c.l.bf16 %v4979
        %v5012 = vunpack.c.l.bf16 %v4980
        %v5013 = vunpack.c.l.bf16 %v4981
        %v5014 = vunpack.c.l.bf16 %v4982
        %v5015 = vunpack.c.l.bf16 %v4983
        %v5016 = vunpack.c.l.bf16 %v4984
        %v5017 = vunpack.c.l.bf16 %v4985
        %5018 = vmatprep.subr.mxu0 0.0
        %5019 = vmatpush1.msra.mxu0 %v5001
        %5020 = vmatprep.subr.mxu0 0.0
        %5021 = vmatpush1.msra.mxu0 %v5000
        %5022 = vmatprep.subr.mxu0 0.0
        %5023 = vmatpush1.msra.mxu0 %v4999
        %5024 = vmatprep.subr.mxu0 0.0
        %5025 = vmatpush1.msra.mxu0 %v4998
        %5026 = vmatprep.subr.mxu0 0.0
        %5027 = vmatpush1.msra.mxu0 %v4997
        %5028 = vmatprep.subr.mxu0 0.0
        %5029 = vmatpush1.msra.mxu0 %v4996
        %5030 = vmatprep.subr.mxu0 0.0
        %5031 = vmatpush1.msra.mxu0 %v4995
        %5032 = vmatprep.subr.mxu0 0.0
        %5033 = vmatpush1.msra.mxu0 %v4994
        %5034 = vmatprep.subr.mxu0 0.0
        %5035 = vmatpush1.msra.mxu0 %v4993
        %5036 = vmatprep.subr.mxu0 0.0
        %5037 = vmatpush1.msra.mxu0 %v4992
        %5038 = vmatprep.subr.mxu0 0.0
        %5039 = vmatpush1.msra.mxu0 %v4991
        %5040 = vmatprep.subr.mxu0 0.0
        %5041 = vmatpush1.msra.mxu0 %v4990
        %5042 = vmatprep.subr.mxu0 0.0
        %5043 = vmatpush1.msra.mxu0 %v4989
        %5044 = vmatprep.subr.mxu0 0.0
        %5045 = vmatpush1.msra.mxu0 %v4988
        %5046 = vmatprep.subr.mxu0 0.0
        %5047 = vmatpush1.msra.mxu0 %v4987
        %5048 = vmatprep.subr.mxu0 0.0
        %5049 = vmatpush1.msra.mxu0 %v4986
        %5050 = vmatprep.subr.mxu0 0.0
        %5051 = vmatpush2.msra.mxu0 %v5017
        %5052 = vmatprep.subr.mxu0 0.0
        %5053 = vmatpush2.msra.mxu0 %v5016
        %5054 = vmatprep.subr.mxu0 0.0
        %5055 = vmatpush2.msra.mxu0 %v5015
        %5056 = vmatprep.subr.mxu0 0.0
        %5057 = vmatpush2.msra.mxu0 %v5014
        %5058 = vmatprep.subr.mxu0 0.0
        %5059 = vmatpush2.msra.mxu0 %v5013
        %5060 = vmatprep.subr.mxu0 0.0
        %5061 = vmatpush2.msra.mxu0 %v5012
        %5062 = vmatprep.subr.mxu0 0.0
        %5063 = vmatpush2.msra.mxu0 %v5011
        %5064 = vmatprep.subr.mxu0 0.0
        %5065 = vmatpush2.msra.mxu0 %v5010
        %5066 = vmatprep.subr.mxu0 0.0
        %5067 = vmatpush2.msra.mxu0 %v5009
        %5068 = vmatprep.subr.mxu0 0.0
        %5069 = vmatpush2.msra.mxu0 %v5008
        %5070 = vmatprep.subr.mxu0 0.0
        %5071 = vmatpush2.msra.mxu0 %v5007
        %5072 = vmatprep.subr.mxu0 0.0
        %5073 = vmatpush2.msra.mxu0 %v5006
        %5074 = vmatprep.subr.mxu0 0.0
        %5075 = vmatpush2.msra.mxu0 %v5005
        %5076 = vmatprep.subr.mxu0 0.0
        %5077 = vmatpush2.msra.mxu0 %v5004
        %5078 = vmatprep.subr.mxu0 0.0
        %5079 = vmatpush2.msra.mxu0 %v5003
        %5080 = vmatprep.subr.mxu0 0.0
        %5081 = vmatpush2.msra.mxu0 %v5002
        %5082 = vmatprep.mubr.f32.mxu0 %v4953
        %5083 = vmatmul.mubr.f32.gmra.mxu0 %v4952
        %v5084 = vpop.f32.mrf.mxu0
        %v5085 = vadd.f32 0.0, %v5084
        %v5086 = vpop.f32.mrf.mxu0
        %5087 = vdwg.mxu0
        %p5088 = scmp.eq.s32.totalorder %s17, 0
        // Predicated region
        $region79: #{dqn_forward.7} parent=73 // pred_check
          %p5089 = pneg %p5088
        $region80: #{dqn_forward.7} parent=73 // pred_check_branch
          %5091 = sbr.rel (%p5089) target = $region82
        $region81: #{dqn_forward.7} parent=73 // pred_region
          %v5092 = vld [vmem:[%s4] sm:$0x1]
          %v5094 = vlaneseq
          %v5095 = vshrl.u32 %v5094, 7
          %v5096 = vsub.s32 0, %v5095
          %v5097 = vrot.slane %v5092, %v5096
          %v5099 = vadd.f32 %v5085, %v5097
          %vm5100 = vcmask 25600
          %5101 = vst.msk [vmem:[#allocation3] sm:$0x3] %vm5100, %v5099
        $region82: #{dqn_forward.7} parent=73 // pred_fallthru
          _
        %p5102 = scmp.ne.s32.totalorder %s17, 0
        // Predicated region
        $region83: #{dqn_forward.7} parent=73 // pred_check
          %p5103 = pneg %p5102
        $region84: #{dqn_forward.7} parent=73 // pred_check_branch
          %5105 = sbr.rel (%p5103) target = $region86
        $region85: #{dqn_forward.7} parent=73 // pred_region
          %v5106 = vld [vmem:[#allocation3] sm:$0x3]
          %v5107 = vadd.f32 %v5106, %v5085
          %vm5108 = vcmask 25600
          %5109 = vst.msk [vmem:[#allocation3] sm:$0x3] %vm5108, %v5107
        $region86: #{dqn_forward.7} parent=73 // pred_fallthru
          _
        // Predicated region
        $region87: #{dqn_forward.7} parent=73 // pred_check
          %p5110 = pneg %p150
        $region88: #{dqn_forward.7} parent=73 // pred_check_branch
          %5112 = sbr.rel (%p5110) target = $region90
        $region89: #{dqn_forward.7} parent=73 // pred_region
          %s5114 = ssub.s32 32, 32
          %5115 = vsyncadd [#allocation4], %s5114
          %s5117 = sshll.u32 [#allocation3], 4
          %s5118 = int_to_ptr.vmem [resolvable:$true] %s5117
          %5120 = dma.vmem_to_hbm [thread:$0]  %s5118, 32, %s5, [#allocation4]
        $region90: #{dqn_forward.7} parent=73 // pred_fallthru
          _
        // Predicated region
        $region91: #{dqn_forward.7} parent=73 // pred_check
          %p5121 = pneg %p150
        $region92: #{dqn_forward.7} parent=73 // pred_check_branch
          %5123 = sbr.rel (%p5121) target = $region94
        $region93: #{dqn_forward.7} parent=73 // pred_region
          %5124 = dma.done [#allocation4], 32
        $region94: #{dqn_forward.7} parent=73 // pred_fallthru
          _
      $region74: #{dqn_forward.7} parent=5 // pred_fallthru
        _
      %p5125 = scmp.le.s32.totalorder 2, %s12
      // Predicated region
      $region95: #{dqn_forward.7} parent=5 // pred_check
        %p5126 = pneg %p5125
      $region96: #{dqn_forward.7} parent=5 // pred_check_branch
        %5128 = sbr.rel (%p5126) target = $region98
      $region97: #{dqn_forward.7} parent=5 // pred_region
        %s5129 = ssub.s32 %s12, 2
      $region98: #{dqn_forward.7} parent=5 // pred_fallthru
        _
    $region6: #{dqn_forward.7} parent=1 // loop_footer
      %s16 = sadd.s32 1, %s12
    $region7: #{dqn_forward.7} parent=1 // loop_footer_branch
      %11 = sbr.rel target = $region3
    $region8: #{dqn_forward.7} parent=1 // loop_exit
      _
    %5130 = vsyncpa [#allocation4], 1
    %s5131 = scalar_lea.sflag [#allocation4], 1
    %5132 = vsyncpa %s5131, 1

</llo_original>
